<compile_context>
chip_gen: v6e
topology: v6e:2x2x1
jax: 0.10.0
libtpu: 0.0.40
codegen_flags: <defaults>
</compile_context>

<pallas_src>
import functools

import jax
import jax.numpy as jnp
from jax.experimental import pallas as pl
from jax.experimental.pallas import tpu as pltpu

_BN_EPS = 1e-5


# ----------------------------- fused Pallas kernel -----------------------------


def _fused_block_kernel(x_ref, hprev_ref, cprev_ref,
                        w0_ref, b0_ref,
                        wlx_ref, wlh_ref, bl_ref,
                        w1_ref, b1_ref,
                        ws_ref, bs_ref,
                        out_ref, h_ref, c_ref,
                        px_ref, pc_ref, ph_ref,
                        *, H, W, Cin, Cout, downsample, matmul_dtype):
    HW = H * W
    f32 = jnp.float32

    def zero_border(pad_ref):
        # Only the 1-px border needs zeroing (interior is fully overwritten every
        # step).  Done per grid step so it is correct even when the parallel grid
        # axis is sharded across TensorCores (scratch is per-core, not zeroed).
        Hp, Wp, C = pad_ref.shape
        z = pad_ref.dtype
        pad_ref[0:1, :, :] = jnp.zeros((1, Wp, C), z)
        pad_ref[Hp - 1:Hp, :, :] = jnp.zeros((1, Wp, C), z)
        pad_ref[:, 0:1, :] = jnp.zeros((Hp, 1, C), z)
        pad_ref[:, Wp - 1:Wp, :] = jnp.zeros((Hp, 1, C), z)

    def fill_interior(pad_ref, img):
        # cast once here (activations enter the MXU in matmul_dtype)
        pad_ref[1:1 + H, 1:1 + W, :] = img.astype(pad_ref.dtype)

    def conv3x3_acc(pad_ref, C, w_ref, acc):
        # Per-tap accumulation: no (HW, 9*C) patch matrix is ever materialized.
        # The kx (sublane) shift is hoisted: 3 shifted views, then 9 free ky
        # leading-dim slices.  w_ref is (9, C, n_out) so the tap weight is a free
        # leading-dim index.
        for kx in range(3):
            xsh = pad_ref[:, kx:kx + W, :]                    # (H+2, W, C)
            for ky in range(3):
                win = xsh[ky:ky + H].reshape(HW, C)           # leading-dim slice
                acc = acc + jnp.dot(win, w_ref[ky * 3 + kx],
                                    preferred_element_type=f32)
        return acc

    def sig(v):
        # sigmoid(x) == 0.5*(1+tanh(x/2)): one EUP push + cheap VPU mul/add
        return 0.5 * (jnp.tanh(0.5 * v) + 1.0)

    # ---- fused 2x2 max-pool --------------------------------------------------
    if downsample:
        # wrapper passed x reshaped to (2H, W, 2*Cin): adjacent column pairs are
        # packed into lanes, so the column max is a lane-slice maximum and the row
        # max only needs a (free) leading-dim split.
        xv = x_ref[0]                                         # (2H, W, 2*Cin)
        cm = jnp.maximum(xv[:, :, :Cin], xv[:, :, Cin:])      # (2H, W, Cin)
        pooled = jnp.max(cm.reshape(H, 2, W, Cin), axis=1)    # (H, W, Cin)
    else:
        pooled = x_ref[0]                                     # (H, W, Cin)
    pooled = pooled.astype(matmul_dtype)

    zero_border(px_ref)
    zero_border(pc_ref)
    zero_border(ph_ref)

    # ---- model0: conv3x3 (BN scale folded) + bias + ReLU ----------------------
    fill_interior(px_ref, pooled)
    out0 = conv3x3_acc(px_ref, Cin, w0_ref,
                       jnp.zeros((HW, Cout), f32)) + b0_ref[...]
    out0 = jnp.maximum(out0, 0.0)                             # (HW, Cout) f32

    # ---- ConvLSTM: gates = conv3x3(out0, Wx) + conv3x3(h_prev, Wh) + b --------
    # (concat avoided by splitting the weight along its input-channel halves; the
    #  (HW, 4*Cout) gates never leave VMEM/vregs)
    fill_interior(pc_ref, out0.reshape(H, W, Cout))
    fill_interior(ph_ref, hprev_ref[0].reshape(H, W, Cout))
    gates = conv3x3_acc(pc_ref, Cout, wlx_ref, jnp.zeros((HW, 4 * Cout), f32))
    gates = conv3x3_acc(ph_ref, Cout, wlh_ref, gates) + bl_ref[...]

    i = sig(gates[:, 0 * Cout:1 * Cout])
    f = sig(gates[:, 1 * Cout:2 * Cout])
    o = sig(gates[:, 2 * Cout:3 * Cout])
    g = jnp.tanh(gates[:, 3 * Cout:4 * Cout])
    c_new = f * cprev_ref[0] + i * g                          # (HW, Cout) f32
    h_new = o * jnp.tanh(c_new)

    # ---- model1: conv3x3 + BN (no ReLU) -- reuse pc_ref for the h_new halo ----
    fill_interior(pc_ref, h_new.reshape(H, W, Cout))
    out1 = conv3x3_acc(pc_ref, Cout, w1_ref,
                       jnp.zeros((HW, Cout), f32)) + b1_ref[...]

    # ---- shortcut (1x1 conv + BN, or identity) fused with add + ReLU ----------
    sc = jnp.dot(pooled.reshape(HW, Cin), ws_ref[...],
                 preferred_element_type=f32) + bs_ref[...]

    out_ref[0] = jnp.maximum(out1 + sc, 0.0)
    h_ref[0] = h_new
    c_ref[0] = c_new


# --------------------------- parameter preparation -----------------------------


def _fold_bn_into_conv(w, b, *, gamma, beta, mean, var):
    """Fold eval-mode BatchNorm into the conv weight / bias (exact algebra)."""
    s = gamma / jnp.sqrt(var + _BN_EPS)                 # (Cout,)
    return w * s[:, None, None, None], (b - mean) * s + beta


def _conv_w_to_taps(w):
    """(Cout, Cin, 3, 3) torch layout -> (9, Cin, Cout); tap index = ky*3 + kx."""
    cout, cin, k, _ = w.shape
    return jnp.transpose(w, (2, 3, 1, 0)).reshape(k * k, cin, cout)


def init_params(key, cin, cout):
    ks = jax.random.split(key, 11)

    def nrm(k, shape, s=0.1):
        return s * jax.random.normal(k, shape, jnp.float32)

    def bn_params(k):
        k1, k2, k3, k4 = jax.random.split(k, 4)
        return dict(gamma=1.0 + nrm(k1, (cout,)),
                    beta=nrm(k2, (cout,)),
                    mean=nrm(k3, (cout,)),
                    var=1.0 + 0.1 * jnp.abs(jax.random.normal(k4, (cout,), jnp.float32)))

    return {
        "w0": nrm(ks[0], (cout, cin, 3, 3)), "b0": nrm(ks[1], (cout,)),
        "bn0": bn_params(ks[2]),
        "wl": nrm(ks[3], (4 * cout, 2 * cout, 3, 3)), "bl": nrm(ks[4], (4 * cout,)),
        "w1": nrm(ks[5], (cout, cout, 3, 3)), "b1": nrm(ks[6], (cout,)),
        "bn1": bn_params(ks[7]),
        "ws": nrm(ks[8], (cout, cin, 1, 1)), "bs": nrm(ks[9], (cout,)),
        "bns": bn_params(ks[10]),
    }


def prepare_params(params, *, use_shortcut=True, matmul_dtype=jnp.float32):
    """Fold BN (eval mode), reshape weights to per-tap layout, and cast the MXU
    operands to matmul_dtype ONCE.  Call once, outside any scan/timestep loop.
    matmul_dtype=jnp.bfloat16 halves weight DMA / VMEM residency and hits the
    MXU bf16 fast path on v6e/v7x; biases and gate/state math stay f32."""
    cout, cin = params["w0"].shape[0], params["w0"].shape[1]

    w0, b0 = _fold_bn_into_conv(params["w0"], params["b0"], **params["bn0"])
    w1, b1 = _fold_bn_into_conv(params["w1"], params["b1"], **params["bn1"])

    wl = params["wl"]                          # (4*Cout, 2*Cout, 3, 3)
    wlx, wlh = wl[:, :cout], wl[:, cout:]      # split concat([x, h]) input halves

    if use_shortcut:
        ws, bs = _fold_bn_into_conv(params["ws"], params["bs"], **params["bns"])
        ws_mat = ws[:, :, 0, 0].T              # (Cin, Cout)
    else:
        # nn.Identity() shortcut: out = out1 + pooled x  (requires Cin == Cout)
        assert cin == cout, "use_shortcut=False requires in_channels == out_channels"
        ws_mat = jnp.eye(cin, dtype=jnp.float32)
        bs = jnp.zeros((cout,), jnp.float32)

    md = matmul_dtype
    return dict(
        w0=_conv_w_to_taps(w0).astype(md), b0=b0.reshape(1, cout).astype(jnp.float32),
        wlx=_conv_w_to_taps(wlx).astype(md), wlh=_conv_w_to_taps(wlh).astype(md),
        bl=params["bl"].reshape(1, 4 * cout).astype(jnp.float32),
        w1=_conv_w_to_taps(w1).astype(md), b1=b1.reshape(1, cout).astype(jnp.float32),
        ws=ws_mat.astype(md), bs=bs.reshape(1, cout).astype(jnp.float32),
    )


# ------------------------------- forward wrapper --------------------------------


def _full_spec(a):
    zeros = (0,) * a.ndim
    return pl.BlockSpec(a.shape, lambda n: zeros)


def unet_recurrent_down_block(x, prep, memory=None, *, downsample=True,
                              alias_state=True):
    """x: (N, H, W, Cin) NHWC.  Returns (out, (h, c)), each (N, Ho, Wo, Cout)."""
    N, H0, W0, Cin = x.shape
    Cout = prep["b0"].shape[-1]
    matmul_dtype = prep["w0"].dtype

    if downsample:
        assert H0 % 2 == 0 and W0 % 2 == 0, "MaxPool2d(2,2) needs even H, W"
        H, W = H0 // 2, W0 // 2
        # free reshape: pack adjacent column pairs into lanes for the fused pool
        x_in = x.reshape(N, H0, W, 2 * Cin)
        x_block = (1, H0, W, 2 * Cin)
    else:
        H, W = H0, W0
        x_in = x
        x_block = (1, H, W, Cin)
    HW = H * W

    if memory is None:
        h_prev = jnp.zeros((N, HW, Cout), jnp.float32)
        c_prev = jnp.zeros((N, HW, Cout), jnp.float32)
    else:
        h_prev = memory[0].astype(jnp.float32).reshape(N, HW, Cout)
        c_prev = memory[1].astype(jnp.float32).reshape(N, HW, Cout)

    kernel = functools.partial(
        _fused_block_kernel, H=H, W=W, Cin=Cin, Cout=Cout,
        downsample=downsample, matmul_dtype=matmul_dtype)

    flops = N * (2 * HW * 9 * Cin * Cout                  # conv0
                 + 2 * 2 * HW * 9 * Cout * 4 * Cout       # ConvLSTM (x & h halves)
                 + 2 * HW * 9 * Cout * Cout               # conv1
                 + 2 * HW * Cin * Cout)                   # shortcut 1x1
    transcendentals = N * HW * Cout * 5                   # 3 sigmoid + 2 tanh
    param_bytes = sum(int(v.size) * v.dtype.itemsize for v in prep.values())
    bytes_accessed = (int(x_in.size) * x_in.dtype.itemsize
                      + 2 * N * HW * Cout * 4             # h_prev, c_prev in
                      + param_bytes
                      + 3 * N * HW * Cout * 4)            # out, h, c

    in_specs = [
        pl.BlockSpec(x_block, lambda n: (n, 0, 0, 0)),
        pl.BlockSpec((1, HW, Cout), lambda n: (n, 0, 0)),
        pl.BlockSpec((1, HW, Cout), lambda n: (n, 0, 0)),
        _full_spec(prep["w0"]), _full_spec(prep["b0"]),
        _full_spec(prep["wlx"]), _full_spec(prep["wlh"]), _full_spec(prep["bl"]),
        _full_spec(prep["w1"]), _full_spec(prep["b1"]),
        _full_spec(prep["ws"]), _full_spec(prep["bs"]),
    ]
    # NOTE: at demo size Cout=8 the output lane dim is narrow (masked stores); at
    # production channel counts (multiples of 128) these stores are lane-dense.
    out_specs = tuple(pl.BlockSpec((1, HW, Cout), lambda n: (n, 0, 0))
                      for _ in range(3))
    out_shape = tuple(jax.ShapeDtypeStruct((N, HW, Cout), jnp.float32)
                      for _ in range(3))
    scratch_shapes = [
        pltpu.VMEM((H + 2, W + 2, Cin), matmul_dtype),   # padded pooled x
        pltpu.VMEM((H + 2, W + 2, Cout), matmul_dtype),  # padded out0, reused for h
        pltpu.VMEM((H + 2, W + 2, Cout), matmul_dtype),  # padded h_prev
    ]
    # alias recurrent state in place (h_prev -> h, c_prev -> c): avoids fresh
    # state allocations/copies every timestep when driven from a scan.
    io_aliases = {1: 1, 2: 2} if alias_state else {}

    out_flat, h_flat, c_flat = pl.pallas_call(
        kernel,
        out_shape=out_shape,
        grid=(N,),
        in_specs=in_specs,
        out_specs=out_specs,
        scratch_shapes=scratch_shapes,
        input_output_aliases=io_aliases,
        compiler_params=pltpu.CompilerParams(
            dimension_semantics=("parallel",),
            vmem_limit_bytes=32 * 1024 * 1024),
        cost_estimate=pl.CostEstimate(flops=flops,
                                      transcendentals=transcendentals,
                                      bytes_accessed=bytes_accessed),
    )(x_in, h_prev, c_prev,
      prep["w0"], prep["b0"], prep["wlx"], prep["wlh"], prep["bl"],
      prep["w1"], prep["b1"], prep["ws"], prep["bs"])

    out = out_flat.reshape(N, H, W, Cout)
    h = h_flat.reshape(N, H, W, Cout)
    c = c_flat.reshape(N, H, W, Cout)
    return out, (h, c)


# --------------------------- pure-JAX reference ---------------------------------


def _reference_forward(x_nhwc, params, memory=None, *, downsample=True,
                       use_shortcut=True):
    def conv(x, w, b, padding):
        w_hwio = jnp.transpose(w, (2, 3, 1, 0))
        y = jax.lax.conv_general_dilated(
            x, w_hwio, window_strides=(1, 1), padding=padding,
            dimension_numbers=("NHWC", "HWIO", "NHWC"),
            precision=jax.lax.Precision.HIGHEST)
        return y + b.reshape(1, 1, 1, -1)

    def bn(x, p):
        return (x - p["mean"]) / jnp.sqrt(p["var"] + _BN_EPS) * p["gamma"] + p["beta"]

    if downsample:
        n, h0, w0, c = x_nhwc.shape
        x_nhwc = x_nhwc.reshape(n, h0 // 2, 2, w0 // 2, 2, c).max(axis=(2, 4))

    out0 = jax.nn.relu(bn(conv(x_nhwc, params["w0"], params["b0"], "SAME"),
                          params["bn0"]))
    n, h, w, _ = out0.shape
    cout = params["w0"].shape[0]
    if memory is None:
        h_prev = jnp.zeros((n, h, w, cout), jnp.float32)
        c_prev = jnp.zeros((n, h, w, cout), jnp.float32)
    else:
        h_prev, c_prev = memory
    gates = conv(jnp.concatenate([out0, h_prev], axis=-1),
                 params["wl"], params["bl"], "SAME")
    i = jax.nn.sigmoid(gates[..., 0 * cout:1 * cout])
    f = jax.nn.sigmoid(gates[..., 1 * cout:2 * cout])
    o = jax.nn.sigmoid(gates[..., 2 * cout:3 * cout])
    g = jnp.tanh(gates[..., 3 * cout:4 * cout])
    c_new = f * c_prev + i * g
    h_new = o * jnp.tanh(c_new)
    out1 = bn(conv(h_new, params["w1"], params["b1"], "SAME"), params["bn1"])
    sc = bn(conv(x_nhwc, params["ws"], params["bs"], "VALID"),
            params["bns"]) if use_shortcut else x_nhwc
    return jax.nn.relu(out1 + sc), (h_new, c_new)


# ------------------------------------- main --------------------------------------


if __name__ == "__main__":
    key = jax.random.PRNGKey(0)
    k_x, k_p = jax.random.split(key)

    N, Cin, H0, W0 = 2, 4, 16, 16
    Cout = 8

    x_nchw = jax.random.normal(k_x, (N, Cin, H0, W0), jnp.float32)  # PyTorch layout
    x_nhwc = jnp.transpose(x_nchw, (0, 2, 3, 1))                    # kernel layout

    params = init_params(k_p, Cin, Cout)
    # hoisted, once; pass matmul_dtype=jnp.bfloat16 for the bf16 MXU path
    prep = prepare_params(params, use_shortcut=True, matmul_dtype=jnp.float32)

    # step 1: no memory (zero-initialized recurrent state)
    out1, (h1, c1) = unet_recurrent_down_block(x_nhwc, prep, memory=None,
                                               downsample=True)
    # step 2: recurrent step with the previous (h, c)
    out2, (h2, c2) = unet_recurrent_down_block(x_nhwc, prep, memory=(h1, c1),
                                               downsample=True)
    jax.block_until_ready((out1, h1, c1, out2, h2, c2))

    assert out1.shape == (N, H0 // 2, W0 // 2, Cout)
    assert h1.shape == (N, H0 // 2, W0 // 2, Cout)
    assert c1.shape == (N, H0 // 2, W0 // 2, Cout)

    # correctness vs. pure-JAX reference
    r_out1, (r_h1, r_c1) = _reference_forward(x_nhwc, params, memory=None,
                                              downsample=True, use_shortcut=True)
    r_out2, (r_h2, r_c2) = _reference_forward(x_nhwc, params, memory=(r_h1, r_c1),
                                              downsample=True, use_shortcut=True)
    for a, b in ((out1, r_out1), (h1, r_h1), (c1, r_c1),
                 (out2, r_out2), (h2, r_h2), (c2, r_c2)):
        assert a.shape == b.shape
        assert bool(jnp.all(jnp.isfinite(a)))
        assert bool(jnp.allclose(a, b, atol=2e-2, rtol=2e-2))

    print("KERNEL_OK")
</pallas_src>

<mosaic_0001>
module attributes {stable_mosaic.version = 11 : i64} {
  func.func @_fused_block_kernel(%arg0: i32, %arg1: memref<1x16x8x8xf32, #tpu.memory_space<vmem>>, %arg2: memref<1x64x8xf32, #tpu.memory_space<vmem>>, %arg3: memref<1x64x8xf32, #tpu.memory_space<vmem>>, %arg4: memref<9x4x8xf32, #tpu.memory_space<vmem>>, %arg5: memref<1x8xf32, #tpu.memory_space<vmem>>, %arg6: memref<9x8x32xf32, #tpu.memory_space<vmem>>, %arg7: memref<9x8x32xf32, #tpu.memory_space<vmem>>, %arg8: memref<1x32xf32, #tpu.memory_space<vmem>>, %arg9: memref<9x8x8xf32, #tpu.memory_space<vmem>>, %arg10: memref<1x8xf32, #tpu.memory_space<vmem>>, %arg11: memref<4x8xf32, #tpu.memory_space<vmem>>, %arg12: memref<1x8xf32, #tpu.memory_space<vmem>>, %arg13: memref<1x64x8xf32, #tpu.memory_space<vmem>>, %arg14: memref<1x64x8xf32, #tpu.memory_space<vmem>>, %arg15: memref<1x64x8xf32, #tpu.memory_space<vmem>>, %arg16: memref<10x10x4xf32, #tpu.memory_space<vmem>>, %arg17: memref<10x10x8xf32, #tpu.memory_space<vmem>>, %arg18: memref<10x10x8xf32, #tpu.memory_space<vmem>>) attributes {dimension_semantics = [#tpu.dimension_semantics<parallel>], iteration_bounds = array<i64: 2>, scalar_prefetch = 0 : i64, scratch_operands = 3 : i64, tpu.core_type = #tpu.core_type<tc>, window_params = [{transform_indices = @transform_0, window_bounds = array<i64: 1, 16, 8, 8>}, {transform_indices = @transform_1, window_bounds = array<i64: 1, 64, 8>}, {transform_indices = @transform_2, window_bounds = array<i64: 1, 64, 8>}, {pipeline_mode = #tpu.pipeline_mode<synchronous>, transform_indices = @transform_3, window_bounds = array<i64: 9, 4, 8>}, {pipeline_mode = #tpu.pipeline_mode<synchronous>, transform_indices = @transform_4, window_bounds = array<i64: 1, 8>}, {pipeline_mode = #tpu.pipeline_mode<synchronous>, transform_indices = @transform_5, window_bounds = array<i64: 9, 8, 32>}, {pipeline_mode = #tpu.pipeline_mode<synchronous>, transform_indices = @transform_6, window_bounds = array<i64: 9, 8, 32>}, {pipeline_mode = #tpu.pipeline_mode<synchronous>, transform_indices = @transform_7, window_bounds = array<i64: 1, 32>}, {pipeline_mode = #tpu.pipeline_mode<synchronous>, transform_indices = @transform_8, window_bounds = array<i64: 9, 8, 8>}, {pipeline_mode = #tpu.pipeline_mode<synchronous>, transform_indices = @transform_9, window_bounds = array<i64: 1, 8>}, {pipeline_mode = #tpu.pipeline_mode<synchronous>, transform_indices = @transform_10, window_bounds = array<i64: 4, 8>}, {pipeline_mode = #tpu.pipeline_mode<synchronous>, transform_indices = @transform_11, window_bounds = array<i64: 1, 8>}, {transform_indices = @transform_12, window_bounds = array<i64: 1, 64, 8>}, {transform_indices = @transform_13, window_bounds = array<i64: 1, 64, 8>}, {transform_indices = @transform_14, window_bounds = array<i64: 1, 64, 8>}]} {
    %c0 = arith.constant 0 : index
    %c0_0 = arith.constant 0 : index
    %c0_1 = arith.constant 0 : index
    %c0_2 = arith.constant 0 : index
    %0 = vector.load %arg1[%c0, %c0_0, %c0_1, %c0_2] : memref<1x16x8x8xf32, #tpu.memory_space<vmem>>, vector<1x16x8x8xf32>
    %1 = vector.shape_cast %0 : vector<1x16x8x8xf32> to vector<16x8x8xf32>
    %2 = vector.extract_strided_slice %1 {offsets = [0, 0, 0], sizes = [16, 8, 4], strides = [1, 1, 1]} : vector<16x8x8xf32> to vector<16x8x4xf32>
    %3 = vector.extract_strided_slice %1 {offsets = [0, 0, 4], sizes = [16, 8, 4], strides = [1, 1, 1]} : vector<16x8x8xf32> to vector<16x8x4xf32>
    %4 = arith.maximumf %2, %3 : vector<16x8x4xf32>
    %5 = vector.shape_cast %4 : vector<16x8x4xf32> to vector<8x2x8x4xf32>
    %cst = arith.constant dense<0xFF800000> : vector<8x8x4xf32>
    %6 = vector.multi_reduction <maximumf>, %5, %cst [1] : vector<8x2x8x4xf32> to vector<8x8x4xf32>
    %cst_3 = arith.constant 0.000000e+00 : f32
    %7 = vector.broadcast %cst_3 : f32 to vector<1x10x4xf32>
    %c0_4 = arith.constant 0 : index
    %c0_5 = arith.constant 0 : index
    %c0_6 = arith.constant 0 : index
    %8 = vector.load %arg16[%c0_4, %c0_5, %c0_6] : memref<10x10x4xf32, #tpu.memory_space<vmem>>, vector<1x10x4xf32>
    tpu.vector_store %arg16[%c0_4, %c0_5, %c0_6], %7 {strides = array<i32>} : memref<10x10x4xf32, #tpu.memory_space<vmem>>, vector<1x10x4xf32>,
    %cst_7 = arith.constant 0.000000e+00 : f32
    %9 = vector.broadcast %cst_7 : f32 to vector<1x10x4xf32>
    %c9 = arith.constant 9 : index
    %c0_8 = arith.constant 0 : index
    %c0_9 = arith.constant 0 : index
    %10 = vector.load %arg16[%c9, %c0_8, %c0_9] : memref<10x10x4xf32, #tpu.memory_space<vmem>>, vector<1x10x4xf32>
    tpu.vector_store %arg16[%c9, %c0_8, %c0_9], %9 {strides = array<i32>} : memref<10x10x4xf32, #tpu.memory_space<vmem>>, vector<1x10x4xf32>,
    %cst_10 = arith.constant 0.000000e+00 : f32
    %11 = vector.broadcast %cst_10 : f32 to vector<10x1x4xf32>
    %c0_11 = arith.constant 0 : index
    %c0_12 = arith.constant 0 : index
    %c0_13 = arith.constant 0 : index
    %12 = vector.load %arg16[%c0_11, %c0_12, %c0_13] : memref<10x10x4xf32, #tpu.memory_space<vmem>>, vector<10x1x4xf32>
    tpu.vector_store %arg16[%c0_11, %c0_12, %c0_13], %11 {strides = array<i32>} : memref<10x10x4xf32, #tpu.memory_space<vmem>>, vector<10x1x4xf32>,
    %cst_14 = arith.constant 0.000000e+00 : f32
    %13 = vector.broadcast %cst_14 : f32 to vector<10x1x4xf32>
    %c0_15 = arith.constant 0 : index
    %c9_16 = arith.constant 9 : index
    %c0_17 = arith.constant 0 : index
    %14 = vector.load %arg16[%c0_15, %c9_16, %c0_17] : memref<10x10x4xf32, #tpu.memory_space<vmem>>, vector<10x1x4xf32>
    tpu.vector_store %arg16[%c0_15, %c9_16, %c0_17], %13 {strides = array<i32>} : memref<10x10x4xf32, #tpu.memory_space<vmem>>, vector<10x1x4xf32>,
    %cst_18 = arith.constant 0.000000e+00 : f32
    %15 = vector.broadcast %cst_18 : f32 to vector<1x10x8xf32>
    %c0_19 = arith.constant 0 : index
    %c0_20 = arith.constant 0 : index
    %c0_21 = arith.constant 0 : index
    %16 = vector.load %arg17[%c0_19, %c0_20, %c0_21] : memref<10x10x8xf32, #tpu.memory_space<vmem>>, vector<1x10x8xf32>
    tpu.vector_store %arg17[%c0_19, %c0_20, %c0_21], %15 {strides = array<i32>} : memref<10x10x8xf32, #tpu.memory_space<vmem>>, vector<1x10x8xf32>,
    %cst_22 = arith.constant 0.000000e+00 : f32
    %17 = vector.broadcast %cst_22 : f32 to vector<1x10x8xf32>
    %c9_23 = arith.constant 9 : index
    %c0_24 = arith.constant 0 : index
    %c0_25 = arith.constant 0 : index
    %18 = vector.load %arg17[%c9_23, %c0_24, %c0_25] : memref<10x10x8xf32, #tpu.memory_space<vmem>>, vector<1x10x8xf32>
    tpu.vector_store %arg17[%c9_23, %c0_24, %c0_25], %17 {strides = array<i32>} : memref<10x10x8xf32, #tpu.memory_space<vmem>>, vector<1x10x8xf32>,
    %cst_26 = arith.constant 0.000000e+00 : f32
    %19 = vector.broadcast %cst_26 : f32 to vector<10x1x8xf32>
    %c0_27 = arith.constant 0 : index
    %c0_28 = arith.constant 0 : index
    %c0_29 = arith.constant 0 : index
    %20 = vector.load %arg17[%c0_27, %c0_28, %c0_29] : memref<10x10x8xf32, #tpu.memory_space<vmem>>, vector<10x1x8xf32>
    tpu.vector_store %arg17[%c0_27, %c0_28, %c0_29], %19 {strides = array<i32>} : memref<10x10x8xf32, #tpu.memory_space<vmem>>, vector<10x1x8xf32>,
    %cst_30 = arith.constant 0.000000e+00 : f32
    %21 = vector.broadcast %cst_30 : f32 to vector<10x1x8xf32>
    %c0_31 = arith.constant 0 : index
    %c9_32 = arith.constant 9 : index
    %c0_33 = arith.constant 0 : index
    %22 = vector.load %arg17[%c0_31, %c9_32, %c0_33] : memref<10x10x8xf32, #tpu.memory_space<vmem>>, vector<10x1x8xf32>
    tpu.vector_store %arg17[%c0_31, %c9_32, %c0_33], %21 {strides = array<i32>} : memref<10x10x8xf32, #tpu.memory_space<vmem>>, vector<10x1x8xf32>,
    %cst_34 = arith.constant 0.000000e+00 : f32
    %23 = vector.broadcast %cst_34 : f32 to vector<1x10x8xf32>
    %c0_35 = arith.constant 0 : index
    %c0_36 = arith.constant 0 : index
    %c0_37 = arith.constant 0 : index
    %24 = vector.load %arg18[%c0_35, %c0_36, %c0_37] : memref<10x10x8xf32, #tpu.memory_space<vmem>>, vector<1x10x8xf32>
    tpu.vector_store %arg18[%c0_35, %c0_36, %c0_37], %23 {strides = array<i32>} : memref<10x10x8xf32, #tpu.memory_space<vmem>>, vector<1x10x8xf32>,
    %cst_38 = arith.constant 0.000000e+00 : f32
    %25 = vector.broadcast %cst_38 : f32 to vector<1x10x8xf32>
    %c9_39 = arith.constant 9 : index
    %c0_40 = arith.constant 0 : index
    %c0_41 = arith.constant 0 : index
    %26 = vector.load %arg18[%c9_39, %c0_40, %c0_41] : memref<10x10x8xf32, #tpu.memory_space<vmem>>, vector<1x10x8xf32>
    tpu.vector_store %arg18[%c9_39, %c0_40, %c0_41], %25 {strides = array<i32>} : memref<10x10x8xf32, #tpu.memory_space<vmem>>, vector<1x10x8xf32>,
    %cst_42 = arith.constant 0.000000e+00 : f32
    %27 = vector.broadcast %cst_42 : f32 to vector<10x1x8xf32>
    %c0_43 = arith.constant 0 : index
    %c0_44 = arith.constant 0 : index
    %c0_45 = arith.constant 0 : index
    %28 = vector.load %arg18[%c0_43, %c0_44, %c0_45] : memref<10x10x8xf32, #tpu.memory_space<vmem>>, vector<10x1x8xf32>
    tpu.vector_store %arg18[%c0_43, %c0_44, %c0_45], %27 {strides = array<i32>} : memref<10x10x8xf32, #tpu.memory_space<vmem>>, vector<10x1x8xf32>,
    %cst_46 = arith.constant 0.000000e+00 : f32
    %29 = vector.broadcast %cst_46 : f32 to vector<10x1x8xf32>
    %c0_47 = arith.constant 0 : index
    %c9_48 = arith.constant 9 : index
    %c0_49 = arith.constant 0 : index
    %30 = vector.load %arg18[%c0_47, %c9_48, %c0_49] : memref<10x10x8xf32, #tpu.memory_space<vmem>>, vector<10x1x8xf32>
    tpu.vector_store %arg18[%c0_47, %c9_48, %c0_49], %29 {strides = array<i32>} : memref<10x10x8xf32, #tpu.memory_space<vmem>>, vector<10x1x8xf32>,
    %c1 = arith.constant 1 : index
    %c1_50 = arith.constant 1 : index
    %c0_51 = arith.constant 0 : index
    %31 = vector.load %arg16[%c1, %c1_50, %c0_51] : memref<10x10x4xf32, #tpu.memory_space<vmem>>, vector<8x8x4xf32>
    tpu.vector_store %arg16[%c1, %c1_50, %c0_51], %6 {strides = array<i32>} : memref<10x10x4xf32, #tpu.memory_space<vmem>>, vector<8x8x4xf32>,
    %cst_52 = arith.constant 0.000000e+00 : f32
    %32 = vector.broadcast %cst_52 : f32 to vector<64x8xf32>
    %c0_53 = arith.constant 0 : index
    %c0_54 = arith.constant 0 : index
    %c0_55 = arith.constant 0 : index
    %33 = vector.load %arg16[%c0_53, %c0_54, %c0_55] : memref<10x10x4xf32, #tpu.memory_space<vmem>>, vector<10x8x4xf32>
    %34 = vector.extract_strided_slice %33 {offsets = [0, 0, 0], sizes = [8, 8, 4], strides = [1, 1, 1]} : vector<10x8x4xf32> to vector<8x8x4xf32>
    %35 = vector.shape_cast %34 : vector<8x8x4xf32> to vector<64x4xf32>
    %c0_56 = arith.constant 0 : index
    %c0_57 = arith.constant 0 : index
    %c0_58 = arith.constant 0 : index
    %36 = vector.load %arg4[%c0_56, %c0_57, %c0_58] : memref<9x4x8xf32, #tpu.memory_space<vmem>>, vector<1x4x8xf32>
    %37 = vector.shape_cast %36 : vector<1x4x8xf32> to vector<4x8xf32>
    %cst_59 = arith.constant dense<0.000000e+00> : vector<64x8xf32>
    %38 = tpu.matmul %35, %37, %cst_59 {dimension_numbers = #tpu.dot_dimension_numbers<[1], [0], [0], [1], [0, 0, 1, 1], [], []>} : vector<64x4xf32>, vector<4x8xf32>, vector<64x8xf32> -> vector<64x8xf32>
    %39 = arith.addf %32, %38 : vector<64x8xf32>
    %40 = vector.extract_strided_slice %33 {offsets = [1, 0, 0], sizes = [8, 8, 4], strides = [1, 1, 1]} : vector<10x8x4xf32> to vector<8x8x4xf32>
    %41 = vector.shape_cast %40 : vector<8x8x4xf32> to vector<64x4xf32>
    %c3 = arith.constant 3 : index
    %c0_60 = arith.constant 0 : index
    %c0_61 = arith.constant 0 : index
    %42 = vector.load %arg4[%c3, %c0_60, %c0_61] : memref<9x4x8xf32, #tpu.memory_space<vmem>>, vector<1x4x8xf32>
    %43 = vector.shape_cast %42 : vector<1x4x8xf32> to vector<4x8xf32>
    %cst_62 = arith.constant dense<0.000000e+00> : vector<64x8xf32>
    %44 = tpu.matmul %41, %43, %cst_62 {dimension_numbers = #tpu.dot_dimension_numbers<[1], [0], [0], [1], [0, 0, 1, 1], [], []>} : vector<64x4xf32>, vector<4x8xf32>, vector<64x8xf32> -> vector<64x8xf32>
    %45 = arith.addf %39, %44 : vector<64x8xf32>
    %46 = vector.extract_strided_slice %33 {offsets = [2, 0, 0], sizes = [8, 8, 4], strides = [1, 1, 1]} : vector<10x8x4xf32> to vector<8x8x4xf32>
    %47 = vector.shape_cast %46 : vector<8x8x4xf32> to vector<64x4xf32>
    %c6 = arith.constant 6 : index
    %c0_63 = arith.constant 0 : index
    %c0_64 = arith.constant 0 : index
    %48 = vector.load %arg4[%c6, %c0_63, %c0_64] : memref<9x4x8xf32, #tpu.memory_space<vmem>>, vector<1x4x8xf32>
    %49 = vector.shape_cast %48 : vector<1x4x8xf32> to vector<4x8xf32>
    %cst_65 = arith.constant dense<0.000000e+00> : vector<64x8xf32>
    %50 = tpu.matmul %47, %49, %cst_65 {dimension_numbers = #tpu.dot_dimension_numbers<[1], [0], [0], [1], [0, 0, 1, 1], [], []>} : vector<64x4xf32>, vector<4x8xf32>, vector<64x8xf32> -> vector<64x8xf32>
    %51 = arith.addf %45, %50 : vector<64x8xf32>
    %c0_66 = arith.constant 0 : index
    %c1_67 = arith.constant 1 : index
    %c0_68 = arith.constant 0 : index
    %52 = vector.load %arg16[%c0_66, %c1_67, %c0_68] : memref<10x10x4xf32, #tpu.memory_space<vmem>>, vector<10x8x4xf32>
    %53 = vector.extract_strided_slice %52 {offsets = [0, 0, 0], sizes = [8, 8, 4], strides = [1, 1, 1]} : vector<10x8x4xf32> to vector<8x8x4xf32>
    %54 = vector.shape_cast %53 : vector<8x8x4xf32> to vector<64x4xf32>
    %c1_69 = arith.constant 1 : index
    %c0_70 = arith.constant 0 : index
    %c0_71 = arith.constant 0 : index
    %55 = vector.load %arg4[%c1_69, %c0_70, %c0_71] : memref<9x4x8xf32, #tpu.memory_space<vmem>>, vector<1x4x8xf32>
    %56 = vector.shape_cast %55 : vector<1x4x8xf32> to vector<4x8xf32>
    %cst_72 = arith.constant dense<0.000000e+00> : vector<64x8xf32>
    %57 = tpu.matmul %54, %56, %cst_72 {dimension_numbers = #tpu.dot_dimension_numbers<[1], [0], [0], [1], [0, 0, 1, 1], [], []>} : vector<64x4xf32>, vector<4x8xf32>, vector<64x8xf32> -> vector<64x8xf32>
    %58 = arith.addf %51, %57 : vector<64x8xf32>
    %59 = vector.extract_strided_slice %52 {offsets = [1, 0, 0], sizes = [8, 8, 4], strides = [1, 1, 1]} : vector<10x8x4xf32> to vector<8x8x4xf32>
    %60 = vector.shape_cast %59 : vector<8x8x4xf32> to vector<64x4xf32>
    %c4 = arith.constant 4 : index
    %c0_73 = arith.constant 0 : index
    %c0_74 = arith.constant 0 : index
    %61 = vector.load %arg4[%c4, %c0_73, %c0_74] : memref<9x4x8xf32, #tpu.memory_space<vmem>>, vector<1x4x8xf32>
    %62 = vector.shape_cast %61 : vector<1x4x8xf32> to vector<4x8xf32>
    %cst_75 = arith.constant dense<0.000000e+00> : vector<64x8xf32>
    %63 = tpu.matmul %60, %62, %cst_75 {dimension_numbers = #tpu.dot_dimension_numbers<[1], [0], [0], [1], [0, 0, 1, 1], [], []>} : vector<64x4xf32>, vector<4x8xf32>, vector<64x8xf32> -> vector<64x8xf32>
    %64 = arith.addf %58, %63 : vector<64x8xf32>
    %65 = vector.extract_strided_slice %52 {offsets = [2, 0, 0], sizes = [8, 8, 4], strides = [1, 1, 1]} : vector<10x8x4xf32> to vector<8x8x4xf32>
    %66 = vector.shape_cast %65 : vector<8x8x4xf32> to vector<64x4xf32>
    %c7 = arith.constant 7 : index
    %c0_76 = arith.constant 0 : index
    %c0_77 = arith.constant 0 : index
    %67 = vector.load %arg4[%c7, %c0_76, %c0_77] : memref<9x4x8xf32, #tpu.memory_space<vmem>>, vector<1x4x8xf32>
    %68 = vector.shape_cast %67 : vector<1x4x8xf32> to vector<4x8xf32>
    %cst_78 = arith.constant dense<0.000000e+00> : vector<64x8xf32>
    %69 = tpu.matmul %66, %68, %cst_78 {dimension_numbers = #tpu.dot_dimension_numbers<[1], [0], [0], [1], [0, 0, 1, 1], [], []>} : vector<64x4xf32>, vector<4x8xf32>, vector<64x8xf32> -> vector<64x8xf32>
    %70 = arith.addf %64, %69 : vector<64x8xf32>
    %c0_79 = arith.constant 0 : index
    %c2 = arith.constant 2 : index
    %c0_80 = arith.constant 0 : index
    %71 = vector.load %arg16[%c0_79, %c2, %c0_80] : memref<10x10x4xf32, #tpu.memory_space<vmem>>, vector<10x8x4xf32>
    %72 = vector.extract_strided_slice %71 {offsets = [0, 0, 0], sizes = [8, 8, 4], strides = [1, 1, 1]} : vector<10x8x4xf32> to vector<8x8x4xf32>
    %73 = vector.shape_cast %72 : vector<8x8x4xf32> to vector<64x4xf32>
    %c2_81 = arith.constant 2 : index
    %c0_82 = arith.constant 0 : index
    %c0_83 = arith.constant 0 : index
    %74 = vector.load %arg4[%c2_81, %c0_82, %c0_83] : memref<9x4x8xf32, #tpu.memory_space<vmem>>, vector<1x4x8xf32>
    %75 = vector.shape_cast %74 : vector<1x4x8xf32> to vector<4x8xf32>
    %cst_84 = arith.constant dense<0.000000e+00> : vector<64x8xf32>
    %76 = tpu.matmul %73, %75, %cst_84 {dimension_numbers = #tpu.dot_dimension_numbers<[1], [0], [0], [1], [0, 0, 1, 1], [], []>} : vector<64x4xf32>, vector<4x8xf32>, vector<64x8xf32> -> vector<64x8xf32>
    %77 = arith.addf %70, %76 : vector<64x8xf32>
    %78 = vector.extract_strided_slice %71 {offsets = [1, 0, 0], sizes = [8, 8, 4], strides = [1, 1, 1]} : vector<10x8x4xf32> to vector<8x8x4xf32>
    %79 = vector.shape_cast %78 : vector<8x8x4xf32> to vector<64x4xf32>
    %c5 = arith.constant 5 : index
    %c0_85 = arith.constant 0 : index
    %c0_86 = arith.constant 0 : index
    %80 = vector.load %arg4[%c5, %c0_85, %c0_86] : memref<9x4x8xf32, #tpu.memory_space<vmem>>, vector<1x4x8xf32>
    %81 = vector.shape_cast %80 : vector<1x4x8xf32> to vector<4x8xf32>
    %cst_87 = arith.constant dense<0.000000e+00> : vector<64x8xf32>
    %82 = tpu.matmul %79, %81, %cst_87 {dimension_numbers = #tpu.dot_dimension_numbers<[1], [0], [0], [1], [0, 0, 1, 1], [], []>} : vector<64x4xf32>, vector<4x8xf32>, vector<64x8xf32> -> vector<64x8xf32>
    %83 = arith.addf %77, %82 : vector<64x8xf32>
    %84 = vector.extract_strided_slice %71 {offsets = [2, 0, 0], sizes = [8, 8, 4], strides = [1, 1, 1]} : vector<10x8x4xf32> to vector<8x8x4xf32>
    %85 = vector.shape_cast %84 : vector<8x8x4xf32> to vector<64x4xf32>
    %c8 = arith.constant 8 : index
    %c0_88 = arith.constant 0 : index
    %c0_89 = arith.constant 0 : index
    %86 = vector.load %arg4[%c8, %c0_88, %c0_89] : memref<9x4x8xf32, #tpu.memory_space<vmem>>, vector<1x4x8xf32>
    %87 = vector.shape_cast %86 : vector<1x4x8xf32> to vector<4x8xf32>
    %cst_90 = arith.constant dense<0.000000e+00> : vector<64x8xf32>
    %88 = tpu.matmul %85, %87, %cst_90 {dimension_numbers = #tpu.dot_dimension_numbers<[1], [0], [0], [1], [0, 0, 1, 1], [], []>} : vector<64x4xf32>, vector<4x8xf32>, vector<64x8xf32> -> vector<64x8xf32>
    %89 = arith.addf %83, %88 : vector<64x8xf32>
    %c0_91 = arith.constant 0 : index
    %c0_92 = arith.constant 0 : index
    %90 = vector.load %arg5[%c0_91, %c0_92] : memref<1x8xf32, #tpu.memory_space<vmem>>, vector<1x8xf32>
    %91 = vector.broadcast %90 : vector<1x8xf32> to vector<64x8xf32>
    %92 = arith.addf %89, %91 : vector<64x8xf32>
    %cst_93 = arith.constant 0.000000e+00 : f32
    %93 = vector.broadcast %cst_93 : f32 to vector<64x8xf32>
    %94 = arith.maximumf %92, %93 : vector<64x8xf32>
    %95 = vector.shape_cast %94 : vector<64x8xf32> to vector<8x8x8xf32>
    %c1_94 = arith.constant 1 : index
    %c1_95 = arith.constant 1 : index
    %c0_96 = arith.constant 0 : index
    %96 = vector.load %arg17[%c1_94, %c1_95, %c0_96] : memref<10x10x8xf32, #tpu.memory_space<vmem>>, vector<8x8x8xf32>
    tpu.vector_store %arg17[%c1_94, %c1_95, %c0_96], %95 {strides = array<i32>} : memref<10x10x8xf32, #tpu.memory_space<vmem>>, vector<8x8x8xf32>,
    %c0_97 = arith.constant 0 : index
    %c0_98 = arith.constant 0 : index
    %c0_99 = arith.constant 0 : index
    %97 = vector.load %arg2[%c0_97, %c0_98, %c0_99] : memref<1x64x8xf32, #tpu.memory_space<vmem>>, vector<1x64x8xf32>
    %98 = vector.shape_cast %97 : vector<1x64x8xf32> to vector<64x8xf32>
    %99 = vector.shape_cast %98 : vector<64x8xf32> to vector<8x8x8xf32>
    %c1_100 = arith.constant 1 : index
    %c1_101 = arith.constant 1 : index
    %c0_102 = arith.constant 0 : index
    %100 = vector.load %arg18[%c1_100, %c1_101, %c0_102] : memref<10x10x8xf32, #tpu.memory_space<vmem>>, vector<8x8x8xf32>
    tpu.vector_store %arg18[%c1_100, %c1_101, %c0_102], %99 {strides = array<i32>} : memref<10x10x8xf32, #tpu.memory_space<vmem>>, vector<8x8x8xf32>,
    %cst_103 = arith.constant 0.000000e+00 : f32
    %101 = vector.broadcast %cst_103 : f32 to vector<64x32xf32>
    %c0_104 = arith.constant 0 : index
    %c0_105 = arith.constant 0 : index
    %c0_106 = arith.constant 0 : index
    %102 = vector.load %arg17[%c0_104, %c0_105, %c0_106] : memref<10x10x8xf32, #tpu.memory_space<vmem>>, vector<10x8x8xf32>
    %103 = vector.extract_strided_slice %102 {offsets = [0, 0, 0], sizes = [8, 8, 8], strides = [1, 1, 1]} : vector<10x8x8xf32> to vector<8x8x8xf32>
    %104 = vector.shape_cast %103 : vector<8x8x8xf32> to vector<64x8xf32>
    %c0_107 = arith.constant 0 : index
    %c0_108 = arith.constant 0 : index
    %c0_109 = arith.constant 0 : index
    %105 = vector.load %arg6[%c0_107, %c0_108, %c0_109] : memref<9x8x32xf32, #tpu.memory_space<vmem>>, vector<1x8x32xf32>
    %106 = vector.shape_cast %105 : vector<1x8x32xf32> to vector<8x32xf32>
    %cst_110 = arith.constant dense<0.000000e+00> : vector<64x32xf32>
    %107 = tpu.matmul %104, %106, %cst_110 {dimension_numbers = #tpu.dot_dimension_numbers<[1], [0], [0], [1], [0, 0, 1, 1], [], []>} : vector<64x8xf32>, vector<8x32xf32>, vector<64x32xf32> -> vector<64x32xf32>
    %108 = arith.addf %101, %107 : vector<64x32xf32>
    %109 = vector.extract_strided_slice %102 {offsets = [1, 0, 0], sizes = [8, 8, 8], strides = [1, 1, 1]} : vector<10x8x8xf32> to vector<8x8x8xf32>
    %110 = vector.shape_cast %109 : vector<8x8x8xf32> to vector<64x8xf32>
    %c3_111 = arith.constant 3 : index
    %c0_112 = arith.constant 0 : index
    %c0_113 = arith.constant 0 : index
    %111 = vector.load %arg6[%c3_111, %c0_112, %c0_113] : memref<9x8x32xf32, #tpu.memory_space<vmem>>, vector<1x8x32xf32>
    %112 = vector.shape_cast %111 : vector<1x8x32xf32> to vector<8x32xf32>
    %cst_114 = arith.constant dense<0.000000e+00> : vector<64x32xf32>
    %113 = tpu.matmul %110, %112, %cst_114 {dimension_numbers = #tpu.dot_dimension_numbers<[1], [0], [0], [1], [0, 0, 1, 1], [], []>} : vector<64x8xf32>, vector<8x32xf32>, vector<64x32xf32> -> vector<64x32xf32>
    %114 = arith.addf %108, %113 : vector<64x32xf32>
    %115 = vector.extract_strided_slice %102 {offsets = [2, 0, 0], sizes = [8, 8, 8], strides = [1, 1, 1]} : vector<10x8x8xf32> to vector<8x8x8xf32>
    %116 = vector.shape_cast %115 : vector<8x8x8xf32> to vector<64x8xf32>
    %c6_115 = arith.constant 6 : index
    %c0_116 = arith.constant 0 : index
    %c0_117 = arith.constant 0 : index
    %117 = vector.load %arg6[%c6_115, %c0_116, %c0_117] : memref<9x8x32xf32, #tpu.memory_space<vmem>>, vector<1x8x32xf32>
    %118 = vector.shape_cast %117 : vector<1x8x32xf32> to vector<8x32xf32>
    %cst_118 = arith.constant dense<0.000000e+00> : vector<64x32xf32>
    %119 = tpu.matmul %116, %118, %cst_118 {dimension_numbers = #tpu.dot_dimension_numbers<[1], [0], [0], [1], [0, 0, 1, 1], [], []>} : vector<64x8xf32>, vector<8x32xf32>, vector<64x32xf32> -> vector<64x32xf32>
    %120 = arith.addf %114, %119 : vector<64x32xf32>
    %c0_119 = arith.constant 0 : index
    %c1_120 = arith.constant 1 : index
    %c0_121 = arith.constant 0 : index
    %121 = vector.load %arg17[%c0_119, %c1_120, %c0_121] : memref<10x10x8xf32, #tpu.memory_space<vmem>>, vector<10x8x8xf32>
    %122 = vector.extract_strided_slice %121 {offsets = [0, 0, 0], sizes = [8, 8, 8], strides = [1, 1, 1]} : vector<10x8x8xf32> to vector<8x8x8xf32>
    %123 = vector.shape_cast %122 : vector<8x8x8xf32> to vector<64x8xf32>
    %c1_122 = arith.constant 1 : index
    %c0_123 = arith.constant 0 : index
    %c0_124 = arith.constant 0 : index
    %124 = vector.load %arg6[%c1_122, %c0_123, %c0_124] : memref<9x8x32xf32, #tpu.memory_space<vmem>>, vector<1x8x32xf32>
    %125 = vector.shape_cast %124 : vector<1x8x32xf32> to vector<8x32xf32>
    %cst_125 = arith.constant dense<0.000000e+00> : vector<64x32xf32>
    %126 = tpu.matmul %123, %125, %cst_125 {dimension_numbers = #tpu.dot_dimension_numbers<[1], [0], [0], [1], [0, 0, 1, 1], [], []>} : vector<64x8xf32>, vector<8x32xf32>, vector<64x32xf32> -> vector<64x32xf32>
    %127 = arith.addf %120, %126 : vector<64x32xf32>
    %128 = vector.extract_strided_slice %121 {offsets = [1, 0, 0], sizes = [8, 8, 8], strides = [1, 1, 1]} : vector<10x8x8xf32> to vector<8x8x8xf32>
    %129 = vector.shape_cast %128 : vector<8x8x8xf32> to vector<64x8xf32>
    %c4_126 = arith.constant 4 : index
    %c0_127 = arith.constant 0 : index
    %c0_128 = arith.constant 0 : index
    %130 = vector.load %arg6[%c4_126, %c0_127, %c0_128] : memref<9x8x32xf32, #tpu.memory_space<vmem>>, vector<1x8x32xf32>
    %131 = vector.shape_cast %130 : vector<1x8x32xf32> to vector<8x32xf32>
    %cst_129 = arith.constant dense<0.000000e+00> : vector<64x32xf32>
    %132 = tpu.matmul %129, %131, %cst_129 {dimension_numbers = #tpu.dot_dimension_numbers<[1], [0], [0], [1], [0, 0, 1, 1], [], []>} : vector<64x8xf32>, vector<8x32xf32>, vector<64x32xf32> -> vector<64x32xf32>
    %133 = arith.addf %127, %132 : vector<64x32xf32>
    %134 = vector.extract_strided_slice %121 {offsets = [2, 0, 0], sizes = [8, 8, 8], strides = [1, 1, 1]} : vector<10x8x8xf32> to vector<8x8x8xf32>
    %135 = vector.shape_cast %134 : vector<8x8x8xf32> to vector<64x8xf32>
    %c7_130 = arith.constant 7 : index
    %c0_131 = arith.constant 0 : index
    %c0_132 = arith.constant 0 : index
    %136 = vector.load %arg6[%c7_130, %c0_131, %c0_132] : memref<9x8x32xf32, #tpu.memory_space<vmem>>, vector<1x8x32xf32>
    %137 = vector.shape_cast %136 : vector<1x8x32xf32> to vector<8x32xf32>
    %cst_133 = arith.constant dense<0.000000e+00> : vector<64x32xf32>
    %138 = tpu.matmul %135, %137, %cst_133 {dimension_numbers = #tpu.dot_dimension_numbers<[1], [0], [0], [1], [0, 0, 1, 1], [], []>} : vector<64x8xf32>, vector<8x32xf32>, vector<64x32xf32> -> vector<64x32xf32>
    %139 = arith.addf %133, %138 : vector<64x32xf32>
    %c0_134 = arith.constant 0 : index
    %c2_135 = arith.constant 2 : index
    %c0_136 = arith.constant 0 : index
    %140 = vector.load %arg17[%c0_134, %c2_135, %c0_136] : memref<10x10x8xf32, #tpu.memory_space<vmem>>, vector<10x8x8xf32>
    %141 = vector.extract_strided_slice %140 {offsets = [0, 0, 0], sizes = [8, 8, 8], strides = [1, 1, 1]} : vector<10x8x8xf32> to vector<8x8x8xf32>
    %142 = vector.shape_cast %141 : vector<8x8x8xf32> to vector<64x8xf32>
    %c2_137 = arith.constant 2 : index
    %c0_138 = arith.constant 0 : index
    %c0_139 = arith.constant 0 : index
    %143 = vector.load %arg6[%c2_137, %c0_138, %c0_139] : memref<9x8x32xf32, #tpu.memory_space<vmem>>, vector<1x8x32xf32>
    %144 = vector.shape_cast %143 : vector<1x8x32xf32> to vector<8x32xf32>
    %cst_140 = arith.constant dense<0.000000e+00> : vector<64x32xf32>
    %145 = tpu.matmul %142, %144, %cst_140 {dimension_numbers = #tpu.dot_dimension_numbers<[1], [0], [0], [1], [0, 0, 1, 1], [], []>} : vector<64x8xf32>, vector<8x32xf32>, vector<64x32xf32> -> vector<64x32xf32>
    %146 = arith.addf %139, %145 : vector<64x32xf32>
    %147 = vector.extract_strided_slice %140 {offsets = [1, 0, 0], sizes = [8, 8, 8], strides = [1, 1, 1]} : vector<10x8x8xf32> to vector<8x8x8xf32>
    %148 = vector.shape_cast %147 : vector<8x8x8xf32> to vector<64x8xf32>
    %c5_141 = arith.constant 5 : index
    %c0_142 = arith.constant 0 : index
    %c0_143 = arith.constant 0 : index
    %149 = vector.load %arg6[%c5_141, %c0_142, %c0_143] : memref<9x8x32xf32, #tpu.memory_space<vmem>>, vector<1x8x32xf32>
    %150 = vector.shape_cast %149 : vector<1x8x32xf32> to vector<8x32xf32>
    %cst_144 = arith.constant dense<0.000000e+00> : vector<64x32xf32>
    %151 = tpu.matmul %148, %150, %cst_144 {dimension_numbers = #tpu.dot_dimension_numbers<[1], [0], [0], [1], [0, 0, 1, 1], [], []>} : vector<64x8xf32>, vector<8x32xf32>, vector<64x32xf32> -> vector<64x32xf32>
    %152 = arith.addf %146, %151 : vector<64x32xf32>
    %153 = vector.extract_strided_slice %140 {offsets = [2, 0, 0], sizes = [8, 8, 8], strides = [1, 1, 1]} : vector<10x8x8xf32> to vector<8x8x8xf32>
    %154 = vector.shape_cast %153 : vector<8x8x8xf32> to vector<64x8xf32>
    %c8_145 = arith.constant 8 : index
    %c0_146 = arith.constant 0 : index
    %c0_147 = arith.constant 0 : index
    %155 = vector.load %arg6[%c8_145, %c0_146, %c0_147] : memref<9x8x32xf32, #tpu.memory_space<vmem>>, vector<1x8x32xf32>
    %156 = vector.shape_cast %155 : vector<1x8x32xf32> to vector<8x32xf32>
    %cst_148 = arith.constant dense<0.000000e+00> : vector<64x32xf32>
    %157 = tpu.matmul %154, %156, %cst_148 {dimension_numbers = #tpu.dot_dimension_numbers<[1], [0], [0], [1], [0, 0, 1, 1], [], []>} : vector<64x8xf32>, vector<8x32xf32>, vector<64x32xf32> -> vector<64x32xf32>
    %158 = arith.addf %152, %157 : vector<64x32xf32>
    %c0_149 = arith.constant 0 : index
    %c0_150 = arith.constant 0 : index
    %c0_151 = arith.constant 0 : index
    %159 = vector.load %arg18[%c0_149, %c0_150, %c0_151] : memref<10x10x8xf32, #tpu.memory_space<vmem>>, vector<10x8x8xf32>
    %160 = vector.extract_strided_slice %159 {offsets = [0, 0, 0], sizes = [8, 8, 8], strides = [1, 1, 1]} : vector<10x8x8xf32> to vector<8x8x8xf32>
    %161 = vector.shape_cast %160 : vector<8x8x8xf32> to vector<64x8xf32>
    %c0_152 = arith.constant 0 : index
    %c0_153 = arith.constant 0 : index
    %c0_154 = arith.constant 0 : index
    %162 = vector.load %arg7[%c0_152, %c0_153, %c0_154] : memref<9x8x32xf32, #tpu.memory_space<vmem>>, vector<1x8x32xf32>
    %163 = vector.shape_cast %162 : vector<1x8x32xf32> to vector<8x32xf32>
    %cst_155 = arith.constant dense<0.000000e+00> : vector<64x32xf32>
    %164 = tpu.matmul %161, %163, %cst_155 {dimension_numbers = #tpu.dot_dimension_numbers<[1], [0], [0], [1], [0, 0, 1, 1], [], []>} : vector<64x8xf32>, vector<8x32xf32>, vector<64x32xf32> -> vector<64x32xf32>
    %165 = arith.addf %158, %164 : vector<64x32xf32>
    %166 = vector.extract_strided_slice %159 {offsets = [1, 0, 0], sizes = [8, 8, 8], strides = [1, 1, 1]} : vector<10x8x8xf32> to vector<8x8x8xf32>
    %167 = vector.shape_cast %166 : vector<8x8x8xf32> to vector<64x8xf32>
    %c3_156 = arith.constant 3 : index
    %c0_157 = arith.constant 0 : index
    %c0_158 = arith.constant 0 : index
    %168 = vector.load %arg7[%c3_156, %c0_157, %c0_158] : memref<9x8x32xf32, #tpu.memory_space<vmem>>, vector<1x8x32xf32>
    %169 = vector.shape_cast %168 : vector<1x8x32xf32> to vector<8x32xf32>
    %cst_159 = arith.constant dense<0.000000e+00> : vector<64x32xf32>
    %170 = tpu.matmul %167, %169, %cst_159 {dimension_numbers = #tpu.dot_dimension_numbers<[1], [0], [0], [1], [0, 0, 1, 1], [], []>} : vector<64x8xf32>, vector<8x32xf32>, vector<64x32xf32> -> vector<64x32xf32>
    %171 = arith.addf %165, %170 : vector<64x32xf32>
    %172 = vector.extract_strided_slice %159 {offsets = [2, 0, 0], sizes = [8, 8, 8], strides = [1, 1, 1]} : vector<10x8x8xf32> to vector<8x8x8xf32>
    %173 = vector.shape_cast %172 : vector<8x8x8xf32> to vector<64x8xf32>
    %c6_160 = arith.constant 6 : index
    %c0_161 = arith.constant 0 : index
    %c0_162 = arith.constant 0 : index
    %174 = vector.load %arg7[%c6_160, %c0_161, %c0_162] : memref<9x8x32xf32, #tpu.memory_space<vmem>>, vector<1x8x32xf32>
    %175 = vector.shape_cast %174 : vector<1x8x32xf32> to vector<8x32xf32>
    %cst_163 = arith.constant dense<0.000000e+00> : vector<64x32xf32>
    %176 = tpu.matmul %173, %175, %cst_163 {dimension_numbers = #tpu.dot_dimension_numbers<[1], [0], [0], [1], [0, 0, 1, 1], [], []>} : vector<64x8xf32>, vector<8x32xf32>, vector<64x32xf32> -> vector<64x32xf32>
    %177 = arith.addf %171, %176 : vector<64x32xf32>
    %c0_164 = arith.constant 0 : index
    %c1_165 = arith.constant 1 : index
    %c0_166 = arith.constant 0 : index
    %178 = vector.load %arg18[%c0_164, %c1_165, %c0_166] : memref<10x10x8xf32, #tpu.memory_space<vmem>>, vector<10x8x8xf32>
    %179 = vector.extract_strided_slice %178 {offsets = [0, 0, 0], sizes = [8, 8, 8], strides = [1, 1, 1]} : vector<10x8x8xf32> to vector<8x8x8xf32>
    %180 = vector.shape_cast %179 : vector<8x8x8xf32> to vector<64x8xf32>
    %c1_167 = arith.constant 1 : index
    %c0_168 = arith.constant 0 : index
    %c0_169 = arith.constant 0 : index
    %181 = vector.load %arg7[%c1_167, %c0_168, %c0_169] : memref<9x8x32xf32, #tpu.memory_space<vmem>>, vector<1x8x32xf32>
    %182 = vector.shape_cast %181 : vector<1x8x32xf32> to vector<8x32xf32>
    %cst_170 = arith.constant dense<0.000000e+00> : vector<64x32xf32>
    %183 = tpu.matmul %180, %182, %cst_170 {dimension_numbers = #tpu.dot_dimension_numbers<[1], [0], [0], [1], [0, 0, 1, 1], [], []>} : vector<64x8xf32>, vector<8x32xf32>, vector<64x32xf32> -> vector<64x32xf32>
    %184 = arith.addf %177, %183 : vector<64x32xf32>
    %185 = vector.extract_strided_slice %178 {offsets = [1, 0, 0], sizes = [8, 8, 8], strides = [1, 1, 1]} : vector<10x8x8xf32> to vector<8x8x8xf32>
    %186 = vector.shape_cast %185 : vector<8x8x8xf32> to vector<64x8xf32>
    %c4_171 = arith.constant 4 : index
    %c0_172 = arith.constant 0 : index
    %c0_173 = arith.constant 0 : index
    %187 = vector.load %arg7[%c4_171, %c0_172, %c0_173] : memref<9x8x32xf32, #tpu.memory_space<vmem>>, vector<1x8x32xf32>
    %188 = vector.shape_cast %187 : vector<1x8x32xf32> to vector<8x32xf32>
    %cst_174 = arith.constant dense<0.000000e+00> : vector<64x32xf32>
    %189 = tpu.matmul %186, %188, %cst_174 {dimension_numbers = #tpu.dot_dimension_numbers<[1], [0], [0], [1], [0, 0, 1, 1], [], []>} : vector<64x8xf32>, vector<8x32xf32>, vector<64x32xf32> -> vector<64x32xf32>
    %190 = arith.addf %184, %189 : vector<64x32xf32>
    %191 = vector.extract_strided_slice %178 {offsets = [2, 0, 0], sizes = [8, 8, 8], strides = [1, 1, 1]} : vector<10x8x8xf32> to vector<8x8x8xf32>
    %192 = vector.shape_cast %191 : vector<8x8x8xf32> to vector<64x8xf32>
    %c7_175 = arith.constant 7 : index
    %c0_176 = arith.constant 0 : index
    %c0_177 = arith.constant 0 : index
    %193 = vector.load %arg7[%c7_175, %c0_176, %c0_177] : memref<9x8x32xf32, #tpu.memory_space<vmem>>, vector<1x8x32xf32>
    %194 = vector.shape_cast %193 : vector<1x8x32xf32> to vector<8x32xf32>
    %cst_178 = arith.constant dense<0.000000e+00> : vector<64x32xf32>
    %195 = tpu.matmul %192, %194, %cst_178 {dimension_numbers = #tpu.dot_dimension_numbers<[1], [0], [0], [1], [0, 0, 1, 1], [], []>} : vector<64x8xf32>, vector<8x32xf32>, vector<64x32xf32> -> vector<64x32xf32>
    %196 = arith.addf %190, %195 : vector<64x32xf32>
    %c0_179 = arith.constant 0 : index
    %c2_180 = arith.constant 2 : index
    %c0_181 = arith.constant 0 : index
    %197 = vector.load %arg18[%c0_179, %c2_180, %c0_181] : memref<10x10x8xf32, #tpu.memory_space<vmem>>, vector<10x8x8xf32>
    %198 = vector.extract_strided_slice %197 {offsets = [0, 0, 0], sizes = [8, 8, 8], strides = [1, 1, 1]} : vector<10x8x8xf32> to vector<8x8x8xf32>
    %199 = vector.shape_cast %198 : vector<8x8x8xf32> to vector<64x8xf32>
    %c2_182 = arith.constant 2 : index
    %c0_183 = arith.constant 0 : index
    %c0_184 = arith.constant 0 : index
    %200 = vector.load %arg7[%c2_182, %c0_183, %c0_184] : memref<9x8x32xf32, #tpu.memory_space<vmem>>, vector<1x8x32xf32>
    %201 = vector.shape_cast %200 : vector<1x8x32xf32> to vector<8x32xf32>
    %cst_185 = arith.constant dense<0.000000e+00> : vector<64x32xf32>
    %202 = tpu.matmul %199, %201, %cst_185 {dimension_numbers = #tpu.dot_dimension_numbers<[1], [0], [0], [1], [0, 0, 1, 1], [], []>} : vector<64x8xf32>, vector<8x32xf32>, vector<64x32xf32> -> vector<64x32xf32>
    %203 = arith.addf %196, %202 : vector<64x32xf32>
    %204 = vector.extract_strided_slice %197 {offsets = [1, 0, 0], sizes = [8, 8, 8], strides = [1, 1, 1]} : vector<10x8x8xf32> to vector<8x8x8xf32>
    %205 = vector.shape_cast %204 : vector<8x8x8xf32> to vector<64x8xf32>
    %c5_186 = arith.constant 5 : index
    %c0_187 = arith.constant 0 : index
    %c0_188 = arith.constant 0 : index
    %206 = vector.load %arg7[%c5_186, %c0_187, %c0_188] : memref<9x8x32xf32, #tpu.memory_space<vmem>>, vector<1x8x32xf32>
    %207 = vector.shape_cast %206 : vector<1x8x32xf32> to vector<8x32xf32>
    %cst_189 = arith.constant dense<0.000000e+00> : vector<64x32xf32>
    %208 = tpu.matmul %205, %207, %cst_189 {dimension_numbers = #tpu.dot_dimension_numbers<[1], [0], [0], [1], [0, 0, 1, 1], [], []>} : vector<64x8xf32>, vector<8x32xf32>, vector<64x32xf32> -> vector<64x32xf32>
    %209 = arith.addf %203, %208 : vector<64x32xf32>
    %210 = vector.extract_strided_slice %197 {offsets = [2, 0, 0], sizes = [8, 8, 8], strides = [1, 1, 1]} : vector<10x8x8xf32> to vector<8x8x8xf32>
    %211 = vector.shape_cast %210 : vector<8x8x8xf32> to vector<64x8xf32>
    %c8_190 = arith.constant 8 : index
    %c0_191 = arith.constant 0 : index
    %c0_192 = arith.constant 0 : index
    %212 = vector.load %arg7[%c8_190, %c0_191, %c0_192] : memref<9x8x32xf32, #tpu.memory_space<vmem>>, vector<1x8x32xf32>
    %213 = vector.shape_cast %212 : vector<1x8x32xf32> to vector<8x32xf32>
    %cst_193 = arith.constant dense<0.000000e+00> : vector<64x32xf32>
    %214 = tpu.matmul %211, %213, %cst_193 {dimension_numbers = #tpu.dot_dimension_numbers<[1], [0], [0], [1], [0, 0, 1, 1], [], []>} : vector<64x8xf32>, vector<8x32xf32>, vector<64x32xf32> -> vector<64x32xf32>
    %215 = arith.addf %209, %214 : vector<64x32xf32>
    %c0_194 = arith.constant 0 : index
    %c0_195 = arith.constant 0 : index
    %216 = vector.load %arg8[%c0_194, %c0_195] : memref<1x32xf32, #tpu.memory_space<vmem>>, vector<1x32xf32>
    %217 = vector.broadcast %216 : vector<1x32xf32> to vector<64x32xf32>
    %218 = arith.addf %215, %217 : vector<64x32xf32>
    %219 = vector.extract_strided_slice %218 {offsets = [0, 0], sizes = [64, 8], strides = [1, 1]} : vector<64x32xf32> to vector<64x8xf32>
    %cst_196 = arith.constant 5.000000e-01 : f32
    %220 = vector.broadcast %cst_196 : f32 to vector<64x8xf32>
    %221 = arith.mulf %220, %219 : vector<64x8xf32>
    %222 = math.tanh %221 : vector<64x8xf32>
    %cst_197 = arith.constant 1.000000e+00 : f32
    %223 = vector.broadcast %cst_197 : f32 to vector<64x8xf32>
    %224 = arith.addf %222, %223 : vector<64x8xf32>
    %cst_198 = arith.constant 5.000000e-01 : f32
    %225 = vector.broadcast %cst_198 : f32 to vector<64x8xf32>
    %226 = arith.mulf %225, %224 : vector<64x8xf32>
    %227 = vector.extract_strided_slice %218 {offsets = [0, 8], sizes = [64, 8], strides = [1, 1]} : vector<64x32xf32> to vector<64x8xf32>
    %cst_199 = arith.constant 5.000000e-01 : f32
    %228 = vector.broadcast %cst_199 : f32 to vector<64x8xf32>
    %229 = arith.mulf %228, %227 : vector<64x8xf32>
    %230 = math.tanh %229 : vector<64x8xf32>
    %cst_200 = arith.constant 1.000000e+00 : f32
    %231 = vector.broadcast %cst_200 : f32 to vector<64x8xf32>
    %232 = arith.addf %230, %231 : vector<64x8xf32>
    %cst_201 = arith.constant 5.000000e-01 : f32
    %233 = vector.broadcast %cst_201 : f32 to vector<64x8xf32>
    %234 = arith.mulf %233, %232 : vector<64x8xf32>
    %235 = vector.extract_strided_slice %218 {offsets = [0, 16], sizes = [64, 8], strides = [1, 1]} : vector<64x32xf32> to vector<64x8xf32>
    %cst_202 = arith.constant 5.000000e-01 : f32
    %236 = vector.broadcast %cst_202 : f32 to vector<64x8xf32>
    %237 = arith.mulf %236, %235 : vector<64x8xf32>
    %238 = math.tanh %237 : vector<64x8xf32>
    %cst_203 = arith.constant 1.000000e+00 : f32
    %239 = vector.broadcast %cst_203 : f32 to vector<64x8xf32>
    %240 = arith.addf %238, %239 : vector<64x8xf32>
    %cst_204 = arith.constant 5.000000e-01 : f32
    %241 = vector.broadcast %cst_204 : f32 to vector<64x8xf32>
    %242 = arith.mulf %241, %240 : vector<64x8xf32>
    %243 = vector.extract_strided_slice %218 {offsets = [0, 24], sizes = [64, 8], strides = [1, 1]} : vector<64x32xf32> to vector<64x8xf32>
    %244 = math.tanh %243 : vector<64x8xf32>
    %c0_205 = arith.constant 0 : index
    %c0_206 = arith.constant 0 : index
    %c0_207 = arith.constant 0 : index
    %245 = vector.load %arg3[%c0_205, %c0_206, %c0_207] : memref<1x64x8xf32, #tpu.memory_space<vmem>>, vector<1x64x8xf32>
    %246 = vector.shape_cast %245 : vector<1x64x8xf32> to vector<64x8xf32>
    %247 = arith.mulf %234, %246 : vector<64x8xf32>
    %248 = arith.mulf %226, %244 : vector<64x8xf32>
    %249 = arith.addf %247, %248 : vector<64x8xf32>
    %250 = math.tanh %249 : vector<64x8xf32>
    %251 = arith.mulf %242, %250 : vector<64x8xf32>
    %252 = vector.shape_cast %251 : vector<64x8xf32> to vector<8x8x8xf32>
    %c1_208 = arith.constant 1 : index
    %c1_209 = arith.constant 1 : index
    %c0_210 = arith.constant 0 : index
    %253 = vector.load %arg17[%c1_208, %c1_209, %c0_210] : memref<10x10x8xf32, #tpu.memory_space<vmem>>, vector<8x8x8xf32>
    tpu.vector_store %arg17[%c1_208, %c1_209, %c0_210], %252 {strides = array<i32>} : memref<10x10x8xf32, #tpu.memory_space<vmem>>, vector<8x8x8xf32>,
    %cst_211 = arith.constant 0.000000e+00 : f32
    %254 = vector.broadcast %cst_211 : f32 to vector<64x8xf32>
    %c0_212 = arith.constant 0 : index
    %c0_213 = arith.constant 0 : index
    %c0_214 = arith.constant 0 : index
    %255 = vector.load %arg17[%c0_212, %c0_213, %c0_214] : memref<10x10x8xf32, #tpu.memory_space<vmem>>, vector<10x8x8xf32>
    %256 = vector.extract_strided_slice %255 {offsets = [0, 0, 0], sizes = [8, 8, 8], strides = [1, 1, 1]} : vector<10x8x8xf32> to vector<8x8x8xf32>
    %257 = vector.shape_cast %256 : vector<8x8x8xf32> to vector<64x8xf32>
    %c0_215 = arith.constant 0 : index
    %c0_216 = arith.constant 0 : index
    %c0_217 = arith.constant 0 : index
    %258 = vector.load %arg9[%c0_215, %c0_216, %c0_217] : memref<9x8x8xf32, #tpu.memory_space<vmem>>, vector<1x8x8xf32>
    %259 = vector.shape_cast %258 : vector<1x8x8xf32> to vector<8x8xf32>
    %cst_218 = arith.constant dense<0.000000e+00> : vector<64x8xf32>
    %260 = tpu.matmul %257, %259, %cst_218 {dimension_numbers = #tpu.dot_dimension_numbers<[1], [0], [0], [1], [0, 0, 1, 1], [], []>} : vector<64x8xf32>, vector<8x8xf32>, vector<64x8xf32> -> vector<64x8xf32>
    %261 = arith.addf %254, %260 : vector<64x8xf32>
    %262 = vector.extract_strided_slice %255 {offsets = [1, 0, 0], sizes = [8, 8, 8], strides = [1, 1, 1]} : vector<10x8x8xf32> to vector<8x8x8xf32>
    %263 = vector.shape_cast %262 : vector<8x8x8xf32> to vector<64x8xf32>
    %c3_219 = arith.constant 3 : index
    %c0_220 = arith.constant 0 : index
    %c0_221 = arith.constant 0 : index
    %264 = vector.load %arg9[%c3_219, %c0_220, %c0_221] : memref<9x8x8xf32, #tpu.memory_space<vmem>>, vector<1x8x8xf32>
    %265 = vector.shape_cast %264 : vector<1x8x8xf32> to vector<8x8xf32>
    %cst_222 = arith.constant dense<0.000000e+00> : vector<64x8xf32>
    %266 = tpu.matmul %263, %265, %cst_222 {dimension_numbers = #tpu.dot_dimension_numbers<[1], [0], [0], [1], [0, 0, 1, 1], [], []>} : vector<64x8xf32>, vector<8x8xf32>, vector<64x8xf32> -> vector<64x8xf32>
    %267 = arith.addf %261, %266 : vector<64x8xf32>
    %268 = vector.extract_strided_slice %255 {offsets = [2, 0, 0], sizes = [8, 8, 8], strides = [1, 1, 1]} : vector<10x8x8xf32> to vector<8x8x8xf32>
    %269 = vector.shape_cast %268 : vector<8x8x8xf32> to vector<64x8xf32>
    %c6_223 = arith.constant 6 : index
    %c0_224 = arith.constant 0 : index
    %c0_225 = arith.constant 0 : index
    %270 = vector.load %arg9[%c6_223, %c0_224, %c0_225] : memref<9x8x8xf32, #tpu.memory_space<vmem>>, vector<1x8x8xf32>
    %271 = vector.shape_cast %270 : vector<1x8x8xf32> to vector<8x8xf32>
    %cst_226 = arith.constant dense<0.000000e+00> : vector<64x8xf32>
    %272 = tpu.matmul %269, %271, %cst_226 {dimension_numbers = #tpu.dot_dimension_numbers<[1], [0], [0], [1], [0, 0, 1, 1], [], []>} : vector<64x8xf32>, vector<8x8xf32>, vector<64x8xf32> -> vector<64x8xf32>
    %273 = arith.addf %267, %272 : vector<64x8xf32>
    %c0_227 = arith.constant 0 : index
    %c1_228 = arith.constant 1 : index
    %c0_229 = arith.constant 0 : index
    %274 = vector.load %arg17[%c0_227, %c1_228, %c0_229] : memref<10x10x8xf32, #tpu.memory_space<vmem>>, vector<10x8x8xf32>
    %275 = vector.extract_strided_slice %274 {offsets = [0, 0, 0], sizes = [8, 8, 8], strides = [1, 1, 1]} : vector<10x8x8xf32> to vector<8x8x8xf32>
    %276 = vector.shape_cast %275 : vector<8x8x8xf32> to vector<64x8xf32>
    %c1_230 = arith.constant 1 : index
    %c0_231 = arith.constant 0 : index
    %c0_232 = arith.constant 0 : index
    %277 = vector.load %arg9[%c1_230, %c0_231, %c0_232] : memref<9x8x8xf32, #tpu.memory_space<vmem>>, vector<1x8x8xf32>
    %278 = vector.shape_cast %277 : vector<1x8x8xf32> to vector<8x8xf32>
    %cst_233 = arith.constant dense<0.000000e+00> : vector<64x8xf32>
    %279 = tpu.matmul %276, %278, %cst_233 {dimension_numbers = #tpu.dot_dimension_numbers<[1], [0], [0], [1], [0, 0, 1, 1], [], []>} : vector<64x8xf32>, vector<8x8xf32>, vector<64x8xf32> -> vector<64x8xf32>
    %280 = arith.addf %273, %279 : vector<64x8xf32>
    %281 = vector.extract_strided_slice %274 {offsets = [1, 0, 0], sizes = [8, 8, 8], strides = [1, 1, 1]} : vector<10x8x8xf32> to vector<8x8x8xf32>
    %282 = vector.shape_cast %281 : vector<8x8x8xf32> to vector<64x8xf32>
    %c4_234 = arith.constant 4 : index
    %c0_235 = arith.constant 0 : index
    %c0_236 = arith.constant 0 : index
    %283 = vector.load %arg9[%c4_234, %c0_235, %c0_236] : memref<9x8x8xf32, #tpu.memory_space<vmem>>, vector<1x8x8xf32>
    %284 = vector.shape_cast %283 : vector<1x8x8xf32> to vector<8x8xf32>
    %cst_237 = arith.constant dense<0.000000e+00> : vector<64x8xf32>
    %285 = tpu.matmul %282, %284, %cst_237 {dimension_numbers = #tpu.dot_dimension_numbers<[1], [0], [0], [1], [0, 0, 1, 1], [], []>} : vector<64x8xf32>, vector<8x8xf32>, vector<64x8xf32> -> vector<64x8xf32>
    %286 = arith.addf %280, %285 : vector<64x8xf32>
    %287 = vector.extract_strided_slice %274 {offsets = [2, 0, 0], sizes = [8, 8, 8], strides = [1, 1, 1]} : vector<10x8x8xf32> to vector<8x8x8xf32>
    %288 = vector.shape_cast %287 : vector<8x8x8xf32> to vector<64x8xf32>
    %c7_238 = arith.constant 7 : index
    %c0_239 = arith.constant 0 : index
    %c0_240 = arith.constant 0 : index
    %289 = vector.load %arg9[%c7_238, %c0_239, %c0_240] : memref<9x8x8xf32, #tpu.memory_space<vmem>>, vector<1x8x8xf32>
    %290 = vector.shape_cast %289 : vector<1x8x8xf32> to vector<8x8xf32>
    %cst_241 = arith.constant dense<0.000000e+00> : vector<64x8xf32>
    %291 = tpu.matmul %288, %290, %cst_241 {dimension_numbers = #tpu.dot_dimension_numbers<[1], [0], [0], [1], [0, 0, 1, 1], [], []>} : vector<64x8xf32>, vector<8x8xf32>, vector<64x8xf32> -> vector<64x8xf32>
    %292 = arith.addf %286, %291 : vector<64x8xf32>
    %c0_242 = arith.constant 0 : index
    %c2_243 = arith.constant 2 : index
    %c0_244 = arith.constant 0 : index
    %293 = vector.load %arg17[%c0_242, %c2_243, %c0_244] : memref<10x10x8xf32, #tpu.memory_space<vmem>>, vector<10x8x8xf32>
    %294 = vector.extract_strided_slice %293 {offsets = [0, 0, 0], sizes = [8, 8, 8], strides = [1, 1, 1]} : vector<10x8x8xf32> to vector<8x8x8xf32>
    %295 = vector.shape_cast %294 : vector<8x8x8xf32> to vector<64x8xf32>
    %c2_245 = arith.constant 2 : index
    %c0_246 = arith.constant 0 : index
    %c0_247 = arith.constant 0 : index
    %296 = vector.load %arg9[%c2_245, %c0_246, %c0_247] : memref<9x8x8xf32, #tpu.memory_space<vmem>>, vector<1x8x8xf32>
    %297 = vector.shape_cast %296 : vector<1x8x8xf32> to vector<8x8xf32>
    %cst_248 = arith.constant dense<0.000000e+00> : vector<64x8xf32>
    %298 = tpu.matmul %295, %297, %cst_248 {dimension_numbers = #tpu.dot_dimension_numbers<[1], [0], [0], [1], [0, 0, 1, 1], [], []>} : vector<64x8xf32>, vector<8x8xf32>, vector<64x8xf32> -> vector<64x8xf32>
    %299 = arith.addf %292, %298 : vector<64x8xf32>
    %300 = vector.extract_strided_slice %293 {offsets = [1, 0, 0], sizes = [8, 8, 8], strides = [1, 1, 1]} : vector<10x8x8xf32> to vector<8x8x8xf32>
    %301 = vector.shape_cast %300 : vector<8x8x8xf32> to vector<64x8xf32>
    %c5_249 = arith.constant 5 : index
    %c0_250 = arith.constant 0 : index
    %c0_251 = arith.constant 0 : index
    %302 = vector.load %arg9[%c5_249, %c0_250, %c0_251] : memref<9x8x8xf32, #tpu.memory_space<vmem>>, vector<1x8x8xf32>
    %303 = vector.shape_cast %302 : vector<1x8x8xf32> to vector<8x8xf32>
    %cst_252 = arith.constant dense<0.000000e+00> : vector<64x8xf32>
    %304 = tpu.matmul %301, %303, %cst_252 {dimension_numbers = #tpu.dot_dimension_numbers<[1], [0], [0], [1], [0, 0, 1, 1], [], []>} : vector<64x8xf32>, vector<8x8xf32>, vector<64x8xf32> -> vector<64x8xf32>
    %305 = arith.addf %299, %304 : vector<64x8xf32>
    %306 = vector.extract_strided_slice %293 {offsets = [2, 0, 0], sizes = [8, 8, 8], strides = [1, 1, 1]} : vector<10x8x8xf32> to vector<8x8x8xf32>
    %307 = vector.shape_cast %306 : vector<8x8x8xf32> to vector<64x8xf32>
    %c8_253 = arith.constant 8 : index
    %c0_254 = arith.constant 0 : index
    %c0_255 = arith.constant 0 : index
    %308 = vector.load %arg9[%c8_253, %c0_254, %c0_255] : memref<9x8x8xf32, #tpu.memory_space<vmem>>, vector<1x8x8xf32>
    %309 = vector.shape_cast %308 : vector<1x8x8xf32> to vector<8x8xf32>
    %cst_256 = arith.constant dense<0.000000e+00> : vector<64x8xf32>
    %310 = tpu.matmul %307, %309, %cst_256 {dimension_numbers = #tpu.dot_dimension_numbers<[1], [0], [0], [1], [0, 0, 1, 1], [], []>} : vector<64x8xf32>, vector<8x8xf32>, vector<64x8xf32> -> vector<64x8xf32>
    %311 = arith.addf %305, %310 : vector<64x8xf32>
    %c0_257 = arith.constant 0 : index
    %c0_258 = arith.constant 0 : index
    %312 = vector.load %arg10[%c0_257, %c0_258] : memref<1x8xf32, #tpu.memory_space<vmem>>, vector<1x8xf32>
    %313 = vector.broadcast %312 : vector<1x8xf32> to vector<64x8xf32>
    %314 = arith.addf %311, %313 : vector<64x8xf32>
    %315 = vector.shape_cast %6 : vector<8x8x4xf32> to vector<64x4xf32>
    %c0_259 = arith.constant 0 : index
    %c0_260 = arith.constant 0 : index
    %316 = vector.load %arg11[%c0_259, %c0_260] : memref<4x8xf32, #tpu.memory_space<vmem>>, vector<4x8xf32>
    %cst_261 = arith.constant dense<0.000000e+00> : vector<64x8xf32>
    %317 = tpu.matmul %315, %316, %cst_261 {dimension_numbers = #tpu.dot_dimension_numbers<[1], [0], [0], [1], [0, 0, 1, 1], [], []>} : vector<64x4xf32>, vector<4x8xf32>, vector<64x8xf32> -> vector<64x8xf32>
    %c0_262 = arith.constant 0 : index
    %c0_263 = arith.constant 0 : index
    %318 = vector.load %arg12[%c0_262, %c0_263] : memref<1x8xf32, #tpu.memory_space<vmem>>, vector<1x8xf32>
    %319 = vector.broadcast %318 : vector<1x8xf32> to vector<64x8xf32>
    %320 = arith.addf %317, %319 : vector<64x8xf32>
    %321 = arith.addf %314, %320 : vector<64x8xf32>
    %cst_264 = arith.constant 0.000000e+00 : f32
    %322 = vector.broadcast %cst_264 : f32 to vector<64x8xf32>
    %323 = arith.maximumf %321, %322 : vector<64x8xf32>
    %c0_265 = arith.constant 0 : index
    %c0_266 = arith.constant 0 : index
    %c0_267 = arith.constant 0 : index
    %324 = vector.load %arg13[%c0_265, %c0_266, %c0_267] : memref<1x64x8xf32, #tpu.memory_space<vmem>>, vector<1x64x8xf32>
    %325 = vector.shape_cast %324 : vector<1x64x8xf32> to vector<64x8xf32>
    %326 = vector.shape_cast %323 : vector<64x8xf32> to vector<1x64x8xf32>
    tpu.vector_store %arg13[%c0_265, %c0_266, %c0_267], %326 {strides = array<i32>} : memref<1x64x8xf32, #tpu.memory_space<vmem>>, vector<1x64x8xf32>,
    %c0_268 = arith.constant 0 : index
    %c0_269 = arith.constant 0 : index
    %c0_270 = arith.constant 0 : index
    %327 = vector.load %arg14[%c0_268, %c0_269, %c0_270] : memref<1x64x8xf32, #tpu.memory_space<vmem>>, vector<1x64x8xf32>
    %328 = vector.shape_cast %327 : vector<1x64x8xf32> to vector<64x8xf32>
    %329 = vector.shape_cast %251 : vector<64x8xf32> to vector<1x64x8xf32>
    tpu.vector_store %arg14[%c0_268, %c0_269, %c0_270], %329 {strides = array<i32>} : memref<1x64x8xf32, #tpu.memory_space<vmem>>, vector<1x64x8xf32>,
    %c0_271 = arith.constant 0 : index
    %c0_272 = arith.constant 0 : index
    %c0_273 = arith.constant 0 : index
    %330 = vector.load %arg15[%c0_271, %c0_272, %c0_273] : memref<1x64x8xf32, #tpu.memory_space<vmem>>, vector<1x64x8xf32>
    %331 = vector.shape_cast %330 : vector<1x64x8xf32> to vector<64x8xf32>
    %332 = vector.shape_cast %249 : vector<64x8xf32> to vector<1x64x8xf32>
    tpu.vector_store %arg15[%c0_271, %c0_272, %c0_273], %332 {strides = array<i32>} : memref<1x64x8xf32, #tpu.memory_space<vmem>>, vector<1x64x8xf32>,
    return
  }
  func.func @transform_0(%arg0: i32) -> (i32, i32, i32, i32) {
    %c0_i32 = arith.constant 0 : i32
    %c0_i32_0 = arith.constant 0 : i32
    %c0_i32_1 = arith.constant 0 : i32
    %c0_i32_2 = arith.constant 0 : i32
    return %arg0, %c0_i32, %c0_i32_0, %c0_i32_1 : i32, i32, i32, i32
  }
  func.func @transform_1(%arg0: i32) -> (i32, i32, i32) {
    %c0_i32 = arith.constant 0 : i32
    %c0_i32_0 = arith.constant 0 : i32
    %c0_i32_1 = arith.constant 0 : i32
    return %arg0, %c0_i32, %c0_i32_0 : i32, i32, i32
  }
  func.func @transform_2(%arg0: i32) -> (i32, i32, i32) {
    %c0_i32 = arith.constant 0 : i32
    %c0_i32_0 = arith.constant 0 : i32
    %c0_i32_1 = arith.constant 0 : i32
    return %arg0, %c0_i32, %c0_i32_0 : i32, i32, i32
  }
  func.func @transform_3(%arg0: i32) -> (i32, i32, i32) {
    %c0_i32 = arith.constant 0 : i32
    %c0_i32_0 = arith.constant 0 : i32
    %c0_i32_1 = arith.constant 0 : i32
    %c0_i32_2 = arith.constant 0 : i32
    return %c0_i32, %c0_i32_0, %c0_i32_1 : i32, i32, i32
  }
  func.func @transform_4(%arg0: i32) -> (i32, i32) {
    %c0_i32 = arith.constant 0 : i32
    %c0_i32_0 = arith.constant 0 : i32
    %c0_i32_1 = arith.constant 0 : i32
    return %c0_i32, %c0_i32_0 : i32, i32
  }
  func.func @transform_5(%arg0: i32) -> (i32, i32, i32) {
    %c0_i32 = arith.constant 0 : i32
    %c0_i32_0 = arith.constant 0 : i32
    %c0_i32_1 = arith.constant 0 : i32
    %c0_i32_2 = arith.constant 0 : i32
    return %c0_i32, %c0_i32_0, %c0_i32_1 : i32, i32, i32
  }
  func.func @transform_6(%arg0: i32) -> (i32, i32, i32) {
    %c0_i32 = arith.constant 0 : i32
    %c0_i32_0 = arith.constant 0 : i32
    %c0_i32_1 = arith.constant 0 : i32
    %c0_i32_2 = arith.constant 0 : i32
    return %c0_i32, %c0_i32_0, %c0_i32_1 : i32, i32, i32
  }
  func.func @transform_7(%arg0: i32) -> (i32, i32) {
    %c0_i32 = arith.constant 0 : i32
    %c0_i32_0 = arith.constant 0 : i32
    %c0_i32_1 = arith.constant 0 : i32
    return %c0_i32, %c0_i32_0 : i32, i32
  }
  func.func @transform_8(%arg0: i32) -> (i32, i32, i32) {
    %c0_i32 = arith.constant 0 : i32
    %c0_i32_0 = arith.constant 0 : i32
    %c0_i32_1 = arith.constant 0 : i32
    %c0_i32_2 = arith.constant 0 : i32
    return %c0_i32, %c0_i32_0, %c0_i32_1 : i32, i32, i32
  }
  func.func @transform_9(%arg0: i32) -> (i32, i32) {
    %c0_i32 = arith.constant 0 : i32
    %c0_i32_0 = arith.constant 0 : i32
    %c0_i32_1 = arith.constant 0 : i32
    return %c0_i32, %c0_i32_0 : i32, i32
  }
  func.func @transform_10(%arg0: i32) -> (i32, i32) {
    %c0_i32 = arith.constant 0 : i32
    %c0_i32_0 = arith.constant 0 : i32
    %c0_i32_1 = arith.constant 0 : i32
    return %c0_i32, %c0_i32_0 : i32, i32
  }
  func.func @transform_11(%arg0: i32) -> (i32, i32) {
    %c0_i32 = arith.constant 0 : i32
    %c0_i32_0 = arith.constant 0 : i32
    %c0_i32_1 = arith.constant 0 : i32
    return %c0_i32, %c0_i32_0 : i32, i32
  }
  func.func @transform_12(%arg0: i32) -> (i32, i32, i32) {
    %c0_i32 = arith.constant 0 : i32
    %c0_i32_0 = arith.constant 0 : i32
    %c0_i32_1 = arith.constant 0 : i32
    return %arg0, %c0_i32, %c0_i32_0 : i32, i32, i32
  }
  func.func @transform_13(%arg0: i32) -> (i32, i32, i32) {
    %c0_i32 = arith.constant 0 : i32
    %c0_i32_0 = arith.constant 0 : i32
    %c0_i32_1 = arith.constant 0 : i32
    return %arg0, %c0_i32, %c0_i32_0 : i32, i32, i32
  }
  func.func @transform_14(%arg0: i32) -> (i32, i32, i32) {
    %c0_i32 = arith.constant 0 : i32
    %c0_i32_0 = arith.constant 0 : i32
    %c0_i32_1 = arith.constant 0 : i32
    return %arg0, %c0_i32, %c0_i32_0 : i32, i32, i32
  }
}

</mosaic_0001>

<llo_original>
// kernel: tpu_custom_call.1
$region0: #{tpu_custom_call.1}
  #allocation0 [shape = 'u32[]', space=smem, size = 0x4, offset = 0x4, fixed_abs, tag = 'smem constant byte address 0x4 - core index']
  #allocation1 [shape = 'u32[144,128]{1,0:T(1,128)}', space=vmem, size = 0x12000, scoped, tag = 'internal scratch']
  #allocation2 [shape = 'f32[10,10,4]{2,1,0:T(8,128)}', space=vmem, size = 0x14000, scoped, tag = 'scratch operand']
  #allocation3 [shape = 'f32[10,10,8]{2,1,0:T(8,128)}', space=vmem, size = 0x14000, scoped, tag = 'scratch operand']
  #allocation4 [shape = 'f32[10,10,8]{2,1,0:T(8,128)}', space=vmem, size = 0x14000, scoped, tag = 'scratch operand']
  %s0 = inlined_call_operand.vmem [shape: f32[2,16,8,8], index: 0, kind: input, shape index: {}]
  %s1 = inlined_call_operand.vmem [shape: f32[2,64,8], index: 1, kind: input, shape index: {}, may-alias: {1,13}]
  %s2 = inlined_call_operand.vmem [shape: f32[2,64,8], index: 2, kind: input, shape index: {}, may-alias: {2,14}]
  %s3 = inlined_call_operand.vmem [shape: f32[9,4,8], index: 3, kind: input, shape index: {}]
  %s4 = inlined_call_operand.vmem [shape: f32[1,8], index: 4, kind: input, shape index: {}]
  %s5 = inlined_call_operand.vmem [shape: f32[9,8,32], index: 5, kind: input, shape index: {}]
  %s6 = inlined_call_operand.vmem [shape: f32[9,8,32], index: 6, kind: input, shape index: {}]
  %s7 = inlined_call_operand.vmem [shape: f32[1,32], index: 7, kind: input, shape index: {}]
  %s8 = inlined_call_operand.vmem [shape: f32[9,8,8], index: 8, kind: input, shape index: {}]
  %s9 = inlined_call_operand.vmem [shape: f32[1,8], index: 9, kind: input, shape index: {}]
  %s10 = inlined_call_operand.vmem [shape: f32[4,8], index: 10, kind: input, shape index: {}]
  %s11 = inlined_call_operand.vmem [shape: f32[1,8], index: 11, kind: input, shape index: {}]
  %s12 = inlined_call_operand.vmem [shape: f32[2,64,8], index: 12, kind: output, shape index: {0}]
  %s13 = inlined_call_operand.vmem [shape: f32[2,64,8], index: 13, kind: output, shape index: {1}, may-alias: {1,13}]
  %s14 = inlined_call_operand.vmem [shape: f32[2,64,8], index: 14, kind: output, shape index: {2}, may-alias: {2,14}]
  %15 = xla_tuple %s12, %s13, %s14
  %s16 = sld [smem:[#allocation0]]
  $region97: #{tpu_custom_call.1} parent=0
    _
  %s18 = ssub.s32 1, %s16
  %s19 = scalar_select 0, %s18, %s16
  loop: start=0, step=1, limit=4
  $region2: #{tpu_custom_call.1} parent=0 // loop_pre_header
    _
  $region3: #{tpu_custom_call.1} parent=0 // loop_header
    %s21 = sphi 0, %s25
    %p22 = scmp.ge.s32.totalorder %s21, 4
    %s31 = sphi 0, %s33
    %s34 = sphi 0, %s31
    %s35 = sphi 0, %s34
    %s51 = sphi 0, %s35
    %s57 = sphi 0, %s59
    %s60 = sphi 0, %s57
    %s61 = sphi 0, %s60
    %s77 = sphi 0, %s61
    %s83 = sphi 0, %s85
    %s86 = sphi 0, %s83
    %s87 = sphi 0, %s86
    %s103 = sphi 0, %s87
    %s107 = sphi 0, %s107
    %s109 = sphi 0, %s107
    %s110 = sphi 0, %s109
    %s124 = sphi 0, %s110
    %s128 = sphi 0, %s128
    %s130 = sphi 0, %s128
    %s131 = sphi 0, %s130
    %s145 = sphi 0, %s131
    %s149 = sphi 0, %s149
    %s151 = sphi 0, %s149
    %s152 = sphi 0, %s151
    %s166 = sphi 0, %s152
    %s170 = sphi 0, %s170
    %s172 = sphi 0, %s170
    %s173 = sphi 0, %s172
    %s187 = sphi 0, %s173
    %s191 = sphi 0, %s191
    %s193 = sphi 0, %s191
    %s194 = sphi 0, %s193
    %s208 = sphi 0, %s194
    %s212 = sphi 0, %s212
    %s214 = sphi 0, %s212
    %s215 = sphi 0, %s214
    %s229 = sphi 0, %s215
    %s233 = sphi 0, %s233
    %s235 = sphi 0, %s233
    %s236 = sphi 0, %s235
    %s250 = sphi 0, %s236
    %s254 = sphi 0, %s254
    %s256 = sphi 0, %s254
    %s257 = sphi 0, %s256
    %s271 = sphi 0, %s257
    %s275 = sphi 0, %s275
    %s277 = sphi 0, %s275
    %s278 = sphi 0, %s277
    %s292 = sphi 0, %s278
    %s298 = sphi 0, %s300
    %s301 = sphi 0, %s298
    %s302 = sphi 0, %s301
    %s318 = sphi 0, %s302
    %s324 = sphi 0, %s326
    %s327 = sphi 0, %s324
    %s328 = sphi 0, %s327
    %s344 = sphi 0, %s328
    %s350 = sphi 0, %s352
    %s353 = sphi 0, %s350
    %s354 = sphi 0, %s353
    %s370 = sphi 0, %s354
  $region4: #{tpu_custom_call.1} parent=0 // loop_header_branch
    %24 = sbr.rel (%p22) target = $region8
  $region5: #{tpu_custom_call.1} parent=0 // loop_body
    %s26 = ssub.s32 %s21, 1
    %s27 = ssub.s32 %s21, 2
    %s28 = sadd.s32 %s21, 1
    %s29 = ssub.s32 %s21, %s28
    %p30 = scmp.eq.s32.totalorder %s29, 0
    %s32 = sadd.s32 %s31, 1
    %s33 = scalar_select %p30, %s31, %s32
    %p36 = pneg %p30
    %p37 = scmp.eq.s32.totalorder %s21, 1
    %p38 = por %p36, %p37
    %p39 = scmp.ne.s32.totalorder %s31, %s34
    %p40 = scmp.eq.s32.totalorder %s21, 0
    %p41 = por %p39, %p40
    %p42 = scmp.ne.s32.totalorder %s31, %s34
    %p43 = scmp.eq.s32.totalorder %s26, 1
    %p44 = por %p42, %p43
    %p45 = scmp.ne.s32.totalorder %s34, %s35
    %p46 = scmp.eq.s32.totalorder %s26, 0
    %p47 = por %p45, %p46
    %p48 = scmp.ne.s32.totalorder %s34, %s35
    %p49 = scmp.eq.s32.totalorder %s27, 1
    %p50 = por %p48, %p49
    %p52 = scmp.ne.s32.totalorder %s35, %s51
    %p53 = scmp.eq.s32.totalorder %s27, 0
    %p54 = por %p52, %p53
    %s55 = ssub.s32 %s21, %s28
    %p56 = scmp.eq.s32.totalorder %s55, 0
    %s58 = sadd.s32 %s57, 1
    %s59 = scalar_select %p56, %s57, %s58
    %p62 = pneg %p56
    %p63 = scmp.eq.s32.totalorder %s21, 1
    %p64 = por %p62, %p63
    %p65 = scmp.ne.s32.totalorder %s57, %s60
    %p66 = scmp.eq.s32.totalorder %s21, 0
    %p67 = por %p65, %p66
    %p68 = scmp.ne.s32.totalorder %s57, %s60
    %p69 = scmp.eq.s32.totalorder %s26, 1
    %p70 = por %p68, %p69
    %p71 = scmp.ne.s32.totalorder %s60, %s61
    %p72 = scmp.eq.s32.totalorder %s26, 0
    %p73 = por %p71, %p72
    %p74 = scmp.ne.s32.totalorder %s60, %s61
    %p75 = scmp.eq.s32.totalorder %s27, 1
    %p76 = por %p74, %p75
    %p78 = scmp.ne.s32.totalorder %s61, %s77
    %p79 = scmp.eq.s32.totalorder %s27, 0
    %p80 = por %p78, %p79
    %s81 = ssub.s32 %s21, %s28
    %p82 = scmp.eq.s32.totalorder %s81, 0
    %s84 = sadd.s32 %s83, 1
    %s85 = scalar_select %p82, %s83, %s84
    %p88 = pneg %p82
    %p89 = scmp.eq.s32.totalorder %s21, 1
    %p90 = por %p88, %p89
    %p91 = scmp.ne.s32.totalorder %s83, %s86
    %p92 = scmp.eq.s32.totalorder %s21, 0
    %p93 = por %p91, %p92
    %p94 = scmp.ne.s32.totalorder %s83, %s86
    %p95 = scmp.eq.s32.totalorder %s26, 1
    %p96 = por %p94, %p95
    %p97 = scmp.ne.s32.totalorder %s86, %s87
    %p98 = scmp.eq.s32.totalorder %s26, 0
    %p99 = por %p97, %p98
    %p100 = scmp.ne.s32.totalorder %s86, %s87
    %p101 = scmp.eq.s32.totalorder %s27, 1
    %p102 = por %p100, %p101
    %p104 = scmp.ne.s32.totalorder %s87, %s103
    %p105 = scmp.eq.s32.totalorder %s27, 0
    %p106 = por %p104, %p105
    %s108 = sadd.s32 %s107, 1
    %p111 = scmp.eq.s32.totalorder %s21, 1
    %p112 = scmp.ne.s32.totalorder %s107, %s109
    %p113 = scmp.eq.s32.totalorder %s21, 0
    %p114 = por %p112, %p113
    %p115 = scmp.ne.s32.totalorder %s107, %s109
    %p116 = scmp.eq.s32.totalorder %s26, 1
    %p117 = por %p115, %p116
    %p118 = scmp.ne.s32.totalorder %s109, %s110
    %p119 = scmp.eq.s32.totalorder %s26, 0
    %p120 = por %p118, %p119
    %p121 = scmp.ne.s32.totalorder %s109, %s110
    %p122 = scmp.eq.s32.totalorder %s27, 1
    %p123 = por %p121, %p122
    %p125 = scmp.ne.s32.totalorder %s110, %s124
    %p126 = scmp.eq.s32.totalorder %s27, 0
    %p127 = por %p125, %p126
    %s129 = sadd.s32 %s128, 1
    %p132 = scmp.eq.s32.totalorder %s21, 1
    %p133 = scmp.ne.s32.totalorder %s128, %s130
    %p134 = scmp.eq.s32.totalorder %s21, 0
    %p135 = por %p133, %p134
    %p136 = scmp.ne.s32.totalorder %s128, %s130
    %p137 = scmp.eq.s32.totalorder %s26, 1
    %p138 = por %p136, %p137
    %p139 = scmp.ne.s32.totalorder %s130, %s131
    %p140 = scmp.eq.s32.totalorder %s26, 0
    %p141 = por %p139, %p140
    %p142 = scmp.ne.s32.totalorder %s130, %s131
    %p143 = scmp.eq.s32.totalorder %s27, 1
    %p144 = por %p142, %p143
    %p146 = scmp.ne.s32.totalorder %s131, %s145
    %p147 = scmp.eq.s32.totalorder %s27, 0
    %p148 = por %p146, %p147
    %s150 = sadd.s32 %s149, 1
    %p153 = scmp.eq.s32.totalorder %s21, 1
    %p154 = scmp.ne.s32.totalorder %s149, %s151
    %p155 = scmp.eq.s32.totalorder %s21, 0
    %p156 = por %p154, %p155
    %p157 = scmp.ne.s32.totalorder %s149, %s151
    %p158 = scmp.eq.s32.totalorder %s26, 1
    %p159 = por %p157, %p158
    %p160 = scmp.ne.s32.totalorder %s151, %s152
    %p161 = scmp.eq.s32.totalorder %s26, 0
    %p162 = por %p160, %p161
    %p163 = scmp.ne.s32.totalorder %s151, %s152
    %p164 = scmp.eq.s32.totalorder %s27, 1
    %p165 = por %p163, %p164
    %p167 = scmp.ne.s32.totalorder %s152, %s166
    %p168 = scmp.eq.s32.totalorder %s27, 0
    %p169 = por %p167, %p168
    %s171 = sadd.s32 %s170, 1
    %p174 = scmp.eq.s32.totalorder %s21, 1
    %p175 = scmp.ne.s32.totalorder %s170, %s172
    %p176 = scmp.eq.s32.totalorder %s21, 0
    %p177 = por %p175, %p176
    %p178 = scmp.ne.s32.totalorder %s170, %s172
    %p179 = scmp.eq.s32.totalorder %s26, 1
    %p180 = por %p178, %p179
    %p181 = scmp.ne.s32.totalorder %s172, %s173
    %p182 = scmp.eq.s32.totalorder %s26, 0
    %p183 = por %p181, %p182
    %p184 = scmp.ne.s32.totalorder %s172, %s173
    %p185 = scmp.eq.s32.totalorder %s27, 1
    %p186 = por %p184, %p185
    %p188 = scmp.ne.s32.totalorder %s173, %s187
    %p189 = scmp.eq.s32.totalorder %s27, 0
    %p190 = por %p188, %p189
    %s192 = sadd.s32 %s191, 1
    %p195 = scmp.eq.s32.totalorder %s21, 1
    %p196 = scmp.ne.s32.totalorder %s191, %s193
    %p197 = scmp.eq.s32.totalorder %s21, 0
    %p198 = por %p196, %p197
    %p199 = scmp.ne.s32.totalorder %s191, %s193
    %p200 = scmp.eq.s32.totalorder %s26, 1
    %p201 = por %p199, %p200
    %p202 = scmp.ne.s32.totalorder %s193, %s194
    %p203 = scmp.eq.s32.totalorder %s26, 0
    %p204 = por %p202, %p203
    %p205 = scmp.ne.s32.totalorder %s193, %s194
    %p206 = scmp.eq.s32.totalorder %s27, 1
    %p207 = por %p205, %p206
    %p209 = scmp.ne.s32.totalorder %s194, %s208
    %p210 = scmp.eq.s32.totalorder %s27, 0
    %p211 = por %p209, %p210
    %s213 = sadd.s32 %s212, 1
    %p216 = scmp.eq.s32.totalorder %s21, 1
    %p217 = scmp.ne.s32.totalorder %s212, %s214
    %p218 = scmp.eq.s32.totalorder %s21, 0
    %p219 = por %p217, %p218
    %p220 = scmp.ne.s32.totalorder %s212, %s214
    %p221 = scmp.eq.s32.totalorder %s26, 1
    %p222 = por %p220, %p221
    %p223 = scmp.ne.s32.totalorder %s214, %s215
    %p224 = scmp.eq.s32.totalorder %s26, 0
    %p225 = por %p223, %p224
    %p226 = scmp.ne.s32.totalorder %s214, %s215
    %p227 = scmp.eq.s32.totalorder %s27, 1
    %p228 = por %p226, %p227
    %p230 = scmp.ne.s32.totalorder %s215, %s229
    %p231 = scmp.eq.s32.totalorder %s27, 0
    %p232 = por %p230, %p231
    %s234 = sadd.s32 %s233, 1
    %p237 = scmp.eq.s32.totalorder %s21, 1
    %p238 = scmp.ne.s32.totalorder %s233, %s235
    %p239 = scmp.eq.s32.totalorder %s21, 0
    %p240 = por %p238, %p239
    %p241 = scmp.ne.s32.totalorder %s233, %s235
    %p242 = scmp.eq.s32.totalorder %s26, 1
    %p243 = por %p241, %p242
    %p244 = scmp.ne.s32.totalorder %s235, %s236
    %p245 = scmp.eq.s32.totalorder %s26, 0
    %p246 = por %p244, %p245
    %p247 = scmp.ne.s32.totalorder %s235, %s236
    %p248 = scmp.eq.s32.totalorder %s27, 1
    %p249 = por %p247, %p248
    %p251 = scmp.ne.s32.totalorder %s236, %s250
    %p252 = scmp.eq.s32.totalorder %s27, 0
    %p253 = por %p251, %p252
    %s255 = sadd.s32 %s254, 1
    %p258 = scmp.eq.s32.totalorder %s21, 1
    %p259 = scmp.ne.s32.totalorder %s254, %s256
    %p260 = scmp.eq.s32.totalorder %s21, 0
    %p261 = por %p259, %p260
    %p262 = scmp.ne.s32.totalorder %s254, %s256
    %p263 = scmp.eq.s32.totalorder %s26, 1
    %p264 = por %p262, %p263
    %p265 = scmp.ne.s32.totalorder %s256, %s257
    %p266 = scmp.eq.s32.totalorder %s26, 0
    %p267 = por %p265, %p266
    %p268 = scmp.ne.s32.totalorder %s256, %s257
    %p269 = scmp.eq.s32.totalorder %s27, 1
    %p270 = por %p268, %p269
    %p272 = scmp.ne.s32.totalorder %s257, %s271
    %p273 = scmp.eq.s32.totalorder %s27, 0
    %p274 = por %p272, %p273
    %s276 = sadd.s32 %s275, 1
    %p279 = scmp.eq.s32.totalorder %s21, 1
    %p280 = scmp.ne.s32.totalorder %s275, %s277
    %p281 = scmp.eq.s32.totalorder %s21, 0
    %p282 = por %p280, %p281
    %p283 = scmp.ne.s32.totalorder %s275, %s277
    %p284 = scmp.eq.s32.totalorder %s26, 1
    %p285 = por %p283, %p284
    %p286 = scmp.ne.s32.totalorder %s277, %s278
    %p287 = scmp.eq.s32.totalorder %s26, 0
    %p288 = por %p286, %p287
    %p289 = scmp.ne.s32.totalorder %s277, %s278
    %p290 = scmp.eq.s32.totalorder %s27, 1
    %p291 = por %p289, %p290
    %p293 = scmp.ne.s32.totalorder %s278, %s292
    %p294 = scmp.eq.s32.totalorder %s27, 0
    %p295 = por %p293, %p294
    %s296 = ssub.s32 %s21, %s28
    %p297 = scmp.eq.s32.totalorder %s296, 0
    %s299 = sadd.s32 %s298, 1
    %s300 = scalar_select %p297, %s298, %s299
    %p303 = pneg %p297
    %p304 = scmp.eq.s32.totalorder %s21, 1
    %p305 = por %p303, %p304
    %p306 = scmp.ne.s32.totalorder %s298, %s301
    %p307 = scmp.eq.s32.totalorder %s21, 0
    %p308 = por %p306, %p307
    %p309 = scmp.ne.s32.totalorder %s298, %s301
    %p310 = scmp.eq.s32.totalorder %s26, 1
    %p311 = por %p309, %p310
    %p312 = scmp.ne.s32.totalorder %s301, %s302
    %p313 = scmp.eq.s32.totalorder %s26, 0
    %p314 = por %p312, %p313
    %p315 = scmp.ne.s32.totalorder %s301, %s302
    %p316 = scmp.eq.s32.totalorder %s27, 1
    %p317 = por %p315, %p316
    %p319 = scmp.ne.s32.totalorder %s302, %s318
    %p320 = scmp.eq.s32.totalorder %s27, 0
    %p321 = por %p319, %p320
    %s322 = ssub.s32 %s21, %s28
    %p323 = scmp.eq.s32.totalorder %s322, 0
    %s325 = sadd.s32 %s324, 1
    %s326 = scalar_select %p323, %s324, %s325
    %p329 = pneg %p323
    %p330 = scmp.eq.s32.totalorder %s21, 1
    %p331 = por %p329, %p330
    %p332 = scmp.ne.s32.totalorder %s324, %s327
    %p333 = scmp.eq.s32.totalorder %s21, 0
    %p334 = por %p332, %p333
    %p335 = scmp.ne.s32.totalorder %s324, %s327
    %p336 = scmp.eq.s32.totalorder %s26, 1
    %p337 = por %p335, %p336
    %p338 = scmp.ne.s32.totalorder %s327, %s328
    %p339 = scmp.eq.s32.totalorder %s26, 0
    %p340 = por %p338, %p339
    %p341 = scmp.ne.s32.totalorder %s327, %s328
    %p342 = scmp.eq.s32.totalorder %s27, 1
    %p343 = por %p341, %p342
    %p345 = scmp.ne.s32.totalorder %s328, %s344
    %p346 = scmp.eq.s32.totalorder %s27, 0
    %p347 = por %p345, %p346
    %s348 = ssub.s32 %s21, %s28
    %p349 = scmp.eq.s32.totalorder %s348, 0
    %s351 = sadd.s32 %s350, 1
    %s352 = scalar_select %p349, %s350, %s351
    %p355 = pneg %p349
    %p356 = scmp.eq.s32.totalorder %s21, 1
    %p357 = por %p355, %p356
    %p358 = scmp.ne.s32.totalorder %s350, %s353
    %p359 = scmp.eq.s32.totalorder %s21, 0
    %p360 = por %p358, %p359
    %p361 = scmp.ne.s32.totalorder %s350, %s353
    %p362 = scmp.eq.s32.totalorder %s26, 1
    %p363 = por %p361, %p362
    %p364 = scmp.ne.s32.totalorder %s353, %s354
    %p365 = scmp.eq.s32.totalorder %s26, 0
    %p366 = por %p364, %p365
    %p367 = scmp.ne.s32.totalorder %s353, %s354
    %p368 = scmp.eq.s32.totalorder %s27, 1
    %p369 = por %p367, %p368
    %p371 = scmp.ne.s32.totalorder %s354, %s370
    %p372 = scmp.eq.s32.totalorder %s27, 0
    %p373 = por %p371, %p372
    %p374 = scmp.le.s32.totalorder 1, %s21
    %p375 = scmp.lt.s32.totalorder %s21, 3
    %p376 = pnand %p374, %p375
    %p377 = pneg %p376
    // Predicated region
    $region9: #{tpu_custom_call.1} parent=5 // pred_check
      _
    $region10: #{tpu_custom_call.1} parent=5 // pred_check_branch
      %379 = sbr.rel (%p376) target = $region12
    $region11: #{tpu_custom_call.1} parent=5 // pred_region
      %s380 = ssub.s32 %s21, 1
      // Predicated region
      $region13: #{tpu_custom_call.1} parent=11 // pred_check
        %p381 = pneg %p120
      $region14: #{tpu_custom_call.1} parent=11 // pred_check_branch
        %383 = sbr.rel (%p381) target = $region16
      $region15: #{tpu_custom_call.1} parent=11 // pred_region
        _
      $region16: #{tpu_custom_call.1} parent=11 // pred_fallthru
        _
      // Predicated region
      $region17: #{tpu_custom_call.1} parent=11 // pred_check
        %p384 = pneg %p141
      $region18: #{tpu_custom_call.1} parent=11 // pred_check_branch
        %386 = sbr.rel (%p384) target = $region20
      $region19: #{tpu_custom_call.1} parent=11 // pred_region
        _
      $region20: #{tpu_custom_call.1} parent=11 // pred_fallthru
        _
      // Predicated region
      $region21: #{tpu_custom_call.1} parent=11 // pred_check
        %p387 = pneg %p162
      $region22: #{tpu_custom_call.1} parent=11 // pred_check_branch
        %389 = sbr.rel (%p387) target = $region24
      $region23: #{tpu_custom_call.1} parent=11 // pred_region
        _
      $region24: #{tpu_custom_call.1} parent=11 // pred_fallthru
        _
      // Predicated region
      $region25: #{tpu_custom_call.1} parent=11 // pred_check
        %p390 = pneg %p183
      $region26: #{tpu_custom_call.1} parent=11 // pred_check_branch
        %392 = sbr.rel (%p390) target = $region28
      $region27: #{tpu_custom_call.1} parent=11 // pred_region
        _
      $region28: #{tpu_custom_call.1} parent=11 // pred_fallthru
        _
      // Predicated region
      $region29: #{tpu_custom_call.1} parent=11 // pred_check
        %p393 = pneg %p204
      $region30: #{tpu_custom_call.1} parent=11 // pred_check_branch
        %395 = sbr.rel (%p393) target = $region32
      $region31: #{tpu_custom_call.1} parent=11 // pred_region
        _
      $region32: #{tpu_custom_call.1} parent=11 // pred_fallthru
        _
      // Predicated region
      $region33: #{tpu_custom_call.1} parent=11 // pred_check
        %p396 = pneg %p225
      $region34: #{tpu_custom_call.1} parent=11 // pred_check_branch
        %398 = sbr.rel (%p396) target = $region36
      $region35: #{tpu_custom_call.1} parent=11 // pred_region
        _
      $region36: #{tpu_custom_call.1} parent=11 // pred_fallthru
        _
      // Predicated region
      $region37: #{tpu_custom_call.1} parent=11 // pred_check
        %p399 = pneg %p246
      $region38: #{tpu_custom_call.1} parent=11 // pred_check_branch
        %401 = sbr.rel (%p399) target = $region40
      $region39: #{tpu_custom_call.1} parent=11 // pred_region
        _
      $region40: #{tpu_custom_call.1} parent=11 // pred_fallthru
        _
      // Predicated region
      $region41: #{tpu_custom_call.1} parent=11 // pred_check
        %p402 = pneg %p267
      $region42: #{tpu_custom_call.1} parent=11 // pred_check_branch
        %404 = sbr.rel (%p402) target = $region44
      $region43: #{tpu_custom_call.1} parent=11 // pred_region
        _
      $region44: #{tpu_custom_call.1} parent=11 // pred_fallthru
        _
      // Predicated region
      $region45: #{tpu_custom_call.1} parent=11 // pred_check
        %p405 = pneg %p288
      $region46: #{tpu_custom_call.1} parent=11 // pred_check_branch
        %407 = sbr.rel (%p405) target = $region48
      $region47: #{tpu_custom_call.1} parent=11 // pred_region
        _
      $region48: #{tpu_custom_call.1} parent=11 // pred_fallthru
        _
    $region12: #{tpu_custom_call.1} parent=5 // pred_fallthru
      _
    %p408 = scmp.lt.s32.totalorder %s21, 2
    // Predicated region
    $region49: #{tpu_custom_call.1} parent=5 // pred_check
      %p409 = pneg %p408
    $region50: #{tpu_custom_call.1} parent=5 // pred_check_branch
      %411 = sbr.rel (%p409) target = $region52
    $region51: #{tpu_custom_call.1} parent=5 // pred_region
      // Predicated region
      $region53: #{tpu_custom_call.1} parent=51 // pred_check
        %p412 = pneg %p41
      $region54: #{tpu_custom_call.1} parent=51 // pred_check_branch
        %414 = sbr.rel (%p412) target = $region56
      $region55: #{tpu_custom_call.1} parent=51 // pred_region
        %p415 = scmp.lt.s32.totalorder %s21, 1
        %s416 = scalar_select %p415, %s21, 1
        %s417 = smul.addr %s416, 16
        %s418 = smul.addr %s417, 8
        %s419 = scalar_lea.vmem %s0, %s418
      $region56: #{tpu_custom_call.1} parent=51 // pred_fallthru
        _
      // Predicated region
      $region57: #{tpu_custom_call.1} parent=51 // pred_check
        %p420 = pneg %p67
      $region58: #{tpu_custom_call.1} parent=51 // pred_check_branch
        %422 = sbr.rel (%p420) target = $region60
      $region59: #{tpu_custom_call.1} parent=51 // pred_region
        %p423 = scmp.lt.s32.totalorder %s21, 1
        %s424 = scalar_select %p423, %s21, 1
        %s425 = smul.addr %s424, 8
        %s426 = smul.addr %s425, 8
        %s427 = scalar_lea.vmem %s1, %s426
      $region60: #{tpu_custom_call.1} parent=51 // pred_fallthru
        _
      // Predicated region
      $region61: #{tpu_custom_call.1} parent=51 // pred_check
        %p428 = pneg %p93
      $region62: #{tpu_custom_call.1} parent=51 // pred_check_branch
        %430 = sbr.rel (%p428) target = $region64
      $region63: #{tpu_custom_call.1} parent=51 // pred_region
        %p431 = scmp.lt.s32.totalorder %s21, 1
        %s432 = scalar_select %p431, %s21, 1
        %s433 = smul.addr %s432, 8
        %s434 = smul.addr %s433, 8
        %s435 = scalar_lea.vmem %s2, %s434
      $region64: #{tpu_custom_call.1} parent=51 // pred_fallthru
        _
    $region52: #{tpu_custom_call.1} parent=5 // pred_fallthru
      _
    %p436 = scmp.le.s32.totalorder 1, %s21
    %p437 = scmp.lt.s32.totalorder %s21, 3
    %p438 = pnand %p436, %p437
    %p439 = pneg %p438
    // Predicated region
    $region65: #{tpu_custom_call.1} parent=5 // pred_check
      _
    $region66: #{tpu_custom_call.1} parent=5 // pred_check_branch
      %441 = sbr.rel (%p438) target = $region68
    $region67: #{tpu_custom_call.1} parent=5 // pred_region
      %s442 = ssub.s32 %s21, 1
      %p443 = scmp.lt.s32.totalorder %s26, 1
      %s444 = scalar_select %p443, %s26, 1
      %s445 = smul.addr %s444, 16
      %s446 = smul.addr %s445, 8
      %s447 = scalar_lea.vmem %s0, %s446
      %p448 = pneg %p47
      %p449 = pneg %p44
      %p450 = scmp.lt.s32.totalorder %s26, 1
      %s451 = scalar_select %p450, %s26, 1
      %s452 = smul.addr %s451, 8
      %s453 = smul.addr %s452, 8
      %s454 = scalar_lea.vmem %s1, %s453
      %p455 = pneg %p73
      %p456 = pneg %p70
      %p457 = scmp.lt.s32.totalorder %s26, 1
      %s458 = scalar_select %p457, %s26, 1
      %s459 = smul.addr %s458, 8
      %s460 = smul.addr %s459, 8
      %s461 = scalar_lea.vmem %s2, %s460
      %p462 = pneg %p99
      %p463 = pneg %p96
      %p464 = pneg %p120
      %p465 = pneg %p117
      %p466 = pneg %p141
      %p467 = pneg %p138
      %p468 = pneg %p162
      %p469 = pneg %p159
      %p470 = pneg %p183
      %p471 = pneg %p180
      %p472 = pneg %p204
      %p473 = pneg %p201
      %p474 = pneg %p225
      %p475 = pneg %p222
      %p476 = pneg %p246
      %p477 = pneg %p243
      %p478 = pneg %p267
      %p479 = pneg %p264
      %p480 = pneg %p288
      %p481 = pneg %p285
      %p482 = pneg %p314
      %p483 = pneg %p311
      %p484 = scmp.lt.s32.totalorder %s26, 1
      %s485 = scalar_select %p484, %s26, 1
      %s486 = smul.addr %s485, 8
      %s487 = smul.addr %s486, 8
      %s488 = scalar_lea.vmem %s12, %s487
      %p489 = pneg %p340
      %p490 = pneg %p337
      %p491 = scmp.lt.s32.totalorder %s26, 1
      %s492 = scalar_select %p491, %s26, 1
      %s493 = smul.addr %s492, 8
      %s494 = smul.addr %s493, 8
      %s495 = scalar_lea.vmem %s13, %s494
      %p496 = pneg %p366
      %p497 = pneg %p363
      %p498 = scmp.lt.s32.totalorder %s26, 1
      %s499 = scalar_select %p498, %s26, 1
      %s500 = smul.addr %s499, 8
      %s501 = smul.addr %s500, 8
      %s502 = scalar_lea.vmem %s14, %s501
      %p503 = scmp.lt.s32.totalorder %s26, 1
      %s504 = scalar_select %p503, %s26, 1
      %s505 = smul.addr %s504, 16
      %s506 = smul.addr %s505, 8
      %s507 = scalar_lea.vmem %s0, %s506
      %p508 = scmp.lt.s32.totalorder %s26, 1
      %s509 = scalar_select %p508, %s26, 1
      %s510 = smul.addr %s509, 8
      %s511 = smul.addr %s510, 8
      %s512 = scalar_lea.vmem %s1, %s511
      %p513 = scmp.lt.s32.totalorder %s26, 1
      %s514 = scalar_select %p513, %s26, 1
      %s515 = smul.addr %s514, 8
      %s516 = smul.addr %s515, 8
      %s517 = scalar_lea.vmem %s2, %s516
      %p518 = scmp.lt.s32.totalorder %s26, 1
      %s519 = scalar_select %p518, %s26, 1
      %s520 = smul.addr %s519, 8
      %s521 = smul.addr %s520, 8
      %s522 = scalar_lea.vmem %s12, %s521
      %p523 = scmp.lt.s32.totalorder %s26, 1
      %s524 = scalar_select %p523, %s26, 1
      %s525 = smul.addr %s524, 8
      %s526 = smul.addr %s525, 8
      %s527 = scalar_lea.vmem %s13, %s526
      %p528 = scmp.lt.s32.totalorder %s26, 1
      %s529 = scalar_select %p528, %s26, 1
      %s530 = smul.addr %s529, 8
      %s531 = smul.addr %s530, 8
      %s532 = scalar_lea.vmem %s14, %s531
      %v533 = vld [vmem:[%s507] sm:$0xff]
      %v534 = vld [vmem:[%s507 + $0x8] sm:$0xff]
      %v535 = vld [vmem:[%s507 + $0x10] sm:$0xff]
      %v536 = vld [vmem:[%s507 + $0x18] sm:$0xff]
      %v537 = vld [vmem:[%s507 + $0x20] sm:$0xff]
      %v538 = vld [vmem:[%s507 + $0x28] sm:$0xff]
      %v539 = vld [vmem:[%s507 + $0x30] sm:$0xff]
      %v540 = vld [vmem:[%s507 + $0x38] sm:$0xff]
      %v541 = vld [vmem:[%s507 + $0x40] sm:$0xff]
      %v542 = vld [vmem:[%s507 + $0x48] sm:$0xff]
      %v543 = vld [vmem:[%s507 + $0x50] sm:$0xff]
      %v544 = vld [vmem:[%s507 + $0x58] sm:$0xff]
      %v545 = vld [vmem:[%s507 + $0x60] sm:$0xff]
      %v546 = vld [vmem:[%s507 + $0x68] sm:$0xff]
      %v547 = vld [vmem:[%s507 + $0x70] sm:$0xff]
      %v548 = vld [vmem:[%s507 + $0x78] sm:$0xff]
      %565 = vrot.lane.b32.xlu0 %v533, 124
      %v566 = vpop.permute.xlu0 %565
      %567 = vrot.lane.b32.xlu0 %v534, 124
      %v568 = vpop.permute.xlu0 %567
      %569 = vrot.lane.b32.xlu0 %v535, 124
      %v570 = vpop.permute.xlu0 %569
      %571 = vrot.lane.b32.xlu0 %v536, 124
      %v572 = vpop.permute.xlu0 %571
      %573 = vrot.lane.b32.xlu0 %v537, 124
      %v574 = vpop.permute.xlu0 %573
      %575 = vrot.lane.b32.xlu0 %v538, 124
      %v576 = vpop.permute.xlu0 %575
      %577 = vrot.lane.b32.xlu0 %v539, 124
      %v578 = vpop.permute.xlu0 %577
      %579 = vrot.lane.b32.xlu0 %v540, 124
      %v580 = vpop.permute.xlu0 %579
      %581 = vrot.lane.b32.xlu0 %v541, 124
      %v582 = vpop.permute.xlu0 %581
      %583 = vrot.lane.b32.xlu0 %v542, 124
      %v584 = vpop.permute.xlu0 %583
      %585 = vrot.lane.b32.xlu0 %v543, 124
      %v586 = vpop.permute.xlu0 %585
      %587 = vrot.lane.b32.xlu0 %v544, 124
      %v588 = vpop.permute.xlu0 %587
      %589 = vrot.lane.b32.xlu0 %v545, 124
      %v590 = vpop.permute.xlu0 %589
      %591 = vrot.lane.b32.xlu0 %v546, 124
      %v592 = vpop.permute.xlu0 %591
      %593 = vrot.lane.b32.xlu0 %v547, 124
      %v594 = vpop.permute.xlu0 %593
      %595 = vrot.lane.b32.xlu0 %v548, 124
      %v596 = vpop.permute.xlu0 %595
      %v613 = vmax.f32 %v533, %v566
      %v614 = vmax.f32 %v534, %v568
      %v615 = vmax.f32 %v535, %v570
      %v616 = vmax.f32 %v536, %v572
      %v617 = vmax.f32 %v537, %v574
      %v618 = vmax.f32 %v538, %v576
      %v619 = vmax.f32 %v539, %v578
      %v620 = vmax.f32 %v540, %v580
      %v621 = vmax.f32 %v541, %v582
      %v622 = vmax.f32 %v542, %v584
      %v623 = vmax.f32 %v543, %v586
      %v624 = vmax.f32 %v544, %v588
      %v625 = vmax.f32 %v545, %v590
      %v626 = vmax.f32 %v546, %v592
      %v627 = vmax.f32 %v547, %v594
      %v628 = vmax.f32 %v548, %v596
      %vm629 = vcmask 31744
      %v630 = vsel %vm629, %v613, -inf
      %v631 = vsel %vm629, %v614, -inf
      %v632 = vmax.f32 %v630, %v631
      %v633 = vsel %vm629, %v615, -inf
      %v634 = vsel %vm629, %v616, -inf
      %v635 = vmax.f32 %v633, %v634
      %v636 = vsel %vm629, %v617, -inf
      %v637 = vsel %vm629, %v618, -inf
      %v638 = vmax.f32 %v636, %v637
      %v639 = vsel %vm629, %v619, -inf
      %v640 = vsel %vm629, %v620, -inf
      %v641 = vmax.f32 %v639, %v640
      %v642 = vsel %vm629, %v621, -inf
      %v643 = vsel %vm629, %v622, -inf
      %v644 = vmax.f32 %v642, %v643
      %v645 = vsel %vm629, %v623, -inf
      %v646 = vsel %vm629, %v624, -inf
      %v647 = vmax.f32 %v645, %v646
      %v648 = vsel %vm629, %v625, -inf
      %v649 = vsel %vm629, %v626, -inf
      %v650 = vmax.f32 %v648, %v649
      %v651 = vsel %vm629, %v627, -inf
      %v652 = vsel %vm629, %v628, -inf
      %v653 = vmax.f32 %v651, %v652
      %654 = vst.msk [vmem:[#allocation2] sm:$0xff] %vm629, 0.0
      %vm655 = vcmask 25600
      %656 = vst.msk [vmem:[#allocation2 + $0x8] sm:$0x3] %vm655, 0.0
      %s657 = scalar_lea.vmem [#allocation2], 144
      %658 = vst.msk [vmem:[%s657] sm:$0xff] %vm629, 0.0
      %659 = vst.msk [vmem:[%s657 + $0x8] sm:$0x3] %vm655, 0.0
      %vm660 = vcmask 24576
      %661 = vst.msk [vmem:[#allocation2] sm:$0x1] %vm660, 0.0
      %662 = vst.msk [vmem:[#allocation2 + $0x10] sm:$0x1] %vm660, 0.0
      %663 = vst.msk [vmem:[#allocation2 + $0x20] sm:$0x1] %vm660, 0.0
      %664 = vst.msk [vmem:[#allocation2 + $0x30] sm:$0x1] %vm660, 0.0
      %665 = vst.msk [vmem:[#allocation2 + $0x40] sm:$0x1] %vm660, 0.0
      %666 = vst.msk [vmem:[#allocation2 + $0x50] sm:$0x1] %vm660, 0.0
      %667 = vst.msk [vmem:[#allocation2 + $0x60] sm:$0x1] %vm660, 0.0
      %668 = vst.msk [vmem:[#allocation2 + $0x70] sm:$0x1] %vm660, 0.0
      %669 = vst.msk [vmem:[#allocation2 + $0x80] sm:$0x1] %vm660, 0.0
      %670 = vst.msk [vmem:[#allocation2 + $0x90] sm:$0x1] %vm660, 0.0
      %671 = vst.msk [vmem:[#allocation2 + $0x9] sm:$0x1] %vm660, 0.0
      %672 = vst.msk [vmem:[#allocation2 + $0x19] sm:$0x1] %vm660, 0.0
      %673 = vst.msk [vmem:[#allocation2 + $0x29] sm:$0x1] %vm660, 0.0
      %674 = vst.msk [vmem:[#allocation2 + $0x39] sm:$0x1] %vm660, 0.0
      %675 = vst.msk [vmem:[#allocation2 + $0x49] sm:$0x1] %vm660, 0.0
      %676 = vst.msk [vmem:[#allocation2 + $0x59] sm:$0x1] %vm660, 0.0
      %677 = vst.msk [vmem:[#allocation2 + $0x69] sm:$0x1] %vm660, 0.0
      %678 = vst.msk [vmem:[#allocation2 + $0x79] sm:$0x1] %vm660, 0.0
      %679 = vst.msk [vmem:[#allocation2 + $0x89] sm:$0x1] %vm660, 0.0
      %680 = vst.msk [vmem:[#allocation2 + $0x99] sm:$0x1] %vm660, 0.0
      %vm681 = vcmask 64512
      %682 = vst.msk [vmem:[#allocation3] sm:$0xff] %vm681, 0.0
      %vm683 = vcmask 58368
      %684 = vst.msk [vmem:[#allocation3 + $0x8] sm:$0x3] %vm683, 0.0
      %s685 = scalar_lea.vmem [#allocation3], 144
      %686 = vst.msk [vmem:[%s685] sm:$0xff] %vm681, 0.0
      %687 = vst.msk [vmem:[%s685 + $0x8] sm:$0x3] %vm683, 0.0
      %vm688 = vcmask 57344
      %689 = vst.msk [vmem:[#allocation3] sm:$0x1] %vm688, 0.0
      %690 = vst.msk [vmem:[#allocation3 + $0x10] sm:$0x1] %vm688, 0.0
      %691 = vst.msk [vmem:[#allocation3 + $0x20] sm:$0x1] %vm688, 0.0
      %692 = vst.msk [vmem:[#allocation3 + $0x30] sm:$0x1] %vm688, 0.0
      %693 = vst.msk [vmem:[#allocation3 + $0x40] sm:$0x1] %vm688, 0.0
      %694 = vst.msk [vmem:[#allocation3 + $0x50] sm:$0x1] %vm688, 0.0
      %695 = vst.msk [vmem:[#allocation3 + $0x60] sm:$0x1] %vm688, 0.0
      %696 = vst.msk [vmem:[#allocation3 + $0x70] sm:$0x1] %vm688, 0.0
      %697 = vst.msk [vmem:[#allocation3 + $0x80] sm:$0x1] %vm688, 0.0
      %698 = vst.msk [vmem:[#allocation3 + $0x90] sm:$0x1] %vm688, 0.0
      %699 = vst.msk [vmem:[#allocation3 + $0x9] sm:$0x1] %vm688, 0.0
      %700 = vst.msk [vmem:[#allocation3 + $0x19] sm:$0x1] %vm688, 0.0
      %701 = vst.msk [vmem:[#allocation3 + $0x29] sm:$0x1] %vm688, 0.0
      %702 = vst.msk [vmem:[#allocation3 + $0x39] sm:$0x1] %vm688, 0.0
      %703 = vst.msk [vmem:[#allocation3 + $0x49] sm:$0x1] %vm688, 0.0
      %704 = vst.msk [vmem:[#allocation3 + $0x59] sm:$0x1] %vm688, 0.0
      %705 = vst.msk [vmem:[#allocation3 + $0x69] sm:$0x1] %vm688, 0.0
      %706 = vst.msk [vmem:[#allocation3 + $0x79] sm:$0x1] %vm688, 0.0
      %707 = vst.msk [vmem:[#allocation3 + $0x89] sm:$0x1] %vm688, 0.0
      %708 = vst.msk [vmem:[#allocation3 + $0x99] sm:$0x1] %vm688, 0.0
      %709 = vst.msk [vmem:[#allocation4] sm:$0xff] %vm681, 0.0
      %710 = vst.msk [vmem:[#allocation4 + $0x8] sm:$0x3] %vm683, 0.0
      %s711 = scalar_lea.vmem [#allocation4], 144
      %712 = vst.msk [vmem:[%s711] sm:$0xff] %vm681, 0.0
      %713 = vst.msk [vmem:[%s711 + $0x8] sm:$0x3] %vm683, 0.0
      %714 = vst.msk [vmem:[#allocation4] sm:$0x1] %vm688, 0.0
      %715 = vst.msk [vmem:[#allocation4 + $0x10] sm:$0x1] %vm688, 0.0
      %716 = vst.msk [vmem:[#allocation4 + $0x20] sm:$0x1] %vm688, 0.0
      %717 = vst.msk [vmem:[#allocation4 + $0x30] sm:$0x1] %vm688, 0.0
      %718 = vst.msk [vmem:[#allocation4 + $0x40] sm:$0x1] %vm688, 0.0
      %719 = vst.msk [vmem:[#allocation4 + $0x50] sm:$0x1] %vm688, 0.0
      %720 = vst.msk [vmem:[#allocation4 + $0x60] sm:$0x1] %vm688, 0.0
      %721 = vst.msk [vmem:[#allocation4 + $0x70] sm:$0x1] %vm688, 0.0
      %722 = vst.msk [vmem:[#allocation4 + $0x80] sm:$0x1] %vm688, 0.0
      %723 = vst.msk [vmem:[#allocation4 + $0x90] sm:$0x1] %vm688, 0.0
      %724 = vst.msk [vmem:[#allocation4 + $0x9] sm:$0x1] %vm688, 0.0
      %725 = vst.msk [vmem:[#allocation4 + $0x19] sm:$0x1] %vm688, 0.0
      %726 = vst.msk [vmem:[#allocation4 + $0x29] sm:$0x1] %vm688, 0.0
      %727 = vst.msk [vmem:[#allocation4 + $0x39] sm:$0x1] %vm688, 0.0
      %728 = vst.msk [vmem:[#allocation4 + $0x49] sm:$0x1] %vm688, 0.0
      %729 = vst.msk [vmem:[#allocation4 + $0x59] sm:$0x1] %vm688, 0.0
      %730 = vst.msk [vmem:[#allocation4 + $0x69] sm:$0x1] %vm688, 0.0
      %731 = vst.msk [vmem:[#allocation4 + $0x79] sm:$0x1] %vm688, 0.0
      %732 = vst.msk [vmem:[#allocation4 + $0x89] sm:$0x1] %vm688, 0.0
      %733 = vst.msk [vmem:[#allocation4 + $0x99] sm:$0x1] %vm688, 0.0
      %s734 = scalar_lea.vmem [#allocation2], 16
      %735 = vst.msk [vmem:[%s734 + $0x1] sm:$0xff] %vm629, %v632
      %736 = vst.msk [vmem:[%s734 + $0x11] sm:$0xff] %vm629, %v635
      %737 = vst.msk [vmem:[%s734 + $0x21] sm:$0xff] %vm629, %v638
      %738 = vst.msk [vmem:[%s734 + $0x31] sm:$0xff] %vm629, %v641
      %739 = vst.msk [vmem:[%s734 + $0x41] sm:$0xff] %vm629, %v644
      %740 = vst.msk [vmem:[%s734 + $0x51] sm:$0xff] %vm629, %v647
      %741 = vst.msk [vmem:[%s734 + $0x61] sm:$0xff] %vm629, %v650
      %742 = vst.msk [vmem:[%s734 + $0x71] sm:$0xff] %vm629, %v653
      %v743 = vld [vmem:[#allocation2] sm:$0xff]
      %v744 = vld [vmem:[#allocation2 + $0x10] sm:$0xff]
      %v745 = vld [vmem:[#allocation2 + $0x20] sm:$0xff]
      %v746 = vld [vmem:[#allocation2 + $0x30] sm:$0xff]
      %v747 = vld [vmem:[#allocation2 + $0x40] sm:$0xff]
      %v748 = vld [vmem:[#allocation2 + $0x50] sm:$0xff]
      %v749 = vld [vmem:[#allocation2 + $0x60] sm:$0xff]
      %v750 = vld [vmem:[#allocation2 + $0x70] sm:$0xff]
      %v751 = vld [vmem:[#allocation2 + $0x80] sm:$0xff]
      %v752 = vld [vmem:[#allocation2 + $0x90] sm:$0xff]
      %v753 = vld [vmem:[%s3] sm:$0xf]
      %s754 = scalar_lea.vmem %s3, 12
      %v755 = vld [vmem:[%s754] sm:$0xf]
      %v757 = vsel %vm629, %v744, 0
      %v760 = vsel %vm629, %v745, 0
      %v763 = vsel %vm629, %v746, 0
      %v766 = vsel %vm629, %v747, 0
      %v769 = vsel %vm629, %v748, 0
      %v772 = vsel %vm629, %v749, 0
      %v775 = vsel %vm629, %v750, 0
      %v778 = vsel %vm629, %v751, 0
      %vm780 = vcmask 1043456
      %v782 = vsel %vm780, %v755, 0
      %784 = vmatprep.subr.mxu0 0.0
      %785 = vmatpush1.msra.mxu0 0.0
      %786 = vmatprep.subr.mxu0 0.0
      %787 = vmatpush1.msra.mxu0 0.0
      %788 = vmatprep.subr.mxu0 0.0
      %789 = vmatpush1.msra.mxu0 0.0
      %790 = vmatprep.subr.mxu0 0.0
      %791 = vmatpush1.msra.mxu0 0.0
      %792 = vmatprep.subr.mxu0 0.0
      %793 = vmatpush1.msra.mxu0 0.0
      %794 = vmatprep.subr.mxu0 0.0
      %795 = vmatpush1.msra.mxu0 0.0
      %796 = vmatprep.subr.mxu0 0.0
      %797 = vmatpush1.msra.mxu0 0.0
      %798 = vmatprep.subr.mxu0 0.0
      %799 = vmatpush1.msra.mxu0 0.0
      %800 = vmatprep.subr.mxu0 0.0
      %801 = vmatpush1.msra.mxu0 0.0
      %802 = vmatprep.subr.mxu0 0.0
      %803 = vmatpush1.msra.mxu0 0.0
      %804 = vmatprep.subr.mxu0 0.0
      %805 = vmatpush1.msra.mxu0 0.0
      %806 = vmatprep.subr.mxu0 0.0
      %807 = vmatpush1.msra.mxu0 0.0
      %808 = vmatprep.subr.mxu0 0.0
      %809 = vmatpush1.msra.mxu0 0.0
      %810 = vmatprep.subr.mxu0 0.0
      %811 = vmatpush1.msra.mxu0 0.0
      %812 = vmatprep.subr.mxu0 0.0
      %813 = vmatpush1.msra.mxu0 0.0
      %814 = vmatprep.subr.mxu0 0.0
      %815 = vmatpush1.msra.mxu0 %v782
      %816 = vmatprep.subr.mxu0 0.0
      %817 = vmatpush2.msra.mxu0 0.0
      %818 = vmatprep.subr.mxu0 0.0
      %819 = vmatpush2.msra.mxu0 0.0
      %820 = vmatprep.subr.mxu0 0.0
      %821 = vmatpush2.msra.mxu0 0.0
      %822 = vmatprep.subr.mxu0 0.0
      %823 = vmatpush2.msra.mxu0 0.0
      %824 = vmatprep.subr.mxu0 0.0
      %825 = vmatpush2.msra.mxu0 0.0
      %826 = vmatprep.subr.mxu0 0.0
      %827 = vmatpush2.msra.mxu0 0.0
      %828 = vmatprep.subr.mxu0 0.0
      %829 = vmatpush2.msra.mxu0 0.0
      %830 = vmatprep.subr.mxu0 0.0
      %831 = vmatpush2.msra.mxu0 0.0
      %832 = vmatprep.subr.mxu0 0.0
      %833 = vmatpush2.msra.mxu0 0.0
      %834 = vmatprep.subr.mxu0 0.0
      %835 = vmatpush2.msra.mxu0 0.0
      %836 = vmatprep.subr.mxu0 0.0
      %837 = vmatpush2.msra.mxu0 0.0
      %838 = vmatprep.subr.mxu0 0.0
      %839 = vmatpush2.msra.mxu0 0.0
      %840 = vmatprep.subr.mxu0 0.0
      %841 = vmatpush2.msra.mxu0 0.0
      %842 = vmatprep.subr.mxu0 0.0
      %843 = vmatpush2.msra.mxu0 0.0
      %844 = vmatprep.subr.mxu0 0.0
      %845 = vmatpush2.msra.mxu0 0.0
      %846 = vmatprep.subr.mxu0 0.0
      %847 = vmatpush2.msra.mxu0 0.0
      %848 = vmatprep.mubr.f32.mxu0 0.0
      %849 = vmatmul.mubr.f32.gmra.mxu0 %v757
      %v850 = vpop.f32.mrf.mxu0
      %v851 = vadd.f32 0.0, %v850
      %v852 = vpop.f32.mrf.mxu0
      %853 = vmatprep.mubr.f32.mxu0 0.0
      %854 = vmatmul.mubr.f32.gmra.mxu0 %v760
      %v855 = vpop.f32.mrf.mxu0
      %v856 = vadd.f32 0.0, %v855
      %v857 = vpop.f32.mrf.mxu0
      %858 = vmatprep.mubr.f32.mxu0 0.0
      %859 = vmatmul.mubr.f32.gmra.mxu0 %v763
      %v860 = vpop.f32.mrf.mxu0
      %v861 = vadd.f32 0.0, %v860
      %v862 = vpop.f32.mrf.mxu0
      %863 = vmatprep.mubr.f32.mxu0 0.0
      %864 = vmatmul.mubr.f32.gmra.mxu0 %v766
      %v865 = vpop.f32.mrf.mxu0
      %v866 = vadd.f32 0.0, %v865
      %v867 = vpop.f32.mrf.mxu0
      %868 = vmatprep.mubr.f32.mxu0 0.0
      %869 = vmatmul.mubr.f32.gmra.mxu0 %v769
      %v870 = vpop.f32.mrf.mxu0
      %v871 = vadd.f32 0.0, %v870
      %v872 = vpop.f32.mrf.mxu0
      %873 = vmatprep.mubr.f32.mxu0 0.0
      %874 = vmatmul.mubr.f32.gmra.mxu0 %v772
      %v875 = vpop.f32.mrf.mxu0
      %v876 = vadd.f32 0.0, %v875
      %v877 = vpop.f32.mrf.mxu0
      %878 = vmatprep.mubr.f32.mxu0 0.0
      %879 = vmatmul.mubr.f32.gmra.mxu0 %v775
      %v880 = vpop.f32.mrf.mxu0
      %v881 = vadd.f32 0.0, %v880
      %v882 = vpop.f32.mrf.mxu0
      %883 = vmatprep.mubr.f32.mxu0 0.0
      %884 = vmatmul.mubr.f32.gmra.mxu0 %v778
      %v885 = vpop.f32.mrf.mxu0
      %v886 = vadd.f32 0.0, %v885
      %v887 = vpop.f32.mrf.mxu0
      %888 = vdwg.mxu0
      %v890 = vsel %vm629, %v743, 0
      %v893 = vsel %vm780, %v753, 0
      %895 = vmatprep.subr.mxu0 0.0
      %896 = vmatpush1.msra.mxu0 0.0
      %897 = vmatprep.subr.mxu0 0.0
      %898 = vmatpush1.msra.mxu0 0.0
      %899 = vmatprep.subr.mxu0 0.0
      %900 = vmatpush1.msra.mxu0 0.0
      %901 = vmatprep.subr.mxu0 0.0
      %902 = vmatpush1.msra.mxu0 0.0
      %903 = vmatprep.subr.mxu0 0.0
      %904 = vmatpush1.msra.mxu0 0.0
      %905 = vmatprep.subr.mxu0 0.0
      %906 = vmatpush1.msra.mxu0 0.0
      %907 = vmatprep.subr.mxu0 0.0
      %908 = vmatpush1.msra.mxu0 0.0
      %909 = vmatprep.subr.mxu0 0.0
      %910 = vmatpush1.msra.mxu0 0.0
      %911 = vmatprep.subr.mxu0 0.0
      %912 = vmatpush1.msra.mxu0 0.0
      %913 = vmatprep.subr.mxu0 0.0
      %914 = vmatpush1.msra.mxu0 0.0
      %915 = vmatprep.subr.mxu0 0.0
      %916 = vmatpush1.msra.mxu0 0.0
      %917 = vmatprep.subr.mxu0 0.0
      %918 = vmatpush1.msra.mxu0 0.0
      %919 = vmatprep.subr.mxu0 0.0
      %920 = vmatpush1.msra.mxu0 0.0
      %921 = vmatprep.subr.mxu0 0.0
      %922 = vmatpush1.msra.mxu0 0.0
      %923 = vmatprep.subr.mxu0 0.0
      %924 = vmatpush1.msra.mxu0 0.0
      %925 = vmatprep.subr.mxu0 0.0
      %926 = vmatpush1.msra.mxu0 %v893
      %927 = vmatprep.subr.mxu0 0.0
      %928 = vmatpush2.msra.mxu0 0.0
      %929 = vmatprep.subr.mxu0 0.0
      %930 = vmatpush2.msra.mxu0 0.0
      %931 = vmatprep.subr.mxu0 0.0
      %932 = vmatpush2.msra.mxu0 0.0
      %933 = vmatprep.subr.mxu0 0.0
      %934 = vmatpush2.msra.mxu0 0.0
      %935 = vmatprep.subr.mxu0 0.0
      %936 = vmatpush2.msra.mxu0 0.0
      %937 = vmatprep.subr.mxu0 0.0
      %938 = vmatpush2.msra.mxu0 0.0
      %939 = vmatprep.subr.mxu0 0.0
      %940 = vmatpush2.msra.mxu0 0.0
      %941 = vmatprep.subr.mxu0 0.0
      %942 = vmatpush2.msra.mxu0 0.0
      %943 = vmatprep.subr.mxu0 0.0
      %944 = vmatpush2.msra.mxu0 0.0
      %945 = vmatprep.subr.mxu0 0.0
      %946 = vmatpush2.msra.mxu0 0.0
      %947 = vmatprep.subr.mxu0 0.0
      %948 = vmatpush2.msra.mxu0 0.0
      %949 = vmatprep.subr.mxu0 0.0
      %950 = vmatpush2.msra.mxu0 0.0
      %951 = vmatprep.subr.mxu0 0.0
      %952 = vmatpush2.msra.mxu0 0.0
      %953 = vmatprep.subr.mxu0 0.0
      %954 = vmatpush2.msra.mxu0 0.0
      %955 = vmatprep.subr.mxu0 0.0
      %956 = vmatpush2.msra.mxu0 0.0
      %957 = vmatprep.subr.mxu0 0.0
      %958 = vmatpush2.msra.mxu0 0.0
      %959 = vmatprep.mubr.f32.mxu0 0.0
      %960 = vmatmul.mubr.f32.gmra.mxu0 %v890
      %v961 = vpop.f32.mrf.mxu0
      %v962 = vadd.f32 %v851, %v961
      %v963 = vpop.f32.mrf.mxu0
      %964 = vmatprep.mubr.f32.mxu0 0.0
      %965 = vmatmul.mubr.f32.gmra.mxu0 %v757
      %v966 = vpop.f32.mrf.mxu0
      %v967 = vadd.f32 %v856, %v966
      %v968 = vpop.f32.mrf.mxu0
      %969 = vmatprep.mubr.f32.mxu0 0.0
      %970 = vmatmul.mubr.f32.gmra.mxu0 %v760
      %v971 = vpop.f32.mrf.mxu0
      %v972 = vadd.f32 %v861, %v971
      %v973 = vpop.f32.mrf.mxu0
      %974 = vmatprep.mubr.f32.mxu0 0.0
      %975 = vmatmul.mubr.f32.gmra.mxu0 %v763
      %v976 = vpop.f32.mrf.mxu0
      %v977 = vadd.f32 %v866, %v976
      %v978 = vpop.f32.mrf.mxu0
      %979 = vmatprep.mubr.f32.mxu0 0.0
      %980 = vmatmul.mubr.f32.gmra.mxu0 %v766
      %v981 = vpop.f32.mrf.mxu0
      %v982 = vadd.f32 %v871, %v981
      %v983 = vpop.f32.mrf.mxu0
      %984 = vmatprep.mubr.f32.mxu0 0.0
      %985 = vmatmul.mubr.f32.gmra.mxu0 %v769
      %v986 = vpop.f32.mrf.mxu0
      %v987 = vadd.f32 %v876, %v986
      %v988 = vpop.f32.mrf.mxu0
      %989 = vmatprep.mubr.f32.mxu0 0.0
      %990 = vmatmul.mubr.f32.gmra.mxu0 %v772
      %v991 = vpop.f32.mrf.mxu0
      %v992 = vadd.f32 %v881, %v991
      %v993 = vpop.f32.mrf.mxu0
      %994 = vmatprep.mubr.f32.mxu0 0.0
      %995 = vmatmul.mubr.f32.gmra.mxu0 %v775
      %v996 = vpop.f32.mrf.mxu0
      %v997 = vadd.f32 %v886, %v996
      %v998 = vpop.f32.mrf.mxu0
      %999 = vdwg.mxu0
      %s1000 = scalar_lea.vmem %s3, 24
      %v1001 = vld [vmem:[%s1000] sm:$0xf]
      %v1003 = vsel %vm629, %v752, 0
      %v1006 = vsel %vm780, %v1001, 0
      %1008 = vmatprep.subr.mxu0 0.0
      %1009 = vmatpush1.msra.mxu0 0.0
      %1010 = vmatprep.subr.mxu0 0.0
      %1011 = vmatpush1.msra.mxu0 0.0
      %1012 = vmatprep.subr.mxu0 0.0
      %1013 = vmatpush1.msra.mxu0 0.0
      %1014 = vmatprep.subr.mxu0 0.0
      %1015 = vmatpush1.msra.mxu0 0.0
      %1016 = vmatprep.subr.mxu0 0.0
      %1017 = vmatpush1.msra.mxu0 0.0
      %1018 = vmatprep.subr.mxu0 0.0
      %1019 = vmatpush1.msra.mxu0 0.0
      %1020 = vmatprep.subr.mxu0 0.0
      %1021 = vmatpush1.msra.mxu0 0.0
      %1022 = vmatprep.subr.mxu0 0.0
      %1023 = vmatpush1.msra.mxu0 0.0
      %1024 = vmatprep.subr.mxu0 0.0
      %1025 = vmatpush1.msra.mxu0 0.0
      %1026 = vmatprep.subr.mxu0 0.0
      %1027 = vmatpush1.msra.mxu0 0.0
      %1028 = vmatprep.subr.mxu0 0.0
      %1029 = vmatpush1.msra.mxu0 0.0
      %1030 = vmatprep.subr.mxu0 0.0
      %1031 = vmatpush1.msra.mxu0 0.0
      %1032 = vmatprep.subr.mxu0 0.0
      %1033 = vmatpush1.msra.mxu0 0.0
      %1034 = vmatprep.subr.mxu0 0.0
      %1035 = vmatpush1.msra.mxu0 0.0
      %1036 = vmatprep.subr.mxu0 0.0
      %1037 = vmatpush1.msra.mxu0 0.0
      %1038 = vmatprep.subr.mxu0 0.0
      %1039 = vmatpush1.msra.mxu0 %v1006
      %1040 = vmatprep.subr.mxu0 0.0
      %1041 = vmatpush2.msra.mxu0 0.0
      %1042 = vmatprep.subr.mxu0 0.0
      %1043 = vmatpush2.msra.mxu0 0.0
      %1044 = vmatprep.subr.mxu0 0.0
      %1045 = vmatpush2.msra.mxu0 0.0
      %1046 = vmatprep.subr.mxu0 0.0
      %1047 = vmatpush2.msra.mxu0 0.0
      %1048 = vmatprep.subr.mxu0 0.0
      %1049 = vmatpush2.msra.mxu0 0.0
      %1050 = vmatprep.subr.mxu0 0.0
      %1051 = vmatpush2.msra.mxu0 0.0
      %1052 = vmatprep.subr.mxu0 0.0
      %1053 = vmatpush2.msra.mxu0 0.0
      %1054 = vmatprep.subr.mxu0 0.0
      %1055 = vmatpush2.msra.mxu0 0.0
      %1056 = vmatprep.subr.mxu0 0.0
      %1057 = vmatpush2.msra.mxu0 0.0
      %1058 = vmatprep.subr.mxu0 0.0
      %1059 = vmatpush2.msra.mxu0 0.0
      %1060 = vmatprep.subr.mxu0 0.0
      %1061 = vmatpush2.msra.mxu0 0.0
      %1062 = vmatprep.subr.mxu0 0.0
      %1063 = vmatpush2.msra.mxu0 0.0
      %1064 = vmatprep.subr.mxu0 0.0
      %1065 = vmatpush2.msra.mxu0 0.0
      %1066 = vmatprep.subr.mxu0 0.0
      %1067 = vmatpush2.msra.mxu0 0.0
      %1068 = vmatprep.subr.mxu0 0.0
      %1069 = vmatpush2.msra.mxu0 0.0
      %1070 = vmatprep.subr.mxu0 0.0
      %1071 = vmatpush2.msra.mxu0 0.0
      %1072 = vmatprep.mubr.f32.mxu0 0.0
      %1073 = vmatmul.mubr.f32.gmra.mxu0 %v760
      %v1074 = vpop.f32.mrf.mxu0
      %v1075 = vadd.f32 0.0, %v1074
      %v1076 = vpop.f32.mrf.mxu0
      %1077 = vmatprep.mubr.f32.mxu0 0.0
      %1078 = vmatmul.mubr.f32.gmra.mxu0 %v763
      %v1079 = vpop.f32.mrf.mxu0
      %v1080 = vadd.f32 0.0, %v1079
      %v1081 = vpop.f32.mrf.mxu0
      %1082 = vmatprep.mubr.f32.mxu0 0.0
      %1083 = vmatmul.mubr.f32.gmra.mxu0 %v766
      %v1084 = vpop.f32.mrf.mxu0
      %v1085 = vadd.f32 0.0, %v1084
      %v1086 = vpop.f32.mrf.mxu0
      %1087 = vmatprep.mubr.f32.mxu0 0.0
      %1088 = vmatmul.mubr.f32.gmra.mxu0 %v769
      %v1089 = vpop.f32.mrf.mxu0
      %v1090 = vadd.f32 0.0, %v1089
      %v1091 = vpop.f32.mrf.mxu0
      %1092 = vmatprep.mubr.f32.mxu0 0.0
      %1093 = vmatmul.mubr.f32.gmra.mxu0 %v772
      %v1094 = vpop.f32.mrf.mxu0
      %v1095 = vadd.f32 0.0, %v1094
      %v1096 = vpop.f32.mrf.mxu0
      %1097 = vmatprep.mubr.f32.mxu0 0.0
      %1098 = vmatmul.mubr.f32.gmra.mxu0 %v775
      %v1099 = vpop.f32.mrf.mxu0
      %v1100 = vadd.f32 0.0, %v1099
      %v1101 = vpop.f32.mrf.mxu0
      %1102 = vmatprep.mubr.f32.mxu0 0.0
      %1103 = vmatmul.mubr.f32.gmra.mxu0 %v778
      %v1104 = vpop.f32.mrf.mxu0
      %v1105 = vadd.f32 0.0, %v1104
      %v1106 = vpop.f32.mrf.mxu0
      %1107 = vmatprep.mubr.f32.mxu0 0.0
      %1108 = vmatmul.mubr.f32.gmra.mxu0 %v1003
      %v1109 = vpop.f32.mrf.mxu0
      %v1110 = vadd.f32 0.0, %v1109
      %v1111 = vpop.f32.mrf.mxu0
      %1112 = vdwg.mxu0
      %v1113 = vadd.f32 %v962, %v1075
      %v1114 = vadd.f32 %v967, %v1080
      %v1115 = vadd.f32 %v972, %v1085
      %v1116 = vadd.f32 %v977, %v1090
      %v1117 = vadd.f32 %v982, %v1095
      %v1118 = vadd.f32 %v987, %v1100
      %v1119 = vadd.f32 %v992, %v1105
      %v1120 = vadd.f32 %v997, %v1110
      %v1121 = vld [vmem:[#allocation2 + $0x1] sm:$0xff]
      %v1122 = vld [vmem:[#allocation2 + $0x11] sm:$0xff]
      %v1123 = vld [vmem:[#allocation2 + $0x21] sm:$0xff]
      %v1124 = vld [vmem:[#allocation2 + $0x31] sm:$0xff]
      %v1125 = vld [vmem:[#allocation2 + $0x41] sm:$0xff]
      %v1126 = vld [vmem:[#allocation2 + $0x51] sm:$0xff]
      %v1127 = vld [vmem:[#allocation2 + $0x61] sm:$0xff]
      %v1128 = vld [vmem:[#allocation2 + $0x71] sm:$0xff]
      %v1129 = vld [vmem:[#allocation2 + $0x81] sm:$0xff]
      %v1130 = vld [vmem:[#allocation2 + $0x91] sm:$0xff]
      %s1131 = scalar_lea.vmem %s3, 4
      %v1132 = vld [vmem:[%s1131] sm:$0xf]
      %v1134 = vsel %vm629, %v1121, 0
      %v1137 = vsel %vm629, %v1122, 0
      %v1140 = vsel %vm629, %v1123, 0
      %v1143 = vsel %vm629, %v1124, 0
      %v1146 = vsel %vm629, %v1125, 0
      %v1149 = vsel %vm629, %v1126, 0
      %v1152 = vsel %vm629, %v1127, 0
      %v1155 = vsel %vm629, %v1128, 0
      %v1158 = vsel %vm780, %v1132, 0
      %1160 = vmatprep.subr.mxu0 0.0
      %1161 = vmatpush1.msra.mxu0 0.0
      %1162 = vmatprep.subr.mxu0 0.0
      %1163 = vmatpush1.msra.mxu0 0.0
      %1164 = vmatprep.subr.mxu0 0.0
      %1165 = vmatpush1.msra.mxu0 0.0
      %1166 = vmatprep.subr.mxu0 0.0
      %1167 = vmatpush1.msra.mxu0 0.0
      %1168 = vmatprep.subr.mxu0 0.0
      %1169 = vmatpush1.msra.mxu0 0.0
      %1170 = vmatprep.subr.mxu0 0.0
      %1171 = vmatpush1.msra.mxu0 0.0
      %1172 = vmatprep.subr.mxu0 0.0
      %1173 = vmatpush1.msra.mxu0 0.0
      %1174 = vmatprep.subr.mxu0 0.0
      %1175 = vmatpush1.msra.mxu0 0.0
      %1176 = vmatprep.subr.mxu0 0.0
      %1177 = vmatpush1.msra.mxu0 0.0
      %1178 = vmatprep.subr.mxu0 0.0
      %1179 = vmatpush1.msra.mxu0 0.0
      %1180 = vmatprep.subr.mxu0 0.0
      %1181 = vmatpush1.msra.mxu0 0.0
      %1182 = vmatprep.subr.mxu0 0.0
      %1183 = vmatpush1.msra.mxu0 0.0
      %1184 = vmatprep.subr.mxu0 0.0
      %1185 = vmatpush1.msra.mxu0 0.0
      %1186 = vmatprep.subr.mxu0 0.0
      %1187 = vmatpush1.msra.mxu0 0.0
      %1188 = vmatprep.subr.mxu0 0.0
      %1189 = vmatpush1.msra.mxu0 0.0
      %1190 = vmatprep.subr.mxu0 0.0
      %1191 = vmatpush1.msra.mxu0 %v1158
      %1192 = vmatprep.subr.mxu0 0.0
      %1193 = vmatpush2.msra.mxu0 0.0
      %1194 = vmatprep.subr.mxu0 0.0
      %1195 = vmatpush2.msra.mxu0 0.0
      %1196 = vmatprep.subr.mxu0 0.0
      %1197 = vmatpush2.msra.mxu0 0.0
      %1198 = vmatprep.subr.mxu0 0.0
      %1199 = vmatpush2.msra.mxu0 0.0
      %1200 = vmatprep.subr.mxu0 0.0
      %1201 = vmatpush2.msra.mxu0 0.0
      %1202 = vmatprep.subr.mxu0 0.0
      %1203 = vmatpush2.msra.mxu0 0.0
      %1204 = vmatprep.subr.mxu0 0.0
      %1205 = vmatpush2.msra.mxu0 0.0
      %1206 = vmatprep.subr.mxu0 0.0
      %1207 = vmatpush2.msra.mxu0 0.0
      %1208 = vmatprep.subr.mxu0 0.0
      %1209 = vmatpush2.msra.mxu0 0.0
      %1210 = vmatprep.subr.mxu0 0.0
      %1211 = vmatpush2.msra.mxu0 0.0
      %1212 = vmatprep.subr.mxu0 0.0
      %1213 = vmatpush2.msra.mxu0 0.0
      %1214 = vmatprep.subr.mxu0 0.0
      %1215 = vmatpush2.msra.mxu0 0.0
      %1216 = vmatprep.subr.mxu0 0.0
      %1217 = vmatpush2.msra.mxu0 0.0
      %1218 = vmatprep.subr.mxu0 0.0
      %1219 = vmatpush2.msra.mxu0 0.0
      %1220 = vmatprep.subr.mxu0 0.0
      %1221 = vmatpush2.msra.mxu0 0.0
      %1222 = vmatprep.subr.mxu0 0.0
      %1223 = vmatpush2.msra.mxu0 0.0
      %1224 = vmatprep.mubr.f32.mxu0 0.0
      %1225 = vmatmul.mubr.f32.gmra.mxu0 %v1134
      %v1226 = vpop.f32.mrf.mxu0
      %v1227 = vadd.f32 0.0, %v1226
      %v1228 = vpop.f32.mrf.mxu0
      %1229 = vmatprep.mubr.f32.mxu0 0.0
      %1230 = vmatmul.mubr.f32.gmra.mxu0 %v1137
      %v1231 = vpop.f32.mrf.mxu0
      %v1232 = vadd.f32 0.0, %v1231
      %v1233 = vpop.f32.mrf.mxu0
      %1234 = vmatprep.mubr.f32.mxu0 0.0
      %1235 = vmatmul.mubr.f32.gmra.mxu0 %v1140
      %v1236 = vpop.f32.mrf.mxu0
      %v1237 = vadd.f32 0.0, %v1236
      %v1238 = vpop.f32.mrf.mxu0
      %1239 = vmatprep.mubr.f32.mxu0 0.0
      %1240 = vmatmul.mubr.f32.gmra.mxu0 %v1143
      %v1241 = vpop.f32.mrf.mxu0
      %v1242 = vadd.f32 0.0, %v1241
      %v1243 = vpop.f32.mrf.mxu0
      %1244 = vmatprep.mubr.f32.mxu0 0.0
      %1245 = vmatmul.mubr.f32.gmra.mxu0 %v1146
      %v1246 = vpop.f32.mrf.mxu0
      %v1247 = vadd.f32 0.0, %v1246
      %v1248 = vpop.f32.mrf.mxu0
      %1249 = vmatprep.mubr.f32.mxu0 0.0
      %1250 = vmatmul.mubr.f32.gmra.mxu0 %v1149
      %v1251 = vpop.f32.mrf.mxu0
      %v1252 = vadd.f32 0.0, %v1251
      %v1253 = vpop.f32.mrf.mxu0
      %1254 = vmatprep.mubr.f32.mxu0 0.0
      %1255 = vmatmul.mubr.f32.gmra.mxu0 %v1152
      %v1256 = vpop.f32.mrf.mxu0
      %v1257 = vadd.f32 0.0, %v1256
      %v1258 = vpop.f32.mrf.mxu0
      %1259 = vmatprep.mubr.f32.mxu0 0.0
      %1260 = vmatmul.mubr.f32.gmra.mxu0 %v1155
      %v1261 = vpop.f32.mrf.mxu0
      %v1262 = vadd.f32 0.0, %v1261
      %v1263 = vpop.f32.mrf.mxu0
      %1264 = vdwg.mxu0
      %v1265 = vadd.f32 %v1113, %v1227
      %v1266 = vadd.f32 %v1114, %v1232
      %v1267 = vadd.f32 %v1115, %v1237
      %v1268 = vadd.f32 %v1116, %v1242
      %v1269 = vadd.f32 %v1117, %v1247
      %v1270 = vadd.f32 %v1118, %v1252
      %v1271 = vadd.f32 %v1119, %v1257
      %v1272 = vadd.f32 %v1120, %v1262
      %s1273 = scalar_lea.vmem %s3, 16
      %v1274 = vld [vmem:[%s1273] sm:$0xf]
      %v1276 = vsel %vm629, %v1129, 0
      %v1279 = vsel %vm780, %v1274, 0
      %1281 = vmatprep.subr.mxu0 0.0
      %1282 = vmatpush1.msra.mxu0 0.0
      %1283 = vmatprep.subr.mxu0 0.0
      %1284 = vmatpush1.msra.mxu0 0.0
      %1285 = vmatprep.subr.mxu0 0.0
      %1286 = vmatpush1.msra.mxu0 0.0
      %1287 = vmatprep.subr.mxu0 0.0
      %1288 = vmatpush1.msra.mxu0 0.0
      %1289 = vmatprep.subr.mxu0 0.0
      %1290 = vmatpush1.msra.mxu0 0.0
      %1291 = vmatprep.subr.mxu0 0.0
      %1292 = vmatpush1.msra.mxu0 0.0
      %1293 = vmatprep.subr.mxu0 0.0
      %1294 = vmatpush1.msra.mxu0 0.0
      %1295 = vmatprep.subr.mxu0 0.0
      %1296 = vmatpush1.msra.mxu0 0.0
      %1297 = vmatprep.subr.mxu0 0.0
      %1298 = vmatpush1.msra.mxu0 0.0
      %1299 = vmatprep.subr.mxu0 0.0
      %1300 = vmatpush1.msra.mxu0 0.0
      %1301 = vmatprep.subr.mxu0 0.0
      %1302 = vmatpush1.msra.mxu0 0.0
      %1303 = vmatprep.subr.mxu0 0.0
      %1304 = vmatpush1.msra.mxu0 0.0
      %1305 = vmatprep.subr.mxu0 0.0
      %1306 = vmatpush1.msra.mxu0 0.0
      %1307 = vmatprep.subr.mxu0 0.0
      %1308 = vmatpush1.msra.mxu0 0.0
      %1309 = vmatprep.subr.mxu0 0.0
      %1310 = vmatpush1.msra.mxu0 0.0
      %1311 = vmatprep.subr.mxu0 0.0
      %1312 = vmatpush1.msra.mxu0 %v1279
      %1313 = vmatprep.subr.mxu0 0.0
      %1314 = vmatpush2.msra.mxu0 0.0
      %1315 = vmatprep.subr.mxu0 0.0
      %1316 = vmatpush2.msra.mxu0 0.0
      %1317 = vmatprep.subr.mxu0 0.0
      %1318 = vmatpush2.msra.mxu0 0.0
      %1319 = vmatprep.subr.mxu0 0.0
      %1320 = vmatpush2.msra.mxu0 0.0
      %1321 = vmatprep.subr.mxu0 0.0
      %1322 = vmatpush2.msra.mxu0 0.0
      %1323 = vmatprep.subr.mxu0 0.0
      %1324 = vmatpush2.msra.mxu0 0.0
      %1325 = vmatprep.subr.mxu0 0.0
      %1326 = vmatpush2.msra.mxu0 0.0
      %1327 = vmatprep.subr.mxu0 0.0
      %1328 = vmatpush2.msra.mxu0 0.0
      %1329 = vmatprep.subr.mxu0 0.0
      %1330 = vmatpush2.msra.mxu0 0.0
      %1331 = vmatprep.subr.mxu0 0.0
      %1332 = vmatpush2.msra.mxu0 0.0
      %1333 = vmatprep.subr.mxu0 0.0
      %1334 = vmatpush2.msra.mxu0 0.0
      %1335 = vmatprep.subr.mxu0 0.0
      %1336 = vmatpush2.msra.mxu0 0.0
      %1337 = vmatprep.subr.mxu0 0.0
      %1338 = vmatpush2.msra.mxu0 0.0
      %1339 = vmatprep.subr.mxu0 0.0
      %1340 = vmatpush2.msra.mxu0 0.0
      %1341 = vmatprep.subr.mxu0 0.0
      %1342 = vmatpush2.msra.mxu0 0.0
      %1343 = vmatprep.subr.mxu0 0.0
      %1344 = vmatpush2.msra.mxu0 0.0
      %1345 = vmatprep.mubr.f32.mxu0 0.0
      %1346 = vmatmul.mubr.f32.gmra.mxu0 %v1137
      %v1347 = vpop.f32.mrf.mxu0
      %v1348 = vadd.f32 0.0, %v1347
      %v1349 = vpop.f32.mrf.mxu0
      %1350 = vmatprep.mubr.f32.mxu0 0.0
      %1351 = vmatmul.mubr.f32.gmra.mxu0 %v1140
      %v1352 = vpop.f32.mrf.mxu0
      %v1353 = vadd.f32 0.0, %v1352
      %v1354 = vpop.f32.mrf.mxu0
      %1355 = vmatprep.mubr.f32.mxu0 0.0
      %1356 = vmatmul.mubr.f32.gmra.mxu0 %v1143
      %v1357 = vpop.f32.mrf.mxu0
      %v1358 = vadd.f32 0.0, %v1357
      %v1359 = vpop.f32.mrf.mxu0
      %1360 = vmatprep.mubr.f32.mxu0 0.0
      %1361 = vmatmul.mubr.f32.gmra.mxu0 %v1146
      %v1362 = vpop.f32.mrf.mxu0
      %v1363 = vadd.f32 0.0, %v1362
      %v1364 = vpop.f32.mrf.mxu0
      %1365 = vmatprep.mubr.f32.mxu0 0.0
      %1366 = vmatmul.mubr.f32.gmra.mxu0 %v1149
      %v1367 = vpop.f32.mrf.mxu0
      %v1368 = vadd.f32 0.0, %v1367
      %v1369 = vpop.f32.mrf.mxu0
      %1370 = vmatprep.mubr.f32.mxu0 0.0
      %1371 = vmatmul.mubr.f32.gmra.mxu0 %v1152
      %v1372 = vpop.f32.mrf.mxu0
      %v1373 = vadd.f32 0.0, %v1372
      %v1374 = vpop.f32.mrf.mxu0
      %1375 = vmatprep.mubr.f32.mxu0 0.0
      %1376 = vmatmul.mubr.f32.gmra.mxu0 %v1155
      %v1377 = vpop.f32.mrf.mxu0
      %v1378 = vadd.f32 0.0, %v1377
      %v1379 = vpop.f32.mrf.mxu0
      %1380 = vmatprep.mubr.f32.mxu0 0.0
      %1381 = vmatmul.mubr.f32.gmra.mxu0 %v1276
      %v1382 = vpop.f32.mrf.mxu0
      %v1383 = vadd.f32 0.0, %v1382
      %v1384 = vpop.f32.mrf.mxu0
      %1385 = vdwg.mxu0
      %v1386 = vadd.f32 %v1265, %v1348
      %v1387 = vadd.f32 %v1266, %v1353
      %v1388 = vadd.f32 %v1267, %v1358
      %v1389 = vadd.f32 %v1268, %v1363
      %v1390 = vadd.f32 %v1269, %v1368
      %v1391 = vadd.f32 %v1270, %v1373
      %v1392 = vadd.f32 %v1271, %v1378
      %v1393 = vadd.f32 %v1272, %v1383
      %s1394 = scalar_lea.vmem %s3, 28
      %v1395 = vld [vmem:[%s1394] sm:$0xf]
      %v1397 = vsel %vm629, %v1130, 0
      %v1400 = vsel %vm780, %v1395, 0
      %1402 = vmatprep.subr.mxu0 0.0
      %1403 = vmatpush1.msra.mxu0 0.0
      %1404 = vmatprep.subr.mxu0 0.0
      %1405 = vmatpush1.msra.mxu0 0.0
      %1406 = vmatprep.subr.mxu0 0.0
      %1407 = vmatpush1.msra.mxu0 0.0
      %1408 = vmatprep.subr.mxu0 0.0
      %1409 = vmatpush1.msra.mxu0 0.0
      %1410 = vmatprep.subr.mxu0 0.0
      %1411 = vmatpush1.msra.mxu0 0.0
      %1412 = vmatprep.subr.mxu0 0.0
      %1413 = vmatpush1.msra.mxu0 0.0
      %1414 = vmatprep.subr.mxu0 0.0
      %1415 = vmatpush1.msra.mxu0 0.0
      %1416 = vmatprep.subr.mxu0 0.0
      %1417 = vmatpush1.msra.mxu0 0.0
      %1418 = vmatprep.subr.mxu0 0.0
      %1419 = vmatpush1.msra.mxu0 0.0
      %1420 = vmatprep.subr.mxu0 0.0
      %1421 = vmatpush1.msra.mxu0 0.0
      %1422 = vmatprep.subr.mxu0 0.0
      %1423 = vmatpush1.msra.mxu0 0.0
      %1424 = vmatprep.subr.mxu0 0.0
      %1425 = vmatpush1.msra.mxu0 0.0
      %1426 = vmatprep.subr.mxu0 0.0
      %1427 = vmatpush1.msra.mxu0 0.0
      %1428 = vmatprep.subr.mxu0 0.0
      %1429 = vmatpush1.msra.mxu0 0.0
      %1430 = vmatprep.subr.mxu0 0.0
      %1431 = vmatpush1.msra.mxu0 0.0
      %1432 = vmatprep.subr.mxu0 0.0
      %1433 = vmatpush1.msra.mxu0 %v1400
      %1434 = vmatprep.subr.mxu0 0.0
      %1435 = vmatpush2.msra.mxu0 0.0
      %1436 = vmatprep.subr.mxu0 0.0
      %1437 = vmatpush2.msra.mxu0 0.0
      %1438 = vmatprep.subr.mxu0 0.0
      %1439 = vmatpush2.msra.mxu0 0.0
      %1440 = vmatprep.subr.mxu0 0.0
      %1441 = vmatpush2.msra.mxu0 0.0
      %1442 = vmatprep.subr.mxu0 0.0
      %1443 = vmatpush2.msra.mxu0 0.0
      %1444 = vmatprep.subr.mxu0 0.0
      %1445 = vmatpush2.msra.mxu0 0.0
      %1446 = vmatprep.subr.mxu0 0.0
      %1447 = vmatpush2.msra.mxu0 0.0
      %1448 = vmatprep.subr.mxu0 0.0
      %1449 = vmatpush2.msra.mxu0 0.0
      %1450 = vmatprep.subr.mxu0 0.0
      %1451 = vmatpush2.msra.mxu0 0.0
      %1452 = vmatprep.subr.mxu0 0.0
      %1453 = vmatpush2.msra.mxu0 0.0
      %1454 = vmatprep.subr.mxu0 0.0
      %1455 = vmatpush2.msra.mxu0 0.0
      %1456 = vmatprep.subr.mxu0 0.0
      %1457 = vmatpush2.msra.mxu0 0.0
      %1458 = vmatprep.subr.mxu0 0.0
      %1459 = vmatpush2.msra.mxu0 0.0
      %1460 = vmatprep.subr.mxu0 0.0
      %1461 = vmatpush2.msra.mxu0 0.0
      %1462 = vmatprep.subr.mxu0 0.0
      %1463 = vmatpush2.msra.mxu0 0.0
      %1464 = vmatprep.subr.mxu0 0.0
      %1465 = vmatpush2.msra.mxu0 0.0
      %1466 = vmatprep.mubr.f32.mxu0 0.0
      %1467 = vmatmul.mubr.f32.gmra.mxu0 %v1140
      %v1468 = vpop.f32.mrf.mxu0
      %v1469 = vadd.f32 0.0, %v1468
      %v1470 = vpop.f32.mrf.mxu0
      %1471 = vmatprep.mubr.f32.mxu0 0.0
      %1472 = vmatmul.mubr.f32.gmra.mxu0 %v1143
      %v1473 = vpop.f32.mrf.mxu0
      %v1474 = vadd.f32 0.0, %v1473
      %v1475 = vpop.f32.mrf.mxu0
      %1476 = vmatprep.mubr.f32.mxu0 0.0
      %1477 = vmatmul.mubr.f32.gmra.mxu0 %v1146
      %v1478 = vpop.f32.mrf.mxu0
      %v1479 = vadd.f32 0.0, %v1478
      %v1480 = vpop.f32.mrf.mxu0
      %1481 = vmatprep.mubr.f32.mxu0 0.0
      %1482 = vmatmul.mubr.f32.gmra.mxu0 %v1149
      %v1483 = vpop.f32.mrf.mxu0
      %v1484 = vadd.f32 0.0, %v1483
      %v1485 = vpop.f32.mrf.mxu0
      %1486 = vmatprep.mubr.f32.mxu0 0.0
      %1487 = vmatmul.mubr.f32.gmra.mxu0 %v1152
      %v1488 = vpop.f32.mrf.mxu0
      %v1489 = vadd.f32 0.0, %v1488
      %v1490 = vpop.f32.mrf.mxu0
      %1491 = vmatprep.mubr.f32.mxu0 0.0
      %1492 = vmatmul.mubr.f32.gmra.mxu0 %v1155
      %v1493 = vpop.f32.mrf.mxu0
      %v1494 = vadd.f32 0.0, %v1493
      %v1495 = vpop.f32.mrf.mxu0
      %1496 = vmatprep.mubr.f32.mxu0 0.0
      %1497 = vmatmul.mubr.f32.gmra.mxu0 %v1276
      %v1498 = vpop.f32.mrf.mxu0
      %v1499 = vadd.f32 0.0, %v1498
      %v1500 = vpop.f32.mrf.mxu0
      %1501 = vmatprep.mubr.f32.mxu0 0.0
      %1502 = vmatmul.mubr.f32.gmra.mxu0 %v1397
      %v1503 = vpop.f32.mrf.mxu0
      %v1504 = vadd.f32 0.0, %v1503
      %v1505 = vpop.f32.mrf.mxu0
      %1506 = vdwg.mxu0
      %v1507 = vadd.f32 %v1386, %v1469
      %v1508 = vadd.f32 %v1387, %v1474
      %v1509 = vadd.f32 %v1388, %v1479
      %v1510 = vadd.f32 %v1389, %v1484
      %v1511 = vadd.f32 %v1390, %v1489
      %v1512 = vadd.f32 %v1391, %v1494
      %v1513 = vadd.f32 %v1392, %v1499
      %v1514 = vadd.f32 %v1393, %v1504
      %v1515 = vld [vmem:[#allocation2 + $0x2] sm:$0xff]
      %v1516 = vld [vmem:[#allocation2 + $0x12] sm:$0xff]
      %v1517 = vld [vmem:[#allocation2 + $0x22] sm:$0xff]
      %v1518 = vld [vmem:[#allocation2 + $0x32] sm:$0xff]
      %v1519 = vld [vmem:[#allocation2 + $0x42] sm:$0xff]
      %v1520 = vld [vmem:[#allocation2 + $0x52] sm:$0xff]
      %v1521 = vld [vmem:[#allocation2 + $0x62] sm:$0xff]
      %v1522 = vld [vmem:[#allocation2 + $0x72] sm:$0xff]
      %v1523 = vld [vmem:[#allocation2 + $0x82] sm:$0xff]
      %v1524 = vld [vmem:[#allocation2 + $0x92] sm:$0xff]
      %s1525 = scalar_lea.vmem %s3, 8
      %v1526 = vld [vmem:[%s1525] sm:$0xf]
      %v1528 = vsel %vm629, %v1515, 0
      %v1531 = vsel %vm629, %v1516, 0
      %v1534 = vsel %vm629, %v1517, 0
      %v1537 = vsel %vm629, %v1518, 0
      %v1540 = vsel %vm629, %v1519, 0
      %v1543 = vsel %vm629, %v1520, 0
      %v1546 = vsel %vm629, %v1521, 0
      %v1549 = vsel %vm629, %v1522, 0
      %v1552 = vsel %vm780, %v1526, 0
      %1554 = vmatprep.subr.mxu0 0.0
      %1555 = vmatpush1.msra.mxu0 0.0
      %1556 = vmatprep.subr.mxu0 0.0
      %1557 = vmatpush1.msra.mxu0 0.0
      %1558 = vmatprep.subr.mxu0 0.0
      %1559 = vmatpush1.msra.mxu0 0.0
      %1560 = vmatprep.subr.mxu0 0.0
      %1561 = vmatpush1.msra.mxu0 0.0
      %1562 = vmatprep.subr.mxu0 0.0
      %1563 = vmatpush1.msra.mxu0 0.0
      %1564 = vmatprep.subr.mxu0 0.0
      %1565 = vmatpush1.msra.mxu0 0.0
      %1566 = vmatprep.subr.mxu0 0.0
      %1567 = vmatpush1.msra.mxu0 0.0
      %1568 = vmatprep.subr.mxu0 0.0
      %1569 = vmatpush1.msra.mxu0 0.0
      %1570 = vmatprep.subr.mxu0 0.0
      %1571 = vmatpush1.msra.mxu0 0.0
      %1572 = vmatprep.subr.mxu0 0.0
      %1573 = vmatpush1.msra.mxu0 0.0
      %1574 = vmatprep.subr.mxu0 0.0
      %1575 = vmatpush1.msra.mxu0 0.0
      %1576 = vmatprep.subr.mxu0 0.0
      %1577 = vmatpush1.msra.mxu0 0.0
      %1578 = vmatprep.subr.mxu0 0.0
      %1579 = vmatpush1.msra.mxu0 0.0
      %1580 = vmatprep.subr.mxu0 0.0
      %1581 = vmatpush1.msra.mxu0 0.0
      %1582 = vmatprep.subr.mxu0 0.0
      %1583 = vmatpush1.msra.mxu0 0.0
      %1584 = vmatprep.subr.mxu0 0.0
      %1585 = vmatpush1.msra.mxu0 %v1552
      %1586 = vmatprep.subr.mxu0 0.0
      %1587 = vmatpush2.msra.mxu0 0.0
      %1588 = vmatprep.subr.mxu0 0.0
      %1589 = vmatpush2.msra.mxu0 0.0
      %1590 = vmatprep.subr.mxu0 0.0
      %1591 = vmatpush2.msra.mxu0 0.0
      %1592 = vmatprep.subr.mxu0 0.0
      %1593 = vmatpush2.msra.mxu0 0.0
      %1594 = vmatprep.subr.mxu0 0.0
      %1595 = vmatpush2.msra.mxu0 0.0
      %1596 = vmatprep.subr.mxu0 0.0
      %1597 = vmatpush2.msra.mxu0 0.0
      %1598 = vmatprep.subr.mxu0 0.0
      %1599 = vmatpush2.msra.mxu0 0.0
      %1600 = vmatprep.subr.mxu0 0.0
      %1601 = vmatpush2.msra.mxu0 0.0
      %1602 = vmatprep.subr.mxu0 0.0
      %1603 = vmatpush2.msra.mxu0 0.0
      %1604 = vmatprep.subr.mxu0 0.0
      %1605 = vmatpush2.msra.mxu0 0.0
      %1606 = vmatprep.subr.mxu0 0.0
      %1607 = vmatpush2.msra.mxu0 0.0
      %1608 = vmatprep.subr.mxu0 0.0
      %1609 = vmatpush2.msra.mxu0 0.0
      %1610 = vmatprep.subr.mxu0 0.0
      %1611 = vmatpush2.msra.mxu0 0.0
      %1612 = vmatprep.subr.mxu0 0.0
      %1613 = vmatpush2.msra.mxu0 0.0
      %1614 = vmatprep.subr.mxu0 0.0
      %1615 = vmatpush2.msra.mxu0 0.0
      %1616 = vmatprep.subr.mxu0 0.0
      %1617 = vmatpush2.msra.mxu0 0.0
      %1618 = vmatprep.mubr.f32.mxu0 0.0
      %1619 = vmatmul.mubr.f32.gmra.mxu0 %v1528
      %v1620 = vpop.f32.mrf.mxu0
      %v1621 = vadd.f32 0.0, %v1620
      %v1622 = vpop.f32.mrf.mxu0
      %1623 = vmatprep.mubr.f32.mxu0 0.0
      %1624 = vmatmul.mubr.f32.gmra.mxu0 %v1531
      %v1625 = vpop.f32.mrf.mxu0
      %v1626 = vadd.f32 0.0, %v1625
      %v1627 = vpop.f32.mrf.mxu0
      %1628 = vmatprep.mubr.f32.mxu0 0.0
      %1629 = vmatmul.mubr.f32.gmra.mxu0 %v1534
      %v1630 = vpop.f32.mrf.mxu0
      %v1631 = vadd.f32 0.0, %v1630
      %v1632 = vpop.f32.mrf.mxu0
      %1633 = vmatprep.mubr.f32.mxu0 0.0
      %1634 = vmatmul.mubr.f32.gmra.mxu0 %v1537
      %v1635 = vpop.f32.mrf.mxu0
      %v1636 = vadd.f32 0.0, %v1635
      %v1637 = vpop.f32.mrf.mxu0
      %1638 = vmatprep.mubr.f32.mxu0 0.0
      %1639 = vmatmul.mubr.f32.gmra.mxu0 %v1540
      %v1640 = vpop.f32.mrf.mxu0
      %v1641 = vadd.f32 0.0, %v1640
      %v1642 = vpop.f32.mrf.mxu0
      %1643 = vmatprep.mubr.f32.mxu0 0.0
      %1644 = vmatmul.mubr.f32.gmra.mxu0 %v1543
      %v1645 = vpop.f32.mrf.mxu0
      %v1646 = vadd.f32 0.0, %v1645
      %v1647 = vpop.f32.mrf.mxu0
      %1648 = vmatprep.mubr.f32.mxu0 0.0
      %1649 = vmatmul.mubr.f32.gmra.mxu0 %v1546
      %v1650 = vpop.f32.mrf.mxu0
      %v1651 = vadd.f32 0.0, %v1650
      %v1652 = vpop.f32.mrf.mxu0
      %1653 = vmatprep.mubr.f32.mxu0 0.0
      %1654 = vmatmul.mubr.f32.gmra.mxu0 %v1549
      %v1655 = vpop.f32.mrf.mxu0
      %v1656 = vadd.f32 0.0, %v1655
      %v1657 = vpop.f32.mrf.mxu0
      %1658 = vdwg.mxu0
      %v1659 = vadd.f32 %v1507, %v1621
      %v1660 = vadd.f32 %v1508, %v1626
      %v1661 = vadd.f32 %v1509, %v1631
      %v1662 = vadd.f32 %v1510, %v1636
      %v1663 = vadd.f32 %v1511, %v1641
      %v1664 = vadd.f32 %v1512, %v1646
      %v1665 = vadd.f32 %v1513, %v1651
      %v1666 = vadd.f32 %v1514, %v1656
      %s1667 = scalar_lea.vmem %s3, 20
      %v1668 = vld [vmem:[%s1667] sm:$0xf]
      %v1670 = vsel %vm629, %v1523, 0
      %v1673 = vsel %vm780, %v1668, 0
      %1675 = vmatprep.subr.mxu0 0.0
      %1676 = vmatpush1.msra.mxu0 0.0
      %1677 = vmatprep.subr.mxu0 0.0
      %1678 = vmatpush1.msra.mxu0 0.0
      %1679 = vmatprep.subr.mxu0 0.0
      %1680 = vmatpush1.msra.mxu0 0.0
      %1681 = vmatprep.subr.mxu0 0.0
      %1682 = vmatpush1.msra.mxu0 0.0
      %1683 = vmatprep.subr.mxu0 0.0
      %1684 = vmatpush1.msra.mxu0 0.0
      %1685 = vmatprep.subr.mxu0 0.0
      %1686 = vmatpush1.msra.mxu0 0.0
      %1687 = vmatprep.subr.mxu0 0.0
      %1688 = vmatpush1.msra.mxu0 0.0
      %1689 = vmatprep.subr.mxu0 0.0
      %1690 = vmatpush1.msra.mxu0 0.0
      %1691 = vmatprep.subr.mxu0 0.0
      %1692 = vmatpush1.msra.mxu0 0.0
      %1693 = vmatprep.subr.mxu0 0.0
      %1694 = vmatpush1.msra.mxu0 0.0
      %1695 = vmatprep.subr.mxu0 0.0
      %1696 = vmatpush1.msra.mxu0 0.0
      %1697 = vmatprep.subr.mxu0 0.0
      %1698 = vmatpush1.msra.mxu0 0.0
      %1699 = vmatprep.subr.mxu0 0.0
      %1700 = vmatpush1.msra.mxu0 0.0
      %1701 = vmatprep.subr.mxu0 0.0
      %1702 = vmatpush1.msra.mxu0 0.0
      %1703 = vmatprep.subr.mxu0 0.0
      %1704 = vmatpush1.msra.mxu0 0.0
      %1705 = vmatprep.subr.mxu0 0.0
      %1706 = vmatpush1.msra.mxu0 %v1673
      %1707 = vmatprep.subr.mxu0 0.0
      %1708 = vmatpush2.msra.mxu0 0.0
      %1709 = vmatprep.subr.mxu0 0.0
      %1710 = vmatpush2.msra.mxu0 0.0
      %1711 = vmatprep.subr.mxu0 0.0
      %1712 = vmatpush2.msra.mxu0 0.0
      %1713 = vmatprep.subr.mxu0 0.0
      %1714 = vmatpush2.msra.mxu0 0.0
      %1715 = vmatprep.subr.mxu0 0.0
      %1716 = vmatpush2.msra.mxu0 0.0
      %1717 = vmatprep.subr.mxu0 0.0
      %1718 = vmatpush2.msra.mxu0 0.0
      %1719 = vmatprep.subr.mxu0 0.0
      %1720 = vmatpush2.msra.mxu0 0.0
      %1721 = vmatprep.subr.mxu0 0.0
      %1722 = vmatpush2.msra.mxu0 0.0
      %1723 = vmatprep.subr.mxu0 0.0
      %1724 = vmatpush2.msra.mxu0 0.0
      %1725 = vmatprep.subr.mxu0 0.0
      %1726 = vmatpush2.msra.mxu0 0.0
      %1727 = vmatprep.subr.mxu0 0.0
      %1728 = vmatpush2.msra.mxu0 0.0
      %1729 = vmatprep.subr.mxu0 0.0
      %1730 = vmatpush2.msra.mxu0 0.0
      %1731 = vmatprep.subr.mxu0 0.0
      %1732 = vmatpush2.msra.mxu0 0.0
      %1733 = vmatprep.subr.mxu0 0.0
      %1734 = vmatpush2.msra.mxu0 0.0
      %1735 = vmatprep.subr.mxu0 0.0
      %1736 = vmatpush2.msra.mxu0 0.0
      %1737 = vmatprep.subr.mxu0 0.0
      %1738 = vmatpush2.msra.mxu0 0.0
      %1739 = vmatprep.mubr.f32.mxu0 0.0
      %1740 = vmatmul.mubr.f32.gmra.mxu0 %v1531
      %v1741 = vpop.f32.mrf.mxu0
      %v1742 = vadd.f32 0.0, %v1741
      %v1743 = vpop.f32.mrf.mxu0
      %1744 = vmatprep.mubr.f32.mxu0 0.0
      %1745 = vmatmul.mubr.f32.gmra.mxu0 %v1534
      %v1746 = vpop.f32.mrf.mxu0
      %v1747 = vadd.f32 0.0, %v1746
      %v1748 = vpop.f32.mrf.mxu0
      %1749 = vmatprep.mubr.f32.mxu0 0.0
      %1750 = vmatmul.mubr.f32.gmra.mxu0 %v1537
      %v1751 = vpop.f32.mrf.mxu0
      %v1752 = vadd.f32 0.0, %v1751
      %v1753 = vpop.f32.mrf.mxu0
      %1754 = vmatprep.mubr.f32.mxu0 0.0
      %1755 = vmatmul.mubr.f32.gmra.mxu0 %v1540
      %v1756 = vpop.f32.mrf.mxu0
      %v1757 = vadd.f32 0.0, %v1756
      %v1758 = vpop.f32.mrf.mxu0
      %1759 = vmatprep.mubr.f32.mxu0 0.0
      %1760 = vmatmul.mubr.f32.gmra.mxu0 %v1543
      %v1761 = vpop.f32.mrf.mxu0
      %v1762 = vadd.f32 0.0, %v1761
      %v1763 = vpop.f32.mrf.mxu0
      %1764 = vmatprep.mubr.f32.mxu0 0.0
      %1765 = vmatmul.mubr.f32.gmra.mxu0 %v1546
      %v1766 = vpop.f32.mrf.mxu0
      %v1767 = vadd.f32 0.0, %v1766
      %v1768 = vpop.f32.mrf.mxu0
      %1769 = vmatprep.mubr.f32.mxu0 0.0
      %1770 = vmatmul.mubr.f32.gmra.mxu0 %v1549
      %v1771 = vpop.f32.mrf.mxu0
      %v1772 = vadd.f32 0.0, %v1771
      %v1773 = vpop.f32.mrf.mxu0
      %1774 = vmatprep.mubr.f32.mxu0 0.0
      %1775 = vmatmul.mubr.f32.gmra.mxu0 %v1670
      %v1776 = vpop.f32.mrf.mxu0
      %v1777 = vadd.f32 0.0, %v1776
      %v1778 = vpop.f32.mrf.mxu0
      %1779 = vdwg.mxu0
      %v1780 = vadd.f32 %v1659, %v1742
      %v1781 = vadd.f32 %v1660, %v1747
      %v1782 = vadd.f32 %v1661, %v1752
      %v1783 = vadd.f32 %v1662, %v1757
      %v1784 = vadd.f32 %v1663, %v1762
      %v1785 = vadd.f32 %v1664, %v1767
      %v1786 = vadd.f32 %v1665, %v1772
      %v1787 = vadd.f32 %v1666, %v1777
      %s1788 = scalar_lea.vmem %s3, 32
      %v1789 = vld [vmem:[%s1788] sm:$0xf]
      %v1791 = vsel %vm629, %v1524, 0
      %v1794 = vsel %vm780, %v1789, 0
      %1796 = vmatprep.subr.mxu0 0.0
      %1797 = vmatpush1.msra.mxu0 0.0
      %1798 = vmatprep.subr.mxu0 0.0
      %1799 = vmatpush1.msra.mxu0 0.0
      %1800 = vmatprep.subr.mxu0 0.0
      %1801 = vmatpush1.msra.mxu0 0.0
      %1802 = vmatprep.subr.mxu0 0.0
      %1803 = vmatpush1.msra.mxu0 0.0
      %1804 = vmatprep.subr.mxu0 0.0
      %1805 = vmatpush1.msra.mxu0 0.0
      %1806 = vmatprep.subr.mxu0 0.0
      %1807 = vmatpush1.msra.mxu0 0.0
      %1808 = vmatprep.subr.mxu0 0.0
      %1809 = vmatpush1.msra.mxu0 0.0
      %1810 = vmatprep.subr.mxu0 0.0
      %1811 = vmatpush1.msra.mxu0 0.0
      %1812 = vmatprep.subr.mxu0 0.0
      %1813 = vmatpush1.msra.mxu0 0.0
      %1814 = vmatprep.subr.mxu0 0.0
      %1815 = vmatpush1.msra.mxu0 0.0
      %1816 = vmatprep.subr.mxu0 0.0
      %1817 = vmatpush1.msra.mxu0 0.0
      %1818 = vmatprep.subr.mxu0 0.0
      %1819 = vmatpush1.msra.mxu0 0.0
      %1820 = vmatprep.subr.mxu0 0.0
      %1821 = vmatpush1.msra.mxu0 0.0
      %1822 = vmatprep.subr.mxu0 0.0
      %1823 = vmatpush1.msra.mxu0 0.0
      %1824 = vmatprep.subr.mxu0 0.0
      %1825 = vmatpush1.msra.mxu0 0.0
      %1826 = vmatprep.subr.mxu0 0.0
      %1827 = vmatpush1.msra.mxu0 %v1794
      %1828 = vmatprep.subr.mxu0 0.0
      %1829 = vmatpush2.msra.mxu0 0.0
      %1830 = vmatprep.subr.mxu0 0.0
      %1831 = vmatpush2.msra.mxu0 0.0
      %1832 = vmatprep.subr.mxu0 0.0
      %1833 = vmatpush2.msra.mxu0 0.0
      %1834 = vmatprep.subr.mxu0 0.0
      %1835 = vmatpush2.msra.mxu0 0.0
      %1836 = vmatprep.subr.mxu0 0.0
      %1837 = vmatpush2.msra.mxu0 0.0
      %1838 = vmatprep.subr.mxu0 0.0
      %1839 = vmatpush2.msra.mxu0 0.0
      %1840 = vmatprep.subr.mxu0 0.0
      %1841 = vmatpush2.msra.mxu0 0.0
      %1842 = vmatprep.subr.mxu0 0.0
      %1843 = vmatpush2.msra.mxu0 0.0
      %1844 = vmatprep.subr.mxu0 0.0
      %1845 = vmatpush2.msra.mxu0 0.0
      %1846 = vmatprep.subr.mxu0 0.0
      %1847 = vmatpush2.msra.mxu0 0.0
      %1848 = vmatprep.subr.mxu0 0.0
      %1849 = vmatpush2.msra.mxu0 0.0
      %1850 = vmatprep.subr.mxu0 0.0
      %1851 = vmatpush2.msra.mxu0 0.0
      %1852 = vmatprep.subr.mxu0 0.0
      %1853 = vmatpush2.msra.mxu0 0.0
      %1854 = vmatprep.subr.mxu0 0.0
      %1855 = vmatpush2.msra.mxu0 0.0
      %1856 = vmatprep.subr.mxu0 0.0
      %1857 = vmatpush2.msra.mxu0 0.0
      %1858 = vmatprep.subr.mxu0 0.0
      %1859 = vmatpush2.msra.mxu0 0.0
      %1860 = vmatprep.mubr.f32.mxu0 0.0
      %1861 = vmatmul.mubr.f32.gmra.mxu0 %v1534
      %v1862 = vpop.f32.mrf.mxu0
      %v1863 = vadd.f32 0.0, %v1862
      %v1864 = vpop.f32.mrf.mxu0
      %1865 = vmatprep.mubr.f32.mxu0 0.0
      %1866 = vmatmul.mubr.f32.gmra.mxu0 %v1537
      %v1867 = vpop.f32.mrf.mxu0
      %v1868 = vadd.f32 0.0, %v1867
      %v1869 = vpop.f32.mrf.mxu0
      %1870 = vmatprep.mubr.f32.mxu0 0.0
      %1871 = vmatmul.mubr.f32.gmra.mxu0 %v1540
      %v1872 = vpop.f32.mrf.mxu0
      %v1873 = vadd.f32 0.0, %v1872
      %v1874 = vpop.f32.mrf.mxu0
      %1875 = vmatprep.mubr.f32.mxu0 0.0
      %1876 = vmatmul.mubr.f32.gmra.mxu0 %v1543
      %v1877 = vpop.f32.mrf.mxu0
      %v1878 = vadd.f32 0.0, %v1877
      %v1879 = vpop.f32.mrf.mxu0
      %1880 = vmatprep.mubr.f32.mxu0 0.0
      %1881 = vmatmul.mubr.f32.gmra.mxu0 %v1546
      %v1882 = vpop.f32.mrf.mxu0
      %v1883 = vadd.f32 0.0, %v1882
      %v1884 = vpop.f32.mrf.mxu0
      %1885 = vmatprep.mubr.f32.mxu0 0.0
      %1886 = vmatmul.mubr.f32.gmra.mxu0 %v1549
      %v1887 = vpop.f32.mrf.mxu0
      %v1888 = vadd.f32 0.0, %v1887
      %v1889 = vpop.f32.mrf.mxu0
      %1890 = vmatprep.mubr.f32.mxu0 0.0
      %1891 = vmatmul.mubr.f32.gmra.mxu0 %v1670
      %v1892 = vpop.f32.mrf.mxu0
      %v1893 = vadd.f32 0.0, %v1892
      %v1894 = vpop.f32.mrf.mxu0
      %1895 = vmatprep.mubr.f32.mxu0 0.0
      %1896 = vmatmul.mubr.f32.gmra.mxu0 %v1791
      %v1897 = vpop.f32.mrf.mxu0
      %v1898 = vadd.f32 0.0, %v1897
      %v1899 = vpop.f32.mrf.mxu0
      %1900 = vdwg.mxu0
      %v1901 = vadd.f32 %v1780, %v1863
      %v1902 = vadd.f32 %v1781, %v1868
      %v1903 = vadd.f32 %v1782, %v1873
      %v1904 = vadd.f32 %v1783, %v1878
      %v1905 = vadd.f32 %v1784, %v1883
      %v1906 = vadd.f32 %v1785, %v1888
      %v1907 = vadd.f32 %v1786, %v1893
      %v1908 = vadd.f32 %v1787, %v1898
      %v1909 = vld [vmem:[%s4] sm:$0x1]
      %v1911 = vlaneseq
      %v1912 = vshrl.u32 %v1911, 7
      %v1913 = vsub.s32 0, %v1912
      %v1914 = vrot.slane %v1909, %v1913
      %v1916 = vadd.f32 %v1901, %v1914
      %v1917 = vadd.f32 %v1902, %v1914
      %v1918 = vadd.f32 %v1903, %v1914
      %v1919 = vadd.f32 %v1904, %v1914
      %v1920 = vadd.f32 %v1905, %v1914
      %v1921 = vadd.f32 %v1906, %v1914
      %v1922 = vadd.f32 %v1907, %v1914
      %v1923 = vadd.f32 %v1908, %v1914
      %v1924 = vmax.f32 %v1916, 0.0
      %v1925 = vmax.f32 %v1917, 0.0
      %v1926 = vmax.f32 %v1918, 0.0
      %v1927 = vmax.f32 %v1919, 0.0
      %v1928 = vmax.f32 %v1920, 0.0
      %v1929 = vmax.f32 %v1921, 0.0
      %v1930 = vmax.f32 %v1922, 0.0
      %v1931 = vmax.f32 %v1923, 0.0
      %s1932 = scalar_lea.vmem [#allocation3], 16
      %1933 = vst.msk [vmem:[%s1932 + $0x1] sm:$0xff] %vm681, %v1924
      %1934 = vst.msk [vmem:[%s1932 + $0x11] sm:$0xff] %vm681, %v1925
      %1935 = vst.msk [vmem:[%s1932 + $0x21] sm:$0xff] %vm681, %v1926
      %1936 = vst.msk [vmem:[%s1932 + $0x31] sm:$0xff] %vm681, %v1927
      %1937 = vst.msk [vmem:[%s1932 + $0x41] sm:$0xff] %vm681, %v1928
      %1938 = vst.msk [vmem:[%s1932 + $0x51] sm:$0xff] %vm681, %v1929
      %1939 = vst.msk [vmem:[%s1932 + $0x61] sm:$0xff] %vm681, %v1930
      %1940 = vst.msk [vmem:[%s1932 + $0x71] sm:$0xff] %vm681, %v1931
      %v1941 = vld [vmem:[%s512] sm:$0xff]
      %v1942 = vld [vmem:[%s512 + $0x8] sm:$0xff]
      %v1943 = vld [vmem:[%s512 + $0x10] sm:$0xff]
      %v1944 = vld [vmem:[%s512 + $0x18] sm:$0xff]
      %v1945 = vld [vmem:[%s512 + $0x20] sm:$0xff]
      %v1946 = vld [vmem:[%s512 + $0x28] sm:$0xff]
      %v1947 = vld [vmem:[%s512 + $0x30] sm:$0xff]
      %v1948 = vld [vmem:[%s512 + $0x38] sm:$0xff]
      %s1949 = scalar_lea.vmem [#allocation4], 16
      %1950 = vst.msk [vmem:[%s1949 + $0x1] sm:$0xff] %vm681, %v1941
      %1951 = vst.msk [vmem:[%s1949 + $0x11] sm:$0xff] %vm681, %v1942
      %1952 = vst.msk [vmem:[%s1949 + $0x21] sm:$0xff] %vm681, %v1943
      %1953 = vst.msk [vmem:[%s1949 + $0x31] sm:$0xff] %vm681, %v1944
      %1954 = vst.msk [vmem:[%s1949 + $0x41] sm:$0xff] %vm681, %v1945
      %1955 = vst.msk [vmem:[%s1949 + $0x51] sm:$0xff] %vm681, %v1946
      %1956 = vst.msk [vmem:[%s1949 + $0x61] sm:$0xff] %vm681, %v1947
      %1957 = vst.msk [vmem:[%s1949 + $0x71] sm:$0xff] %vm681, %v1948
      %v1958 = vld [vmem:[#allocation3] sm:$0xff]
      %v1959 = vld [vmem:[#allocation3 + $0x10] sm:$0xff]
      %v1960 = vld [vmem:[#allocation3 + $0x20] sm:$0xff]
      %v1961 = vld [vmem:[#allocation3 + $0x30] sm:$0xff]
      %v1962 = vld [vmem:[#allocation3 + $0x40] sm:$0xff]
      %v1963 = vld [vmem:[#allocation3 + $0x50] sm:$0xff]
      %v1964 = vld [vmem:[#allocation3 + $0x60] sm:$0xff]
      %v1965 = vld [vmem:[#allocation3 + $0x70] sm:$0xff]
      %v1966 = vld [vmem:[#allocation3 + $0x80] sm:$0xff]
      %v1967 = vld [vmem:[#allocation3 + $0x90] sm:$0xff]
      %v1968 = vld [vmem:[%s5] sm:$0xff]
      %s1969 = scalar_lea.vmem %s5, 24
      %v1970 = vld [vmem:[%s1969] sm:$0xff]
      %v1972 = vsel %vm681, %v1959, 0
      %v1975 = vsel %vm681, %v1960, 0
      %v1978 = vsel %vm681, %v1961, 0
      %v1981 = vsel %vm681, %v1962, 0
      %v1984 = vsel %vm681, %v1963, 0
      %v1987 = vsel %vm681, %v1964, 0
      %v1990 = vsel %vm681, %v1965, 0
      %v1993 = vsel %vm681, %v1966, 0
      %1995 = vmatprep.subr.mxu0 0.0
      %1996 = vmatpush1.msra.mxu0 0.0
      %1997 = vmatprep.subr.mxu0 0.0
      %1998 = vmatpush1.msra.mxu0 0.0
      %1999 = vmatprep.subr.mxu0 0.0
      %2000 = vmatpush1.msra.mxu0 0.0
      %2001 = vmatprep.subr.mxu0 0.0
      %2002 = vmatpush1.msra.mxu0 0.0
      %2003 = vmatprep.subr.mxu0 0.0
      %2004 = vmatpush1.msra.mxu0 0.0
      %2005 = vmatprep.subr.mxu0 0.0
      %2006 = vmatpush1.msra.mxu0 0.0
      %2007 = vmatprep.subr.mxu0 0.0
      %2008 = vmatpush1.msra.mxu0 0.0
      %2009 = vmatprep.subr.mxu0 0.0
      %2010 = vmatpush1.msra.mxu0 0.0
      %2011 = vmatprep.subr.mxu0 0.0
      %2012 = vmatpush1.msra.mxu0 0.0
      %2013 = vmatprep.subr.mxu0 0.0
      %2014 = vmatpush1.msra.mxu0 0.0
      %2015 = vmatprep.subr.mxu0 0.0
      %2016 = vmatpush1.msra.mxu0 0.0
      %2017 = vmatprep.subr.mxu0 0.0
      %2018 = vmatpush1.msra.mxu0 0.0
      %2019 = vmatprep.subr.mxu0 0.0
      %2020 = vmatpush1.msra.mxu0 0.0
      %2021 = vmatprep.subr.mxu0 0.0
      %2022 = vmatpush1.msra.mxu0 0.0
      %2023 = vmatprep.subr.mxu0 0.0
      %2024 = vmatpush1.msra.mxu0 0.0
      %2025 = vmatprep.subr.mxu0 0.0
      %2026 = vmatpush1.msra.mxu0 %v1970
      %2027 = vmatprep.subr.mxu0 0.0
      %2028 = vmatpush2.msra.mxu0 0.0
      %2029 = vmatprep.subr.mxu0 0.0
      %2030 = vmatpush2.msra.mxu0 0.0
      %2031 = vmatprep.subr.mxu0 0.0
      %2032 = vmatpush2.msra.mxu0 0.0
      %2033 = vmatprep.subr.mxu0 0.0
      %2034 = vmatpush2.msra.mxu0 0.0
      %2035 = vmatprep.subr.mxu0 0.0
      %2036 = vmatpush2.msra.mxu0 0.0
      %2037 = vmatprep.subr.mxu0 0.0
      %2038 = vmatpush2.msra.mxu0 0.0
      %2039 = vmatprep.subr.mxu0 0.0
      %2040 = vmatpush2.msra.mxu0 0.0
      %2041 = vmatprep.subr.mxu0 0.0
      %2042 = vmatpush2.msra.mxu0 0.0
      %2043 = vmatprep.subr.mxu0 0.0
      %2044 = vmatpush2.msra.mxu0 0.0
      %2045 = vmatprep.subr.mxu0 0.0
      %2046 = vmatpush2.msra.mxu0 0.0
      %2047 = vmatprep.subr.mxu0 0.0
      %2048 = vmatpush2.msra.mxu0 0.0
      %2049 = vmatprep.subr.mxu0 0.0
      %2050 = vmatpush2.msra.mxu0 0.0
      %2051 = vmatprep.subr.mxu0 0.0
      %2052 = vmatpush2.msra.mxu0 0.0
      %2053 = vmatprep.subr.mxu0 0.0
      %2054 = vmatpush2.msra.mxu0 0.0
      %2055 = vmatprep.subr.mxu0 0.0
      %2056 = vmatpush2.msra.mxu0 0.0
      %2057 = vmatprep.subr.mxu0 0.0
      %2058 = vmatpush2.msra.mxu0 0.0
      %2059 = vmatprep.mubr.f32.mxu0 0.0
      %2060 = vmatmul.mubr.f32.gmra.mxu0 %v1972
      %v2061 = vpop.f32.mrf.mxu0
      %v2062 = vadd.f32 0.0, %v2061
      %v2063 = vpop.f32.mrf.mxu0
      %2064 = vmatprep.mubr.f32.mxu0 0.0
      %2065 = vmatmul.mubr.f32.gmra.mxu0 %v1975
      %v2066 = vpop.f32.mrf.mxu0
      %v2067 = vadd.f32 0.0, %v2066
      %v2068 = vpop.f32.mrf.mxu0
      %2069 = vmatprep.mubr.f32.mxu0 0.0
      %2070 = vmatmul.mubr.f32.gmra.mxu0 %v1978
      %v2071 = vpop.f32.mrf.mxu0
      %v2072 = vadd.f32 0.0, %v2071
      %v2073 = vpop.f32.mrf.mxu0
      %2074 = vmatprep.mubr.f32.mxu0 0.0
      %2075 = vmatmul.mubr.f32.gmra.mxu0 %v1981
      %v2076 = vpop.f32.mrf.mxu0
      %v2077 = vadd.f32 0.0, %v2076
      %v2078 = vpop.f32.mrf.mxu0
      %2079 = vmatprep.mubr.f32.mxu0 0.0
      %2080 = vmatmul.mubr.f32.gmra.mxu0 %v1984
      %v2081 = vpop.f32.mrf.mxu0
      %v2082 = vadd.f32 0.0, %v2081
      %v2083 = vpop.f32.mrf.mxu0
      %2084 = vmatprep.mubr.f32.mxu0 0.0
      %2085 = vmatmul.mubr.f32.gmra.mxu0 %v1987
      %v2086 = vpop.f32.mrf.mxu0
      %v2087 = vadd.f32 0.0, %v2086
      %v2088 = vpop.f32.mrf.mxu0
      %2089 = vmatprep.mubr.f32.mxu0 0.0
      %2090 = vmatmul.mubr.f32.gmra.mxu0 %v1990
      %v2091 = vpop.f32.mrf.mxu0
      %v2092 = vadd.f32 0.0, %v2091
      %v2093 = vpop.f32.mrf.mxu0
      %2094 = vmatprep.mubr.f32.mxu0 0.0
      %2095 = vmatmul.mubr.f32.gmra.mxu0 %v1993
      %v2096 = vpop.f32.mrf.mxu0
      %v2097 = vadd.f32 0.0, %v2096
      %v2098 = vpop.f32.mrf.mxu0
      %2099 = vdwg.mxu0
      %v2101 = vsel %vm681, %v1958, 0
      %2103 = vmatprep.subr.mxu0 0.0
      %2104 = vmatpush1.msra.mxu0 0.0
      %2105 = vmatprep.subr.mxu0 0.0
      %2106 = vmatpush1.msra.mxu0 0.0
      %2107 = vmatprep.subr.mxu0 0.0
      %2108 = vmatpush1.msra.mxu0 0.0
      %2109 = vmatprep.subr.mxu0 0.0
      %2110 = vmatpush1.msra.mxu0 0.0
      %2111 = vmatprep.subr.mxu0 0.0
      %2112 = vmatpush1.msra.mxu0 0.0
      %2113 = vmatprep.subr.mxu0 0.0
      %2114 = vmatpush1.msra.mxu0 0.0
      %2115 = vmatprep.subr.mxu0 0.0
      %2116 = vmatpush1.msra.mxu0 0.0
      %2117 = vmatprep.subr.mxu0 0.0
      %2118 = vmatpush1.msra.mxu0 0.0
      %2119 = vmatprep.subr.mxu0 0.0
      %2120 = vmatpush1.msra.mxu0 0.0
      %2121 = vmatprep.subr.mxu0 0.0
      %2122 = vmatpush1.msra.mxu0 0.0
      %2123 = vmatprep.subr.mxu0 0.0
      %2124 = vmatpush1.msra.mxu0 0.0
      %2125 = vmatprep.subr.mxu0 0.0
      %2126 = vmatpush1.msra.mxu0 0.0
      %2127 = vmatprep.subr.mxu0 0.0
      %2128 = vmatpush1.msra.mxu0 0.0
      %2129 = vmatprep.subr.mxu0 0.0
      %2130 = vmatpush1.msra.mxu0 0.0
      %2131 = vmatprep.subr.mxu0 0.0
      %2132 = vmatpush1.msra.mxu0 0.0
      %2133 = vmatprep.subr.mxu0 0.0
      %2134 = vmatpush1.msra.mxu0 %v1968
      %2135 = vmatprep.subr.mxu0 0.0
      %2136 = vmatpush2.msra.mxu0 0.0
      %2137 = vmatprep.subr.mxu0 0.0
      %2138 = vmatpush2.msra.mxu0 0.0
      %2139 = vmatprep.subr.mxu0 0.0
      %2140 = vmatpush2.msra.mxu0 0.0
      %2141 = vmatprep.subr.mxu0 0.0
      %2142 = vmatpush2.msra.mxu0 0.0
      %2143 = vmatprep.subr.mxu0 0.0
      %2144 = vmatpush2.msra.mxu0 0.0
      %2145 = vmatprep.subr.mxu0 0.0
      %2146 = vmatpush2.msra.mxu0 0.0
      %2147 = vmatprep.subr.mxu0 0.0
      %2148 = vmatpush2.msra.mxu0 0.0
      %2149 = vmatprep.subr.mxu0 0.0
      %2150 = vmatpush2.msra.mxu0 0.0
      %2151 = vmatprep.subr.mxu0 0.0
      %2152 = vmatpush2.msra.mxu0 0.0
      %2153 = vmatprep.subr.mxu0 0.0
      %2154 = vmatpush2.msra.mxu0 0.0
      %2155 = vmatprep.subr.mxu0 0.0
      %2156 = vmatpush2.msra.mxu0 0.0
      %2157 = vmatprep.subr.mxu0 0.0
      %2158 = vmatpush2.msra.mxu0 0.0
      %2159 = vmatprep.subr.mxu0 0.0
      %2160 = vmatpush2.msra.mxu0 0.0
      %2161 = vmatprep.subr.mxu0 0.0
      %2162 = vmatpush2.msra.mxu0 0.0
      %2163 = vmatprep.subr.mxu0 0.0
      %2164 = vmatpush2.msra.mxu0 0.0
      %2165 = vmatprep.subr.mxu0 0.0
      %2166 = vmatpush2.msra.mxu0 0.0
      %2167 = vmatprep.mubr.f32.mxu0 0.0
      %2168 = vmatmul.mubr.f32.gmra.mxu0 %v2101
      %v2169 = vpop.f32.mrf.mxu0
      %v2170 = vadd.f32 %v2062, %v2169
      %v2171 = vpop.f32.mrf.mxu0
      %2172 = vmatprep.mubr.f32.mxu0 0.0
      %2173 = vmatmul.mubr.f32.gmra.mxu0 %v1972
      %v2174 = vpop.f32.mrf.mxu0
      %v2175 = vadd.f32 %v2067, %v2174
      %v2176 = vpop.f32.mrf.mxu0
      %2177 = vmatprep.mubr.f32.mxu0 0.0
      %2178 = vmatmul.mubr.f32.gmra.mxu0 %v1975
      %v2179 = vpop.f32.mrf.mxu0
      %v2180 = vadd.f32 %v2072, %v2179
      %v2181 = vpop.f32.mrf.mxu0
      %2182 = vmatprep.mubr.f32.mxu0 0.0
      %2183 = vmatmul.mubr.f32.gmra.mxu0 %v1978
      %v2184 = vpop.f32.mrf.mxu0
      %v2185 = vadd.f32 %v2077, %v2184
      %v2186 = vpop.f32.mrf.mxu0
      %2187 = vmatprep.mubr.f32.mxu0 0.0
      %2188 = vmatmul.mubr.f32.gmra.mxu0 %v1981
      %v2189 = vpop.f32.mrf.mxu0
      %v2190 = vadd.f32 %v2082, %v2189
      %v2191 = vpop.f32.mrf.mxu0
      %2192 = vmatprep.mubr.f32.mxu0 0.0
      %2193 = vmatmul.mubr.f32.gmra.mxu0 %v1984
      %v2194 = vpop.f32.mrf.mxu0
      %v2195 = vadd.f32 %v2087, %v2194
      %v2196 = vpop.f32.mrf.mxu0
      %2197 = vmatprep.mubr.f32.mxu0 0.0
      %2198 = vmatmul.mubr.f32.gmra.mxu0 %v1987
      %v2199 = vpop.f32.mrf.mxu0
      %v2200 = vadd.f32 %v2092, %v2199
      %v2201 = vpop.f32.mrf.mxu0
      %2202 = vmatprep.mubr.f32.mxu0 0.0
      %2203 = vmatmul.mubr.f32.gmra.mxu0 %v1990
      %v2204 = vpop.f32.mrf.mxu0
      %v2205 = vadd.f32 %v2097, %v2204
      %v2206 = vpop.f32.mrf.mxu0
      %2207 = vdwg.mxu0
      %s2208 = scalar_lea.vmem %s5, 48
      %v2209 = vld [vmem:[%s2208] sm:$0xff]
      %v2211 = vsel %vm681, %v1967, 0
      %2213 = vmatprep.subr.mxu0 0.0
      %2214 = vmatpush1.msra.mxu0 0.0
      %2215 = vmatprep.subr.mxu0 0.0
      %2216 = vmatpush1.msra.mxu0 0.0
      %2217 = vmatprep.subr.mxu0 0.0
      %2218 = vmatpush1.msra.mxu0 0.0
      %2219 = vmatprep.subr.mxu0 0.0
      %2220 = vmatpush1.msra.mxu0 0.0
      %2221 = vmatprep.subr.mxu0 0.0
      %2222 = vmatpush1.msra.mxu0 0.0
      %2223 = vmatprep.subr.mxu0 0.0
      %2224 = vmatpush1.msra.mxu0 0.0
      %2225 = vmatprep.subr.mxu0 0.0
      %2226 = vmatpush1.msra.mxu0 0.0
      %2227 = vmatprep.subr.mxu0 0.0
      %2228 = vmatpush1.msra.mxu0 0.0
      %2229 = vmatprep.subr.mxu0 0.0
      %2230 = vmatpush1.msra.mxu0 0.0
      %2231 = vmatprep.subr.mxu0 0.0
      %2232 = vmatpush1.msra.mxu0 0.0
      %2233 = vmatprep.subr.mxu0 0.0
      %2234 = vmatpush1.msra.mxu0 0.0
      %2235 = vmatprep.subr.mxu0 0.0
      %2236 = vmatpush1.msra.mxu0 0.0
      %2237 = vmatprep.subr.mxu0 0.0
      %2238 = vmatpush1.msra.mxu0 0.0
      %2239 = vmatprep.subr.mxu0 0.0
      %2240 = vmatpush1.msra.mxu0 0.0
      %2241 = vmatprep.subr.mxu0 0.0
      %2242 = vmatpush1.msra.mxu0 0.0
      %2243 = vmatprep.subr.mxu0 0.0
      %2244 = vmatpush1.msra.mxu0 %v2209
      %2245 = vmatprep.subr.mxu0 0.0
      %2246 = vmatpush2.msra.mxu0 0.0
      %2247 = vmatprep.subr.mxu0 0.0
      %2248 = vmatpush2.msra.mxu0 0.0
      %2249 = vmatprep.subr.mxu0 0.0
      %2250 = vmatpush2.msra.mxu0 0.0
      %2251 = vmatprep.subr.mxu0 0.0
      %2252 = vmatpush2.msra.mxu0 0.0
      %2253 = vmatprep.subr.mxu0 0.0
      %2254 = vmatpush2.msra.mxu0 0.0
      %2255 = vmatprep.subr.mxu0 0.0
      %2256 = vmatpush2.msra.mxu0 0.0
      %2257 = vmatprep.subr.mxu0 0.0
      %2258 = vmatpush2.msra.mxu0 0.0
      %2259 = vmatprep.subr.mxu0 0.0
      %2260 = vmatpush2.msra.mxu0 0.0
      %2261 = vmatprep.subr.mxu0 0.0
      %2262 = vmatpush2.msra.mxu0 0.0
      %2263 = vmatprep.subr.mxu0 0.0
      %2264 = vmatpush2.msra.mxu0 0.0
      %2265 = vmatprep.subr.mxu0 0.0
      %2266 = vmatpush2.msra.mxu0 0.0
      %2267 = vmatprep.subr.mxu0 0.0
      %2268 = vmatpush2.msra.mxu0 0.0
      %2269 = vmatprep.subr.mxu0 0.0
      %2270 = vmatpush2.msra.mxu0 0.0
      %2271 = vmatprep.subr.mxu0 0.0
      %2272 = vmatpush2.msra.mxu0 0.0
      %2273 = vmatprep.subr.mxu0 0.0
      %2274 = vmatpush2.msra.mxu0 0.0
      %2275 = vmatprep.subr.mxu0 0.0
      %2276 = vmatpush2.msra.mxu0 0.0
      %2277 = vmatprep.mubr.f32.mxu0 0.0
      %2278 = vmatmul.mubr.f32.gmra.mxu0 %v1975
      %v2279 = vpop.f32.mrf.mxu0
      %v2280 = vadd.f32 0.0, %v2279
      %v2281 = vpop.f32.mrf.mxu0
      %2282 = vmatprep.mubr.f32.mxu0 0.0
      %2283 = vmatmul.mubr.f32.gmra.mxu0 %v1978
      %v2284 = vpop.f32.mrf.mxu0
      %v2285 = vadd.f32 0.0, %v2284
      %v2286 = vpop.f32.mrf.mxu0
      %2287 = vmatprep.mubr.f32.mxu0 0.0
      %2288 = vmatmul.mubr.f32.gmra.mxu0 %v1981
      %v2289 = vpop.f32.mrf.mxu0
      %v2290 = vadd.f32 0.0, %v2289
      %v2291 = vpop.f32.mrf.mxu0
      %2292 = vmatprep.mubr.f32.mxu0 0.0
      %2293 = vmatmul.mubr.f32.gmra.mxu0 %v1984
      %v2294 = vpop.f32.mrf.mxu0
      %v2295 = vadd.f32 0.0, %v2294
      %v2296 = vpop.f32.mrf.mxu0
      %2297 = vmatprep.mubr.f32.mxu0 0.0
      %2298 = vmatmul.mubr.f32.gmra.mxu0 %v1987
      %v2299 = vpop.f32.mrf.mxu0
      %v2300 = vadd.f32 0.0, %v2299
      %v2301 = vpop.f32.mrf.mxu0
      %2302 = vmatprep.mubr.f32.mxu0 0.0
      %2303 = vmatmul.mubr.f32.gmra.mxu0 %v1990
      %v2304 = vpop.f32.mrf.mxu0
      %v2305 = vadd.f32 0.0, %v2304
      %v2306 = vpop.f32.mrf.mxu0
      %2307 = vmatprep.mubr.f32.mxu0 0.0
      %2308 = vmatmul.mubr.f32.gmra.mxu0 %v1993
      %v2309 = vpop.f32.mrf.mxu0
      %v2310 = vadd.f32 0.0, %v2309
      %v2311 = vpop.f32.mrf.mxu0
      %2312 = vmatprep.mubr.f32.mxu0 0.0
      %2313 = vmatmul.mubr.f32.gmra.mxu0 %v2211
      %v2314 = vpop.f32.mrf.mxu0
      %v2315 = vadd.f32 0.0, %v2314
      %v2316 = vpop.f32.mrf.mxu0
      %2317 = vdwg.mxu0
      %v2318 = vadd.f32 %v2170, %v2280
      %v2319 = vadd.f32 %v2175, %v2285
      %v2320 = vadd.f32 %v2180, %v2290
      %v2321 = vadd.f32 %v2185, %v2295
      %v2322 = vadd.f32 %v2190, %v2300
      %v2323 = vadd.f32 %v2195, %v2305
      %v2324 = vadd.f32 %v2200, %v2310
      %v2325 = vadd.f32 %v2205, %v2315
      %v2326 = vld [vmem:[#allocation3 + $0x1] sm:$0xff]
      %v2327 = vld [vmem:[#allocation3 + $0x11] sm:$0xff]
      %v2328 = vld [vmem:[#allocation3 + $0x21] sm:$0xff]
      %v2329 = vld [vmem:[#allocation3 + $0x31] sm:$0xff]
      %v2330 = vld [vmem:[#allocation3 + $0x41] sm:$0xff]
      %v2331 = vld [vmem:[#allocation3 + $0x51] sm:$0xff]
      %v2332 = vld [vmem:[#allocation3 + $0x61] sm:$0xff]
      %v2333 = vld [vmem:[#allocation3 + $0x71] sm:$0xff]
      %v2334 = vld [vmem:[#allocation3 + $0x81] sm:$0xff]
      %v2335 = vld [vmem:[#allocation3 + $0x91] sm:$0xff]
      %s2336 = scalar_lea.vmem %s5, 8
      %v2337 = vld [vmem:[%s2336] sm:$0xff]
      %v2339 = vsel %vm681, %v2326, 0
      %v2342 = vsel %vm681, %v2327, 0
      %v2345 = vsel %vm681, %v2328, 0
      %v2348 = vsel %vm681, %v2329, 0
      %v2351 = vsel %vm681, %v2330, 0
      %v2354 = vsel %vm681, %v2331, 0
      %v2357 = vsel %vm681, %v2332, 0
      %v2360 = vsel %vm681, %v2333, 0
      %2362 = vmatprep.subr.mxu0 0.0
      %2363 = vmatpush1.msra.mxu0 0.0
      %2364 = vmatprep.subr.mxu0 0.0
      %2365 = vmatpush1.msra.mxu0 0.0
      %2366 = vmatprep.subr.mxu0 0.0
      %2367 = vmatpush1.msra.mxu0 0.0
      %2368 = vmatprep.subr.mxu0 0.0
      %2369 = vmatpush1.msra.mxu0 0.0
      %2370 = vmatprep.subr.mxu0 0.0
      %2371 = vmatpush1.msra.mxu0 0.0
      %2372 = vmatprep.subr.mxu0 0.0
      %2373 = vmatpush1.msra.mxu0 0.0
      %2374 = vmatprep.subr.mxu0 0.0
      %2375 = vmatpush1.msra.mxu0 0.0
      %2376 = vmatprep.subr.mxu0 0.0
      %2377 = vmatpush1.msra.mxu0 0.0
      %2378 = vmatprep.subr.mxu0 0.0
      %2379 = vmatpush1.msra.mxu0 0.0
      %2380 = vmatprep.subr.mxu0 0.0
      %2381 = vmatpush1.msra.mxu0 0.0
      %2382 = vmatprep.subr.mxu0 0.0
      %2383 = vmatpush1.msra.mxu0 0.0
      %2384 = vmatprep.subr.mxu0 0.0
      %2385 = vmatpush1.msra.mxu0 0.0
      %2386 = vmatprep.subr.mxu0 0.0
      %2387 = vmatpush1.msra.mxu0 0.0
      %2388 = vmatprep.subr.mxu0 0.0
      %2389 = vmatpush1.msra.mxu0 0.0
      %2390 = vmatprep.subr.mxu0 0.0
      %2391 = vmatpush1.msra.mxu0 0.0
      %2392 = vmatprep.subr.mxu0 0.0
      %2393 = vmatpush1.msra.mxu0 %v2337
      %2394 = vmatprep.subr.mxu0 0.0
      %2395 = vmatpush2.msra.mxu0 0.0
      %2396 = vmatprep.subr.mxu0 0.0
      %2397 = vmatpush2.msra.mxu0 0.0
      %2398 = vmatprep.subr.mxu0 0.0
      %2399 = vmatpush2.msra.mxu0 0.0
      %2400 = vmatprep.subr.mxu0 0.0
      %2401 = vmatpush2.msra.mxu0 0.0
      %2402 = vmatprep.subr.mxu0 0.0
      %2403 = vmatpush2.msra.mxu0 0.0
      %2404 = vmatprep.subr.mxu0 0.0
      %2405 = vmatpush2.msra.mxu0 0.0
      %2406 = vmatprep.subr.mxu0 0.0
      %2407 = vmatpush2.msra.mxu0 0.0
      %2408 = vmatprep.subr.mxu0 0.0
      %2409 = vmatpush2.msra.mxu0 0.0
      %2410 = vmatprep.subr.mxu0 0.0
      %2411 = vmatpush2.msra.mxu0 0.0
      %2412 = vmatprep.subr.mxu0 0.0
      %2413 = vmatpush2.msra.mxu0 0.0
      %2414 = vmatprep.subr.mxu0 0.0
      %2415 = vmatpush2.msra.mxu0 0.0
      %2416 = vmatprep.subr.mxu0 0.0
      %2417 = vmatpush2.msra.mxu0 0.0
      %2418 = vmatprep.subr.mxu0 0.0
      %2419 = vmatpush2.msra.mxu0 0.0
      %2420 = vmatprep.subr.mxu0 0.0
      %2421 = vmatpush2.msra.mxu0 0.0
      %2422 = vmatprep.subr.mxu0 0.0
      %2423 = vmatpush2.msra.mxu0 0.0
      %2424 = vmatprep.subr.mxu0 0.0
      %2425 = vmatpush2.msra.mxu0 0.0
      %2426 = vmatprep.mubr.f32.mxu0 0.0
      %2427 = vmatmul.mubr.f32.gmra.mxu0 %v2339
      %v2428 = vpop.f32.mrf.mxu0
      %v2429 = vadd.f32 0.0, %v2428
      %v2430 = vpop.f32.mrf.mxu0
      %2431 = vmatprep.mubr.f32.mxu0 0.0
      %2432 = vmatmul.mubr.f32.gmra.mxu0 %v2342
      %v2433 = vpop.f32.mrf.mxu0
      %v2434 = vadd.f32 0.0, %v2433
      %v2435 = vpop.f32.mrf.mxu0
      %2436 = vmatprep.mubr.f32.mxu0 0.0
      %2437 = vmatmul.mubr.f32.gmra.mxu0 %v2345
      %v2438 = vpop.f32.mrf.mxu0
      %v2439 = vadd.f32 0.0, %v2438
      %v2440 = vpop.f32.mrf.mxu0
      %2441 = vmatprep.mubr.f32.mxu0 0.0
      %2442 = vmatmul.mubr.f32.gmra.mxu0 %v2348
      %v2443 = vpop.f32.mrf.mxu0
      %v2444 = vadd.f32 0.0, %v2443
      %v2445 = vpop.f32.mrf.mxu0
      %2446 = vmatprep.mubr.f32.mxu0 0.0
      %2447 = vmatmul.mubr.f32.gmra.mxu0 %v2351
      %v2448 = vpop.f32.mrf.mxu0
      %v2449 = vadd.f32 0.0, %v2448
      %v2450 = vpop.f32.mrf.mxu0
      %2451 = vmatprep.mubr.f32.mxu0 0.0
      %2452 = vmatmul.mubr.f32.gmra.mxu0 %v2354
      %v2453 = vpop.f32.mrf.mxu0
      %v2454 = vadd.f32 0.0, %v2453
      %v2455 = vpop.f32.mrf.mxu0
      %2456 = vmatprep.mubr.f32.mxu0 0.0
      %2457 = vmatmul.mubr.f32.gmra.mxu0 %v2357
      %v2458 = vpop.f32.mrf.mxu0
      %v2459 = vadd.f32 0.0, %v2458
      %v2460 = vpop.f32.mrf.mxu0
      %2461 = vmatprep.mubr.f32.mxu0 0.0
      %2462 = vmatmul.mubr.f32.gmra.mxu0 %v2360
      %v2463 = vpop.f32.mrf.mxu0
      %v2464 = vadd.f32 0.0, %v2463
      %v2465 = vpop.f32.mrf.mxu0
      %2466 = vdwg.mxu0
      %v2467 = vadd.f32 %v2318, %v2429
      %v2468 = vadd.f32 %v2319, %v2434
      %v2469 = vadd.f32 %v2320, %v2439
      %v2470 = vadd.f32 %v2321, %v2444
      %v2471 = vadd.f32 %v2322, %v2449
      %v2472 = vadd.f32 %v2323, %v2454
      %v2473 = vadd.f32 %v2324, %v2459
      %v2474 = vadd.f32 %v2325, %v2464
      %s2475 = scalar_lea.vmem %s5, 32
      %v2476 = vld [vmem:[%s2475] sm:$0xff]
      %v2478 = vsel %vm681, %v2334, 0
      %2480 = vmatprep.subr.mxu0 0.0
      %2481 = vmatpush1.msra.mxu0 0.0
      %2482 = vmatprep.subr.mxu0 0.0
      %2483 = vmatpush1.msra.mxu0 0.0
      %2484 = vmatprep.subr.mxu0 0.0
      %2485 = vmatpush1.msra.mxu0 0.0
      %2486 = vmatprep.subr.mxu0 0.0
      %2487 = vmatpush1.msra.mxu0 0.0
      %2488 = vmatprep.subr.mxu0 0.0
      %2489 = vmatpush1.msra.mxu0 0.0
      %2490 = vmatprep.subr.mxu0 0.0
      %2491 = vmatpush1.msra.mxu0 0.0
      %2492 = vmatprep.subr.mxu0 0.0
      %2493 = vmatpush1.msra.mxu0 0.0
      %2494 = vmatprep.subr.mxu0 0.0
      %2495 = vmatpush1.msra.mxu0 0.0
      %2496 = vmatprep.subr.mxu0 0.0
      %2497 = vmatpush1.msra.mxu0 0.0
      %2498 = vmatprep.subr.mxu0 0.0
      %2499 = vmatpush1.msra.mxu0 0.0
      %2500 = vmatprep.subr.mxu0 0.0
      %2501 = vmatpush1.msra.mxu0 0.0
      %2502 = vmatprep.subr.mxu0 0.0
      %2503 = vmatpush1.msra.mxu0 0.0
      %2504 = vmatprep.subr.mxu0 0.0
      %2505 = vmatpush1.msra.mxu0 0.0
      %2506 = vmatprep.subr.mxu0 0.0
      %2507 = vmatpush1.msra.mxu0 0.0
      %2508 = vmatprep.subr.mxu0 0.0
      %2509 = vmatpush1.msra.mxu0 0.0
      %2510 = vmatprep.subr.mxu0 0.0
      %2511 = vmatpush1.msra.mxu0 %v2476
      %2512 = vmatprep.subr.mxu0 0.0
      %2513 = vmatpush2.msra.mxu0 0.0
      %2514 = vmatprep.subr.mxu0 0.0
      %2515 = vmatpush2.msra.mxu0 0.0
      %2516 = vmatprep.subr.mxu0 0.0
      %2517 = vmatpush2.msra.mxu0 0.0
      %2518 = vmatprep.subr.mxu0 0.0
      %2519 = vmatpush2.msra.mxu0 0.0
      %2520 = vmatprep.subr.mxu0 0.0
      %2521 = vmatpush2.msra.mxu0 0.0
      %2522 = vmatprep.subr.mxu0 0.0
      %2523 = vmatpush2.msra.mxu0 0.0
      %2524 = vmatprep.subr.mxu0 0.0
      %2525 = vmatpush2.msra.mxu0 0.0
      %2526 = vmatprep.subr.mxu0 0.0
      %2527 = vmatpush2.msra.mxu0 0.0
      %2528 = vmatprep.subr.mxu0 0.0
      %2529 = vmatpush2.msra.mxu0 0.0
      %2530 = vmatprep.subr.mxu0 0.0
      %2531 = vmatpush2.msra.mxu0 0.0
      %2532 = vmatprep.subr.mxu0 0.0
      %2533 = vmatpush2.msra.mxu0 0.0
      %2534 = vmatprep.subr.mxu0 0.0
      %2535 = vmatpush2.msra.mxu0 0.0
      %2536 = vmatprep.subr.mxu0 0.0
      %2537 = vmatpush2.msra.mxu0 0.0
      %2538 = vmatprep.subr.mxu0 0.0
      %2539 = vmatpush2.msra.mxu0 0.0
      %2540 = vmatprep.subr.mxu0 0.0
      %2541 = vmatpush2.msra.mxu0 0.0
      %2542 = vmatprep.subr.mxu0 0.0
      %2543 = vmatpush2.msra.mxu0 0.0
      %2544 = vmatprep.mubr.f32.mxu0 0.0
      %2545 = vmatmul.mubr.f32.gmra.mxu0 %v2342
      %v2546 = vpop.f32.mrf.mxu0
      %v2547 = vadd.f32 0.0, %v2546
      %v2548 = vpop.f32.mrf.mxu0
      %2549 = vmatprep.mubr.f32.mxu0 0.0
      %2550 = vmatmul.mubr.f32.gmra.mxu0 %v2345
      %v2551 = vpop.f32.mrf.mxu0
      %v2552 = vadd.f32 0.0, %v2551
      %v2553 = vpop.f32.mrf.mxu0
      %2554 = vmatprep.mubr.f32.mxu0 0.0
      %2555 = vmatmul.mubr.f32.gmra.mxu0 %v2348
      %v2556 = vpop.f32.mrf.mxu0
      %v2557 = vadd.f32 0.0, %v2556
      %v2558 = vpop.f32.mrf.mxu0
      %2559 = vmatprep.mubr.f32.mxu0 0.0
      %2560 = vmatmul.mubr.f32.gmra.mxu0 %v2351
      %v2561 = vpop.f32.mrf.mxu0
      %v2562 = vadd.f32 0.0, %v2561
      %v2563 = vpop.f32.mrf.mxu0
      %2564 = vmatprep.mubr.f32.mxu0 0.0
      %2565 = vmatmul.mubr.f32.gmra.mxu0 %v2354
      %v2566 = vpop.f32.mrf.mxu0
      %v2567 = vadd.f32 0.0, %v2566
      %v2568 = vpop.f32.mrf.mxu0
      %2569 = vmatprep.mubr.f32.mxu0 0.0
      %2570 = vmatmul.mubr.f32.gmra.mxu0 %v2357
      %v2571 = vpop.f32.mrf.mxu0
      %v2572 = vadd.f32 0.0, %v2571
      %v2573 = vpop.f32.mrf.mxu0
      %2574 = vmatprep.mubr.f32.mxu0 0.0
      %2575 = vmatmul.mubr.f32.gmra.mxu0 %v2360
      %v2576 = vpop.f32.mrf.mxu0
      %v2577 = vadd.f32 0.0, %v2576
      %v2578 = vpop.f32.mrf.mxu0
      %2579 = vmatprep.mubr.f32.mxu0 0.0
      %2580 = vmatmul.mubr.f32.gmra.mxu0 %v2478
      %v2581 = vpop.f32.mrf.mxu0
      %v2582 = vadd.f32 0.0, %v2581
      %v2583 = vpop.f32.mrf.mxu0
      %2584 = vdwg.mxu0
      %v2585 = vadd.f32 %v2467, %v2547
      %v2586 = vadd.f32 %v2468, %v2552
      %v2587 = vadd.f32 %v2469, %v2557
      %v2588 = vadd.f32 %v2470, %v2562
      %v2589 = vadd.f32 %v2471, %v2567
      %v2590 = vadd.f32 %v2472, %v2572
      %v2591 = vadd.f32 %v2473, %v2577
      %v2592 = vadd.f32 %v2474, %v2582
      %s2593 = scalar_lea.vmem %s5, 56
      %v2594 = vld [vmem:[%s2593] sm:$0xff]
      %v2596 = vsel %vm681, %v2335, 0
      %2598 = vmatprep.subr.mxu0 0.0
      %2599 = vmatpush1.msra.mxu0 0.0
      %2600 = vmatprep.subr.mxu0 0.0
      %2601 = vmatpush1.msra.mxu0 0.0
      %2602 = vmatprep.subr.mxu0 0.0
      %2603 = vmatpush1.msra.mxu0 0.0
      %2604 = vmatprep.subr.mxu0 0.0
      %2605 = vmatpush1.msra.mxu0 0.0
      %2606 = vmatprep.subr.mxu0 0.0
      %2607 = vmatpush1.msra.mxu0 0.0
      %2608 = vmatprep.subr.mxu0 0.0
      %2609 = vmatpush1.msra.mxu0 0.0
      %2610 = vmatprep.subr.mxu0 0.0
      %2611 = vmatpush1.msra.mxu0 0.0
      %2612 = vmatprep.subr.mxu0 0.0
      %2613 = vmatpush1.msra.mxu0 0.0
      %2614 = vmatprep.subr.mxu0 0.0
      %2615 = vmatpush1.msra.mxu0 0.0
      %2616 = vmatprep.subr.mxu0 0.0
      %2617 = vmatpush1.msra.mxu0 0.0
      %2618 = vmatprep.subr.mxu0 0.0
      %2619 = vmatpush1.msra.mxu0 0.0
      %2620 = vmatprep.subr.mxu0 0.0
      %2621 = vmatpush1.msra.mxu0 0.0
      %2622 = vmatprep.subr.mxu0 0.0
      %2623 = vmatpush1.msra.mxu0 0.0
      %2624 = vmatprep.subr.mxu0 0.0
      %2625 = vmatpush1.msra.mxu0 0.0
      %2626 = vmatprep.subr.mxu0 0.0
      %2627 = vmatpush1.msra.mxu0 0.0
      %2628 = vmatprep.subr.mxu0 0.0
      %2629 = vmatpush1.msra.mxu0 %v2594
      %2630 = vmatprep.subr.mxu0 0.0
      %2631 = vmatpush2.msra.mxu0 0.0
      %2632 = vmatprep.subr.mxu0 0.0
      %2633 = vmatpush2.msra.mxu0 0.0
      %2634 = vmatprep.subr.mxu0 0.0
      %2635 = vmatpush2.msra.mxu0 0.0
      %2636 = vmatprep.subr.mxu0 0.0
      %2637 = vmatpush2.msra.mxu0 0.0
      %2638 = vmatprep.subr.mxu0 0.0
      %2639 = vmatpush2.msra.mxu0 0.0
      %2640 = vmatprep.subr.mxu0 0.0
      %2641 = vmatpush2.msra.mxu0 0.0
      %2642 = vmatprep.subr.mxu0 0.0
      %2643 = vmatpush2.msra.mxu0 0.0
      %2644 = vmatprep.subr.mxu0 0.0
      %2645 = vmatpush2.msra.mxu0 0.0
      %2646 = vmatprep.subr.mxu0 0.0
      %2647 = vmatpush2.msra.mxu0 0.0
      %2648 = vmatprep.subr.mxu0 0.0
      %2649 = vmatpush2.msra.mxu0 0.0
      %2650 = vmatprep.subr.mxu0 0.0
      %2651 = vmatpush2.msra.mxu0 0.0
      %2652 = vmatprep.subr.mxu0 0.0
      %2653 = vmatpush2.msra.mxu0 0.0
      %2654 = vmatprep.subr.mxu0 0.0
      %2655 = vmatpush2.msra.mxu0 0.0
      %2656 = vmatprep.subr.mxu0 0.0
      %2657 = vmatpush2.msra.mxu0 0.0
      %2658 = vmatprep.subr.mxu0 0.0
      %2659 = vmatpush2.msra.mxu0 0.0
      %2660 = vmatprep.subr.mxu0 0.0
      %2661 = vmatpush2.msra.mxu0 0.0
      %2662 = vmatprep.mubr.f32.mxu0 0.0
      %2663 = vmatmul.mubr.f32.gmra.mxu0 %v2345
      %v2664 = vpop.f32.mrf.mxu0
      %v2665 = vadd.f32 0.0, %v2664
      %v2666 = vpop.f32.mrf.mxu0
      %2667 = vmatprep.mubr.f32.mxu0 0.0
      %2668 = vmatmul.mubr.f32.gmra.mxu0 %v2348
      %v2669 = vpop.f32.mrf.mxu0
      %v2670 = vadd.f32 0.0, %v2669
      %v2671 = vpop.f32.mrf.mxu0
      %2672 = vmatprep.mubr.f32.mxu0 0.0
      %2673 = vmatmul.mubr.f32.gmra.mxu0 %v2351
      %v2674 = vpop.f32.mrf.mxu0
      %v2675 = vadd.f32 0.0, %v2674
      %v2676 = vpop.f32.mrf.mxu0
      %2677 = vmatprep.mubr.f32.mxu0 0.0
      %2678 = vmatmul.mubr.f32.gmra.mxu0 %v2354
      %v2679 = vpop.f32.mrf.mxu0
      %v2680 = vadd.f32 0.0, %v2679
      %v2681 = vpop.f32.mrf.mxu0
      %2682 = vmatprep.mubr.f32.mxu0 0.0
      %2683 = vmatmul.mubr.f32.gmra.mxu0 %v2357
      %v2684 = vpop.f32.mrf.mxu0
      %v2685 = vadd.f32 0.0, %v2684
      %v2686 = vpop.f32.mrf.mxu0
      %2687 = vmatprep.mubr.f32.mxu0 0.0
      %2688 = vmatmul.mubr.f32.gmra.mxu0 %v2360
      %v2689 = vpop.f32.mrf.mxu0
      %v2690 = vadd.f32 0.0, %v2689
      %v2691 = vpop.f32.mrf.mxu0
      %2692 = vmatprep.mubr.f32.mxu0 0.0
      %2693 = vmatmul.mubr.f32.gmra.mxu0 %v2478
      %v2694 = vpop.f32.mrf.mxu0
      %v2695 = vadd.f32 0.0, %v2694
      %v2696 = vpop.f32.mrf.mxu0
      %2697 = vmatprep.mubr.f32.mxu0 0.0
      %2698 = vmatmul.mubr.f32.gmra.mxu0 %v2596
      %v2699 = vpop.f32.mrf.mxu0
      %v2700 = vadd.f32 0.0, %v2699
      %v2701 = vpop.f32.mrf.mxu0
      %2702 = vdwg.mxu0
      %v2703 = vadd.f32 %v2585, %v2665
      %v2704 = vadd.f32 %v2586, %v2670
      %v2705 = vadd.f32 %v2587, %v2675
      %v2706 = vadd.f32 %v2588, %v2680
      %v2707 = vadd.f32 %v2589, %v2685
      %v2708 = vadd.f32 %v2590, %v2690
      %v2709 = vadd.f32 %v2591, %v2695
      %v2710 = vadd.f32 %v2592, %v2700
      %v2711 = vld [vmem:[#allocation3 + $0x2] sm:$0xff]
      %v2712 = vld [vmem:[#allocation3 + $0x12] sm:$0xff]
      %v2713 = vld [vmem:[#allocation3 + $0x22] sm:$0xff]
      %v2714 = vld [vmem:[#allocation3 + $0x32] sm:$0xff]
      %v2715 = vld [vmem:[#allocation3 + $0x42] sm:$0xff]
      %v2716 = vld [vmem:[#allocation3 + $0x52] sm:$0xff]
      %v2717 = vld [vmem:[#allocation3 + $0x62] sm:$0xff]
      %v2718 = vld [vmem:[#allocation3 + $0x72] sm:$0xff]
      %v2719 = vld [vmem:[#allocation3 + $0x82] sm:$0xff]
      %v2720 = vld [vmem:[#allocation3 + $0x92] sm:$0xff]
      %s2721 = scalar_lea.vmem %s5, 16
      %v2722 = vld [vmem:[%s2721] sm:$0xff]
      %v2724 = vsel %vm681, %v2711, 0
      %v2727 = vsel %vm681, %v2712, 0
      %v2730 = vsel %vm681, %v2713, 0
      %v2733 = vsel %vm681, %v2714, 0
      %v2736 = vsel %vm681, %v2715, 0
      %v2739 = vsel %vm681, %v2716, 0
      %v2742 = vsel %vm681, %v2717, 0
      %v2745 = vsel %vm681, %v2718, 0
      %2747 = vmatprep.subr.mxu0 0.0
      %2748 = vmatpush1.msra.mxu0 0.0
      %2749 = vmatprep.subr.mxu0 0.0
      %2750 = vmatpush1.msra.mxu0 0.0
      %2751 = vmatprep.subr.mxu0 0.0
      %2752 = vmatpush1.msra.mxu0 0.0
      %2753 = vmatprep.subr.mxu0 0.0
      %2754 = vmatpush1.msra.mxu0 0.0
      %2755 = vmatprep.subr.mxu0 0.0
      %2756 = vmatpush1.msra.mxu0 0.0
      %2757 = vmatprep.subr.mxu0 0.0
      %2758 = vmatpush1.msra.mxu0 0.0
      %2759 = vmatprep.subr.mxu0 0.0
      %2760 = vmatpush1.msra.mxu0 0.0
      %2761 = vmatprep.subr.mxu0 0.0
      %2762 = vmatpush1.msra.mxu0 0.0
      %2763 = vmatprep.subr.mxu0 0.0
      %2764 = vmatpush1.msra.mxu0 0.0
      %2765 = vmatprep.subr.mxu0 0.0
      %2766 = vmatpush1.msra.mxu0 0.0
      %2767 = vmatprep.subr.mxu0 0.0
      %2768 = vmatpush1.msra.mxu0 0.0
      %2769 = vmatprep.subr.mxu0 0.0
      %2770 = vmatpush1.msra.mxu0 0.0
      %2771 = vmatprep.subr.mxu0 0.0
      %2772 = vmatpush1.msra.mxu0 0.0
      %2773 = vmatprep.subr.mxu0 0.0
      %2774 = vmatpush1.msra.mxu0 0.0
      %2775 = vmatprep.subr.mxu0 0.0
      %2776 = vmatpush1.msra.mxu0 0.0
      %2777 = vmatprep.subr.mxu0 0.0
      %2778 = vmatpush1.msra.mxu0 %v2722
      %2779 = vmatprep.subr.mxu0 0.0
      %2780 = vmatpush2.msra.mxu0 0.0
      %2781 = vmatprep.subr.mxu0 0.0
      %2782 = vmatpush2.msra.mxu0 0.0
      %2783 = vmatprep.subr.mxu0 0.0
      %2784 = vmatpush2.msra.mxu0 0.0
      %2785 = vmatprep.subr.mxu0 0.0
      %2786 = vmatpush2.msra.mxu0 0.0
      %2787 = vmatprep.subr.mxu0 0.0
      %2788 = vmatpush2.msra.mxu0 0.0
      %2789 = vmatprep.subr.mxu0 0.0
      %2790 = vmatpush2.msra.mxu0 0.0
      %2791 = vmatprep.subr.mxu0 0.0
      %2792 = vmatpush2.msra.mxu0 0.0
      %2793 = vmatprep.subr.mxu0 0.0
      %2794 = vmatpush2.msra.mxu0 0.0
      %2795 = vmatprep.subr.mxu0 0.0
      %2796 = vmatpush2.msra.mxu0 0.0
      %2797 = vmatprep.subr.mxu0 0.0
      %2798 = vmatpush2.msra.mxu0 0.0
      %2799 = vmatprep.subr.mxu0 0.0
      %2800 = vmatpush2.msra.mxu0 0.0
      %2801 = vmatprep.subr.mxu0 0.0
      %2802 = vmatpush2.msra.mxu0 0.0
      %2803 = vmatprep.subr.mxu0 0.0
      %2804 = vmatpush2.msra.mxu0 0.0
      %2805 = vmatprep.subr.mxu0 0.0
      %2806 = vmatpush2.msra.mxu0 0.0
      %2807 = vmatprep.subr.mxu0 0.0
      %2808 = vmatpush2.msra.mxu0 0.0
      %2809 = vmatprep.subr.mxu0 0.0
      %2810 = vmatpush2.msra.mxu0 0.0
      %2811 = vmatprep.mubr.f32.mxu0 0.0
      %2812 = vmatmul.mubr.f32.gmra.mxu0 %v2724
      %v2813 = vpop.f32.mrf.mxu0
      %v2814 = vadd.f32 0.0, %v2813
      %v2815 = vpop.f32.mrf.mxu0
      %2816 = vmatprep.mubr.f32.mxu0 0.0
      %2817 = vmatmul.mubr.f32.gmra.mxu0 %v2727
      %v2818 = vpop.f32.mrf.mxu0
      %v2819 = vadd.f32 0.0, %v2818
      %v2820 = vpop.f32.mrf.mxu0
      %2821 = vmatprep.mubr.f32.mxu0 0.0
      %2822 = vmatmul.mubr.f32.gmra.mxu0 %v2730
      %v2823 = vpop.f32.mrf.mxu0
      %v2824 = vadd.f32 0.0, %v2823
      %v2825 = vpop.f32.mrf.mxu0
      %2826 = vmatprep.mubr.f32.mxu0 0.0
      %2827 = vmatmul.mubr.f32.gmra.mxu0 %v2733
      %v2828 = vpop.f32.mrf.mxu0
      %v2829 = vadd.f32 0.0, %v2828
      %v2830 = vpop.f32.mrf.mxu0
      %2831 = vmatprep.mubr.f32.mxu0 0.0
      %2832 = vmatmul.mubr.f32.gmra.mxu0 %v2736
      %v2833 = vpop.f32.mrf.mxu0
      %v2834 = vadd.f32 0.0, %v2833
      %v2835 = vpop.f32.mrf.mxu0
      %2836 = vmatprep.mubr.f32.mxu0 0.0
      %2837 = vmatmul.mubr.f32.gmra.mxu0 %v2739
      %v2838 = vpop.f32.mrf.mxu0
      %v2839 = vadd.f32 0.0, %v2838
      %v2840 = vpop.f32.mrf.mxu0
      %2841 = vmatprep.mubr.f32.mxu0 0.0
      %2842 = vmatmul.mubr.f32.gmra.mxu0 %v2742
      %v2843 = vpop.f32.mrf.mxu0
      %v2844 = vadd.f32 0.0, %v2843
      %v2845 = vpop.f32.mrf.mxu0
      %2846 = vmatprep.mubr.f32.mxu0 0.0
      %2847 = vmatmul.mubr.f32.gmra.mxu0 %v2745
      %v2848 = vpop.f32.mrf.mxu0
      %v2849 = vadd.f32 0.0, %v2848
      %v2850 = vpop.f32.mrf.mxu0
      %2851 = vdwg.mxu0
      %v2852 = vadd.f32 %v2703, %v2814
      %v2853 = vadd.f32 %v2704, %v2819
      %v2854 = vadd.f32 %v2705, %v2824
      %v2855 = vadd.f32 %v2706, %v2829
      %v2856 = vadd.f32 %v2707, %v2834
      %v2857 = vadd.f32 %v2708, %v2839
      %v2858 = vadd.f32 %v2709, %v2844
      %v2859 = vadd.f32 %v2710, %v2849
      %s2860 = scalar_lea.vmem %s5, 40
      %v2861 = vld [vmem:[%s2860] sm:$0xff]
      %v2863 = vsel %vm681, %v2719, 0
      %2865 = vmatprep.subr.mxu0 0.0
      %2866 = vmatpush1.msra.mxu0 0.0
      %2867 = vmatprep.subr.mxu0 0.0
      %2868 = vmatpush1.msra.mxu0 0.0
      %2869 = vmatprep.subr.mxu0 0.0
      %2870 = vmatpush1.msra.mxu0 0.0
      %2871 = vmatprep.subr.mxu0 0.0
      %2872 = vmatpush1.msra.mxu0 0.0
      %2873 = vmatprep.subr.mxu0 0.0
      %2874 = vmatpush1.msra.mxu0 0.0
      %2875 = vmatprep.subr.mxu0 0.0
      %2876 = vmatpush1.msra.mxu0 0.0
      %2877 = vmatprep.subr.mxu0 0.0
      %2878 = vmatpush1.msra.mxu0 0.0
      %2879 = vmatprep.subr.mxu0 0.0
      %2880 = vmatpush1.msra.mxu0 0.0
      %2881 = vmatprep.subr.mxu0 0.0
      %2882 = vmatpush1.msra.mxu0 0.0
      %2883 = vmatprep.subr.mxu0 0.0
      %2884 = vmatpush1.msra.mxu0 0.0
      %2885 = vmatprep.subr.mxu0 0.0
      %2886 = vmatpush1.msra.mxu0 0.0
      %2887 = vmatprep.subr.mxu0 0.0
      %2888 = vmatpush1.msra.mxu0 0.0
      %2889 = vmatprep.subr.mxu0 0.0
      %2890 = vmatpush1.msra.mxu0 0.0
      %2891 = vmatprep.subr.mxu0 0.0
      %2892 = vmatpush1.msra.mxu0 0.0
      %2893 = vmatprep.subr.mxu0 0.0
      %2894 = vmatpush1.msra.mxu0 0.0
      %2895 = vmatprep.subr.mxu0 0.0
      %2896 = vmatpush1.msra.mxu0 %v2861
      %2897 = vmatprep.subr.mxu0 0.0
      %2898 = vmatpush2.msra.mxu0 0.0
      %2899 = vmatprep.subr.mxu0 0.0
      %2900 = vmatpush2.msra.mxu0 0.0
      %2901 = vmatprep.subr.mxu0 0.0
      %2902 = vmatpush2.msra.mxu0 0.0
      %2903 = vmatprep.subr.mxu0 0.0
      %2904 = vmatpush2.msra.mxu0 0.0
      %2905 = vmatprep.subr.mxu0 0.0
      %2906 = vmatpush2.msra.mxu0 0.0
      %2907 = vmatprep.subr.mxu0 0.0
      %2908 = vmatpush2.msra.mxu0 0.0
      %2909 = vmatprep.subr.mxu0 0.0
      %2910 = vmatpush2.msra.mxu0 0.0
      %2911 = vmatprep.subr.mxu0 0.0
      %2912 = vmatpush2.msra.mxu0 0.0
      %2913 = vmatprep.subr.mxu0 0.0
      %2914 = vmatpush2.msra.mxu0 0.0
      %2915 = vmatprep.subr.mxu0 0.0
      %2916 = vmatpush2.msra.mxu0 0.0
      %2917 = vmatprep.subr.mxu0 0.0
      %2918 = vmatpush2.msra.mxu0 0.0
      %2919 = vmatprep.subr.mxu0 0.0
      %2920 = vmatpush2.msra.mxu0 0.0
      %2921 = vmatprep.subr.mxu0 0.0
      %2922 = vmatpush2.msra.mxu0 0.0
      %2923 = vmatprep.subr.mxu0 0.0
      %2924 = vmatpush2.msra.mxu0 0.0
      %2925 = vmatprep.subr.mxu0 0.0
      %2926 = vmatpush2.msra.mxu0 0.0
      %2927 = vmatprep.subr.mxu0 0.0
      %2928 = vmatpush2.msra.mxu0 0.0
      %2929 = vmatprep.mubr.f32.mxu0 0.0
      %2930 = vmatmul.mubr.f32.gmra.mxu0 %v2727
      %v2931 = vpop.f32.mrf.mxu0
      %v2932 = vadd.f32 0.0, %v2931
      %v2933 = vpop.f32.mrf.mxu0
      %2934 = vmatprep.mubr.f32.mxu0 0.0
      %2935 = vmatmul.mubr.f32.gmra.mxu0 %v2730
      %v2936 = vpop.f32.mrf.mxu0
      %v2937 = vadd.f32 0.0, %v2936
      %v2938 = vpop.f32.mrf.mxu0
      %2939 = vmatprep.mubr.f32.mxu0 0.0
      %2940 = vmatmul.mubr.f32.gmra.mxu0 %v2733
      %v2941 = vpop.f32.mrf.mxu0
      %v2942 = vadd.f32 0.0, %v2941
      %v2943 = vpop.f32.mrf.mxu0
      %2944 = vmatprep.mubr.f32.mxu0 0.0
      %2945 = vmatmul.mubr.f32.gmra.mxu0 %v2736
      %v2946 = vpop.f32.mrf.mxu0
      %v2947 = vadd.f32 0.0, %v2946
      %v2948 = vpop.f32.mrf.mxu0
      %2949 = vmatprep.mubr.f32.mxu0 0.0
      %2950 = vmatmul.mubr.f32.gmra.mxu0 %v2739
      %v2951 = vpop.f32.mrf.mxu0
      %v2952 = vadd.f32 0.0, %v2951
      %v2953 = vpop.f32.mrf.mxu0
      %2954 = vmatprep.mubr.f32.mxu0 0.0
      %2955 = vmatmul.mubr.f32.gmra.mxu0 %v2742
      %v2956 = vpop.f32.mrf.mxu0
      %v2957 = vadd.f32 0.0, %v2956
      %v2958 = vpop.f32.mrf.mxu0
      %2959 = vmatprep.mubr.f32.mxu0 0.0
      %2960 = vmatmul.mubr.f32.gmra.mxu0 %v2745
      %v2961 = vpop.f32.mrf.mxu0
      %v2962 = vadd.f32 0.0, %v2961
      %v2963 = vpop.f32.mrf.mxu0
      %2964 = vmatprep.mubr.f32.mxu0 0.0
      %2965 = vmatmul.mubr.f32.gmra.mxu0 %v2863
      %v2966 = vpop.f32.mrf.mxu0
      %v2967 = vadd.f32 0.0, %v2966
      %v2968 = vpop.f32.mrf.mxu0
      %2969 = vdwg.mxu0
      %v2970 = vadd.f32 %v2852, %v2932
      %v2971 = vadd.f32 %v2853, %v2937
      %v2972 = vadd.f32 %v2854, %v2942
      %v2973 = vadd.f32 %v2855, %v2947
      %v2974 = vadd.f32 %v2856, %v2952
      %v2975 = vadd.f32 %v2857, %v2957
      %v2976 = vadd.f32 %v2858, %v2962
      %v2977 = vadd.f32 %v2859, %v2967
      %s2978 = scalar_lea.vmem %s5, 64
      %v2979 = vld [vmem:[%s2978] sm:$0xff]
      %v2981 = vsel %vm681, %v2720, 0
      %2983 = vmatprep.subr.mxu0 0.0
      %2984 = vmatpush1.msra.mxu0 0.0
      %2985 = vmatprep.subr.mxu0 0.0
      %2986 = vmatpush1.msra.mxu0 0.0
      %2987 = vmatprep.subr.mxu0 0.0
      %2988 = vmatpush1.msra.mxu0 0.0
      %2989 = vmatprep.subr.mxu0 0.0
      %2990 = vmatpush1.msra.mxu0 0.0
      %2991 = vmatprep.subr.mxu0 0.0
      %2992 = vmatpush1.msra.mxu0 0.0
      %2993 = vmatprep.subr.mxu0 0.0
      %2994 = vmatpush1.msra.mxu0 0.0
      %2995 = vmatprep.subr.mxu0 0.0
      %2996 = vmatpush1.msra.mxu0 0.0
      %2997 = vmatprep.subr.mxu0 0.0
      %2998 = vmatpush1.msra.mxu0 0.0
      %2999 = vmatprep.subr.mxu0 0.0
      %3000 = vmatpush1.msra.mxu0 0.0
      %3001 = vmatprep.subr.mxu0 0.0
      %3002 = vmatpush1.msra.mxu0 0.0
      %3003 = vmatprep.subr.mxu0 0.0
      %3004 = vmatpush1.msra.mxu0 0.0
      %3005 = vmatprep.subr.mxu0 0.0
      %3006 = vmatpush1.msra.mxu0 0.0
      %3007 = vmatprep.subr.mxu0 0.0
      %3008 = vmatpush1.msra.mxu0 0.0
      %3009 = vmatprep.subr.mxu0 0.0
      %3010 = vmatpush1.msra.mxu0 0.0
      %3011 = vmatprep.subr.mxu0 0.0
      %3012 = vmatpush1.msra.mxu0 0.0
      %3013 = vmatprep.subr.mxu0 0.0
      %3014 = vmatpush1.msra.mxu0 %v2979
      %3015 = vmatprep.subr.mxu0 0.0
      %3016 = vmatpush2.msra.mxu0 0.0
      %3017 = vmatprep.subr.mxu0 0.0
      %3018 = vmatpush2.msra.mxu0 0.0
      %3019 = vmatprep.subr.mxu0 0.0
      %3020 = vmatpush2.msra.mxu0 0.0
      %3021 = vmatprep.subr.mxu0 0.0
      %3022 = vmatpush2.msra.mxu0 0.0
      %3023 = vmatprep.subr.mxu0 0.0
      %3024 = vmatpush2.msra.mxu0 0.0
      %3025 = vmatprep.subr.mxu0 0.0
      %3026 = vmatpush2.msra.mxu0 0.0
      %3027 = vmatprep.subr.mxu0 0.0
      %3028 = vmatpush2.msra.mxu0 0.0
      %3029 = vmatprep.subr.mxu0 0.0
      %3030 = vmatpush2.msra.mxu0 0.0
      %3031 = vmatprep.subr.mxu0 0.0
      %3032 = vmatpush2.msra.mxu0 0.0
      %3033 = vmatprep.subr.mxu0 0.0
      %3034 = vmatpush2.msra.mxu0 0.0
      %3035 = vmatprep.subr.mxu0 0.0
      %3036 = vmatpush2.msra.mxu0 0.0
      %3037 = vmatprep.subr.mxu0 0.0
      %3038 = vmatpush2.msra.mxu0 0.0
      %3039 = vmatprep.subr.mxu0 0.0
      %3040 = vmatpush2.msra.mxu0 0.0
      %3041 = vmatprep.subr.mxu0 0.0
      %3042 = vmatpush2.msra.mxu0 0.0
      %3043 = vmatprep.subr.mxu0 0.0
      %3044 = vmatpush2.msra.mxu0 0.0
      %3045 = vmatprep.subr.mxu0 0.0
      %3046 = vmatpush2.msra.mxu0 0.0
      %3047 = vmatprep.mubr.f32.mxu0 0.0
      %3048 = vmatmul.mubr.f32.gmra.mxu0 %v2730
      %v3049 = vpop.f32.mrf.mxu0
      %v3050 = vadd.f32 0.0, %v3049
      %v3051 = vpop.f32.mrf.mxu0
      %3052 = vmatprep.mubr.f32.mxu0 0.0
      %3053 = vmatmul.mubr.f32.gmra.mxu0 %v2733
      %v3054 = vpop.f32.mrf.mxu0
      %v3055 = vadd.f32 0.0, %v3054
      %v3056 = vpop.f32.mrf.mxu0
      %3057 = vmatprep.mubr.f32.mxu0 0.0
      %3058 = vmatmul.mubr.f32.gmra.mxu0 %v2736
      %v3059 = vpop.f32.mrf.mxu0
      %v3060 = vadd.f32 0.0, %v3059
      %v3061 = vpop.f32.mrf.mxu0
      %3062 = vmatprep.mubr.f32.mxu0 0.0
      %3063 = vmatmul.mubr.f32.gmra.mxu0 %v2739
      %v3064 = vpop.f32.mrf.mxu0
      %v3065 = vadd.f32 0.0, %v3064
      %v3066 = vpop.f32.mrf.mxu0
      %3067 = vmatprep.mubr.f32.mxu0 0.0
      %3068 = vmatmul.mubr.f32.gmra.mxu0 %v2742
      %v3069 = vpop.f32.mrf.mxu0
      %v3070 = vadd.f32 0.0, %v3069
      %v3071 = vpop.f32.mrf.mxu0
      %3072 = vmatprep.mubr.f32.mxu0 0.0
      %3073 = vmatmul.mubr.f32.gmra.mxu0 %v2745
      %v3074 = vpop.f32.mrf.mxu0
      %v3075 = vadd.f32 0.0, %v3074
      %v3076 = vpop.f32.mrf.mxu0
      %3077 = vmatprep.mubr.f32.mxu0 0.0
      %3078 = vmatmul.mubr.f32.gmra.mxu0 %v2863
      %v3079 = vpop.f32.mrf.mxu0
      %v3080 = vadd.f32 0.0, %v3079
      %v3081 = vpop.f32.mrf.mxu0
      %3082 = vmatprep.mubr.f32.mxu0 0.0
      %3083 = vmatmul.mubr.f32.gmra.mxu0 %v2981
      %v3084 = vpop.f32.mrf.mxu0
      %v3085 = vadd.f32 0.0, %v3084
      %v3086 = vpop.f32.mrf.mxu0
      %3087 = vdwg.mxu0
      %v3088 = vadd.f32 %v2970, %v3050
      %v3089 = vadd.f32 %v2971, %v3055
      %v3090 = vadd.f32 %v2972, %v3060
      %v3091 = vadd.f32 %v2973, %v3065
      %v3092 = vadd.f32 %v2974, %v3070
      %v3093 = vadd.f32 %v2975, %v3075
      %v3094 = vadd.f32 %v2976, %v3080
      %v3095 = vadd.f32 %v2977, %v3085
      %v3096 = vld [vmem:[#allocation4] sm:$0xff]
      %v3097 = vld [vmem:[#allocation4 + $0x10] sm:$0xff]
      %v3098 = vld [vmem:[#allocation4 + $0x20] sm:$0xff]
      %v3099 = vld [vmem:[#allocation4 + $0x30] sm:$0xff]
      %v3100 = vld [vmem:[#allocation4 + $0x40] sm:$0xff]
      %v3101 = vld [vmem:[#allocation4 + $0x50] sm:$0xff]
      %v3102 = vld [vmem:[#allocation4 + $0x60] sm:$0xff]
      %v3103 = vld [vmem:[#allocation4 + $0x70] sm:$0xff]
      %v3104 = vld [vmem:[#allocation4 + $0x80] sm:$0xff]
      %v3105 = vld [vmem:[#allocation4 + $0x90] sm:$0xff]
      %v3106 = vld [vmem:[%s6] sm:$0xff]
      %v3108 = vsel %vm681, %v3096, 0
      %v3111 = vsel %vm681, %v3097, 0
      %v3114 = vsel %vm681, %v3098, 0
      %v3117 = vsel %vm681, %v3099, 0
      %v3120 = vsel %vm681, %v3100, 0
      %v3123 = vsel %vm681, %v3101, 0
      %v3126 = vsel %vm681, %v3102, 0
      %v3129 = vsel %vm681, %v3103, 0
      %3131 = vmatprep.subr.mxu0 0.0
      %3132 = vmatpush1.msra.mxu0 0.0
      %3133 = vmatprep.subr.mxu0 0.0
      %3134 = vmatpush1.msra.mxu0 0.0
      %3135 = vmatprep.subr.mxu0 0.0
      %3136 = vmatpush1.msra.mxu0 0.0
      %3137 = vmatprep.subr.mxu0 0.0
      %3138 = vmatpush1.msra.mxu0 0.0
      %3139 = vmatprep.subr.mxu0 0.0
      %3140 = vmatpush1.msra.mxu0 0.0
      %3141 = vmatprep.subr.mxu0 0.0
      %3142 = vmatpush1.msra.mxu0 0.0
      %3143 = vmatprep.subr.mxu0 0.0
      %3144 = vmatpush1.msra.mxu0 0.0
      %3145 = vmatprep.subr.mxu0 0.0
      %3146 = vmatpush1.msra.mxu0 0.0
      %3147 = vmatprep.subr.mxu0 0.0
      %3148 = vmatpush1.msra.mxu0 0.0
      %3149 = vmatprep.subr.mxu0 0.0
      %3150 = vmatpush1.msra.mxu0 0.0
      %3151 = vmatprep.subr.mxu0 0.0
      %3152 = vmatpush1.msra.mxu0 0.0
      %3153 = vmatprep.subr.mxu0 0.0
      %3154 = vmatpush1.msra.mxu0 0.0
      %3155 = vmatprep.subr.mxu0 0.0
      %3156 = vmatpush1.msra.mxu0 0.0
      %3157 = vmatprep.subr.mxu0 0.0
      %3158 = vmatpush1.msra.mxu0 0.0
      %3159 = vmatprep.subr.mxu0 0.0
      %3160 = vmatpush1.msra.mxu0 0.0
      %3161 = vmatprep.subr.mxu0 0.0
      %3162 = vmatpush1.msra.mxu0 %v3106
      %3163 = vmatprep.subr.mxu0 0.0
      %3164 = vmatpush2.msra.mxu0 0.0
      %3165 = vmatprep.subr.mxu0 0.0
      %3166 = vmatpush2.msra.mxu0 0.0
      %3167 = vmatprep.subr.mxu0 0.0
      %3168 = vmatpush2.msra.mxu0 0.0
      %3169 = vmatprep.subr.mxu0 0.0
      %3170 = vmatpush2.msra.mxu0 0.0
      %3171 = vmatprep.subr.mxu0 0.0
      %3172 = vmatpush2.msra.mxu0 0.0
      %3173 = vmatprep.subr.mxu0 0.0
      %3174 = vmatpush2.msra.mxu0 0.0
      %3175 = vmatprep.subr.mxu0 0.0
      %3176 = vmatpush2.msra.mxu0 0.0
      %3177 = vmatprep.subr.mxu0 0.0
      %3178 = vmatpush2.msra.mxu0 0.0
      %3179 = vmatprep.subr.mxu0 0.0
      %3180 = vmatpush2.msra.mxu0 0.0
      %3181 = vmatprep.subr.mxu0 0.0
      %3182 = vmatpush2.msra.mxu0 0.0
      %3183 = vmatprep.subr.mxu0 0.0
      %3184 = vmatpush2.msra.mxu0 0.0
      %3185 = vmatprep.subr.mxu0 0.0
      %3186 = vmatpush2.msra.mxu0 0.0
      %3187 = vmatprep.subr.mxu0 0.0
      %3188 = vmatpush2.msra.mxu0 0.0
      %3189 = vmatprep.subr.mxu0 0.0
      %3190 = vmatpush2.msra.mxu0 0.0
      %3191 = vmatprep.subr.mxu0 0.0
      %3192 = vmatpush2.msra.mxu0 0.0
      %3193 = vmatprep.subr.mxu0 0.0
      %3194 = vmatpush2.msra.mxu0 0.0
      %3195 = vmatprep.mubr.f32.mxu0 0.0
      %3196 = vmatmul.mubr.f32.gmra.mxu0 %v3108
      %v3197 = vpop.f32.mrf.mxu0
      %v3198 = vadd.f32 0.0, %v3197
      %v3199 = vpop.f32.mrf.mxu0
      %3200 = vmatprep.mubr.f32.mxu0 0.0
      %3201 = vmatmul.mubr.f32.gmra.mxu0 %v3111
      %v3202 = vpop.f32.mrf.mxu0
      %v3203 = vadd.f32 0.0, %v3202
      %v3204 = vpop.f32.mrf.mxu0
      %3205 = vmatprep.mubr.f32.mxu0 0.0
      %3206 = vmatmul.mubr.f32.gmra.mxu0 %v3114
      %v3207 = vpop.f32.mrf.mxu0
      %v3208 = vadd.f32 0.0, %v3207
      %v3209 = vpop.f32.mrf.mxu0
      %3210 = vmatprep.mubr.f32.mxu0 0.0
      %3211 = vmatmul.mubr.f32.gmra.mxu0 %v3117
      %v3212 = vpop.f32.mrf.mxu0
      %v3213 = vadd.f32 0.0, %v3212
      %v3214 = vpop.f32.mrf.mxu0
      %3215 = vmatprep.mubr.f32.mxu0 0.0
      %3216 = vmatmul.mubr.f32.gmra.mxu0 %v3120
      %v3217 = vpop.f32.mrf.mxu0
      %v3218 = vadd.f32 0.0, %v3217
      %v3219 = vpop.f32.mrf.mxu0
      %3220 = vmatprep.mubr.f32.mxu0 0.0
      %3221 = vmatmul.mubr.f32.gmra.mxu0 %v3123
      %v3222 = vpop.f32.mrf.mxu0
      %v3223 = vadd.f32 0.0, %v3222
      %v3224 = vpop.f32.mrf.mxu0
      %3225 = vmatprep.mubr.f32.mxu0 0.0
      %3226 = vmatmul.mubr.f32.gmra.mxu0 %v3126
      %v3227 = vpop.f32.mrf.mxu0
      %v3228 = vadd.f32 0.0, %v3227
      %v3229 = vpop.f32.mrf.mxu0
      %3230 = vmatprep.mubr.f32.mxu0 0.0
      %3231 = vmatmul.mubr.f32.gmra.mxu0 %v3129
      %v3232 = vpop.f32.mrf.mxu0
      %v3233 = vadd.f32 0.0, %v3232
      %v3234 = vpop.f32.mrf.mxu0
      %3235 = vdwg.mxu0
      %v3236 = vadd.f32 %v3088, %v3198
      %v3237 = vadd.f32 %v3089, %v3203
      %v3238 = vadd.f32 %v3090, %v3208
      %v3239 = vadd.f32 %v3091, %v3213
      %v3240 = vadd.f32 %v3092, %v3218
      %v3241 = vadd.f32 %v3093, %v3223
      %v3242 = vadd.f32 %v3094, %v3228
      %v3243 = vadd.f32 %v3095, %v3233
      %s3244 = scalar_lea.vmem %s6, 24
      %v3245 = vld [vmem:[%s3244] sm:$0xff]
      %v3247 = vsel %vm681, %v3104, 0
      %3249 = vmatprep.subr.mxu0 0.0
      %3250 = vmatpush1.msra.mxu0 0.0
      %3251 = vmatprep.subr.mxu0 0.0
      %3252 = vmatpush1.msra.mxu0 0.0
      %3253 = vmatprep.subr.mxu0 0.0
      %3254 = vmatpush1.msra.mxu0 0.0
      %3255 = vmatprep.subr.mxu0 0.0
      %3256 = vmatpush1.msra.mxu0 0.0
      %3257 = vmatprep.subr.mxu0 0.0
      %3258 = vmatpush1.msra.mxu0 0.0
      %3259 = vmatprep.subr.mxu0 0.0
      %3260 = vmatpush1.msra.mxu0 0.0
      %3261 = vmatprep.subr.mxu0 0.0
      %3262 = vmatpush1.msra.mxu0 0.0
      %3263 = vmatprep.subr.mxu0 0.0
      %3264 = vmatpush1.msra.mxu0 0.0
      %3265 = vmatprep.subr.mxu0 0.0
      %3266 = vmatpush1.msra.mxu0 0.0
      %3267 = vmatprep.subr.mxu0 0.0
      %3268 = vmatpush1.msra.mxu0 0.0
      %3269 = vmatprep.subr.mxu0 0.0
      %3270 = vmatpush1.msra.mxu0 0.0
      %3271 = vmatprep.subr.mxu0 0.0
      %3272 = vmatpush1.msra.mxu0 0.0
      %3273 = vmatprep.subr.mxu0 0.0
      %3274 = vmatpush1.msra.mxu0 0.0
      %3275 = vmatprep.subr.mxu0 0.0
      %3276 = vmatpush1.msra.mxu0 0.0
      %3277 = vmatprep.subr.mxu0 0.0
      %3278 = vmatpush1.msra.mxu0 0.0
      %3279 = vmatprep.subr.mxu0 0.0
      %3280 = vmatpush1.msra.mxu0 %v3245
      %3281 = vmatprep.subr.mxu0 0.0
      %3282 = vmatpush2.msra.mxu0 0.0
      %3283 = vmatprep.subr.mxu0 0.0
      %3284 = vmatpush2.msra.mxu0 0.0
      %3285 = vmatprep.subr.mxu0 0.0
      %3286 = vmatpush2.msra.mxu0 0.0
      %3287 = vmatprep.subr.mxu0 0.0
      %3288 = vmatpush2.msra.mxu0 0.0
      %3289 = vmatprep.subr.mxu0 0.0
      %3290 = vmatpush2.msra.mxu0 0.0
      %3291 = vmatprep.subr.mxu0 0.0
      %3292 = vmatpush2.msra.mxu0 0.0
      %3293 = vmatprep.subr.mxu0 0.0
      %3294 = vmatpush2.msra.mxu0 0.0
      %3295 = vmatprep.subr.mxu0 0.0
      %3296 = vmatpush2.msra.mxu0 0.0
      %3297 = vmatprep.subr.mxu0 0.0
      %3298 = vmatpush2.msra.mxu0 0.0
      %3299 = vmatprep.subr.mxu0 0.0
      %3300 = vmatpush2.msra.mxu0 0.0
      %3301 = vmatprep.subr.mxu0 0.0
      %3302 = vmatpush2.msra.mxu0 0.0
      %3303 = vmatprep.subr.mxu0 0.0
      %3304 = vmatpush2.msra.mxu0 0.0
      %3305 = vmatprep.subr.mxu0 0.0
      %3306 = vmatpush2.msra.mxu0 0.0
      %3307 = vmatprep.subr.mxu0 0.0
      %3308 = vmatpush2.msra.mxu0 0.0
      %3309 = vmatprep.subr.mxu0 0.0
      %3310 = vmatpush2.msra.mxu0 0.0
      %3311 = vmatprep.subr.mxu0 0.0
      %3312 = vmatpush2.msra.mxu0 0.0
      %3313 = vmatprep.mubr.f32.mxu0 0.0
      %3314 = vmatmul.mubr.f32.gmra.mxu0 %v3111
      %v3315 = vpop.f32.mrf.mxu0
      %v3316 = vadd.f32 0.0, %v3315
      %v3317 = vpop.f32.mrf.mxu0
      %3318 = vmatprep.mubr.f32.mxu0 0.0
      %3319 = vmatmul.mubr.f32.gmra.mxu0 %v3114
      %v3320 = vpop.f32.mrf.mxu0
      %v3321 = vadd.f32 0.0, %v3320
      %v3322 = vpop.f32.mrf.mxu0
      %3323 = vmatprep.mubr.f32.mxu0 0.0
      %3324 = vmatmul.mubr.f32.gmra.mxu0 %v3117
      %v3325 = vpop.f32.mrf.mxu0
      %v3326 = vadd.f32 0.0, %v3325
      %v3327 = vpop.f32.mrf.mxu0
      %3328 = vmatprep.mubr.f32.mxu0 0.0
      %3329 = vmatmul.mubr.f32.gmra.mxu0 %v3120
      %v3330 = vpop.f32.mrf.mxu0
      %v3331 = vadd.f32 0.0, %v3330
      %v3332 = vpop.f32.mrf.mxu0
      %3333 = vmatprep.mubr.f32.mxu0 0.0
      %3334 = vmatmul.mubr.f32.gmra.mxu0 %v3123
      %v3335 = vpop.f32.mrf.mxu0
      %v3336 = vadd.f32 0.0, %v3335
      %v3337 = vpop.f32.mrf.mxu0
      %3338 = vmatprep.mubr.f32.mxu0 0.0
      %3339 = vmatmul.mubr.f32.gmra.mxu0 %v3126
      %v3340 = vpop.f32.mrf.mxu0
      %v3341 = vadd.f32 0.0, %v3340
      %v3342 = vpop.f32.mrf.mxu0
      %3343 = vmatprep.mubr.f32.mxu0 0.0
      %3344 = vmatmul.mubr.f32.gmra.mxu0 %v3129
      %v3345 = vpop.f32.mrf.mxu0
      %v3346 = vadd.f32 0.0, %v3345
      %v3347 = vpop.f32.mrf.mxu0
      %3348 = vmatprep.mubr.f32.mxu0 0.0
      %3349 = vmatmul.mubr.f32.gmra.mxu0 %v3247
      %v3350 = vpop.f32.mrf.mxu0
      %v3351 = vadd.f32 0.0, %v3350
      %v3352 = vpop.f32.mrf.mxu0
      %3353 = vdwg.mxu0
      %v3354 = vadd.f32 %v3236, %v3316
      %v3355 = vadd.f32 %v3237, %v3321
      %v3356 = vadd.f32 %v3238, %v3326
      %v3357 = vadd.f32 %v3239, %v3331
      %v3358 = vadd.f32 %v3240, %v3336
      %v3359 = vadd.f32 %v3241, %v3341
      %v3360 = vadd.f32 %v3242, %v3346
      %v3361 = vadd.f32 %v3243, %v3351
      %s3362 = scalar_lea.vmem %s6, 48
      %v3363 = vld [vmem:[%s3362] sm:$0xff]
      %v3365 = vsel %vm681, %v3105, 0
      %3367 = vmatprep.subr.mxu0 0.0
      %3368 = vmatpush1.msra.mxu0 0.0
      %3369 = vmatprep.subr.mxu0 0.0
      %3370 = vmatpush1.msra.mxu0 0.0
      %3371 = vmatprep.subr.mxu0 0.0
      %3372 = vmatpush1.msra.mxu0 0.0
      %3373 = vmatprep.subr.mxu0 0.0
      %3374 = vmatpush1.msra.mxu0 0.0
      %3375 = vmatprep.subr.mxu0 0.0
      %3376 = vmatpush1.msra.mxu0 0.0
      %3377 = vmatprep.subr.mxu0 0.0
      %3378 = vmatpush1.msra.mxu0 0.0
      %3379 = vmatprep.subr.mxu0 0.0
      %3380 = vmatpush1.msra.mxu0 0.0
      %3381 = vmatprep.subr.mxu0 0.0
      %3382 = vmatpush1.msra.mxu0 0.0
      %3383 = vmatprep.subr.mxu0 0.0
      %3384 = vmatpush1.msra.mxu0 0.0
      %3385 = vmatprep.subr.mxu0 0.0
      %3386 = vmatpush1.msra.mxu0 0.0
      %3387 = vmatprep.subr.mxu0 0.0
      %3388 = vmatpush1.msra.mxu0 0.0
      %3389 = vmatprep.subr.mxu0 0.0
      %3390 = vmatpush1.msra.mxu0 0.0
      %3391 = vmatprep.subr.mxu0 0.0
      %3392 = vmatpush1.msra.mxu0 0.0
      %3393 = vmatprep.subr.mxu0 0.0
      %3394 = vmatpush1.msra.mxu0 0.0
      %3395 = vmatprep.subr.mxu0 0.0
      %3396 = vmatpush1.msra.mxu0 0.0
      %3397 = vmatprep.subr.mxu0 0.0
      %3398 = vmatpush1.msra.mxu0 %v3363
      %3399 = vmatprep.subr.mxu0 0.0
      %3400 = vmatpush2.msra.mxu0 0.0
      %3401 = vmatprep.subr.mxu0 0.0
      %3402 = vmatpush2.msra.mxu0 0.0
      %3403 = vmatprep.subr.mxu0 0.0
      %3404 = vmatpush2.msra.mxu0 0.0
      %3405 = vmatprep.subr.mxu0 0.0
      %3406 = vmatpush2.msra.mxu0 0.0
      %3407 = vmatprep.subr.mxu0 0.0
      %3408 = vmatpush2.msra.mxu0 0.0
      %3409 = vmatprep.subr.mxu0 0.0
      %3410 = vmatpush2.msra.mxu0 0.0
      %3411 = vmatprep.subr.mxu0 0.0
      %3412 = vmatpush2.msra.mxu0 0.0
      %3413 = vmatprep.subr.mxu0 0.0
      %3414 = vmatpush2.msra.mxu0 0.0
      %3415 = vmatprep.subr.mxu0 0.0
      %3416 = vmatpush2.msra.mxu0 0.0
      %3417 = vmatprep.subr.mxu0 0.0
      %3418 = vmatpush2.msra.mxu0 0.0
      %3419 = vmatprep.subr.mxu0 0.0
      %3420 = vmatpush2.msra.mxu0 0.0
      %3421 = vmatprep.subr.mxu0 0.0
      %3422 = vmatpush2.msra.mxu0 0.0
      %3423 = vmatprep.subr.mxu0 0.0
      %3424 = vmatpush2.msra.mxu0 0.0
      %3425 = vmatprep.subr.mxu0 0.0
      %3426 = vmatpush2.msra.mxu0 0.0
      %3427 = vmatprep.subr.mxu0 0.0
      %3428 = vmatpush2.msra.mxu0 0.0
      %3429 = vmatprep.subr.mxu0 0.0
      %3430 = vmatpush2.msra.mxu0 0.0
      %3431 = vmatprep.mubr.f32.mxu0 0.0
      %3432 = vmatmul.mubr.f32.gmra.mxu0 %v3114
      %v3433 = vpop.f32.mrf.mxu0
      %v3434 = vadd.f32 0.0, %v3433
      %v3435 = vpop.f32.mrf.mxu0
      %3436 = vmatprep.mubr.f32.mxu0 0.0
      %3437 = vmatmul.mubr.f32.gmra.mxu0 %v3117
      %v3438 = vpop.f32.mrf.mxu0
      %v3439 = vadd.f32 0.0, %v3438
      %v3440 = vpop.f32.mrf.mxu0
      %3441 = vmatprep.mubr.f32.mxu0 0.0
      %3442 = vmatmul.mubr.f32.gmra.mxu0 %v3120
      %v3443 = vpop.f32.mrf.mxu0
      %v3444 = vadd.f32 0.0, %v3443
      %v3445 = vpop.f32.mrf.mxu0
      %3446 = vmatprep.mubr.f32.mxu0 0.0
      %3447 = vmatmul.mubr.f32.gmra.mxu0 %v3123
      %v3448 = vpop.f32.mrf.mxu0
      %v3449 = vadd.f32 0.0, %v3448
      %v3450 = vpop.f32.mrf.mxu0
      %3451 = vmatprep.mubr.f32.mxu0 0.0
      %3452 = vmatmul.mubr.f32.gmra.mxu0 %v3126
      %v3453 = vpop.f32.mrf.mxu0
      %v3454 = vadd.f32 0.0, %v3453
      %v3455 = vpop.f32.mrf.mxu0
      %3456 = vmatprep.mubr.f32.mxu0 0.0
      %3457 = vmatmul.mubr.f32.gmra.mxu0 %v3129
      %v3458 = vpop.f32.mrf.mxu0
      %v3459 = vadd.f32 0.0, %v3458
      %v3460 = vpop.f32.mrf.mxu0
      %3461 = vmatprep.mubr.f32.mxu0 0.0
      %3462 = vmatmul.mubr.f32.gmra.mxu0 %v3247
      %v3463 = vpop.f32.mrf.mxu0
      %v3464 = vadd.f32 0.0, %v3463
      %v3465 = vpop.f32.mrf.mxu0
      %3466 = vmatprep.mubr.f32.mxu0 0.0
      %3467 = vmatmul.mubr.f32.gmra.mxu0 %v3365
      %v3468 = vpop.f32.mrf.mxu0
      %v3469 = vadd.f32 0.0, %v3468
      %v3470 = vpop.f32.mrf.mxu0
      %3471 = vdwg.mxu0
      %v3472 = vadd.f32 %v3354, %v3434
      %v3473 = vadd.f32 %v3355, %v3439
      %v3474 = vadd.f32 %v3356, %v3444
      %v3475 = vadd.f32 %v3357, %v3449
      %v3476 = vadd.f32 %v3358, %v3454
      %v3477 = vadd.f32 %v3359, %v3459
      %v3478 = vadd.f32 %v3360, %v3464
      %v3479 = vadd.f32 %v3361, %v3469
      %v3480 = vld [vmem:[#allocation4 + $0x1] sm:$0xff]
      %v3481 = vld [vmem:[#allocation4 + $0x11] sm:$0xff]
      %v3482 = vld [vmem:[#allocation4 + $0x21] sm:$0xff]
      %v3483 = vld [vmem:[#allocation4 + $0x31] sm:$0xff]
      %v3484 = vld [vmem:[#allocation4 + $0x41] sm:$0xff]
      %v3485 = vld [vmem:[#allocation4 + $0x51] sm:$0xff]
      %v3486 = vld [vmem:[#allocation4 + $0x61] sm:$0xff]
      %v3487 = vld [vmem:[#allocation4 + $0x71] sm:$0xff]
      %v3488 = vld [vmem:[#allocation4 + $0x81] sm:$0xff]
      %v3489 = vld [vmem:[#allocation4 + $0x91] sm:$0xff]
      %s3490 = scalar_lea.vmem %s6, 8
      %v3491 = vld [vmem:[%s3490] sm:$0xff]
      %v3493 = vsel %vm681, %v3480, 0
      %v3496 = vsel %vm681, %v3481, 0
      %v3499 = vsel %vm681, %v3482, 0
      %v3502 = vsel %vm681, %v3483, 0
      %v3505 = vsel %vm681, %v3484, 0
      %v3508 = vsel %vm681, %v3485, 0
      %v3511 = vsel %vm681, %v3486, 0
      %v3514 = vsel %vm681, %v3487, 0
      %3516 = vmatprep.subr.mxu0 0.0
      %3517 = vmatpush1.msra.mxu0 0.0
      %3518 = vmatprep.subr.mxu0 0.0
      %3519 = vmatpush1.msra.mxu0 0.0
      %3520 = vmatprep.subr.mxu0 0.0
      %3521 = vmatpush1.msra.mxu0 0.0
      %3522 = vmatprep.subr.mxu0 0.0
      %3523 = vmatpush1.msra.mxu0 0.0
      %3524 = vmatprep.subr.mxu0 0.0
      %3525 = vmatpush1.msra.mxu0 0.0
      %3526 = vmatprep.subr.mxu0 0.0
      %3527 = vmatpush1.msra.mxu0 0.0
      %3528 = vmatprep.subr.mxu0 0.0
      %3529 = vmatpush1.msra.mxu0 0.0
      %3530 = vmatprep.subr.mxu0 0.0
      %3531 = vmatpush1.msra.mxu0 0.0
      %3532 = vmatprep.subr.mxu0 0.0
      %3533 = vmatpush1.msra.mxu0 0.0
      %3534 = vmatprep.subr.mxu0 0.0
      %3535 = vmatpush1.msra.mxu0 0.0
      %3536 = vmatprep.subr.mxu0 0.0
      %3537 = vmatpush1.msra.mxu0 0.0
      %3538 = vmatprep.subr.mxu0 0.0
      %3539 = vmatpush1.msra.mxu0 0.0
      %3540 = vmatprep.subr.mxu0 0.0
      %3541 = vmatpush1.msra.mxu0 0.0
      %3542 = vmatprep.subr.mxu0 0.0
      %3543 = vmatpush1.msra.mxu0 0.0
      %3544 = vmatprep.subr.mxu0 0.0
      %3545 = vmatpush1.msra.mxu0 0.0
      %3546 = vmatprep.subr.mxu0 0.0
      %3547 = vmatpush1.msra.mxu0 %v3491
      %3548 = vmatprep.subr.mxu0 0.0
      %3549 = vmatpush2.msra.mxu0 0.0
      %3550 = vmatprep.subr.mxu0 0.0
      %3551 = vmatpush2.msra.mxu0 0.0
      %3552 = vmatprep.subr.mxu0 0.0
      %3553 = vmatpush2.msra.mxu0 0.0
      %3554 = vmatprep.subr.mxu0 0.0
      %3555 = vmatpush2.msra.mxu0 0.0
      %3556 = vmatprep.subr.mxu0 0.0
      %3557 = vmatpush2.msra.mxu0 0.0
      %3558 = vmatprep.subr.mxu0 0.0
      %3559 = vmatpush2.msra.mxu0 0.0
      %3560 = vmatprep.subr.mxu0 0.0
      %3561 = vmatpush2.msra.mxu0 0.0
      %3562 = vmatprep.subr.mxu0 0.0
      %3563 = vmatpush2.msra.mxu0 0.0
      %3564 = vmatprep.subr.mxu0 0.0
      %3565 = vmatpush2.msra.mxu0 0.0
      %3566 = vmatprep.subr.mxu0 0.0
      %3567 = vmatpush2.msra.mxu0 0.0
      %3568 = vmatprep.subr.mxu0 0.0
      %3569 = vmatpush2.msra.mxu0 0.0
      %3570 = vmatprep.subr.mxu0 0.0
      %3571 = vmatpush2.msra.mxu0 0.0
      %3572 = vmatprep.subr.mxu0 0.0
      %3573 = vmatpush2.msra.mxu0 0.0
      %3574 = vmatprep.subr.mxu0 0.0
      %3575 = vmatpush2.msra.mxu0 0.0
      %3576 = vmatprep.subr.mxu0 0.0
      %3577 = vmatpush2.msra.mxu0 0.0
      %3578 = vmatprep.subr.mxu0 0.0
      %3579 = vmatpush2.msra.mxu0 0.0
      %3580 = vmatprep.mubr.f32.mxu0 0.0
      %3581 = vmatmul.mubr.f32.gmra.mxu0 %v3493
      %v3582 = vpop.f32.mrf.mxu0
      %v3583 = vadd.f32 0.0, %v3582
      %v3584 = vpop.f32.mrf.mxu0
      %3585 = vmatprep.mubr.f32.mxu0 0.0
      %3586 = vmatmul.mubr.f32.gmra.mxu0 %v3496
      %v3587 = vpop.f32.mrf.mxu0
      %v3588 = vadd.f32 0.0, %v3587
      %v3589 = vpop.f32.mrf.mxu0
      %3590 = vmatprep.mubr.f32.mxu0 0.0
      %3591 = vmatmul.mubr.f32.gmra.mxu0 %v3499
      %v3592 = vpop.f32.mrf.mxu0
      %v3593 = vadd.f32 0.0, %v3592
      %v3594 = vpop.f32.mrf.mxu0
      %3595 = vmatprep.mubr.f32.mxu0 0.0
      %3596 = vmatmul.mubr.f32.gmra.mxu0 %v3502
      %v3597 = vpop.f32.mrf.mxu0
      %v3598 = vadd.f32 0.0, %v3597
      %v3599 = vpop.f32.mrf.mxu0
      %3600 = vmatprep.mubr.f32.mxu0 0.0
      %3601 = vmatmul.mubr.f32.gmra.mxu0 %v3505
      %v3602 = vpop.f32.mrf.mxu0
      %v3603 = vadd.f32 0.0, %v3602
      %v3604 = vpop.f32.mrf.mxu0
      %3605 = vmatprep.mubr.f32.mxu0 0.0
      %3606 = vmatmul.mubr.f32.gmra.mxu0 %v3508
      %v3607 = vpop.f32.mrf.mxu0
      %v3608 = vadd.f32 0.0, %v3607
      %v3609 = vpop.f32.mrf.mxu0
      %3610 = vmatprep.mubr.f32.mxu0 0.0
      %3611 = vmatmul.mubr.f32.gmra.mxu0 %v3511
      %v3612 = vpop.f32.mrf.mxu0
      %v3613 = vadd.f32 0.0, %v3612
      %v3614 = vpop.f32.mrf.mxu0
      %3615 = vmatprep.mubr.f32.mxu0 0.0
      %3616 = vmatmul.mubr.f32.gmra.mxu0 %v3514
      %v3617 = vpop.f32.mrf.mxu0
      %v3618 = vadd.f32 0.0, %v3617
      %v3619 = vpop.f32.mrf.mxu0
      %3620 = vdwg.mxu0
      %v3621 = vadd.f32 %v3472, %v3583
      %v3622 = vadd.f32 %v3473, %v3588
      %v3623 = vadd.f32 %v3474, %v3593
      %v3624 = vadd.f32 %v3475, %v3598
      %v3625 = vadd.f32 %v3476, %v3603
      %v3626 = vadd.f32 %v3477, %v3608
      %v3627 = vadd.f32 %v3478, %v3613
      %v3628 = vadd.f32 %v3479, %v3618
      %s3629 = scalar_lea.vmem %s6, 32
      %v3630 = vld [vmem:[%s3629] sm:$0xff]
      %v3632 = vsel %vm681, %v3488, 0
      %3634 = vmatprep.subr.mxu0 0.0
      %3635 = vmatpush1.msra.mxu0 0.0
      %3636 = vmatprep.subr.mxu0 0.0
      %3637 = vmatpush1.msra.mxu0 0.0
      %3638 = vmatprep.subr.mxu0 0.0
      %3639 = vmatpush1.msra.mxu0 0.0
      %3640 = vmatprep.subr.mxu0 0.0
      %3641 = vmatpush1.msra.mxu0 0.0
      %3642 = vmatprep.subr.mxu0 0.0
      %3643 = vmatpush1.msra.mxu0 0.0
      %3644 = vmatprep.subr.mxu0 0.0
      %3645 = vmatpush1.msra.mxu0 0.0
      %3646 = vmatprep.subr.mxu0 0.0
      %3647 = vmatpush1.msra.mxu0 0.0
      %3648 = vmatprep.subr.mxu0 0.0
      %3649 = vmatpush1.msra.mxu0 0.0
      %3650 = vmatprep.subr.mxu0 0.0
      %3651 = vmatpush1.msra.mxu0 0.0
      %3652 = vmatprep.subr.mxu0 0.0
      %3653 = vmatpush1.msra.mxu0 0.0
      %3654 = vmatprep.subr.mxu0 0.0
      %3655 = vmatpush1.msra.mxu0 0.0
      %3656 = vmatprep.subr.mxu0 0.0
      %3657 = vmatpush1.msra.mxu0 0.0
      %3658 = vmatprep.subr.mxu0 0.0
      %3659 = vmatpush1.msra.mxu0 0.0
      %3660 = vmatprep.subr.mxu0 0.0
      %3661 = vmatpush1.msra.mxu0 0.0
      %3662 = vmatprep.subr.mxu0 0.0
      %3663 = vmatpush1.msra.mxu0 0.0
      %3664 = vmatprep.subr.mxu0 0.0
      %3665 = vmatpush1.msra.mxu0 %v3630
      %3666 = vmatprep.subr.mxu0 0.0
      %3667 = vmatpush2.msra.mxu0 0.0
      %3668 = vmatprep.subr.mxu0 0.0
      %3669 = vmatpush2.msra.mxu0 0.0
      %3670 = vmatprep.subr.mxu0 0.0
      %3671 = vmatpush2.msra.mxu0 0.0
      %3672 = vmatprep.subr.mxu0 0.0
      %3673 = vmatpush2.msra.mxu0 0.0
      %3674 = vmatprep.subr.mxu0 0.0
      %3675 = vmatpush2.msra.mxu0 0.0
      %3676 = vmatprep.subr.mxu0 0.0
      %3677 = vmatpush2.msra.mxu0 0.0
      %3678 = vmatprep.subr.mxu0 0.0
      %3679 = vmatpush2.msra.mxu0 0.0
      %3680 = vmatprep.subr.mxu0 0.0
      %3681 = vmatpush2.msra.mxu0 0.0
      %3682 = vmatprep.subr.mxu0 0.0
      %3683 = vmatpush2.msra.mxu0 0.0
      %3684 = vmatprep.subr.mxu0 0.0
      %3685 = vmatpush2.msra.mxu0 0.0
      %3686 = vmatprep.subr.mxu0 0.0
      %3687 = vmatpush2.msra.mxu0 0.0
      %3688 = vmatprep.subr.mxu0 0.0
      %3689 = vmatpush2.msra.mxu0 0.0
      %3690 = vmatprep.subr.mxu0 0.0
      %3691 = vmatpush2.msra.mxu0 0.0
      %3692 = vmatprep.subr.mxu0 0.0
      %3693 = vmatpush2.msra.mxu0 0.0
      %3694 = vmatprep.subr.mxu0 0.0
      %3695 = vmatpush2.msra.mxu0 0.0
      %3696 = vmatprep.subr.mxu0 0.0
      %3697 = vmatpush2.msra.mxu0 0.0
      %3698 = vmatprep.mubr.f32.mxu0 0.0
      %3699 = vmatmul.mubr.f32.gmra.mxu0 %v3496
      %v3700 = vpop.f32.mrf.mxu0
      %v3701 = vadd.f32 0.0, %v3700
      %v3702 = vpop.f32.mrf.mxu0
      %3703 = vmatprep.mubr.f32.mxu0 0.0
      %3704 = vmatmul.mubr.f32.gmra.mxu0 %v3499
      %v3705 = vpop.f32.mrf.mxu0
      %v3706 = vadd.f32 0.0, %v3705
      %v3707 = vpop.f32.mrf.mxu0
      %3708 = vmatprep.mubr.f32.mxu0 0.0
      %3709 = vmatmul.mubr.f32.gmra.mxu0 %v3502
      %v3710 = vpop.f32.mrf.mxu0
      %v3711 = vadd.f32 0.0, %v3710
      %v3712 = vpop.f32.mrf.mxu0
      %3713 = vmatprep.mubr.f32.mxu0 0.0
      %3714 = vmatmul.mubr.f32.gmra.mxu0 %v3505
      %v3715 = vpop.f32.mrf.mxu0
      %v3716 = vadd.f32 0.0, %v3715
      %v3717 = vpop.f32.mrf.mxu0
      %3718 = vmatprep.mubr.f32.mxu0 0.0
      %3719 = vmatmul.mubr.f32.gmra.mxu0 %v3508
      %v3720 = vpop.f32.mrf.mxu0
      %v3721 = vadd.f32 0.0, %v3720
      %v3722 = vpop.f32.mrf.mxu0
      %3723 = vmatprep.mubr.f32.mxu0 0.0
      %3724 = vmatmul.mubr.f32.gmra.mxu0 %v3511
      %v3725 = vpop.f32.mrf.mxu0
      %v3726 = vadd.f32 0.0, %v3725
      %v3727 = vpop.f32.mrf.mxu0
      %3728 = vmatprep.mubr.f32.mxu0 0.0
      %3729 = vmatmul.mubr.f32.gmra.mxu0 %v3514
      %v3730 = vpop.f32.mrf.mxu0
      %v3731 = vadd.f32 0.0, %v3730
      %v3732 = vpop.f32.mrf.mxu0
      %3733 = vmatprep.mubr.f32.mxu0 0.0
      %3734 = vmatmul.mubr.f32.gmra.mxu0 %v3632
      %v3735 = vpop.f32.mrf.mxu0
      %v3736 = vadd.f32 0.0, %v3735
      %v3737 = vpop.f32.mrf.mxu0
      %3738 = vdwg.mxu0
      %v3739 = vadd.f32 %v3621, %v3701
      %v3740 = vadd.f32 %v3622, %v3706
      %v3741 = vadd.f32 %v3623, %v3711
      %v3742 = vadd.f32 %v3624, %v3716
      %v3743 = vadd.f32 %v3625, %v3721
      %v3744 = vadd.f32 %v3626, %v3726
      %v3745 = vadd.f32 %v3627, %v3731
      %v3746 = vadd.f32 %v3628, %v3736
      %s3747 = scalar_lea.vmem %s6, 56
      %v3748 = vld [vmem:[%s3747] sm:$0xff]
      %v3750 = vsel %vm681, %v3489, 0
      %3752 = vmatprep.subr.mxu0 0.0
      %3753 = vmatpush1.msra.mxu0 0.0
      %3754 = vmatprep.subr.mxu0 0.0
      %3755 = vmatpush1.msra.mxu0 0.0
      %3756 = vmatprep.subr.mxu0 0.0
      %3757 = vmatpush1.msra.mxu0 0.0
      %3758 = vmatprep.subr.mxu0 0.0
      %3759 = vmatpush1.msra.mxu0 0.0
      %3760 = vmatprep.subr.mxu0 0.0
      %3761 = vmatpush1.msra.mxu0 0.0
      %3762 = vmatprep.subr.mxu0 0.0
      %3763 = vmatpush1.msra.mxu0 0.0
      %3764 = vmatprep.subr.mxu0 0.0
      %3765 = vmatpush1.msra.mxu0 0.0
      %3766 = vmatprep.subr.mxu0 0.0
      %3767 = vmatpush1.msra.mxu0 0.0
      %3768 = vmatprep.subr.mxu0 0.0
      %3769 = vmatpush1.msra.mxu0 0.0
      %3770 = vmatprep.subr.mxu0 0.0
      %3771 = vmatpush1.msra.mxu0 0.0
      %3772 = vmatprep.subr.mxu0 0.0
      %3773 = vmatpush1.msra.mxu0 0.0
      %3774 = vmatprep.subr.mxu0 0.0
      %3775 = vmatpush1.msra.mxu0 0.0
      %3776 = vmatprep.subr.mxu0 0.0
      %3777 = vmatpush1.msra.mxu0 0.0
      %3778 = vmatprep.subr.mxu0 0.0
      %3779 = vmatpush1.msra.mxu0 0.0
      %3780 = vmatprep.subr.mxu0 0.0
      %3781 = vmatpush1.msra.mxu0 0.0
      %3782 = vmatprep.subr.mxu0 0.0
      %3783 = vmatpush1.msra.mxu0 %v3748
      %3784 = vmatprep.subr.mxu0 0.0
      %3785 = vmatpush2.msra.mxu0 0.0
      %3786 = vmatprep.subr.mxu0 0.0
      %3787 = vmatpush2.msra.mxu0 0.0
      %3788 = vmatprep.subr.mxu0 0.0
      %3789 = vmatpush2.msra.mxu0 0.0
      %3790 = vmatprep.subr.mxu0 0.0
      %3791 = vmatpush2.msra.mxu0 0.0
      %3792 = vmatprep.subr.mxu0 0.0
      %3793 = vmatpush2.msra.mxu0 0.0
      %3794 = vmatprep.subr.mxu0 0.0
      %3795 = vmatpush2.msra.mxu0 0.0
      %3796 = vmatprep.subr.mxu0 0.0
      %3797 = vmatpush2.msra.mxu0 0.0
      %3798 = vmatprep.subr.mxu0 0.0
      %3799 = vmatpush2.msra.mxu0 0.0
      %3800 = vmatprep.subr.mxu0 0.0
      %3801 = vmatpush2.msra.mxu0 0.0
      %3802 = vmatprep.subr.mxu0 0.0
      %3803 = vmatpush2.msra.mxu0 0.0
      %3804 = vmatprep.subr.mxu0 0.0
      %3805 = vmatpush2.msra.mxu0 0.0
      %3806 = vmatprep.subr.mxu0 0.0
      %3807 = vmatpush2.msra.mxu0 0.0
      %3808 = vmatprep.subr.mxu0 0.0
      %3809 = vmatpush2.msra.mxu0 0.0
      %3810 = vmatprep.subr.mxu0 0.0
      %3811 = vmatpush2.msra.mxu0 0.0
      %3812 = vmatprep.subr.mxu0 0.0
      %3813 = vmatpush2.msra.mxu0 0.0
      %3814 = vmatprep.subr.mxu0 0.0
      %3815 = vmatpush2.msra.mxu0 0.0
      %3816 = vmatprep.mubr.f32.mxu0 0.0
      %3817 = vmatmul.mubr.f32.gmra.mxu0 %v3499
      %v3818 = vpop.f32.mrf.mxu0
      %v3819 = vadd.f32 0.0, %v3818
      %v3820 = vpop.f32.mrf.mxu0
      %3821 = vmatprep.mubr.f32.mxu0 0.0
      %3822 = vmatmul.mubr.f32.gmra.mxu0 %v3502
      %v3823 = vpop.f32.mrf.mxu0
      %v3824 = vadd.f32 0.0, %v3823
      %v3825 = vpop.f32.mrf.mxu0
      %3826 = vmatprep.mubr.f32.mxu0 0.0
      %3827 = vmatmul.mubr.f32.gmra.mxu0 %v3505
      %v3828 = vpop.f32.mrf.mxu0
      %v3829 = vadd.f32 0.0, %v3828
      %v3830 = vpop.f32.mrf.mxu0
      %3831 = vmatprep.mubr.f32.mxu0 0.0
      %3832 = vmatmul.mubr.f32.gmra.mxu0 %v3508
      %v3833 = vpop.f32.mrf.mxu0
      %v3834 = vadd.f32 0.0, %v3833
      %v3835 = vpop.f32.mrf.mxu0
      %3836 = vmatprep.mubr.f32.mxu0 0.0
      %3837 = vmatmul.mubr.f32.gmra.mxu0 %v3511
      %v3838 = vpop.f32.mrf.mxu0
      %v3839 = vadd.f32 0.0, %v3838
      %v3840 = vpop.f32.mrf.mxu0
      %3841 = vmatprep.mubr.f32.mxu0 0.0
      %3842 = vmatmul.mubr.f32.gmra.mxu0 %v3514
      %v3843 = vpop.f32.mrf.mxu0
      %v3844 = vadd.f32 0.0, %v3843
      %v3845 = vpop.f32.mrf.mxu0
      %3846 = vmatprep.mubr.f32.mxu0 0.0
      %3847 = vmatmul.mubr.f32.gmra.mxu0 %v3632
      %v3848 = vpop.f32.mrf.mxu0
      %v3849 = vadd.f32 0.0, %v3848
      %v3850 = vpop.f32.mrf.mxu0
      %3851 = vmatprep.mubr.f32.mxu0 0.0
      %3852 = vmatmul.mubr.f32.gmra.mxu0 %v3750
      %v3853 = vpop.f32.mrf.mxu0
      %v3854 = vadd.f32 0.0, %v3853
      %v3855 = vpop.f32.mrf.mxu0
      %3856 = vdwg.mxu0
      %v3857 = vadd.f32 %v3739, %v3819
      %v3858 = vadd.f32 %v3740, %v3824
      %v3859 = vadd.f32 %v3741, %v3829
      %v3860 = vadd.f32 %v3742, %v3834
      %v3861 = vadd.f32 %v3743, %v3839
      %v3862 = vadd.f32 %v3744, %v3844
      %v3863 = vadd.f32 %v3745, %v3849
      %v3864 = vadd.f32 %v3746, %v3854
      %v3865 = vld [vmem:[#allocation4 + $0x2] sm:$0xff]
      %v3866 = vld [vmem:[#allocation4 + $0x12] sm:$0xff]
      %v3867 = vld [vmem:[#allocation4 + $0x22] sm:$0xff]
      %v3868 = vld [vmem:[#allocation4 + $0x32] sm:$0xff]
      %v3869 = vld [vmem:[#allocation4 + $0x42] sm:$0xff]
      %v3870 = vld [vmem:[#allocation4 + $0x52] sm:$0xff]
      %v3871 = vld [vmem:[#allocation4 + $0x62] sm:$0xff]
      %v3872 = vld [vmem:[#allocation4 + $0x72] sm:$0xff]
      %v3873 = vld [vmem:[#allocation4 + $0x82] sm:$0xff]
      %v3874 = vld [vmem:[#allocation4 + $0x92] sm:$0xff]
      %s3875 = scalar_lea.vmem %s6, 16
      %v3876 = vld [vmem:[%s3875] sm:$0xff]
      %v3878 = vsel %vm681, %v3865, 0
      %v3881 = vsel %vm681, %v3866, 0
      %v3884 = vsel %vm681, %v3867, 0
      %v3887 = vsel %vm681, %v3868, 0
      %v3890 = vsel %vm681, %v3869, 0
      %v3893 = vsel %vm681, %v3870, 0
      %v3896 = vsel %vm681, %v3871, 0
      %v3899 = vsel %vm681, %v3872, 0
      %3901 = vmatprep.subr.mxu0 0.0
      %3902 = vmatpush1.msra.mxu0 0.0
      %3903 = vmatprep.subr.mxu0 0.0
      %3904 = vmatpush1.msra.mxu0 0.0
      %3905 = vmatprep.subr.mxu0 0.0
      %3906 = vmatpush1.msra.mxu0 0.0
      %3907 = vmatprep.subr.mxu0 0.0
      %3908 = vmatpush1.msra.mxu0 0.0
      %3909 = vmatprep.subr.mxu0 0.0
      %3910 = vmatpush1.msra.mxu0 0.0
      %3911 = vmatprep.subr.mxu0 0.0
      %3912 = vmatpush1.msra.mxu0 0.0
      %3913 = vmatprep.subr.mxu0 0.0
      %3914 = vmatpush1.msra.mxu0 0.0
      %3915 = vmatprep.subr.mxu0 0.0
      %3916 = vmatpush1.msra.mxu0 0.0
      %3917 = vmatprep.subr.mxu0 0.0
      %3918 = vmatpush1.msra.mxu0 0.0
      %3919 = vmatprep.subr.mxu0 0.0
      %3920 = vmatpush1.msra.mxu0 0.0
      %3921 = vmatprep.subr.mxu0 0.0
      %3922 = vmatpush1.msra.mxu0 0.0
      %3923 = vmatprep.subr.mxu0 0.0
      %3924 = vmatpush1.msra.mxu0 0.0
      %3925 = vmatprep.subr.mxu0 0.0
      %3926 = vmatpush1.msra.mxu0 0.0
      %3927 = vmatprep.subr.mxu0 0.0
      %3928 = vmatpush1.msra.mxu0 0.0
      %3929 = vmatprep.subr.mxu0 0.0
      %3930 = vmatpush1.msra.mxu0 0.0
      %3931 = vmatprep.subr.mxu0 0.0
      %3932 = vmatpush1.msra.mxu0 %v3876
      %3933 = vmatprep.subr.mxu0 0.0
      %3934 = vmatpush2.msra.mxu0 0.0
      %3935 = vmatprep.subr.mxu0 0.0
      %3936 = vmatpush2.msra.mxu0 0.0
      %3937 = vmatprep.subr.mxu0 0.0
      %3938 = vmatpush2.msra.mxu0 0.0
      %3939 = vmatprep.subr.mxu0 0.0
      %3940 = vmatpush2.msra.mxu0 0.0
      %3941 = vmatprep.subr.mxu0 0.0
      %3942 = vmatpush2.msra.mxu0 0.0
      %3943 = vmatprep.subr.mxu0 0.0
      %3944 = vmatpush2.msra.mxu0 0.0
      %3945 = vmatprep.subr.mxu0 0.0
      %3946 = vmatpush2.msra.mxu0 0.0
      %3947 = vmatprep.subr.mxu0 0.0
      %3948 = vmatpush2.msra.mxu0 0.0
      %3949 = vmatprep.subr.mxu0 0.0
      %3950 = vmatpush2.msra.mxu0 0.0
      %3951 = vmatprep.subr.mxu0 0.0
      %3952 = vmatpush2.msra.mxu0 0.0
      %3953 = vmatprep.subr.mxu0 0.0
      %3954 = vmatpush2.msra.mxu0 0.0
      %3955 = vmatprep.subr.mxu0 0.0
      %3956 = vmatpush2.msra.mxu0 0.0
      %3957 = vmatprep.subr.mxu0 0.0
      %3958 = vmatpush2.msra.mxu0 0.0
      %3959 = vmatprep.subr.mxu0 0.0
      %3960 = vmatpush2.msra.mxu0 0.0
      %3961 = vmatprep.subr.mxu0 0.0
      %3962 = vmatpush2.msra.mxu0 0.0
      %3963 = vmatprep.subr.mxu0 0.0
      %3964 = vmatpush2.msra.mxu0 0.0
      %3965 = vmatprep.mubr.f32.mxu0 0.0
      %3966 = vmatmul.mubr.f32.gmra.mxu0 %v3878
      %v3967 = vpop.f32.mrf.mxu0
      %v3968 = vadd.f32 0.0, %v3967
      %v3969 = vpop.f32.mrf.mxu0
      %3970 = vmatprep.mubr.f32.mxu0 0.0
      %3971 = vmatmul.mubr.f32.gmra.mxu0 %v3881
      %v3972 = vpop.f32.mrf.mxu0
      %v3973 = vadd.f32 0.0, %v3972
      %v3974 = vpop.f32.mrf.mxu0
      %3975 = vmatprep.mubr.f32.mxu0 0.0
      %3976 = vmatmul.mubr.f32.gmra.mxu0 %v3884
      %v3977 = vpop.f32.mrf.mxu0
      %v3978 = vadd.f32 0.0, %v3977
      %v3979 = vpop.f32.mrf.mxu0
      %3980 = vmatprep.mubr.f32.mxu0 0.0
      %3981 = vmatmul.mubr.f32.gmra.mxu0 %v3887
      %v3982 = vpop.f32.mrf.mxu0
      %v3983 = vadd.f32 0.0, %v3982
      %v3984 = vpop.f32.mrf.mxu0
      %3985 = vmatprep.mubr.f32.mxu0 0.0
      %3986 = vmatmul.mubr.f32.gmra.mxu0 %v3890
      %v3987 = vpop.f32.mrf.mxu0
      %v3988 = vadd.f32 0.0, %v3987
      %v3989 = vpop.f32.mrf.mxu0
      %3990 = vmatprep.mubr.f32.mxu0 0.0
      %3991 = vmatmul.mubr.f32.gmra.mxu0 %v3893
      %v3992 = vpop.f32.mrf.mxu0
      %v3993 = vadd.f32 0.0, %v3992
      %v3994 = vpop.f32.mrf.mxu0
      %3995 = vmatprep.mubr.f32.mxu0 0.0
      %3996 = vmatmul.mubr.f32.gmra.mxu0 %v3896
      %v3997 = vpop.f32.mrf.mxu0
      %v3998 = vadd.f32 0.0, %v3997
      %v3999 = vpop.f32.mrf.mxu0
      %4000 = vmatprep.mubr.f32.mxu0 0.0
      %4001 = vmatmul.mubr.f32.gmra.mxu0 %v3899
      %v4002 = vpop.f32.mrf.mxu0
      %v4003 = vadd.f32 0.0, %v4002
      %v4004 = vpop.f32.mrf.mxu0
      %4005 = vdwg.mxu0
      %v4006 = vadd.f32 %v3857, %v3968
      %v4007 = vadd.f32 %v3858, %v3973
      %v4008 = vadd.f32 %v3859, %v3978
      %v4009 = vadd.f32 %v3860, %v3983
      %v4010 = vadd.f32 %v3861, %v3988
      %v4011 = vadd.f32 %v3862, %v3993
      %v4012 = vadd.f32 %v3863, %v3998
      %v4013 = vadd.f32 %v3864, %v4003
      %s4014 = scalar_lea.vmem %s6, 40
      %v4015 = vld [vmem:[%s4014] sm:$0xff]
      %v4017 = vsel %vm681, %v3873, 0
      %4019 = vmatprep.subr.mxu0 0.0
      %4020 = vmatpush1.msra.mxu0 0.0
      %4021 = vmatprep.subr.mxu0 0.0
      %4022 = vmatpush1.msra.mxu0 0.0
      %4023 = vmatprep.subr.mxu0 0.0
      %4024 = vmatpush1.msra.mxu0 0.0
      %4025 = vmatprep.subr.mxu0 0.0
      %4026 = vmatpush1.msra.mxu0 0.0
      %4027 = vmatprep.subr.mxu0 0.0
      %4028 = vmatpush1.msra.mxu0 0.0
      %4029 = vmatprep.subr.mxu0 0.0
      %4030 = vmatpush1.msra.mxu0 0.0
      %4031 = vmatprep.subr.mxu0 0.0
      %4032 = vmatpush1.msra.mxu0 0.0
      %4033 = vmatprep.subr.mxu0 0.0
      %4034 = vmatpush1.msra.mxu0 0.0
      %4035 = vmatprep.subr.mxu0 0.0
      %4036 = vmatpush1.msra.mxu0 0.0
      %4037 = vmatprep.subr.mxu0 0.0
      %4038 = vmatpush1.msra.mxu0 0.0
      %4039 = vmatprep.subr.mxu0 0.0
      %4040 = vmatpush1.msra.mxu0 0.0
      %4041 = vmatprep.subr.mxu0 0.0
      %4042 = vmatpush1.msra.mxu0 0.0
      %4043 = vmatprep.subr.mxu0 0.0
      %4044 = vmatpush1.msra.mxu0 0.0
      %4045 = vmatprep.subr.mxu0 0.0
      %4046 = vmatpush1.msra.mxu0 0.0
      %4047 = vmatprep.subr.mxu0 0.0
      %4048 = vmatpush1.msra.mxu0 0.0
      %4049 = vmatprep.subr.mxu0 0.0
      %4050 = vmatpush1.msra.mxu0 %v4015
      %4051 = vmatprep.subr.mxu0 0.0
      %4052 = vmatpush2.msra.mxu0 0.0
      %4053 = vmatprep.subr.mxu0 0.0
      %4054 = vmatpush2.msra.mxu0 0.0
      %4055 = vmatprep.subr.mxu0 0.0
      %4056 = vmatpush2.msra.mxu0 0.0
      %4057 = vmatprep.subr.mxu0 0.0
      %4058 = vmatpush2.msra.mxu0 0.0
      %4059 = vmatprep.subr.mxu0 0.0
      %4060 = vmatpush2.msra.mxu0 0.0
      %4061 = vmatprep.subr.mxu0 0.0
      %4062 = vmatpush2.msra.mxu0 0.0
      %4063 = vmatprep.subr.mxu0 0.0
      %4064 = vmatpush2.msra.mxu0 0.0
      %4065 = vmatprep.subr.mxu0 0.0
      %4066 = vmatpush2.msra.mxu0 0.0
      %4067 = vmatprep.subr.mxu0 0.0
      %4068 = vmatpush2.msra.mxu0 0.0
      %4069 = vmatprep.subr.mxu0 0.0
      %4070 = vmatpush2.msra.mxu0 0.0
      %4071 = vmatprep.subr.mxu0 0.0
      %4072 = vmatpush2.msra.mxu0 0.0
      %4073 = vmatprep.subr.mxu0 0.0
      %4074 = vmatpush2.msra.mxu0 0.0
      %4075 = vmatprep.subr.mxu0 0.0
      %4076 = vmatpush2.msra.mxu0 0.0
      %4077 = vmatprep.subr.mxu0 0.0
      %4078 = vmatpush2.msra.mxu0 0.0
      %4079 = vmatprep.subr.mxu0 0.0
      %4080 = vmatpush2.msra.mxu0 0.0
      %4081 = vmatprep.subr.mxu0 0.0
      %4082 = vmatpush2.msra.mxu0 0.0
      %4083 = vmatprep.mubr.f32.mxu0 0.0
      %4084 = vmatmul.mubr.f32.gmra.mxu0 %v3881
      %v4085 = vpop.f32.mrf.mxu0
      %v4086 = vadd.f32 0.0, %v4085
      %v4087 = vpop.f32.mrf.mxu0
      %4088 = vmatprep.mubr.f32.mxu0 0.0
      %4089 = vmatmul.mubr.f32.gmra.mxu0 %v3884
      %v4090 = vpop.f32.mrf.mxu0
      %v4091 = vadd.f32 0.0, %v4090
      %v4092 = vpop.f32.mrf.mxu0
      %4093 = vmatprep.mubr.f32.mxu0 0.0
      %4094 = vmatmul.mubr.f32.gmra.mxu0 %v3887
      %v4095 = vpop.f32.mrf.mxu0
      %v4096 = vadd.f32 0.0, %v4095
      %v4097 = vpop.f32.mrf.mxu0
      %4098 = vmatprep.mubr.f32.mxu0 0.0
      %4099 = vmatmul.mubr.f32.gmra.mxu0 %v3890
      %v4100 = vpop.f32.mrf.mxu0
      %v4101 = vadd.f32 0.0, %v4100
      %v4102 = vpop.f32.mrf.mxu0
      %4103 = vmatprep.mubr.f32.mxu0 0.0
      %4104 = vmatmul.mubr.f32.gmra.mxu0 %v3893
      %v4105 = vpop.f32.mrf.mxu0
      %v4106 = vadd.f32 0.0, %v4105
      %v4107 = vpop.f32.mrf.mxu0
      %4108 = vmatprep.mubr.f32.mxu0 0.0
      %4109 = vmatmul.mubr.f32.gmra.mxu0 %v3896
      %v4110 = vpop.f32.mrf.mxu0
      %v4111 = vadd.f32 0.0, %v4110
      %v4112 = vpop.f32.mrf.mxu0
      %4113 = vmatprep.mubr.f32.mxu0 0.0
      %4114 = vmatmul.mubr.f32.gmra.mxu0 %v3899
      %v4115 = vpop.f32.mrf.mxu0
      %v4116 = vadd.f32 0.0, %v4115
      %v4117 = vpop.f32.mrf.mxu0
      %4118 = vmatprep.mubr.f32.mxu0 0.0
      %4119 = vmatmul.mubr.f32.gmra.mxu0 %v4017
      %v4120 = vpop.f32.mrf.mxu0
      %v4121 = vadd.f32 0.0, %v4120
      %v4122 = vpop.f32.mrf.mxu0
      %4123 = vdwg.mxu0
      %v4124 = vadd.f32 %v4006, %v4086
      %v4125 = vadd.f32 %v4007, %v4091
      %v4126 = vadd.f32 %v4008, %v4096
      %v4127 = vadd.f32 %v4009, %v4101
      %v4128 = vadd.f32 %v4010, %v4106
      %v4129 = vadd.f32 %v4011, %v4111
      %v4130 = vadd.f32 %v4012, %v4116
      %v4131 = vadd.f32 %v4013, %v4121
      %s4132 = scalar_lea.vmem %s6, 64
      %v4133 = vld [vmem:[%s4132] sm:$0xff]
      %v4135 = vsel %vm681, %v3874, 0
      %4137 = vmatprep.subr.mxu0 0.0
      %4138 = vmatpush1.msra.mxu0 0.0
      %4139 = vmatprep.subr.mxu0 0.0
      %4140 = vmatpush1.msra.mxu0 0.0
      %4141 = vmatprep.subr.mxu0 0.0
      %4142 = vmatpush1.msra.mxu0 0.0
      %4143 = vmatprep.subr.mxu0 0.0
      %4144 = vmatpush1.msra.mxu0 0.0
      %4145 = vmatprep.subr.mxu0 0.0
      %4146 = vmatpush1.msra.mxu0 0.0
      %4147 = vmatprep.subr.mxu0 0.0
      %4148 = vmatpush1.msra.mxu0 0.0
      %4149 = vmatprep.subr.mxu0 0.0
      %4150 = vmatpush1.msra.mxu0 0.0
      %4151 = vmatprep.subr.mxu0 0.0
      %4152 = vmatpush1.msra.mxu0 0.0
      %4153 = vmatprep.subr.mxu0 0.0
      %4154 = vmatpush1.msra.mxu0 0.0
      %4155 = vmatprep.subr.mxu0 0.0
      %4156 = vmatpush1.msra.mxu0 0.0
      %4157 = vmatprep.subr.mxu0 0.0
      %4158 = vmatpush1.msra.mxu0 0.0
      %4159 = vmatprep.subr.mxu0 0.0
      %4160 = vmatpush1.msra.mxu0 0.0
      %4161 = vmatprep.subr.mxu0 0.0
      %4162 = vmatpush1.msra.mxu0 0.0
      %4163 = vmatprep.subr.mxu0 0.0
      %4164 = vmatpush1.msra.mxu0 0.0
      %4165 = vmatprep.subr.mxu0 0.0
      %4166 = vmatpush1.msra.mxu0 0.0
      %4167 = vmatprep.subr.mxu0 0.0
      %4168 = vmatpush1.msra.mxu0 %v4133
      %4169 = vmatprep.subr.mxu0 0.0
      %4170 = vmatpush2.msra.mxu0 0.0
      %4171 = vmatprep.subr.mxu0 0.0
      %4172 = vmatpush2.msra.mxu0 0.0
      %4173 = vmatprep.subr.mxu0 0.0
      %4174 = vmatpush2.msra.mxu0 0.0
      %4175 = vmatprep.subr.mxu0 0.0
      %4176 = vmatpush2.msra.mxu0 0.0
      %4177 = vmatprep.subr.mxu0 0.0
      %4178 = vmatpush2.msra.mxu0 0.0
      %4179 = vmatprep.subr.mxu0 0.0
      %4180 = vmatpush2.msra.mxu0 0.0
      %4181 = vmatprep.subr.mxu0 0.0
      %4182 = vmatpush2.msra.mxu0 0.0
      %4183 = vmatprep.subr.mxu0 0.0
      %4184 = vmatpush2.msra.mxu0 0.0
      %4185 = vmatprep.subr.mxu0 0.0
      %4186 = vmatpush2.msra.mxu0 0.0
      %4187 = vmatprep.subr.mxu0 0.0
      %4188 = vmatpush2.msra.mxu0 0.0
      %4189 = vmatprep.subr.mxu0 0.0
      %4190 = vmatpush2.msra.mxu0 0.0
      %4191 = vmatprep.subr.mxu0 0.0
      %4192 = vmatpush2.msra.mxu0 0.0
      %4193 = vmatprep.subr.mxu0 0.0
      %4194 = vmatpush2.msra.mxu0 0.0
      %4195 = vmatprep.subr.mxu0 0.0
      %4196 = vmatpush2.msra.mxu0 0.0
      %4197 = vmatprep.subr.mxu0 0.0
      %4198 = vmatpush2.msra.mxu0 0.0
      %4199 = vmatprep.subr.mxu0 0.0
      %4200 = vmatpush2.msra.mxu0 0.0
      %4201 = vmatprep.mubr.f32.mxu0 0.0
      %4202 = vmatmul.mubr.f32.gmra.mxu0 %v3884
      %v4203 = vpop.f32.mrf.mxu0
      %v4204 = vadd.f32 0.0, %v4203
      %v4205 = vpop.f32.mrf.mxu0
      %4206 = vmatprep.mubr.f32.mxu0 0.0
      %4207 = vmatmul.mubr.f32.gmra.mxu0 %v3887
      %v4208 = vpop.f32.mrf.mxu0
      %v4209 = vadd.f32 0.0, %v4208
      %v4210 = vpop.f32.mrf.mxu0
      %4211 = vmatprep.mubr.f32.mxu0 0.0
      %4212 = vmatmul.mubr.f32.gmra.mxu0 %v3890
      %v4213 = vpop.f32.mrf.mxu0
      %v4214 = vadd.f32 0.0, %v4213
      %v4215 = vpop.f32.mrf.mxu0
      %4216 = vmatprep.mubr.f32.mxu0 0.0
      %4217 = vmatmul.mubr.f32.gmra.mxu0 %v3893
      %v4218 = vpop.f32.mrf.mxu0
      %v4219 = vadd.f32 0.0, %v4218
      %v4220 = vpop.f32.mrf.mxu0
      %4221 = vmatprep.mubr.f32.mxu0 0.0
      %4222 = vmatmul.mubr.f32.gmra.mxu0 %v3896
      %v4223 = vpop.f32.mrf.mxu0
      %v4224 = vadd.f32 0.0, %v4223
      %v4225 = vpop.f32.mrf.mxu0
      %4226 = vmatprep.mubr.f32.mxu0 0.0
      %4227 = vmatmul.mubr.f32.gmra.mxu0 %v3899
      %v4228 = vpop.f32.mrf.mxu0
      %v4229 = vadd.f32 0.0, %v4228
      %v4230 = vpop.f32.mrf.mxu0
      %4231 = vmatprep.mubr.f32.mxu0 0.0
      %4232 = vmatmul.mubr.f32.gmra.mxu0 %v4017
      %v4233 = vpop.f32.mrf.mxu0
      %v4234 = vadd.f32 0.0, %v4233
      %v4235 = vpop.f32.mrf.mxu0
      %4236 = vmatprep.mubr.f32.mxu0 0.0
      %4237 = vmatmul.mubr.f32.gmra.mxu0 %v4135
      %v4238 = vpop.f32.mrf.mxu0
      %v4239 = vadd.f32 0.0, %v4238
      %v4240 = vpop.f32.mrf.mxu0
      %4241 = vdwg.mxu0
      %v4242 = vadd.f32 %v4124, %v4204
      %v4243 = vadd.f32 %v4125, %v4209
      %v4244 = vadd.f32 %v4126, %v4214
      %v4245 = vadd.f32 %v4127, %v4219
      %v4246 = vadd.f32 %v4128, %v4224
      %v4247 = vadd.f32 %v4129, %v4229
      %v4248 = vadd.f32 %v4130, %v4234
      %v4249 = vadd.f32 %v4131, %v4239
      %v4250 = vld [vmem:[%s7] sm:$0x1]
      %v4252 = vlaneseq
      %v4253 = vshrl.u32 %v4252, 7
      %v4254 = vsub.s32 0, %v4253
      %v4255 = vrot.slane %v4250, %v4254
      %v4257 = vadd.f32 %v4242, %v4255
      %v4258 = vadd.f32 %v4243, %v4255
      %v4259 = vadd.f32 %v4244, %v4255
      %v4260 = vadd.f32 %v4245, %v4255
      %v4261 = vadd.f32 %v4246, %v4255
      %v4262 = vadd.f32 %v4247, %v4255
      %v4263 = vadd.f32 %v4248, %v4255
      %v4264 = vadd.f32 %v4249, %v4255
      %v4265 = vmul.f32 %v4257, 0.5
      %v4266 = vmul.f32 %v4258, 0.5
      %v4267 = vmul.f32 %v4259, 0.5
      %v4268 = vmul.f32 %v4260, 0.5
      %v4269 = vmul.f32 %v4261, 0.5
      %v4270 = vmul.f32 %v4262, 0.5
      %v4271 = vmul.f32 %v4263, 0.5
      %v4272 = vmul.f32 %v4264, 0.5
      %v4273 = vtanh.pop %v4265
      %v4274 = vtanh.pop %v4266
      %v4275 = vtanh.pop %v4267
      %v4276 = vtanh.pop %v4268
      %v4277 = vtanh.pop %v4269
      %v4278 = vtanh.pop %v4270
      %v4279 = vtanh.pop %v4271
      %v4280 = vtanh.pop %v4272
      %v4281 = vadd.f32 %v4273, 1.0
      %v4282 = vadd.f32 %v4274, 1.0
      %v4283 = vadd.f32 %v4275, 1.0
      %v4284 = vadd.f32 %v4276, 1.0
      %v4285 = vadd.f32 %v4277, 1.0
      %v4286 = vadd.f32 %v4278, 1.0
      %v4287 = vadd.f32 %v4279, 1.0
      %v4288 = vadd.f32 %v4280, 1.0
      %v4289 = vmul.f32 %v4281, 0.5
      %v4290 = vmul.f32 %v4282, 0.5
      %v4291 = vmul.f32 %v4283, 0.5
      %v4292 = vmul.f32 %v4284, 0.5
      %v4293 = vmul.f32 %v4285, 0.5
      %v4294 = vmul.f32 %v4286, 0.5
      %v4295 = vmul.f32 %v4287, 0.5
      %v4296 = vmul.f32 %v4288, 0.5
      %v4297 = vtanh.pop %v4257
      %v4298 = vtanh.pop %v4258
      %v4299 = vtanh.pop %v4259
      %v4300 = vtanh.pop %v4260
      %v4301 = vtanh.pop %v4261
      %v4302 = vtanh.pop %v4262
      %v4303 = vtanh.pop %v4263
      %v4304 = vtanh.pop %v4264
      %v4305 = vld [vmem:[%s517] sm:$0xff]
      %v4306 = vld [vmem:[%s517 + $0x8] sm:$0xff]
      %v4307 = vld [vmem:[%s517 + $0x10] sm:$0xff]
      %v4308 = vld [vmem:[%s517 + $0x18] sm:$0xff]
      %v4309 = vld [vmem:[%s517 + $0x20] sm:$0xff]
      %v4310 = vld [vmem:[%s517 + $0x28] sm:$0xff]
      %v4311 = vld [vmem:[%s517 + $0x30] sm:$0xff]
      %v4312 = vld [vmem:[%s517 + $0x38] sm:$0xff]
      %4321 = vrot.lane.b32.xlu0 %v4305, 8
      %v4322 = vpop.permute.xlu0 %4321
      %4323 = vrot.lane.b32.xlu0 %v4306, 8
      %v4324 = vpop.permute.xlu0 %4323
      %4325 = vrot.lane.b32.xlu0 %v4307, 8
      %v4326 = vpop.permute.xlu0 %4325
      %4327 = vrot.lane.b32.xlu0 %v4308, 8
      %v4328 = vpop.permute.xlu0 %4327
      %4329 = vrot.lane.b32.xlu0 %v4309, 8
      %v4330 = vpop.permute.xlu0 %4329
      %4331 = vrot.lane.b32.xlu0 %v4310, 8
      %v4332 = vpop.permute.xlu0 %4331
      %4333 = vrot.lane.b32.xlu0 %v4311, 8
      %v4334 = vpop.permute.xlu0 %4333
      %4335 = vrot.lane.b32.xlu0 %v4312, 8
      %v4336 = vpop.permute.xlu0 %4335
      %v4345 = vmul.f32 %v4289, %v4322
      %v4346 = vmul.f32 %v4290, %v4324
      %v4347 = vmul.f32 %v4291, %v4326
      %v4348 = vmul.f32 %v4292, %v4328
      %v4349 = vmul.f32 %v4293, %v4330
      %v4350 = vmul.f32 %v4294, %v4332
      %v4351 = vmul.f32 %v4295, %v4334
      %v4352 = vmul.f32 %v4296, %v4336
      %4361 = vrot.lane.b32.xlu0 %v4297, 104
      %v4362 = vpop.permute.xlu0 %4361
      %4363 = vrot.lane.b32.xlu0 %v4298, 104
      %v4364 = vpop.permute.xlu0 %4363
      %4365 = vrot.lane.b32.xlu0 %v4299, 104
      %v4366 = vpop.permute.xlu0 %4365
      %4367 = vrot.lane.b32.xlu0 %v4300, 104
      %v4368 = vpop.permute.xlu0 %4367
      %4369 = vrot.lane.b32.xlu0 %v4301, 104
      %v4370 = vpop.permute.xlu0 %4369
      %4371 = vrot.lane.b32.xlu0 %v4302, 104
      %v4372 = vpop.permute.xlu0 %4371
      %4373 = vrot.lane.b32.xlu0 %v4303, 104
      %v4374 = vpop.permute.xlu0 %4373
      %4375 = vrot.lane.b32.xlu0 %v4304, 104
      %v4376 = vpop.permute.xlu0 %4375
      %v4385 = vmul.f32 %v4289, %v4362
      %v4386 = vmul.f32 %v4290, %v4364
      %v4387 = vmul.f32 %v4291, %v4366
      %v4388 = vmul.f32 %v4292, %v4368
      %v4389 = vmul.f32 %v4293, %v4370
      %v4390 = vmul.f32 %v4294, %v4372
      %v4391 = vmul.f32 %v4295, %v4374
      %v4392 = vmul.f32 %v4296, %v4376
      %4401 = vrot.lane.b32.xlu0 %v4385, 8
      %v4402 = vpop.permute.xlu0 %4401
      %4403 = vrot.lane.b32.xlu0 %v4386, 8
      %v4404 = vpop.permute.xlu0 %4403
      %4405 = vrot.lane.b32.xlu0 %v4387, 8
      %v4406 = vpop.permute.xlu0 %4405
      %4407 = vrot.lane.b32.xlu0 %v4388, 8
      %v4408 = vpop.permute.xlu0 %4407
      %4409 = vrot.lane.b32.xlu0 %v4389, 8
      %v4410 = vpop.permute.xlu0 %4409
      %4411 = vrot.lane.b32.xlu0 %v4390, 8
      %v4412 = vpop.permute.xlu0 %4411
      %4413 = vrot.lane.b32.xlu0 %v4391, 8
      %v4414 = vpop.permute.xlu0 %4413
      %4415 = vrot.lane.b32.xlu0 %v4392, 8
      %v4416 = vpop.permute.xlu0 %4415
      %v4425 = vadd.f32 %v4345, %v4402
      %v4426 = vadd.f32 %v4346, %v4404
      %v4427 = vadd.f32 %v4347, %v4406
      %v4428 = vadd.f32 %v4348, %v4408
      %v4429 = vadd.f32 %v4349, %v4410
      %v4430 = vadd.f32 %v4350, %v4412
      %v4431 = vadd.f32 %v4351, %v4414
      %v4432 = vadd.f32 %v4352, %v4416
      %v4433 = vtanh.pop %v4425
      %v4434 = vtanh.pop %v4426
      %v4435 = vtanh.pop %v4427
      %v4436 = vtanh.pop %v4428
      %v4437 = vtanh.pop %v4429
      %v4438 = vtanh.pop %v4430
      %v4439 = vtanh.pop %v4431
      %v4440 = vtanh.pop %v4432
      %4449 = vrot.lane.b32.xlu0 %v4433, 8
      %v4450 = vpop.permute.xlu0 %4449
      %4451 = vrot.lane.b32.xlu0 %v4434, 8
      %v4452 = vpop.permute.xlu0 %4451
      %4453 = vrot.lane.b32.xlu0 %v4435, 8
      %v4454 = vpop.permute.xlu0 %4453
      %4455 = vrot.lane.b32.xlu0 %v4436, 8
      %v4456 = vpop.permute.xlu0 %4455
      %4457 = vrot.lane.b32.xlu0 %v4437, 8
      %v4458 = vpop.permute.xlu0 %4457
      %4459 = vrot.lane.b32.xlu0 %v4438, 8
      %v4460 = vpop.permute.xlu0 %4459
      %4461 = vrot.lane.b32.xlu0 %v4439, 8
      %v4462 = vpop.permute.xlu0 %4461
      %4463 = vrot.lane.b32.xlu0 %v4440, 8
      %v4464 = vpop.permute.xlu0 %4463
      %v4473 = vmul.f32 %v4289, %v4450
      %v4474 = vmul.f32 %v4290, %v4452
      %v4475 = vmul.f32 %v4291, %v4454
      %v4476 = vmul.f32 %v4292, %v4456
      %v4477 = vmul.f32 %v4293, %v4458
      %v4478 = vmul.f32 %v4294, %v4460
      %v4479 = vmul.f32 %v4295, %v4462
      %v4480 = vmul.f32 %v4296, %v4464
      %4489 = vrot.lane.b32.xlu0 %v4473, 112
      %v4490 = vpop.permute.xlu0 %4489
      %4491 = vrot.lane.b32.xlu0 %v4474, 112
      %v4492 = vpop.permute.xlu0 %4491
      %4493 = vrot.lane.b32.xlu0 %v4475, 112
      %v4494 = vpop.permute.xlu0 %4493
      %4495 = vrot.lane.b32.xlu0 %v4476, 112
      %v4496 = vpop.permute.xlu0 %4495
      %4497 = vrot.lane.b32.xlu0 %v4477, 112
      %v4498 = vpop.permute.xlu0 %4497
      %4499 = vrot.lane.b32.xlu0 %v4478, 112
      %v4500 = vpop.permute.xlu0 %4499
      %4501 = vrot.lane.b32.xlu0 %v4479, 112
      %v4502 = vpop.permute.xlu0 %4501
      %4503 = vrot.lane.b32.xlu0 %v4480, 112
      %v4504 = vpop.permute.xlu0 %4503
      %4513 = vst.msk [vmem:[%s1932 + $0x1] sm:$0xff] %vm681, %v4490
      %4514 = vst.msk [vmem:[%s1932 + $0x11] sm:$0xff] %vm681, %v4492
      %4515 = vst.msk [vmem:[%s1932 + $0x21] sm:$0xff] %vm681, %v4494
      %4516 = vst.msk [vmem:[%s1932 + $0x31] sm:$0xff] %vm681, %v4496
      %4517 = vst.msk [vmem:[%s1932 + $0x41] sm:$0xff] %vm681, %v4498
      %4518 = vst.msk [vmem:[%s1932 + $0x51] sm:$0xff] %vm681, %v4500
      %4519 = vst.msk [vmem:[%s1932 + $0x61] sm:$0xff] %vm681, %v4502
      %4520 = vst.msk [vmem:[%s1932 + $0x71] sm:$0xff] %vm681, %v4504
      %v4521 = vld [vmem:[#allocation3] sm:$0xff]
      %v4522 = vld [vmem:[#allocation3 + $0x10] sm:$0xff]
      %v4523 = vld [vmem:[#allocation3 + $0x20] sm:$0xff]
      %v4524 = vld [vmem:[#allocation3 + $0x30] sm:$0xff]
      %v4525 = vld [vmem:[#allocation3 + $0x40] sm:$0xff]
      %v4526 = vld [vmem:[#allocation3 + $0x50] sm:$0xff]
      %v4527 = vld [vmem:[#allocation3 + $0x60] sm:$0xff]
      %v4528 = vld [vmem:[#allocation3 + $0x70] sm:$0xff]
      %v4529 = vld [vmem:[#allocation3 + $0x80] sm:$0xff]
      %v4530 = vld [vmem:[#allocation3 + $0x90] sm:$0xff]
      %v4531 = vld [vmem:[%s8] sm:$0xff]
      %s4532 = scalar_lea.vmem %s8, 24
      %v4533 = vld [vmem:[%s4532] sm:$0xff]
      %v4535 = vsel %vm681, %v4522, 0
      %v4538 = vsel %vm681, %v4523, 0
      %v4541 = vsel %vm681, %v4524, 0
      %v4544 = vsel %vm681, %v4525, 0
      %v4547 = vsel %vm681, %v4526, 0
      %v4550 = vsel %vm681, %v4527, 0
      %v4553 = vsel %vm681, %v4528, 0
      %v4556 = vsel %vm681, %v4529, 0
      %4558 = vmatprep.subr.mxu0 0.0
      %4559 = vmatpush1.msra.mxu0 0.0
      %4560 = vmatprep.subr.mxu0 0.0
      %4561 = vmatpush1.msra.mxu0 0.0
      %4562 = vmatprep.subr.mxu0 0.0
      %4563 = vmatpush1.msra.mxu0 0.0
      %4564 = vmatprep.subr.mxu0 0.0
      %4565 = vmatpush1.msra.mxu0 0.0
      %4566 = vmatprep.subr.mxu0 0.0
      %4567 = vmatpush1.msra.mxu0 0.0
      %4568 = vmatprep.subr.mxu0 0.0
      %4569 = vmatpush1.msra.mxu0 0.0
      %4570 = vmatprep.subr.mxu0 0.0
      %4571 = vmatpush1.msra.mxu0 0.0
      %4572 = vmatprep.subr.mxu0 0.0
      %4573 = vmatpush1.msra.mxu0 0.0
      %4574 = vmatprep.subr.mxu0 0.0
      %4575 = vmatpush1.msra.mxu0 0.0
      %4576 = vmatprep.subr.mxu0 0.0
      %4577 = vmatpush1.msra.mxu0 0.0
      %4578 = vmatprep.subr.mxu0 0.0
      %4579 = vmatpush1.msra.mxu0 0.0
      %4580 = vmatprep.subr.mxu0 0.0
      %4581 = vmatpush1.msra.mxu0 0.0
      %4582 = vmatprep.subr.mxu0 0.0
      %4583 = vmatpush1.msra.mxu0 0.0
      %4584 = vmatprep.subr.mxu0 0.0
      %4585 = vmatpush1.msra.mxu0 0.0
      %4586 = vmatprep.subr.mxu0 0.0
      %4587 = vmatpush1.msra.mxu0 0.0
      %4588 = vmatprep.subr.mxu0 0.0
      %4589 = vmatpush1.msra.mxu0 %v4533
      %4590 = vmatprep.subr.mxu0 0.0
      %4591 = vmatpush2.msra.mxu0 0.0
      %4592 = vmatprep.subr.mxu0 0.0
      %4593 = vmatpush2.msra.mxu0 0.0
      %4594 = vmatprep.subr.mxu0 0.0
      %4595 = vmatpush2.msra.mxu0 0.0
      %4596 = vmatprep.subr.mxu0 0.0
      %4597 = vmatpush2.msra.mxu0 0.0
      %4598 = vmatprep.subr.mxu0 0.0
      %4599 = vmatpush2.msra.mxu0 0.0
      %4600 = vmatprep.subr.mxu0 0.0
      %4601 = vmatpush2.msra.mxu0 0.0
      %4602 = vmatprep.subr.mxu0 0.0
      %4603 = vmatpush2.msra.mxu0 0.0
      %4604 = vmatprep.subr.mxu0 0.0
      %4605 = vmatpush2.msra.mxu0 0.0
      %4606 = vmatprep.subr.mxu0 0.0
      %4607 = vmatpush2.msra.mxu0 0.0
      %4608 = vmatprep.subr.mxu0 0.0
      %4609 = vmatpush2.msra.mxu0 0.0
      %4610 = vmatprep.subr.mxu0 0.0
      %4611 = vmatpush2.msra.mxu0 0.0
      %4612 = vmatprep.subr.mxu0 0.0
      %4613 = vmatpush2.msra.mxu0 0.0
      %4614 = vmatprep.subr.mxu0 0.0
      %4615 = vmatpush2.msra.mxu0 0.0
      %4616 = vmatprep.subr.mxu0 0.0
      %4617 = vmatpush2.msra.mxu0 0.0
      %4618 = vmatprep.subr.mxu0 0.0
      %4619 = vmatpush2.msra.mxu0 0.0
      %4620 = vmatprep.subr.mxu0 0.0
      %4621 = vmatpush2.msra.mxu0 0.0
      %4622 = vmatprep.mubr.f32.mxu0 0.0
      %4623 = vmatmul.mubr.f32.gmra.mxu0 %v4535
      %v4624 = vpop.f32.mrf.mxu0
      %v4625 = vadd.f32 0.0, %v4624
      %v4626 = vpop.f32.mrf.mxu0
      %4627 = vmatprep.mubr.f32.mxu0 0.0
      %4628 = vmatmul.mubr.f32.gmra.mxu0 %v4538
      %v4629 = vpop.f32.mrf.mxu0
      %v4630 = vadd.f32 0.0, %v4629
      %v4631 = vpop.f32.mrf.mxu0
      %4632 = vmatprep.mubr.f32.mxu0 0.0
      %4633 = vmatmul.mubr.f32.gmra.mxu0 %v4541
      %v4634 = vpop.f32.mrf.mxu0
      %v4635 = vadd.f32 0.0, %v4634
      %v4636 = vpop.f32.mrf.mxu0
      %4637 = vmatprep.mubr.f32.mxu0 0.0
      %4638 = vmatmul.mubr.f32.gmra.mxu0 %v4544
      %v4639 = vpop.f32.mrf.mxu0
      %v4640 = vadd.f32 0.0, %v4639
      %v4641 = vpop.f32.mrf.mxu0
      %4642 = vmatprep.mubr.f32.mxu0 0.0
      %4643 = vmatmul.mubr.f32.gmra.mxu0 %v4547
      %v4644 = vpop.f32.mrf.mxu0
      %v4645 = vadd.f32 0.0, %v4644
      %v4646 = vpop.f32.mrf.mxu0
      %4647 = vmatprep.mubr.f32.mxu0 0.0
      %4648 = vmatmul.mubr.f32.gmra.mxu0 %v4550
      %v4649 = vpop.f32.mrf.mxu0
      %v4650 = vadd.f32 0.0, %v4649
      %v4651 = vpop.f32.mrf.mxu0
      %4652 = vmatprep.mubr.f32.mxu0 0.0
      %4653 = vmatmul.mubr.f32.gmra.mxu0 %v4553
      %v4654 = vpop.f32.mrf.mxu0
      %v4655 = vadd.f32 0.0, %v4654
      %v4656 = vpop.f32.mrf.mxu0
      %4657 = vmatprep.mubr.f32.mxu0 0.0
      %4658 = vmatmul.mubr.f32.gmra.mxu0 %v4556
      %v4659 = vpop.f32.mrf.mxu0
      %v4660 = vadd.f32 0.0, %v4659
      %v4661 = vpop.f32.mrf.mxu0
      %4662 = vdwg.mxu0
      %v4664 = vsel %vm681, %v4521, 0
      %4666 = vmatprep.subr.mxu0 0.0
      %4667 = vmatpush1.msra.mxu0 0.0
      %4668 = vmatprep.subr.mxu0 0.0
      %4669 = vmatpush1.msra.mxu0 0.0
      %4670 = vmatprep.subr.mxu0 0.0
      %4671 = vmatpush1.msra.mxu0 0.0
      %4672 = vmatprep.subr.mxu0 0.0
      %4673 = vmatpush1.msra.mxu0 0.0
      %4674 = vmatprep.subr.mxu0 0.0
      %4675 = vmatpush1.msra.mxu0 0.0
      %4676 = vmatprep.subr.mxu0 0.0
      %4677 = vmatpush1.msra.mxu0 0.0
      %4678 = vmatprep.subr.mxu0 0.0
      %4679 = vmatpush1.msra.mxu0 0.0
      %4680 = vmatprep.subr.mxu0 0.0
      %4681 = vmatpush1.msra.mxu0 0.0
      %4682 = vmatprep.subr.mxu0 0.0
      %4683 = vmatpush1.msra.mxu0 0.0
      %4684 = vmatprep.subr.mxu0 0.0
      %4685 = vmatpush1.msra.mxu0 0.0
      %4686 = vmatprep.subr.mxu0 0.0
      %4687 = vmatpush1.msra.mxu0 0.0
      %4688 = vmatprep.subr.mxu0 0.0
      %4689 = vmatpush1.msra.mxu0 0.0
      %4690 = vmatprep.subr.mxu0 0.0
      %4691 = vmatpush1.msra.mxu0 0.0
      %4692 = vmatprep.subr.mxu0 0.0
      %4693 = vmatpush1.msra.mxu0 0.0
      %4694 = vmatprep.subr.mxu0 0.0
      %4695 = vmatpush1.msra.mxu0 0.0
      %4696 = vmatprep.subr.mxu0 0.0
      %4697 = vmatpush1.msra.mxu0 %v4531
      %4698 = vmatprep.subr.mxu0 0.0
      %4699 = vmatpush2.msra.mxu0 0.0
      %4700 = vmatprep.subr.mxu0 0.0
      %4701 = vmatpush2.msra.mxu0 0.0
      %4702 = vmatprep.subr.mxu0 0.0
      %4703 = vmatpush2.msra.mxu0 0.0
      %4704 = vmatprep.subr.mxu0 0.0
      %4705 = vmatpush2.msra.mxu0 0.0
      %4706 = vmatprep.subr.mxu0 0.0
      %4707 = vmatpush2.msra.mxu0 0.0
      %4708 = vmatprep.subr.mxu0 0.0
      %4709 = vmatpush2.msra.mxu0 0.0
      %4710 = vmatprep.subr.mxu0 0.0
      %4711 = vmatpush2.msra.mxu0 0.0
      %4712 = vmatprep.subr.mxu0 0.0
      %4713 = vmatpush2.msra.mxu0 0.0
      %4714 = vmatprep.subr.mxu0 0.0
      %4715 = vmatpush2.msra.mxu0 0.0
      %4716 = vmatprep.subr.mxu0 0.0
      %4717 = vmatpush2.msra.mxu0 0.0
      %4718 = vmatprep.subr.mxu0 0.0
      %4719 = vmatpush2.msra.mxu0 0.0
      %4720 = vmatprep.subr.mxu0 0.0
      %4721 = vmatpush2.msra.mxu0 0.0
      %4722 = vmatprep.subr.mxu0 0.0
      %4723 = vmatpush2.msra.mxu0 0.0
      %4724 = vmatprep.subr.mxu0 0.0
      %4725 = vmatpush2.msra.mxu0 0.0
      %4726 = vmatprep.subr.mxu0 0.0
      %4727 = vmatpush2.msra.mxu0 0.0
      %4728 = vmatprep.subr.mxu0 0.0
      %4729 = vmatpush2.msra.mxu0 0.0
      %4730 = vmatprep.mubr.f32.mxu0 0.0
      %4731 = vmatmul.mubr.f32.gmra.mxu0 %v4664
      %v4732 = vpop.f32.mrf.mxu0
      %v4733 = vadd.f32 %v4625, %v4732
      %v4734 = vpop.f32.mrf.mxu0
      %4735 = vmatprep.mubr.f32.mxu0 0.0
      %4736 = vmatmul.mubr.f32.gmra.mxu0 %v4535
      %v4737 = vpop.f32.mrf.mxu0
      %v4738 = vadd.f32 %v4630, %v4737
      %v4739 = vpop.f32.mrf.mxu0
      %4740 = vmatprep.mubr.f32.mxu0 0.0
      %4741 = vmatmul.mubr.f32.gmra.mxu0 %v4538
      %v4742 = vpop.f32.mrf.mxu0
      %v4743 = vadd.f32 %v4635, %v4742
      %v4744 = vpop.f32.mrf.mxu0
      %4745 = vmatprep.mubr.f32.mxu0 0.0
      %4746 = vmatmul.mubr.f32.gmra.mxu0 %v4541
      %v4747 = vpop.f32.mrf.mxu0
      %v4748 = vadd.f32 %v4640, %v4747
      %v4749 = vpop.f32.mrf.mxu0
      %4750 = vmatprep.mubr.f32.mxu0 0.0
      %4751 = vmatmul.mubr.f32.gmra.mxu0 %v4544
      %v4752 = vpop.f32.mrf.mxu0
      %v4753 = vadd.f32 %v4645, %v4752
      %v4754 = vpop.f32.mrf.mxu0
      %4755 = vmatprep.mubr.f32.mxu0 0.0
      %4756 = vmatmul.mubr.f32.gmra.mxu0 %v4547
      %v4757 = vpop.f32.mrf.mxu0
      %v4758 = vadd.f32 %v4650, %v4757
      %v4759 = vpop.f32.mrf.mxu0
      %4760 = vmatprep.mubr.f32.mxu0 0.0
      %4761 = vmatmul.mubr.f32.gmra.mxu0 %v4550
      %v4762 = vpop.f32.mrf.mxu0
      %v4763 = vadd.f32 %v4655, %v4762
      %v4764 = vpop.f32.mrf.mxu0
      %4765 = vmatprep.mubr.f32.mxu0 0.0
      %4766 = vmatmul.mubr.f32.gmra.mxu0 %v4553
      %v4767 = vpop.f32.mrf.mxu0
      %v4768 = vadd.f32 %v4660, %v4767
      %v4769 = vpop.f32.mrf.mxu0
      %4770 = vdwg.mxu0
      %s4771 = scalar_lea.vmem %s8, 48
      %v4772 = vld [vmem:[%s4771] sm:$0xff]
      %v4774 = vsel %vm681, %v4530, 0
      %4776 = vmatprep.subr.mxu0 0.0
      %4777 = vmatpush1.msra.mxu0 0.0
      %4778 = vmatprep.subr.mxu0 0.0
      %4779 = vmatpush1.msra.mxu0 0.0
      %4780 = vmatprep.subr.mxu0 0.0
      %4781 = vmatpush1.msra.mxu0 0.0
      %4782 = vmatprep.subr.mxu0 0.0
      %4783 = vmatpush1.msra.mxu0 0.0
      %4784 = vmatprep.subr.mxu0 0.0
      %4785 = vmatpush1.msra.mxu0 0.0
      %4786 = vmatprep.subr.mxu0 0.0
      %4787 = vmatpush1.msra.mxu0 0.0
      %4788 = vmatprep.subr.mxu0 0.0
      %4789 = vmatpush1.msra.mxu0 0.0
      %4790 = vmatprep.subr.mxu0 0.0
      %4791 = vmatpush1.msra.mxu0 0.0
      %4792 = vmatprep.subr.mxu0 0.0
      %4793 = vmatpush1.msra.mxu0 0.0
      %4794 = vmatprep.subr.mxu0 0.0
      %4795 = vmatpush1.msra.mxu0 0.0
      %4796 = vmatprep.subr.mxu0 0.0
      %4797 = vmatpush1.msra.mxu0 0.0
      %4798 = vmatprep.subr.mxu0 0.0
      %4799 = vmatpush1.msra.mxu0 0.0
      %4800 = vmatprep.subr.mxu0 0.0
      %4801 = vmatpush1.msra.mxu0 0.0
      %4802 = vmatprep.subr.mxu0 0.0
      %4803 = vmatpush1.msra.mxu0 0.0
      %4804 = vmatprep.subr.mxu0 0.0
      %4805 = vmatpush1.msra.mxu0 0.0
      %4806 = vmatprep.subr.mxu0 0.0
      %4807 = vmatpush1.msra.mxu0 %v4772
      %4808 = vmatprep.subr.mxu0 0.0
      %4809 = vmatpush2.msra.mxu0 0.0
      %4810 = vmatprep.subr.mxu0 0.0
      %4811 = vmatpush2.msra.mxu0 0.0
      %4812 = vmatprep.subr.mxu0 0.0
      %4813 = vmatpush2.msra.mxu0 0.0
      %4814 = vmatprep.subr.mxu0 0.0
      %4815 = vmatpush2.msra.mxu0 0.0
      %4816 = vmatprep.subr.mxu0 0.0
      %4817 = vmatpush2.msra.mxu0 0.0
      %4818 = vmatprep.subr.mxu0 0.0
      %4819 = vmatpush2.msra.mxu0 0.0
      %4820 = vmatprep.subr.mxu0 0.0
      %4821 = vmatpush2.msra.mxu0 0.0
      %4822 = vmatprep.subr.mxu0 0.0
      %4823 = vmatpush2.msra.mxu0 0.0
      %4824 = vmatprep.subr.mxu0 0.0
      %4825 = vmatpush2.msra.mxu0 0.0
      %4826 = vmatprep.subr.mxu0 0.0
      %4827 = vmatpush2.msra.mxu0 0.0
      %4828 = vmatprep.subr.mxu0 0.0
      %4829 = vmatpush2.msra.mxu0 0.0
      %4830 = vmatprep.subr.mxu0 0.0
      %4831 = vmatpush2.msra.mxu0 0.0
      %4832 = vmatprep.subr.mxu0 0.0
      %4833 = vmatpush2.msra.mxu0 0.0
      %4834 = vmatprep.subr.mxu0 0.0
      %4835 = vmatpush2.msra.mxu0 0.0
      %4836 = vmatprep.subr.mxu0 0.0
      %4837 = vmatpush2.msra.mxu0 0.0
      %4838 = vmatprep.subr.mxu0 0.0
      %4839 = vmatpush2.msra.mxu0 0.0
      %4840 = vmatprep.mubr.f32.mxu0 0.0
      %4841 = vmatmul.mubr.f32.gmra.mxu0 %v4538
      %v4842 = vpop.f32.mrf.mxu0
      %v4843 = vadd.f32 0.0, %v4842
      %v4844 = vpop.f32.mrf.mxu0
      %4845 = vmatprep.mubr.f32.mxu0 0.0
      %4846 = vmatmul.mubr.f32.gmra.mxu0 %v4541
      %v4847 = vpop.f32.mrf.mxu0
      %v4848 = vadd.f32 0.0, %v4847
      %v4849 = vpop.f32.mrf.mxu0
      %4850 = vmatprep.mubr.f32.mxu0 0.0
      %4851 = vmatmul.mubr.f32.gmra.mxu0 %v4544
      %v4852 = vpop.f32.mrf.mxu0
      %v4853 = vadd.f32 0.0, %v4852
      %v4854 = vpop.f32.mrf.mxu0
      %4855 = vmatprep.mubr.f32.mxu0 0.0
      %4856 = vmatmul.mubr.f32.gmra.mxu0 %v4547
      %v4857 = vpop.f32.mrf.mxu0
      %v4858 = vadd.f32 0.0, %v4857
      %v4859 = vpop.f32.mrf.mxu0
      %4860 = vmatprep.mubr.f32.mxu0 0.0
      %4861 = vmatmul.mubr.f32.gmra.mxu0 %v4550
      %v4862 = vpop.f32.mrf.mxu0
      %v4863 = vadd.f32 0.0, %v4862
      %v4864 = vpop.f32.mrf.mxu0
      %4865 = vmatprep.mubr.f32.mxu0 0.0
      %4866 = vmatmul.mubr.f32.gmra.mxu0 %v4553
      %v4867 = vpop.f32.mrf.mxu0
      %v4868 = vadd.f32 0.0, %v4867
      %v4869 = vpop.f32.mrf.mxu0
      %4870 = vmatprep.mubr.f32.mxu0 0.0
      %4871 = vmatmul.mubr.f32.gmra.mxu0 %v4556
      %v4872 = vpop.f32.mrf.mxu0
      %v4873 = vadd.f32 0.0, %v4872
      %v4874 = vpop.f32.mrf.mxu0
      %4875 = vmatprep.mubr.f32.mxu0 0.0
      %4876 = vmatmul.mubr.f32.gmra.mxu0 %v4774
      %v4877 = vpop.f32.mrf.mxu0
      %v4878 = vadd.f32 0.0, %v4877
      %v4879 = vpop.f32.mrf.mxu0
      %4880 = vdwg.mxu0
      %v4881 = vadd.f32 %v4733, %v4843
      %v4882 = vadd.f32 %v4738, %v4848
      %v4883 = vadd.f32 %v4743, %v4853
      %v4884 = vadd.f32 %v4748, %v4858
      %v4885 = vadd.f32 %v4753, %v4863
      %v4886 = vadd.f32 %v4758, %v4868
      %v4887 = vadd.f32 %v4763, %v4873
      %v4888 = vadd.f32 %v4768, %v4878
      %v4889 = vld [vmem:[#allocation3 + $0x1] sm:$0xff]
      %v4890 = vld [vmem:[#allocation3 + $0x11] sm:$0xff]
      %v4891 = vld [vmem:[#allocation3 + $0x21] sm:$0xff]
      %v4892 = vld [vmem:[#allocation3 + $0x31] sm:$0xff]
      %v4893 = vld [vmem:[#allocation3 + $0x41] sm:$0xff]
      %v4894 = vld [vmem:[#allocation3 + $0x51] sm:$0xff]
      %v4895 = vld [vmem:[#allocation3 + $0x61] sm:$0xff]
      %v4896 = vld [vmem:[#allocation3 + $0x71] sm:$0xff]
      %v4897 = vld [vmem:[#allocation3 + $0x81] sm:$0xff]
      %v4898 = vld [vmem:[#allocation3 + $0x91] sm:$0xff]
      %s4899 = scalar_lea.vmem %s8, 8
      %v4900 = vld [vmem:[%s4899] sm:$0xff]
      %v4902 = vsel %vm681, %v4889, 0
      %v4905 = vsel %vm681, %v4890, 0
      %v4908 = vsel %vm681, %v4891, 0
      %v4911 = vsel %vm681, %v4892, 0
      %v4914 = vsel %vm681, %v4893, 0
      %v4917 = vsel %vm681, %v4894, 0
      %v4920 = vsel %vm681, %v4895, 0
      %v4923 = vsel %vm681, %v4896, 0
      %4925 = vmatprep.subr.mxu0 0.0
      %4926 = vmatpush1.msra.mxu0 0.0
      %4927 = vmatprep.subr.mxu0 0.0
      %4928 = vmatpush1.msra.mxu0 0.0
      %4929 = vmatprep.subr.mxu0 0.0
      %4930 = vmatpush1.msra.mxu0 0.0
      %4931 = vmatprep.subr.mxu0 0.0
      %4932 = vmatpush1.msra.mxu0 0.0
      %4933 = vmatprep.subr.mxu0 0.0
      %4934 = vmatpush1.msra.mxu0 0.0
      %4935 = vmatprep.subr.mxu0 0.0
      %4936 = vmatpush1.msra.mxu0 0.0
      %4937 = vmatprep.subr.mxu0 0.0
      %4938 = vmatpush1.msra.mxu0 0.0
      %4939 = vmatprep.subr.mxu0 0.0
      %4940 = vmatpush1.msra.mxu0 0.0
      %4941 = vmatprep.subr.mxu0 0.0
      %4942 = vmatpush1.msra.mxu0 0.0
      %4943 = vmatprep.subr.mxu0 0.0
      %4944 = vmatpush1.msra.mxu0 0.0
      %4945 = vmatprep.subr.mxu0 0.0
      %4946 = vmatpush1.msra.mxu0 0.0
      %4947 = vmatprep.subr.mxu0 0.0
      %4948 = vmatpush1.msra.mxu0 0.0
      %4949 = vmatprep.subr.mxu0 0.0
      %4950 = vmatpush1.msra.mxu0 0.0
      %4951 = vmatprep.subr.mxu0 0.0
      %4952 = vmatpush1.msra.mxu0 0.0
      %4953 = vmatprep.subr.mxu0 0.0
      %4954 = vmatpush1.msra.mxu0 0.0
      %4955 = vmatprep.subr.mxu0 0.0
      %4956 = vmatpush1.msra.mxu0 %v4900
      %4957 = vmatprep.subr.mxu0 0.0
      %4958 = vmatpush2.msra.mxu0 0.0
      %4959 = vmatprep.subr.mxu0 0.0
      %4960 = vmatpush2.msra.mxu0 0.0
      %4961 = vmatprep.subr.mxu0 0.0
      %4962 = vmatpush2.msra.mxu0 0.0
      %4963 = vmatprep.subr.mxu0 0.0
      %4964 = vmatpush2.msra.mxu0 0.0
      %4965 = vmatprep.subr.mxu0 0.0
      %4966 = vmatpush2.msra.mxu0 0.0
      %4967 = vmatprep.subr.mxu0 0.0
      %4968 = vmatpush2.msra.mxu0 0.0
      %4969 = vmatprep.subr.mxu0 0.0
      %4970 = vmatpush2.msra.mxu0 0.0
      %4971 = vmatprep.subr.mxu0 0.0
      %4972 = vmatpush2.msra.mxu0 0.0
      %4973 = vmatprep.subr.mxu0 0.0
      %4974 = vmatpush2.msra.mxu0 0.0
      %4975 = vmatprep.subr.mxu0 0.0
      %4976 = vmatpush2.msra.mxu0 0.0
      %4977 = vmatprep.subr.mxu0 0.0
      %4978 = vmatpush2.msra.mxu0 0.0
      %4979 = vmatprep.subr.mxu0 0.0
      %4980 = vmatpush2.msra.mxu0 0.0
      %4981 = vmatprep.subr.mxu0 0.0
      %4982 = vmatpush2.msra.mxu0 0.0
      %4983 = vmatprep.subr.mxu0 0.0
      %4984 = vmatpush2.msra.mxu0 0.0
      %4985 = vmatprep.subr.mxu0 0.0
      %4986 = vmatpush2.msra.mxu0 0.0
      %4987 = vmatprep.subr.mxu0 0.0
      %4988 = vmatpush2.msra.mxu0 0.0
      %4989 = vmatprep.mubr.f32.mxu0 0.0
      %4990 = vmatmul.mubr.f32.gmra.mxu0 %v4902
      %v4991 = vpop.f32.mrf.mxu0
      %v4992 = vadd.f32 0.0, %v4991
      %v4993 = vpop.f32.mrf.mxu0
      %4994 = vmatprep.mubr.f32.mxu0 0.0
      %4995 = vmatmul.mubr.f32.gmra.mxu0 %v4905
      %v4996 = vpop.f32.mrf.mxu0
      %v4997 = vadd.f32 0.0, %v4996
      %v4998 = vpop.f32.mrf.mxu0
      %4999 = vmatprep.mubr.f32.mxu0 0.0
      %5000 = vmatmul.mubr.f32.gmra.mxu0 %v4908
      %v5001 = vpop.f32.mrf.mxu0
      %v5002 = vadd.f32 0.0, %v5001
      %v5003 = vpop.f32.mrf.mxu0
      %5004 = vmatprep.mubr.f32.mxu0 0.0
      %5005 = vmatmul.mubr.f32.gmra.mxu0 %v4911
      %v5006 = vpop.f32.mrf.mxu0
      %v5007 = vadd.f32 0.0, %v5006
      %v5008 = vpop.f32.mrf.mxu0
      %5009 = vmatprep.mubr.f32.mxu0 0.0
      %5010 = vmatmul.mubr.f32.gmra.mxu0 %v4914
      %v5011 = vpop.f32.mrf.mxu0
      %v5012 = vadd.f32 0.0, %v5011
      %v5013 = vpop.f32.mrf.mxu0
      %5014 = vmatprep.mubr.f32.mxu0 0.0
      %5015 = vmatmul.mubr.f32.gmra.mxu0 %v4917
      %v5016 = vpop.f32.mrf.mxu0
      %v5017 = vadd.f32 0.0, %v5016
      %v5018 = vpop.f32.mrf.mxu0
      %5019 = vmatprep.mubr.f32.mxu0 0.0
      %5020 = vmatmul.mubr.f32.gmra.mxu0 %v4920
      %v5021 = vpop.f32.mrf.mxu0
      %v5022 = vadd.f32 0.0, %v5021
      %v5023 = vpop.f32.mrf.mxu0
      %5024 = vmatprep.mubr.f32.mxu0 0.0
      %5025 = vmatmul.mubr.f32.gmra.mxu0 %v4923
      %v5026 = vpop.f32.mrf.mxu0
      %v5027 = vadd.f32 0.0, %v5026
      %v5028 = vpop.f32.mrf.mxu0
      %5029 = vdwg.mxu0
      %v5030 = vadd.f32 %v4881, %v4992
      %v5031 = vadd.f32 %v4882, %v4997
      %v5032 = vadd.f32 %v4883, %v5002
      %v5033 = vadd.f32 %v4884, %v5007
      %v5034 = vadd.f32 %v4885, %v5012
      %v5035 = vadd.f32 %v4886, %v5017
      %v5036 = vadd.f32 %v4887, %v5022
      %v5037 = vadd.f32 %v4888, %v5027
      %s5038 = scalar_lea.vmem %s8, 32
      %v5039 = vld [vmem:[%s5038] sm:$0xff]
      %v5041 = vsel %vm681, %v4897, 0
      %5043 = vmatprep.subr.mxu0 0.0
      %5044 = vmatpush1.msra.mxu0 0.0
      %5045 = vmatprep.subr.mxu0 0.0
      %5046 = vmatpush1.msra.mxu0 0.0
      %5047 = vmatprep.subr.mxu0 0.0
      %5048 = vmatpush1.msra.mxu0 0.0
      %5049 = vmatprep.subr.mxu0 0.0
      %5050 = vmatpush1.msra.mxu0 0.0
      %5051 = vmatprep.subr.mxu0 0.0
      %5052 = vmatpush1.msra.mxu0 0.0
      %5053 = vmatprep.subr.mxu0 0.0
      %5054 = vmatpush1.msra.mxu0 0.0
      %5055 = vmatprep.subr.mxu0 0.0
      %5056 = vmatpush1.msra.mxu0 0.0
      %5057 = vmatprep.subr.mxu0 0.0
      %5058 = vmatpush1.msra.mxu0 0.0
      %5059 = vmatprep.subr.mxu0 0.0
      %5060 = vmatpush1.msra.mxu0 0.0
      %5061 = vmatprep.subr.mxu0 0.0
      %5062 = vmatpush1.msra.mxu0 0.0
      %5063 = vmatprep.subr.mxu0 0.0
      %5064 = vmatpush1.msra.mxu0 0.0
      %5065 = vmatprep.subr.mxu0 0.0
      %5066 = vmatpush1.msra.mxu0 0.0
      %5067 = vmatprep.subr.mxu0 0.0
      %5068 = vmatpush1.msra.mxu0 0.0
      %5069 = vmatprep.subr.mxu0 0.0
      %5070 = vmatpush1.msra.mxu0 0.0
      %5071 = vmatprep.subr.mxu0 0.0
      %5072 = vmatpush1.msra.mxu0 0.0
      %5073 = vmatprep.subr.mxu0 0.0
      %5074 = vmatpush1.msra.mxu0 %v5039
      %5075 = vmatprep.subr.mxu0 0.0
      %5076 = vmatpush2.msra.mxu0 0.0
      %5077 = vmatprep.subr.mxu0 0.0
      %5078 = vmatpush2.msra.mxu0 0.0
      %5079 = vmatprep.subr.mxu0 0.0
      %5080 = vmatpush2.msra.mxu0 0.0
      %5081 = vmatprep.subr.mxu0 0.0
      %5082 = vmatpush2.msra.mxu0 0.0
      %5083 = vmatprep.subr.mxu0 0.0
      %5084 = vmatpush2.msra.mxu0 0.0
      %5085 = vmatprep.subr.mxu0 0.0
      %5086 = vmatpush2.msra.mxu0 0.0
      %5087 = vmatprep.subr.mxu0 0.0
      %5088 = vmatpush2.msra.mxu0 0.0
      %5089 = vmatprep.subr.mxu0 0.0
      %5090 = vmatpush2.msra.mxu0 0.0
      %5091 = vmatprep.subr.mxu0 0.0
      %5092 = vmatpush2.msra.mxu0 0.0
      %5093 = vmatprep.subr.mxu0 0.0
      %5094 = vmatpush2.msra.mxu0 0.0
      %5095 = vmatprep.subr.mxu0 0.0
      %5096 = vmatpush2.msra.mxu0 0.0
      %5097 = vmatprep.subr.mxu0 0.0
      %5098 = vmatpush2.msra.mxu0 0.0
      %5099 = vmatprep.subr.mxu0 0.0
      %5100 = vmatpush2.msra.mxu0 0.0
      %5101 = vmatprep.subr.mxu0 0.0
      %5102 = vmatpush2.msra.mxu0 0.0
      %5103 = vmatprep.subr.mxu0 0.0
      %5104 = vmatpush2.msra.mxu0 0.0
      %5105 = vmatprep.subr.mxu0 0.0
      %5106 = vmatpush2.msra.mxu0 0.0
      %5107 = vmatprep.mubr.f32.mxu0 0.0
      %5108 = vmatmul.mubr.f32.gmra.mxu0 %v4905
      %v5109 = vpop.f32.mrf.mxu0
      %v5110 = vadd.f32 0.0, %v5109
      %v5111 = vpop.f32.mrf.mxu0
      %5112 = vmatprep.mubr.f32.mxu0 0.0
      %5113 = vmatmul.mubr.f32.gmra.mxu0 %v4908
      %v5114 = vpop.f32.mrf.mxu0
      %v5115 = vadd.f32 0.0, %v5114
      %v5116 = vpop.f32.mrf.mxu0
      %5117 = vmatprep.mubr.f32.mxu0 0.0
      %5118 = vmatmul.mubr.f32.gmra.mxu0 %v4911
      %v5119 = vpop.f32.mrf.mxu0
      %v5120 = vadd.f32 0.0, %v5119
      %v5121 = vpop.f32.mrf.mxu0
      %5122 = vmatprep.mubr.f32.mxu0 0.0
      %5123 = vmatmul.mubr.f32.gmra.mxu0 %v4914
      %v5124 = vpop.f32.mrf.mxu0
      %v5125 = vadd.f32 0.0, %v5124
      %v5126 = vpop.f32.mrf.mxu0
      %5127 = vmatprep.mubr.f32.mxu0 0.0
      %5128 = vmatmul.mubr.f32.gmra.mxu0 %v4917
      %v5129 = vpop.f32.mrf.mxu0
      %v5130 = vadd.f32 0.0, %v5129
      %v5131 = vpop.f32.mrf.mxu0
      %5132 = vmatprep.mubr.f32.mxu0 0.0
      %5133 = vmatmul.mubr.f32.gmra.mxu0 %v4920
      %v5134 = vpop.f32.mrf.mxu0
      %v5135 = vadd.f32 0.0, %v5134
      %v5136 = vpop.f32.mrf.mxu0
      %5137 = vmatprep.mubr.f32.mxu0 0.0
      %5138 = vmatmul.mubr.f32.gmra.mxu0 %v4923
      %v5139 = vpop.f32.mrf.mxu0
      %v5140 = vadd.f32 0.0, %v5139
      %v5141 = vpop.f32.mrf.mxu0
      %5142 = vmatprep.mubr.f32.mxu0 0.0
      %5143 = vmatmul.mubr.f32.gmra.mxu0 %v5041
      %v5144 = vpop.f32.mrf.mxu0
      %v5145 = vadd.f32 0.0, %v5144
      %v5146 = vpop.f32.mrf.mxu0
      %5147 = vdwg.mxu0
      %v5148 = vadd.f32 %v5030, %v5110
      %v5149 = vadd.f32 %v5031, %v5115
      %v5150 = vadd.f32 %v5032, %v5120
      %v5151 = vadd.f32 %v5033, %v5125
      %v5152 = vadd.f32 %v5034, %v5130
      %v5153 = vadd.f32 %v5035, %v5135
      %v5154 = vadd.f32 %v5036, %v5140
      %v5155 = vadd.f32 %v5037, %v5145
      %s5156 = scalar_lea.vmem %s8, 56
      %v5157 = vld [vmem:[%s5156] sm:$0xff]
      %v5159 = vsel %vm681, %v4898, 0
      %5161 = vmatprep.subr.mxu0 0.0
      %5162 = vmatpush1.msra.mxu0 0.0
      %5163 = vmatprep.subr.mxu0 0.0
      %5164 = vmatpush1.msra.mxu0 0.0
      %5165 = vmatprep.subr.mxu0 0.0
      %5166 = vmatpush1.msra.mxu0 0.0
      %5167 = vmatprep.subr.mxu0 0.0
      %5168 = vmatpush1.msra.mxu0 0.0
      %5169 = vmatprep.subr.mxu0 0.0
      %5170 = vmatpush1.msra.mxu0 0.0
      %5171 = vmatprep.subr.mxu0 0.0
      %5172 = vmatpush1.msra.mxu0 0.0
      %5173 = vmatprep.subr.mxu0 0.0
      %5174 = vmatpush1.msra.mxu0 0.0
      %5175 = vmatprep.subr.mxu0 0.0
      %5176 = vmatpush1.msra.mxu0 0.0
      %5177 = vmatprep.subr.mxu0 0.0
      %5178 = vmatpush1.msra.mxu0 0.0
      %5179 = vmatprep.subr.mxu0 0.0
      %5180 = vmatpush1.msra.mxu0 0.0
      %5181 = vmatprep.subr.mxu0 0.0
      %5182 = vmatpush1.msra.mxu0 0.0
      %5183 = vmatprep.subr.mxu0 0.0
      %5184 = vmatpush1.msra.mxu0 0.0
      %5185 = vmatprep.subr.mxu0 0.0
      %5186 = vmatpush1.msra.mxu0 0.0
      %5187 = vmatprep.subr.mxu0 0.0
      %5188 = vmatpush1.msra.mxu0 0.0
      %5189 = vmatprep.subr.mxu0 0.0
      %5190 = vmatpush1.msra.mxu0 0.0
      %5191 = vmatprep.subr.mxu0 0.0
      %5192 = vmatpush1.msra.mxu0 %v5157
      %5193 = vmatprep.subr.mxu0 0.0
      %5194 = vmatpush2.msra.mxu0 0.0
      %5195 = vmatprep.subr.mxu0 0.0
      %5196 = vmatpush2.msra.mxu0 0.0
      %5197 = vmatprep.subr.mxu0 0.0
      %5198 = vmatpush2.msra.mxu0 0.0
      %5199 = vmatprep.subr.mxu0 0.0
      %5200 = vmatpush2.msra.mxu0 0.0
      %5201 = vmatprep.subr.mxu0 0.0
      %5202 = vmatpush2.msra.mxu0 0.0
      %5203 = vmatprep.subr.mxu0 0.0
      %5204 = vmatpush2.msra.mxu0 0.0
      %5205 = vmatprep.subr.mxu0 0.0
      %5206 = vmatpush2.msra.mxu0 0.0
      %5207 = vmatprep.subr.mxu0 0.0
      %5208 = vmatpush2.msra.mxu0 0.0
      %5209 = vmatprep.subr.mxu0 0.0
      %5210 = vmatpush2.msra.mxu0 0.0
      %5211 = vmatprep.subr.mxu0 0.0
      %5212 = vmatpush2.msra.mxu0 0.0
      %5213 = vmatprep.subr.mxu0 0.0
      %5214 = vmatpush2.msra.mxu0 0.0
      %5215 = vmatprep.subr.mxu0 0.0
      %5216 = vmatpush2.msra.mxu0 0.0
      %5217 = vmatprep.subr.mxu0 0.0
      %5218 = vmatpush2.msra.mxu0 0.0
      %5219 = vmatprep.subr.mxu0 0.0
      %5220 = vmatpush2.msra.mxu0 0.0
      %5221 = vmatprep.subr.mxu0 0.0
      %5222 = vmatpush2.msra.mxu0 0.0
      %5223 = vmatprep.subr.mxu0 0.0
      %5224 = vmatpush2.msra.mxu0 0.0
      %5225 = vmatprep.mubr.f32.mxu0 0.0
      %5226 = vmatmul.mubr.f32.gmra.mxu0 %v4908
      %v5227 = vpop.f32.mrf.mxu0
      %v5228 = vadd.f32 0.0, %v5227
      %v5229 = vpop.f32.mrf.mxu0
      %5230 = vmatprep.mubr.f32.mxu0 0.0
      %5231 = vmatmul.mubr.f32.gmra.mxu0 %v4911
      %v5232 = vpop.f32.mrf.mxu0
      %v5233 = vadd.f32 0.0, %v5232
      %v5234 = vpop.f32.mrf.mxu0
      %5235 = vmatprep.mubr.f32.mxu0 0.0
      %5236 = vmatmul.mubr.f32.gmra.mxu0 %v4914
      %v5237 = vpop.f32.mrf.mxu0
      %v5238 = vadd.f32 0.0, %v5237
      %v5239 = vpop.f32.mrf.mxu0
      %5240 = vmatprep.mubr.f32.mxu0 0.0
      %5241 = vmatmul.mubr.f32.gmra.mxu0 %v4917
      %v5242 = vpop.f32.mrf.mxu0
      %v5243 = vadd.f32 0.0, %v5242
      %v5244 = vpop.f32.mrf.mxu0
      %5245 = vmatprep.mubr.f32.mxu0 0.0
      %5246 = vmatmul.mubr.f32.gmra.mxu0 %v4920
      %v5247 = vpop.f32.mrf.mxu0
      %v5248 = vadd.f32 0.0, %v5247
      %v5249 = vpop.f32.mrf.mxu0
      %5250 = vmatprep.mubr.f32.mxu0 0.0
      %5251 = vmatmul.mubr.f32.gmra.mxu0 %v4923
      %v5252 = vpop.f32.mrf.mxu0
      %v5253 = vadd.f32 0.0, %v5252
      %v5254 = vpop.f32.mrf.mxu0
      %5255 = vmatprep.mubr.f32.mxu0 0.0
      %5256 = vmatmul.mubr.f32.gmra.mxu0 %v5041
      %v5257 = vpop.f32.mrf.mxu0
      %v5258 = vadd.f32 0.0, %v5257
      %v5259 = vpop.f32.mrf.mxu0
      %5260 = vmatprep.mubr.f32.mxu0 0.0
      %5261 = vmatmul.mubr.f32.gmra.mxu0 %v5159
      %v5262 = vpop.f32.mrf.mxu0
      %v5263 = vadd.f32 0.0, %v5262
      %v5264 = vpop.f32.mrf.mxu0
      %5265 = vdwg.mxu0
      %v5266 = vadd.f32 %v5148, %v5228
      %v5267 = vadd.f32 %v5149, %v5233
      %v5268 = vadd.f32 %v5150, %v5238
      %v5269 = vadd.f32 %v5151, %v5243
      %v5270 = vadd.f32 %v5152, %v5248
      %v5271 = vadd.f32 %v5153, %v5253
      %v5272 = vadd.f32 %v5154, %v5258
      %v5273 = vadd.f32 %v5155, %v5263
      %v5274 = vld [vmem:[#allocation3 + $0x2] sm:$0xff]
      %v5275 = vld [vmem:[#allocation3 + $0x12] sm:$0xff]
      %v5276 = vld [vmem:[#allocation3 + $0x22] sm:$0xff]
      %v5277 = vld [vmem:[#allocation3 + $0x32] sm:$0xff]
      %v5278 = vld [vmem:[#allocation3 + $0x42] sm:$0xff]
      %v5279 = vld [vmem:[#allocation3 + $0x52] sm:$0xff]
      %v5280 = vld [vmem:[#allocation3 + $0x62] sm:$0xff]
      %v5281 = vld [vmem:[#allocation3 + $0x72] sm:$0xff]
      %v5282 = vld [vmem:[#allocation3 + $0x82] sm:$0xff]
      %v5283 = vld [vmem:[#allocation3 + $0x92] sm:$0xff]
      %s5284 = scalar_lea.vmem %s8, 16
      %v5285 = vld [vmem:[%s5284] sm:$0xff]
      %v5287 = vsel %vm681, %v5274, 0
      %v5290 = vsel %vm681, %v5275, 0
      %v5293 = vsel %vm681, %v5276, 0
      %v5296 = vsel %vm681, %v5277, 0
      %v5299 = vsel %vm681, %v5278, 0
      %v5302 = vsel %vm681, %v5279, 0
      %v5305 = vsel %vm681, %v5280, 0
      %v5308 = vsel %vm681, %v5281, 0
      %5310 = vmatprep.subr.mxu0 0.0
      %5311 = vmatpush1.msra.mxu0 0.0
      %5312 = vmatprep.subr.mxu0 0.0
      %5313 = vmatpush1.msra.mxu0 0.0
      %5314 = vmatprep.subr.mxu0 0.0
      %5315 = vmatpush1.msra.mxu0 0.0
      %5316 = vmatprep.subr.mxu0 0.0
      %5317 = vmatpush1.msra.mxu0 0.0
      %5318 = vmatprep.subr.mxu0 0.0
      %5319 = vmatpush1.msra.mxu0 0.0
      %5320 = vmatprep.subr.mxu0 0.0
      %5321 = vmatpush1.msra.mxu0 0.0
      %5322 = vmatprep.subr.mxu0 0.0
      %5323 = vmatpush1.msra.mxu0 0.0
      %5324 = vmatprep.subr.mxu0 0.0
      %5325 = vmatpush1.msra.mxu0 0.0
      %5326 = vmatprep.subr.mxu0 0.0
      %5327 = vmatpush1.msra.mxu0 0.0
      %5328 = vmatprep.subr.mxu0 0.0
      %5329 = vmatpush1.msra.mxu0 0.0
      %5330 = vmatprep.subr.mxu0 0.0
      %5331 = vmatpush1.msra.mxu0 0.0
      %5332 = vmatprep.subr.mxu0 0.0
      %5333 = vmatpush1.msra.mxu0 0.0
      %5334 = vmatprep.subr.mxu0 0.0
      %5335 = vmatpush1.msra.mxu0 0.0
      %5336 = vmatprep.subr.mxu0 0.0
      %5337 = vmatpush1.msra.mxu0 0.0
      %5338 = vmatprep.subr.mxu0 0.0
      %5339 = vmatpush1.msra.mxu0 0.0
      %5340 = vmatprep.subr.mxu0 0.0
      %5341 = vmatpush1.msra.mxu0 %v5285
      %5342 = vmatprep.subr.mxu0 0.0
      %5343 = vmatpush2.msra.mxu0 0.0
      %5344 = vmatprep.subr.mxu0 0.0
      %5345 = vmatpush2.msra.mxu0 0.0
      %5346 = vmatprep.subr.mxu0 0.0
      %5347 = vmatpush2.msra.mxu0 0.0
      %5348 = vmatprep.subr.mxu0 0.0
      %5349 = vmatpush2.msra.mxu0 0.0
      %5350 = vmatprep.subr.mxu0 0.0
      %5351 = vmatpush2.msra.mxu0 0.0
      %5352 = vmatprep.subr.mxu0 0.0
      %5353 = vmatpush2.msra.mxu0 0.0
      %5354 = vmatprep.subr.mxu0 0.0
      %5355 = vmatpush2.msra.mxu0 0.0
      %5356 = vmatprep.subr.mxu0 0.0
      %5357 = vmatpush2.msra.mxu0 0.0
      %5358 = vmatprep.subr.mxu0 0.0
      %5359 = vmatpush2.msra.mxu0 0.0
      %5360 = vmatprep.subr.mxu0 0.0
      %5361 = vmatpush2.msra.mxu0 0.0
      %5362 = vmatprep.subr.mxu0 0.0
      %5363 = vmatpush2.msra.mxu0 0.0
      %5364 = vmatprep.subr.mxu0 0.0
      %5365 = vmatpush2.msra.mxu0 0.0
      %5366 = vmatprep.subr.mxu0 0.0
      %5367 = vmatpush2.msra.mxu0 0.0
      %5368 = vmatprep.subr.mxu0 0.0
      %5369 = vmatpush2.msra.mxu0 0.0
      %5370 = vmatprep.subr.mxu0 0.0
      %5371 = vmatpush2.msra.mxu0 0.0
      %5372 = vmatprep.subr.mxu0 0.0
      %5373 = vmatpush2.msra.mxu0 0.0
      %5374 = vmatprep.mubr.f32.mxu0 0.0
      %5375 = vmatmul.mubr.f32.gmra.mxu0 %v5287
      %v5376 = vpop.f32.mrf.mxu0
      %v5377 = vadd.f32 0.0, %v5376
      %v5378 = vpop.f32.mrf.mxu0
      %5379 = vmatprep.mubr.f32.mxu0 0.0
      %5380 = vmatmul.mubr.f32.gmra.mxu0 %v5290
      %v5381 = vpop.f32.mrf.mxu0
      %v5382 = vadd.f32 0.0, %v5381
      %v5383 = vpop.f32.mrf.mxu0
      %5384 = vmatprep.mubr.f32.mxu0 0.0
      %5385 = vmatmul.mubr.f32.gmra.mxu0 %v5293
      %v5386 = vpop.f32.mrf.mxu0
      %v5387 = vadd.f32 0.0, %v5386
      %v5388 = vpop.f32.mrf.mxu0
      %5389 = vmatprep.mubr.f32.mxu0 0.0
      %5390 = vmatmul.mubr.f32.gmra.mxu0 %v5296
      %v5391 = vpop.f32.mrf.mxu0
      %v5392 = vadd.f32 0.0, %v5391
      %v5393 = vpop.f32.mrf.mxu0
      %5394 = vmatprep.mubr.f32.mxu0 0.0
      %5395 = vmatmul.mubr.f32.gmra.mxu0 %v5299
      %v5396 = vpop.f32.mrf.mxu0
      %v5397 = vadd.f32 0.0, %v5396
      %v5398 = vpop.f32.mrf.mxu0
      %5399 = vmatprep.mubr.f32.mxu0 0.0
      %5400 = vmatmul.mubr.f32.gmra.mxu0 %v5302
      %v5401 = vpop.f32.mrf.mxu0
      %v5402 = vadd.f32 0.0, %v5401
      %v5403 = vpop.f32.mrf.mxu0
      %5404 = vmatprep.mubr.f32.mxu0 0.0
      %5405 = vmatmul.mubr.f32.gmra.mxu0 %v5305
      %v5406 = vpop.f32.mrf.mxu0
      %v5407 = vadd.f32 0.0, %v5406
      %v5408 = vpop.f32.mrf.mxu0
      %5409 = vmatprep.mubr.f32.mxu0 0.0
      %5410 = vmatmul.mubr.f32.gmra.mxu0 %v5308
      %v5411 = vpop.f32.mrf.mxu0
      %v5412 = vadd.f32 0.0, %v5411
      %v5413 = vpop.f32.mrf.mxu0
      %5414 = vdwg.mxu0
      %v5415 = vadd.f32 %v5266, %v5377
      %v5416 = vadd.f32 %v5267, %v5382
      %v5417 = vadd.f32 %v5268, %v5387
      %v5418 = vadd.f32 %v5269, %v5392
      %v5419 = vadd.f32 %v5270, %v5397
      %v5420 = vadd.f32 %v5271, %v5402
      %v5421 = vadd.f32 %v5272, %v5407
      %v5422 = vadd.f32 %v5273, %v5412
      %s5423 = scalar_lea.vmem %s8, 40
      %v5424 = vld [vmem:[%s5423] sm:$0xff]
      %v5426 = vsel %vm681, %v5282, 0
      %5428 = vmatprep.subr.mxu0 0.0
      %5429 = vmatpush1.msra.mxu0 0.0
      %5430 = vmatprep.subr.mxu0 0.0
      %5431 = vmatpush1.msra.mxu0 0.0
      %5432 = vmatprep.subr.mxu0 0.0
      %5433 = vmatpush1.msra.mxu0 0.0
      %5434 = vmatprep.subr.mxu0 0.0
      %5435 = vmatpush1.msra.mxu0 0.0
      %5436 = vmatprep.subr.mxu0 0.0
      %5437 = vmatpush1.msra.mxu0 0.0
      %5438 = vmatprep.subr.mxu0 0.0
      %5439 = vmatpush1.msra.mxu0 0.0
      %5440 = vmatprep.subr.mxu0 0.0
      %5441 = vmatpush1.msra.mxu0 0.0
      %5442 = vmatprep.subr.mxu0 0.0
      %5443 = vmatpush1.msra.mxu0 0.0
      %5444 = vmatprep.subr.mxu0 0.0
      %5445 = vmatpush1.msra.mxu0 0.0
      %5446 = vmatprep.subr.mxu0 0.0
      %5447 = vmatpush1.msra.mxu0 0.0
      %5448 = vmatprep.subr.mxu0 0.0
      %5449 = vmatpush1.msra.mxu0 0.0
      %5450 = vmatprep.subr.mxu0 0.0
      %5451 = vmatpush1.msra.mxu0 0.0
      %5452 = vmatprep.subr.mxu0 0.0
      %5453 = vmatpush1.msra.mxu0 0.0
      %5454 = vmatprep.subr.mxu0 0.0
      %5455 = vmatpush1.msra.mxu0 0.0
      %5456 = vmatprep.subr.mxu0 0.0
      %5457 = vmatpush1.msra.mxu0 0.0
      %5458 = vmatprep.subr.mxu0 0.0
      %5459 = vmatpush1.msra.mxu0 %v5424
      %5460 = vmatprep.subr.mxu0 0.0
      %5461 = vmatpush2.msra.mxu0 0.0
      %5462 = vmatprep.subr.mxu0 0.0
      %5463 = vmatpush2.msra.mxu0 0.0
      %5464 = vmatprep.subr.mxu0 0.0
      %5465 = vmatpush2.msra.mxu0 0.0
      %5466 = vmatprep.subr.mxu0 0.0
      %5467 = vmatpush2.msra.mxu0 0.0
      %5468 = vmatprep.subr.mxu0 0.0
      %5469 = vmatpush2.msra.mxu0 0.0
      %5470 = vmatprep.subr.mxu0 0.0
      %5471 = vmatpush2.msra.mxu0 0.0
      %5472 = vmatprep.subr.mxu0 0.0
      %5473 = vmatpush2.msra.mxu0 0.0
      %5474 = vmatprep.subr.mxu0 0.0
      %5475 = vmatpush2.msra.mxu0 0.0
      %5476 = vmatprep.subr.mxu0 0.0
      %5477 = vmatpush2.msra.mxu0 0.0
      %5478 = vmatprep.subr.mxu0 0.0
      %5479 = vmatpush2.msra.mxu0 0.0
      %5480 = vmatprep.subr.mxu0 0.0
      %5481 = vmatpush2.msra.mxu0 0.0
      %5482 = vmatprep.subr.mxu0 0.0
      %5483 = vmatpush2.msra.mxu0 0.0
      %5484 = vmatprep.subr.mxu0 0.0
      %5485 = vmatpush2.msra.mxu0 0.0
      %5486 = vmatprep.subr.mxu0 0.0
      %5487 = vmatpush2.msra.mxu0 0.0
      %5488 = vmatprep.subr.mxu0 0.0
      %5489 = vmatpush2.msra.mxu0 0.0
      %5490 = vmatprep.subr.mxu0 0.0
      %5491 = vmatpush2.msra.mxu0 0.0
      %5492 = vmatprep.mubr.f32.mxu0 0.0
      %5493 = vmatmul.mubr.f32.gmra.mxu0 %v5290
      %v5494 = vpop.f32.mrf.mxu0
      %v5495 = vadd.f32 0.0, %v5494
      %v5496 = vpop.f32.mrf.mxu0
      %5497 = vmatprep.mubr.f32.mxu0 0.0
      %5498 = vmatmul.mubr.f32.gmra.mxu0 %v5293
      %v5499 = vpop.f32.mrf.mxu0
      %v5500 = vadd.f32 0.0, %v5499
      %v5501 = vpop.f32.mrf.mxu0
      %5502 = vmatprep.mubr.f32.mxu0 0.0
      %5503 = vmatmul.mubr.f32.gmra.mxu0 %v5296
      %v5504 = vpop.f32.mrf.mxu0
      %v5505 = vadd.f32 0.0, %v5504
      %v5506 = vpop.f32.mrf.mxu0
      %5507 = vmatprep.mubr.f32.mxu0 0.0
      %5508 = vmatmul.mubr.f32.gmra.mxu0 %v5299
      %v5509 = vpop.f32.mrf.mxu0
      %v5510 = vadd.f32 0.0, %v5509
      %v5511 = vpop.f32.mrf.mxu0
      %5512 = vmatprep.mubr.f32.mxu0 0.0
      %5513 = vmatmul.mubr.f32.gmra.mxu0 %v5302
      %v5514 = vpop.f32.mrf.mxu0
      %v5515 = vadd.f32 0.0, %v5514
      %v5516 = vpop.f32.mrf.mxu0
      %5517 = vmatprep.mubr.f32.mxu0 0.0
      %5518 = vmatmul.mubr.f32.gmra.mxu0 %v5305
      %v5519 = vpop.f32.mrf.mxu0
      %v5520 = vadd.f32 0.0, %v5519
      %v5521 = vpop.f32.mrf.mxu0
      %5522 = vmatprep.mubr.f32.mxu0 0.0
      %5523 = vmatmul.mubr.f32.gmra.mxu0 %v5308
      %v5524 = vpop.f32.mrf.mxu0
      %v5525 = vadd.f32 0.0, %v5524
      %v5526 = vpop.f32.mrf.mxu0
      %5527 = vmatprep.mubr.f32.mxu0 0.0
      %5528 = vmatmul.mubr.f32.gmra.mxu0 %v5426
      %v5529 = vpop.f32.mrf.mxu0
      %v5530 = vadd.f32 0.0, %v5529
      %v5531 = vpop.f32.mrf.mxu0
      %5532 = vdwg.mxu0
      %v5533 = vadd.f32 %v5415, %v5495
      %v5534 = vadd.f32 %v5416, %v5500
      %v5535 = vadd.f32 %v5417, %v5505
      %v5536 = vadd.f32 %v5418, %v5510
      %v5537 = vadd.f32 %v5419, %v5515
      %v5538 = vadd.f32 %v5420, %v5520
      %v5539 = vadd.f32 %v5421, %v5525
      %v5540 = vadd.f32 %v5422, %v5530
      %s5541 = scalar_lea.vmem %s8, 64
      %v5542 = vld [vmem:[%s5541] sm:$0xff]
      %v5544 = vsel %vm681, %v5283, 0
      %5546 = vmatprep.subr.mxu0 0.0
      %5547 = vmatpush1.msra.mxu0 0.0
      %5548 = vmatprep.subr.mxu0 0.0
      %5549 = vmatpush1.msra.mxu0 0.0
      %5550 = vmatprep.subr.mxu0 0.0
      %5551 = vmatpush1.msra.mxu0 0.0
      %5552 = vmatprep.subr.mxu0 0.0
      %5553 = vmatpush1.msra.mxu0 0.0
      %5554 = vmatprep.subr.mxu0 0.0
      %5555 = vmatpush1.msra.mxu0 0.0
      %5556 = vmatprep.subr.mxu0 0.0
      %5557 = vmatpush1.msra.mxu0 0.0
      %5558 = vmatprep.subr.mxu0 0.0
      %5559 = vmatpush1.msra.mxu0 0.0
      %5560 = vmatprep.subr.mxu0 0.0
      %5561 = vmatpush1.msra.mxu0 0.0
      %5562 = vmatprep.subr.mxu0 0.0
      %5563 = vmatpush1.msra.mxu0 0.0
      %5564 = vmatprep.subr.mxu0 0.0
      %5565 = vmatpush1.msra.mxu0 0.0
      %5566 = vmatprep.subr.mxu0 0.0
      %5567 = vmatpush1.msra.mxu0 0.0
      %5568 = vmatprep.subr.mxu0 0.0
      %5569 = vmatpush1.msra.mxu0 0.0
      %5570 = vmatprep.subr.mxu0 0.0
      %5571 = vmatpush1.msra.mxu0 0.0
      %5572 = vmatprep.subr.mxu0 0.0
      %5573 = vmatpush1.msra.mxu0 0.0
      %5574 = vmatprep.subr.mxu0 0.0
      %5575 = vmatpush1.msra.mxu0 0.0
      %5576 = vmatprep.subr.mxu0 0.0
      %5577 = vmatpush1.msra.mxu0 %v5542
      %5578 = vmatprep.subr.mxu0 0.0
      %5579 = vmatpush2.msra.mxu0 0.0
      %5580 = vmatprep.subr.mxu0 0.0
      %5581 = vmatpush2.msra.mxu0 0.0
      %5582 = vmatprep.subr.mxu0 0.0
      %5583 = vmatpush2.msra.mxu0 0.0
      %5584 = vmatprep.subr.mxu0 0.0
      %5585 = vmatpush2.msra.mxu0 0.0
      %5586 = vmatprep.subr.mxu0 0.0
      %5587 = vmatpush2.msra.mxu0 0.0
      %5588 = vmatprep.subr.mxu0 0.0
      %5589 = vmatpush2.msra.mxu0 0.0
      %5590 = vmatprep.subr.mxu0 0.0
      %5591 = vmatpush2.msra.mxu0 0.0
      %5592 = vmatprep.subr.mxu0 0.0
      %5593 = vmatpush2.msra.mxu0 0.0
      %5594 = vmatprep.subr.mxu0 0.0
      %5595 = vmatpush2.msra.mxu0 0.0
      %5596 = vmatprep.subr.mxu0 0.0
      %5597 = vmatpush2.msra.mxu0 0.0
      %5598 = vmatprep.subr.mxu0 0.0
      %5599 = vmatpush2.msra.mxu0 0.0
      %5600 = vmatprep.subr.mxu0 0.0
      %5601 = vmatpush2.msra.mxu0 0.0
      %5602 = vmatprep.subr.mxu0 0.0
      %5603 = vmatpush2.msra.mxu0 0.0
      %5604 = vmatprep.subr.mxu0 0.0
      %5605 = vmatpush2.msra.mxu0 0.0
      %5606 = vmatprep.subr.mxu0 0.0
      %5607 = vmatpush2.msra.mxu0 0.0
      %5608 = vmatprep.subr.mxu0 0.0
      %5609 = vmatpush2.msra.mxu0 0.0
      %5610 = vmatprep.mubr.f32.mxu0 0.0
      %5611 = vmatmul.mubr.f32.gmra.mxu0 %v5293
      %v5612 = vpop.f32.mrf.mxu0
      %v5613 = vadd.f32 0.0, %v5612
      %v5614 = vpop.f32.mrf.mxu0
      %5615 = vmatprep.mubr.f32.mxu0 0.0
      %5616 = vmatmul.mubr.f32.gmra.mxu0 %v5296
      %v5617 = vpop.f32.mrf.mxu0
      %v5618 = vadd.f32 0.0, %v5617
      %v5619 = vpop.f32.mrf.mxu0
      %5620 = vmatprep.mubr.f32.mxu0 0.0
      %5621 = vmatmul.mubr.f32.gmra.mxu0 %v5299
      %v5622 = vpop.f32.mrf.mxu0
      %v5623 = vadd.f32 0.0, %v5622
      %v5624 = vpop.f32.mrf.mxu0
      %5625 = vmatprep.mubr.f32.mxu0 0.0
      %5626 = vmatmul.mubr.f32.gmra.mxu0 %v5302
      %v5627 = vpop.f32.mrf.mxu0
      %v5628 = vadd.f32 0.0, %v5627
      %v5629 = vpop.f32.mrf.mxu0
      %5630 = vmatprep.mubr.f32.mxu0 0.0
      %5631 = vmatmul.mubr.f32.gmra.mxu0 %v5305
      %v5632 = vpop.f32.mrf.mxu0
      %v5633 = vadd.f32 0.0, %v5632
      %v5634 = vpop.f32.mrf.mxu0
      %5635 = vmatprep.mubr.f32.mxu0 0.0
      %5636 = vmatmul.mubr.f32.gmra.mxu0 %v5308
      %v5637 = vpop.f32.mrf.mxu0
      %v5638 = vadd.f32 0.0, %v5637
      %v5639 = vpop.f32.mrf.mxu0
      %5640 = vmatprep.mubr.f32.mxu0 0.0
      %5641 = vmatmul.mubr.f32.gmra.mxu0 %v5426
      %v5642 = vpop.f32.mrf.mxu0
      %v5643 = vadd.f32 0.0, %v5642
      %v5644 = vpop.f32.mrf.mxu0
      %5645 = vmatprep.mubr.f32.mxu0 0.0
      %5646 = vmatmul.mubr.f32.gmra.mxu0 %v5544
      %v5647 = vpop.f32.mrf.mxu0
      %v5648 = vadd.f32 0.0, %v5647
      %v5649 = vpop.f32.mrf.mxu0
      %5650 = vdwg.mxu0
      %v5651 = vadd.f32 %v5533, %v5613
      %v5652 = vadd.f32 %v5534, %v5618
      %v5653 = vadd.f32 %v5535, %v5623
      %v5654 = vadd.f32 %v5536, %v5628
      %v5655 = vadd.f32 %v5537, %v5633
      %v5656 = vadd.f32 %v5538, %v5638
      %v5657 = vadd.f32 %v5539, %v5643
      %v5658 = vadd.f32 %v5540, %v5648
      %v5659 = vld [vmem:[%s9] sm:$0x1]
      %v5661 = vlaneseq
      %v5662 = vshrl.u32 %v5661, 7
      %v5663 = vsub.s32 0, %v5662
      %v5664 = vrot.slane %v5659, %v5663
      %v5666 = vadd.f32 %v5651, %v5664
      %v5667 = vadd.f32 %v5652, %v5664
      %v5668 = vadd.f32 %v5653, %v5664
      %v5669 = vadd.f32 %v5654, %v5664
      %v5670 = vadd.f32 %v5655, %v5664
      %v5671 = vadd.f32 %v5656, %v5664
      %v5672 = vadd.f32 %v5657, %v5664
      %v5673 = vadd.f32 %v5658, %v5664
      %v5674 = vld [vmem:[%s10] sm:$0xf]
      %v5675 = vld [vmem:[%s11] sm:$0x1]
      %v5677 = vlaneseq
      %v5678 = vshrl.u32 %v5677, 7
      %v5679 = vsub.s32 0, %v5678
      %v5680 = vrot.slane %v5675, %v5679
      %v5683 = vsel %vm629, %v632, 0
      %v5686 = vsel %vm629, %v635, 0
      %v5689 = vsel %vm629, %v638, 0
      %v5692 = vsel %vm629, %v641, 0
      %v5695 = vsel %vm629, %v644, 0
      %v5698 = vsel %vm629, %v647, 0
      %v5701 = vsel %vm629, %v650, 0
      %v5704 = vsel %vm629, %v653, 0
      %v5707 = vsel %vm780, %v5674, 0
      %5709 = vmatprep.subr.mxu0 0.0
      %5710 = vmatpush1.msra.mxu0 0.0
      %5711 = vmatprep.subr.mxu0 0.0
      %5712 = vmatpush1.msra.mxu0 0.0
      %5713 = vmatprep.subr.mxu0 0.0
      %5714 = vmatpush1.msra.mxu0 0.0
      %5715 = vmatprep.subr.mxu0 0.0
      %5716 = vmatpush1.msra.mxu0 0.0
      %5717 = vmatprep.subr.mxu0 0.0
      %5718 = vmatpush1.msra.mxu0 0.0
      %5719 = vmatprep.subr.mxu0 0.0
      %5720 = vmatpush1.msra.mxu0 0.0
      %5721 = vmatprep.subr.mxu0 0.0
      %5722 = vmatpush1.msra.mxu0 0.0
      %5723 = vmatprep.subr.mxu0 0.0
      %5724 = vmatpush1.msra.mxu0 0.0
      %5725 = vmatprep.subr.mxu0 0.0
      %5726 = vmatpush1.msra.mxu0 0.0
      %5727 = vmatprep.subr.mxu0 0.0
      %5728 = vmatpush1.msra.mxu0 0.0
      %5729 = vmatprep.subr.mxu0 0.0
      %5730 = vmatpush1.msra.mxu0 0.0
      %5731 = vmatprep.subr.mxu0 0.0
      %5732 = vmatpush1.msra.mxu0 0.0
      %5733 = vmatprep.subr.mxu0 0.0
      %5734 = vmatpush1.msra.mxu0 0.0
      %5735 = vmatprep.subr.mxu0 0.0
      %5736 = vmatpush1.msra.mxu0 0.0
      %5737 = vmatprep.subr.mxu0 0.0
      %5738 = vmatpush1.msra.mxu0 0.0
      %5739 = vmatprep.subr.mxu0 0.0
      %5740 = vmatpush1.msra.mxu0 %v5707
      %5741 = vmatprep.subr.mxu0 0.0
      %5742 = vmatpush2.msra.mxu0 0.0
      %5743 = vmatprep.subr.mxu0 0.0
      %5744 = vmatpush2.msra.mxu0 0.0
      %5745 = vmatprep.subr.mxu0 0.0
      %5746 = vmatpush2.msra.mxu0 0.0
      %5747 = vmatprep.subr.mxu0 0.0
      %5748 = vmatpush2.msra.mxu0 0.0
      %5749 = vmatprep.subr.mxu0 0.0
      %5750 = vmatpush2.msra.mxu0 0.0
      %5751 = vmatprep.subr.mxu0 0.0
      %5752 = vmatpush2.msra.mxu0 0.0
      %5753 = vmatprep.subr.mxu0 0.0
      %5754 = vmatpush2.msra.mxu0 0.0
      %5755 = vmatprep.subr.mxu0 0.0
      %5756 = vmatpush2.msra.mxu0 0.0
      %5757 = vmatprep.subr.mxu0 0.0
      %5758 = vmatpush2.msra.mxu0 0.0
      %5759 = vmatprep.subr.mxu0 0.0
      %5760 = vmatpush2.msra.mxu0 0.0
      %5761 = vmatprep.subr.mxu0 0.0
      %5762 = vmatpush2.msra.mxu0 0.0
      %5763 = vmatprep.subr.mxu0 0.0
      %5764 = vmatpush2.msra.mxu0 0.0
      %5765 = vmatprep.subr.mxu0 0.0
      %5766 = vmatpush2.msra.mxu0 0.0
      %5767 = vmatprep.subr.mxu0 0.0
      %5768 = vmatpush2.msra.mxu0 0.0
      %5769 = vmatprep.subr.mxu0 0.0
      %5770 = vmatpush2.msra.mxu0 0.0
      %5771 = vmatprep.subr.mxu0 0.0
      %5772 = vmatpush2.msra.mxu0 0.0
      %5773 = vmatprep.mubr.f32.mxu0 0.0
      %5774 = vmatmul.mubr.f32.gmra.mxu0 %v5683
      %v5775 = vpop.f32.mrf.mxu0
      %v5776 = vadd.f32 %v5680, %v5775
      %v5777 = vpop.f32.mrf.mxu0
      %5778 = vmatprep.mubr.f32.mxu0 0.0
      %5779 = vmatmul.mubr.f32.gmra.mxu0 %v5686
      %v5780 = vpop.f32.mrf.mxu0
      %v5781 = vadd.f32 %v5680, %v5780
      %v5782 = vpop.f32.mrf.mxu0
      %5783 = vmatprep.mubr.f32.mxu0 0.0
      %5784 = vmatmul.mubr.f32.gmra.mxu0 %v5689
      %v5785 = vpop.f32.mrf.mxu0
      %v5786 = vadd.f32 %v5680, %v5785
      %v5787 = vpop.f32.mrf.mxu0
      %5788 = vmatprep.mubr.f32.mxu0 0.0
      %5789 = vmatmul.mubr.f32.gmra.mxu0 %v5692
      %v5790 = vpop.f32.mrf.mxu0
      %v5791 = vadd.f32 %v5680, %v5790
      %v5792 = vpop.f32.mrf.mxu0
      %5793 = vmatprep.mubr.f32.mxu0 0.0
      %5794 = vmatmul.mubr.f32.gmra.mxu0 %v5695
      %v5795 = vpop.f32.mrf.mxu0
      %v5796 = vadd.f32 %v5680, %v5795
      %v5797 = vpop.f32.mrf.mxu0
      %5798 = vmatprep.mubr.f32.mxu0 0.0
      %5799 = vmatmul.mubr.f32.gmra.mxu0 %v5698
      %v5800 = vpop.f32.mrf.mxu0
      %v5801 = vadd.f32 %v5680, %v5800
      %v5802 = vpop.f32.mrf.mxu0
      %5803 = vmatprep.mubr.f32.mxu0 0.0
      %5804 = vmatmul.mubr.f32.gmra.mxu0 %v5701
      %v5805 = vpop.f32.mrf.mxu0
      %v5806 = vadd.f32 %v5680, %v5805
      %v5807 = vpop.f32.mrf.mxu0
      %5808 = vmatprep.mubr.f32.mxu0 0.0
      %5809 = vmatmul.mubr.f32.gmra.mxu0 %v5704
      %v5810 = vpop.f32.mrf.mxu0
      %v5811 = vadd.f32 %v5680, %v5810
      %v5812 = vpop.f32.mrf.mxu0
      %5813 = vdwg.mxu0
      %v5814 = vadd.f32 %v5666, %v5776
      %v5815 = vadd.f32 %v5667, %v5781
      %v5816 = vadd.f32 %v5668, %v5786
      %v5817 = vadd.f32 %v5669, %v5791
      %v5818 = vadd.f32 %v5670, %v5796
      %v5819 = vadd.f32 %v5671, %v5801
      %v5820 = vadd.f32 %v5672, %v5806
      %v5821 = vadd.f32 %v5673, %v5811
      %v5822 = vmax.f32 %v5814, 0.0
      %v5823 = vmax.f32 %v5815, 0.0
      %v5824 = vmax.f32 %v5816, 0.0
      %v5825 = vmax.f32 %v5817, 0.0
      %v5826 = vmax.f32 %v5818, 0.0
      %v5827 = vmax.f32 %v5819, 0.0
      %v5828 = vmax.f32 %v5820, 0.0
      %v5829 = vmax.f32 %v5821, 0.0
      %5830 = vst.msk [vmem:[%s522] sm:$0xff] %vm681, %v5822
      %5831 = vst.msk [vmem:[%s522 + $0x8] sm:$0xff] %vm681, %v5823
      %5832 = vst.msk [vmem:[%s522 + $0x10] sm:$0xff] %vm681, %v5824
      %5833 = vst.msk [vmem:[%s522 + $0x18] sm:$0xff] %vm681, %v5825
      %5834 = vst.msk [vmem:[%s522 + $0x20] sm:$0xff] %vm681, %v5826
      %5835 = vst.msk [vmem:[%s522 + $0x28] sm:$0xff] %vm681, %v5827
      %5836 = vst.msk [vmem:[%s522 + $0x30] sm:$0xff] %vm681, %v5828
      %5837 = vst.msk [vmem:[%s522 + $0x38] sm:$0xff] %vm681, %v5829
      %5838 = vst.msk [vmem:[%s527] sm:$0xff] %vm681, %v4490
      %5839 = vst.msk [vmem:[%s527 + $0x8] sm:$0xff] %vm681, %v4492
      %5840 = vst.msk [vmem:[%s527 + $0x10] sm:$0xff] %vm681, %v4494
      %5841 = vst.msk [vmem:[%s527 + $0x18] sm:$0xff] %vm681, %v4496
      %5842 = vst.msk [vmem:[%s527 + $0x20] sm:$0xff] %vm681, %v4498
      %5843 = vst.msk [vmem:[%s527 + $0x28] sm:$0xff] %vm681, %v4500
      %5844 = vst.msk [vmem:[%s527 + $0x30] sm:$0xff] %vm681, %v4502
      %5845 = vst.msk [vmem:[%s527 + $0x38] sm:$0xff] %vm681, %v4504
      %5854 = vrot.lane.b32.xlu0 %v4425, 120
      %v5855 = vpop.permute.xlu0 %5854
      %5856 = vrot.lane.b32.xlu0 %v4426, 120
      %v5857 = vpop.permute.xlu0 %5856
      %5858 = vrot.lane.b32.xlu0 %v4427, 120
      %v5859 = vpop.permute.xlu0 %5858
      %5860 = vrot.lane.b32.xlu0 %v4428, 120
      %v5861 = vpop.permute.xlu0 %5860
      %5862 = vrot.lane.b32.xlu0 %v4429, 120
      %v5863 = vpop.permute.xlu0 %5862
      %5864 = vrot.lane.b32.xlu0 %v4430, 120
      %v5865 = vpop.permute.xlu0 %5864
      %5866 = vrot.lane.b32.xlu0 %v4431, 120
      %v5867 = vpop.permute.xlu0 %5866
      %5868 = vrot.lane.b32.xlu0 %v4432, 120
      %v5869 = vpop.permute.xlu0 %5868
      %5878 = vst.msk [vmem:[%s532] sm:$0xff] %vm681, %v5855
      %5879 = vst.msk [vmem:[%s532 + $0x8] sm:$0xff] %vm681, %v5857
      %5880 = vst.msk [vmem:[%s532 + $0x10] sm:$0xff] %vm681, %v5859
      %5881 = vst.msk [vmem:[%s532 + $0x18] sm:$0xff] %vm681, %v5861
      %5882 = vst.msk [vmem:[%s532 + $0x20] sm:$0xff] %vm681, %v5863
      %5883 = vst.msk [vmem:[%s532 + $0x28] sm:$0xff] %vm681, %v5865
      %5884 = vst.msk [vmem:[%s532 + $0x30] sm:$0xff] %vm681, %v5867
      %5885 = vst.msk [vmem:[%s532 + $0x38] sm:$0xff] %vm681, %v5869
      %p5886 = scmp.lt.s32.totalorder %s26, 1
      %s5887 = scalar_select %p5886, %s26, 1
      %s5888 = smul.addr %s5887, 8
      %s5889 = smul.addr %s5888, 8
      %s5890 = scalar_lea.vmem %s12, %s5889
      %p5891 = scmp.lt.s32.totalorder %s26, 1
      %s5892 = scalar_select %p5891, %s26, 1
      %s5893 = smul.addr %s5892, 8
      %s5894 = smul.addr %s5893, 8
      %s5895 = scalar_lea.vmem %s13, %s5894
      %p5896 = scmp.lt.s32.totalorder %s26, 1
      %s5897 = scalar_select %p5896, %s26, 1
      %s5898 = smul.addr %s5897, 8
      %s5899 = smul.addr %s5898, 8
      %s5900 = scalar_lea.vmem %s14, %s5899
      // Predicated region
      $region69: #{tpu_custom_call.1} parent=67 // pred_check
        %p5901 = pneg %p311
      $region70: #{tpu_custom_call.1} parent=67 // pred_check_branch
        %5903 = sbr.rel (%p5901) target = $region72
      $region71: #{tpu_custom_call.1} parent=67 // pred_region
        _
      $region72: #{tpu_custom_call.1} parent=67 // pred_fallthru
        _
      // Predicated region
      $region73: #{tpu_custom_call.1} parent=67 // pred_check
        %p5904 = pneg %p337
      $region74: #{tpu_custom_call.1} parent=67 // pred_check_branch
        %5906 = sbr.rel (%p5904) target = $region76
      $region75: #{tpu_custom_call.1} parent=67 // pred_region
        _
      $region76: #{tpu_custom_call.1} parent=67 // pred_fallthru
        _
      // Predicated region
      $region77: #{tpu_custom_call.1} parent=67 // pred_check
        %p5907 = pneg %p363
      $region78: #{tpu_custom_call.1} parent=67 // pred_check_branch
        %5909 = sbr.rel (%p5907) target = $region80
      $region79: #{tpu_custom_call.1} parent=67 // pred_region
        _
      $region80: #{tpu_custom_call.1} parent=67 // pred_fallthru
        _
    $region68: #{tpu_custom_call.1} parent=5 // pred_fallthru
      _
    %p5910 = scmp.le.s32.totalorder 2, %s21
    // Predicated region
    $region81: #{tpu_custom_call.1} parent=5 // pred_check
      %p5911 = pneg %p5910
    $region82: #{tpu_custom_call.1} parent=5 // pred_check_branch
      %5913 = sbr.rel (%p5911) target = $region84
    $region83: #{tpu_custom_call.1} parent=5 // pred_region
      %s5914 = ssub.s32 %s21, 2
      // Predicated region
      $region85: #{tpu_custom_call.1} parent=83 // pred_check
        %p5915 = pneg %p317
      $region86: #{tpu_custom_call.1} parent=83 // pred_check_branch
        %5917 = sbr.rel (%p5915) target = $region88
      $region87: #{tpu_custom_call.1} parent=83 // pred_region
        %p5918 = scmp.lt.s32.totalorder %s27, 1
        %s5919 = scalar_select %p5918, %s27, 1
        %s5920 = smul.addr %s5919, 8
        %s5921 = smul.addr %s5920, 8
        %s5922 = scalar_lea.vmem %s12, %s5921
      $region88: #{tpu_custom_call.1} parent=83 // pred_fallthru
        _
      // Predicated region
      $region89: #{tpu_custom_call.1} parent=83 // pred_check
        %p5923 = pneg %p343
      $region90: #{tpu_custom_call.1} parent=83 // pred_check_branch
        %5925 = sbr.rel (%p5923) target = $region92
      $region91: #{tpu_custom_call.1} parent=83 // pred_region
        %p5926 = scmp.lt.s32.totalorder %s27, 1
        %s5927 = scalar_select %p5926, %s27, 1
        %s5928 = smul.addr %s5927, 8
        %s5929 = smul.addr %s5928, 8
        %s5930 = scalar_lea.vmem %s13, %s5929
      $region92: #{tpu_custom_call.1} parent=83 // pred_fallthru
        _
      // Predicated region
      $region93: #{tpu_custom_call.1} parent=83 // pred_check
        %p5931 = pneg %p369
      $region94: #{tpu_custom_call.1} parent=83 // pred_check_branch
        %5933 = sbr.rel (%p5931) target = $region96
      $region95: #{tpu_custom_call.1} parent=83 // pred_region
        %p5934 = scmp.lt.s32.totalorder %s27, 1
        %s5935 = scalar_select %p5934, %s27, 1
        %s5936 = smul.addr %s5935, 8
        %s5937 = smul.addr %s5936, 8
        %s5938 = scalar_lea.vmem %s14, %s5937
      $region96: #{tpu_custom_call.1} parent=83 // pred_fallthru
        _
    $region84: #{tpu_custom_call.1} parent=5 // pred_fallthru
      _
  $region6: #{tpu_custom_call.1} parent=0 // loop_footer
    %s25 = sadd.s32 1, %s21
  $region7: #{tpu_custom_call.1} parent=0 // loop_footer_branch
    %20 = sbr.rel target = $region3
  $region8: #{tpu_custom_call.1} parent=0 // loop_exit
    _

</llo_original>
